<compile_context>
chip_gen: v6e
topology: v6e:2x2x1
jax: 0.10.0
libtpu: 0.0.40
codegen_flags: <defaults>
</compile_context>

<pallas_src>
import jax
import jax.numpy as jnp
from jax import lax
from jax.experimental import pallas as pl
from jax.experimental.pallas import tpu as pltpu

EPS = 1e-5  # PyTorch BatchNorm2d default


# ---------------------------------------------------------------------------
# Pass 1: fused (upsample x2 -> conv3x3 -> +bias) + partial BN statistics
# ---------------------------------------------------------------------------
def upconv_conv_kernel(xp_ref, w_ref, b_ref, y_ref, stats_ref, xu_ref):
    """Grid step = (batch element n, output row-tile t).

    xp_ref   : (1, H+2, W+2, Cin)   original-resolution input, zero-padded by 1 (bf16)
    w_ref    : (9*Cin, Cpad)        im2col conv weight (bf16), Cpad = mult of 128
    b_ref    : (1, Cpad)            conv bias (f32)
    y_ref    : (1, TH, 2W, Cpad)    conv+bias output tile (f32, lane-dense)
    stats_ref: (1, 1, 8, Cpad)      row 0 = per-channel sum, row 1 = sum of squares
    xu_ref   : (TH+2, 2W+2, Cin)    VMEM scratch: upsampled+padded window for this tile
    """
    THp2, W2p2, Cin = xu_ref.shape
    TH, W2 = THp2 - 2, W2p2 - 2          # output rows in this tile, 2W
    W = W2 // 2
    rh = TH // 2                         # original-resolution rows per tile
    Cpad = w_ref.shape[1]
    M = TH * W2

    t = pl.program_id(1)
    a0 = pl.multiple_of(t * rh, rh)      # first original-res (padded) row needed

    # ---- fused nearest-2x upsample + zero pad ------------------------------
    # Upsampled&padded row i (global) maps to padded-original row (i+1)//2, and
    # likewise for columns, so the window for this tile is built by replicating
    # rows/cols of (rh+2) original rows.  Only Cin (=4) lanes move here, cheap.
    xp_loc = xp_ref[0, pl.ds(a0, rh + 2), :, :]              # (rh+2, W+2, Cin)
    rows = jnp.concatenate(
        [xp_loc[0:1],
         jnp.repeat(xp_loc[1:rh + 1], 2, axis=0),
         xp_loc[rh + 1:rh + 2]], axis=0)                      # (TH+2, W+2, Cin)
    xu = jnp.concatenate(
        [rows[:, 0:1, :],
         jnp.repeat(rows[:, 1:W + 1, :], 2, axis=1),
         rows[:, W + 1:W + 2, :]], axis=1)                    # (TH+2, 2W+2, Cin)
    xu_ref[...] = xu

    # ---- im2col: one (M, 9*Cin) x (9*Cin, Cpad) MXU matmul -----------------
    # Taps are read directly from the VMEM scratch ref (no full-tensor copies).
    pieces = [
        xu_ref[dy:dy + TH, dx:dx + W2, :].reshape(M, Cin)
        for dy in range(3) for dx in range(3)
    ]
    lhs = jnp.concatenate(pieces, axis=-1)                    # (M, 9*Cin) bf16
    acc = jnp.dot(lhs, w_ref[...],
                  preferred_element_type=jnp.float32)         # (M, Cpad) f32
    acc = acc + b_ref[...]                                    # broadcast (1, Cpad)

    # ---- fused partial BatchNorm statistics --------------------------------
    s1 = jnp.sum(acc, axis=0, keepdims=True)                  # (1, Cpad)
    s2 = jnp.sum(acc * acc, axis=0, keepdims=True)            # (1, Cpad)
    stats_ref[0, 0] = jnp.concatenate(
        [s1, s2, jnp.zeros((6, Cpad), jnp.float32)], axis=0)  # (8, Cpad)

    # ---- lane-dense (Cpad multiple of 128) store of the conv output --------
    y_ref[...] = acc.reshape(1, TH, W2, Cpad)


# ---------------------------------------------------------------------------
# Pass 2: y * scale + shift, ReLU   (scale/shift precomputed from global stats)
# ---------------------------------------------------------------------------
def bn_act_kernel(y_ref, scale_ref, shift_ref, o_ref):
    y = y_ref[...]                                            # (1, TH, 2W, Cpad) f32
    o_ref[...] = jnp.maximum(y * scale_ref[...] + shift_ref[...], 0.0)


# ---------------------------------------------------------------------------
# Wrapper
# ---------------------------------------------------------------------------
def upconv(x_nchw, w_oihw, bias, gamma, beta, *, row_tile=16):
    """Forward pass of UpConv. x_nchw: (N, Cin, H, W) -> (N, Cout, 2H, 2W)."""
    N, Cin, H, W = x_nchw.shape
    Cout = w_oihw.shape[0]
    assert w_oihw.shape[1] == Cin
    Hu, Wu = 2 * H, 2 * W
    Cpad = ((Cout + 127) // 128) * 128                        # lane-dense channels

    TH = row_tile if (Hu % row_tile == 0) else Hu             # output rows per tile
    assert TH % 2 == 0 and Hu % TH == 0
    rh = TH // 2
    grid_t = Hu // TH

    # --- glue (original resolution only; the 2x upsample is fused in-kernel) ---
    x = jnp.transpose(x_nchw, (0, 2, 3, 1))                   # NCHW -> NHWC
    xp = jnp.pad(x, ((0, 0), (1, 1), (1, 1), (0, 0))).astype(jnp.bfloat16)

    # conv weight OIHW -> im2col matrix (9*Cin, Cpad), bf16 (f32 accumulate in-kernel)
    w_mat = jnp.transpose(w_oihw, (2, 3, 1, 0)).reshape(9 * Cin, Cout)
    w_mat = jnp.pad(w_mat, ((0, 0), (0, Cpad - Cout))).astype(jnp.bfloat16)
    b_p = jnp.pad(bias.astype(jnp.float32), (0, Cpad - Cout)).reshape(1, Cpad)

    cparams = pltpu.CompilerParams(
        dimension_semantics=("parallel", "parallel"),
        vmem_limit_bytes=32 * 1024 * 1024,                    # v7x-safe with headroom
    )

    # --- pass 1: conv + bias + partial BN stats -------------------------------
    y_pad, stats = pl.pallas_call(
        upconv_conv_kernel,
        out_shape=(jax.ShapeDtypeStruct((N, Hu, Wu, Cpad), jnp.float32),
                   jax.ShapeDtypeStruct((N, grid_t, 8, Cpad), jnp.float32)),
        grid_spec=pltpu.PrefetchScalarGridSpec(
            num_scalar_prefetch=0,
            grid=(N, grid_t),
            in_specs=[
                # resident per batch element across the row-tile axis
                pl.BlockSpec((1, H + 2, W + 2, Cin), lambda n, t: (n, 0, 0, 0)),
                pl.BlockSpec((9 * Cin, Cpad), lambda n, t: (0, 0)),
                pl.BlockSpec((1, Cpad), lambda n, t: (0, 0)),
            ],
            out_specs=[
                pl.BlockSpec((1, TH, Wu, Cpad), lambda n, t: (n, t, 0, 0)),
                pl.BlockSpec((1, 1, 8, Cpad), lambda n, t: (n, t, 0, 0)),
            ],
            scratch_shapes=[pltpu.VMEM((TH + 2, Wu + 2, Cin), jnp.bfloat16)],
        ),
        compiler_params=cparams,
    )(xp, w_mat, b_p)

    # --- tiny host-side reduction of the per-tile stats -> scale/shift --------
    s = jnp.sum(stats, axis=(0, 1))                           # (8, Cpad)
    count = jnp.float32(N * Hu * Wu)
    mean = s[0] / count
    var = jnp.maximum(s[1] / count - mean * mean, 0.0)        # biased variance
    g_p = jnp.pad(gamma.astype(jnp.float32), (0, Cpad - Cout))
    be_p = jnp.pad(beta.astype(jnp.float32), (0, Cpad - Cout))
    scale = g_p * lax.rsqrt(var + EPS)                        # pad channels -> 0
    shift = be_p - mean * scale
    scale2 = scale.reshape(1, Cpad)
    shift2 = shift.reshape(1, Cpad)

    # --- pass 2: normalize + ReLU ---------------------------------------------
    out_pad = pl.pallas_call(
        bn_act_kernel,
        out_shape=jax.ShapeDtypeStruct((N, Hu, Wu, Cpad), jnp.float32),
        grid_spec=pltpu.PrefetchScalarGridSpec(
            num_scalar_prefetch=0,
            grid=(N, grid_t),
            in_specs=[
                pl.BlockSpec((1, TH, Wu, Cpad), lambda n, t: (n, t, 0, 0)),
                pl.BlockSpec((1, Cpad), lambda n, t: (0, 0)),
                pl.BlockSpec((1, Cpad), lambda n, t: (0, 0)),
            ],
            out_specs=pl.BlockSpec((1, TH, Wu, Cpad), lambda n, t: (n, t, 0, 0)),
        ),
        compiler_params=cparams,
    )(y_pad, scale2, shift2)

    out = out_pad[..., :Cout]                                 # drop channel padding
    return jnp.transpose(out, (0, 3, 1, 2))                   # back to NCHW


# ---------------------------------------------------------------------------
# Pure-JAX reference (mirrors PyTorch forward in training mode)
# ---------------------------------------------------------------------------
def upconv_reference(x_nchw, w_oihw, bias, gamma, beta):
    x = jnp.repeat(jnp.repeat(x_nchw, 2, axis=2), 2, axis=3)
    y = lax.conv_general_dilated(
        x.astype(jnp.float32), w_oihw.astype(jnp.float32),
        window_strides=(1, 1), padding=((1, 1), (1, 1)),
        dimension_numbers=("NCHW", "OIHW", "NCHW"),
        preferred_element_type=jnp.float32)
    y = y + bias.reshape(1, -1, 1, 1)
    mean = jnp.mean(y, axis=(0, 2, 3), keepdims=True)
    var = jnp.mean((y - mean) ** 2, axis=(0, 2, 3), keepdims=True)
    y = (y - mean) * lax.rsqrt(var + EPS)
    y = y * gamma.reshape(1, -1, 1, 1) + beta.reshape(1, -1, 1, 1)
    return jnp.maximum(y, 0.0)


if __name__ == "__main__":
    key = jax.random.PRNGKey(0)
    k_x, k_w, k_b = jax.random.split(key, 3)

    N, Cin, Cout, H, W = 2, 4, 8, 16, 16

    x = jax.random.normal(k_x, (N, Cin, H, W), jnp.float32)
    # deterministic synthetic parameters (PyTorch-like defaults)
    w = jax.random.normal(k_w, (Cout, Cin, 3, 3), jnp.float32) * 0.1
    b = jax.random.normal(k_b, (Cout,), jnp.float32) * 0.1
    gamma = jnp.ones((Cout,), jnp.float32)    # BN weight default = 1
    beta = jnp.zeros((Cout,), jnp.float32)    # BN bias default = 0

    fwd = jax.jit(upconv)
    out = jax.block_until_ready(fwd(x, w, b, gamma, beta))
    ref = jax.block_until_ready(upconv_reference(x, w, b, gamma, beta))

    assert out.shape == (N, Cout, 2 * H, 2 * W), out.shape
    max_err = float(jnp.max(jnp.abs(out - ref)))
    assert jnp.allclose(out, ref, atol=2e-2, rtol=2e-2), max_err

    print("KERNEL_OK")
</pallas_src>

<mosaic_0001>
module attributes {stable_mosaic.version = 11 : i64} {
  func.func @bn_act_kernel(%arg0: i32, %arg1: i32, %arg2: memref<1x16x32x128xf32, #tpu.memory_space<vmem>>, %arg3: memref<1x128xf32, #tpu.memory_space<vmem>>, %arg4: memref<1x128xf32, #tpu.memory_space<vmem>>, %arg5: memref<1x16x32x128xf32, #tpu.memory_space<vmem>>) attributes {dimension_semantics = [#tpu.dimension_semantics<parallel>, #tpu.dimension_semantics<parallel>], iteration_bounds = array<i64: 2, 2>, scalar_prefetch = 0 : i64, scratch_operands = 0 : i64, tpu.core_type = #tpu.core_type<tc>, window_params = [{transform_indices = @transform_0, window_bounds = array<i64: 1, 16, 32, 128>}, {pipeline_mode = #tpu.pipeline_mode<synchronous>, transform_indices = @transform_1, window_bounds = array<i64: 1, 128>}, {pipeline_mode = #tpu.pipeline_mode<synchronous>, transform_indices = @transform_2, window_bounds = array<i64: 1, 128>}, {transform_indices = @transform_3, window_bounds = array<i64: 1, 16, 32, 128>}]} {
    %c0 = arith.constant 0 : index
    %c0_0 = arith.constant 0 : index
    %c0_1 = arith.constant 0 : index
    %c0_2 = arith.constant 0 : index
    %0 = vector.load %arg2[%c0, %c0_0, %c0_1, %c0_2] : memref<1x16x32x128xf32, #tpu.memory_space<vmem>>, vector<1x16x32x128xf32>
    %c0_3 = arith.constant 0 : index
    %c0_4 = arith.constant 0 : index
    %1 = vector.load %arg3[%c0_3, %c0_4] : memref<1x128xf32, #tpu.memory_space<vmem>>, vector<1x128xf32>
    %2 = vector.shape_cast %1 : vector<1x128xf32> to vector<1x1x1x128xf32>
    %3 = vector.broadcast %2 : vector<1x1x1x128xf32> to vector<1x16x32x128xf32>
    %4 = arith.mulf %0, %3 : vector<1x16x32x128xf32>
    %c0_5 = arith.constant 0 : index
    %c0_6 = arith.constant 0 : index
    %5 = vector.load %arg4[%c0_5, %c0_6] : memref<1x128xf32, #tpu.memory_space<vmem>>, vector<1x128xf32>
    %6 = vector.shape_cast %5 : vector<1x128xf32> to vector<1x1x1x128xf32>
    %7 = vector.broadcast %6 : vector<1x1x1x128xf32> to vector<1x16x32x128xf32>
    %8 = arith.addf %4, %7 : vector<1x16x32x128xf32>
    %cst = arith.constant 0.000000e+00 : f32
    %9 = vector.broadcast %cst : f32 to vector<1x16x32x128xf32>
    %10 = arith.maximumf %8, %9 : vector<1x16x32x128xf32>
    %c0_7 = arith.constant 0 : index
    %c0_8 = arith.constant 0 : index
    %c0_9 = arith.constant 0 : index
    %c0_10 = arith.constant 0 : index
    %11 = vector.load %arg5[%c0_7, %c0_8, %c0_9, %c0_10] : memref<1x16x32x128xf32, #tpu.memory_space<vmem>>, vector<1x16x32x128xf32>
    tpu.vector_store %arg5[%c0_7, %c0_8, %c0_9, %c0_10], %10 {strides = array<i32>} : memref<1x16x32x128xf32, #tpu.memory_space<vmem>>, vector<1x16x32x128xf32>,
    return
  }
  func.func @transform_0(%arg0: i32, %arg1: i32) -> (i32, i32, i32, i32) {
    %c0_i32 = arith.constant 0 : i32
    %c0_i32_0 = arith.constant 0 : i32
    %c0_i32_1 = arith.constant 0 : i32
    return %arg0, %arg1, %c0_i32, %c0_i32_0 : i32, i32, i32, i32
  }
  func.func @transform_1(%arg0: i32, %arg1: i32) -> (i32, i32) {
    %c0_i32 = arith.constant 0 : i32
    %c0_i32_0 = arith.constant 0 : i32
    %c0_i32_1 = arith.constant 0 : i32
    return %c0_i32, %c0_i32_0 : i32, i32
  }
  func.func @transform_2(%arg0: i32, %arg1: i32) -> (i32, i32) {
    %c0_i32 = arith.constant 0 : i32
    %c0_i32_0 = arith.constant 0 : i32
    %c0_i32_1 = arith.constant 0 : i32
    return %c0_i32, %c0_i32_0 : i32, i32
  }
  func.func @transform_3(%arg0: i32, %arg1: i32) -> (i32, i32, i32, i32) {
    %c0_i32 = arith.constant 0 : i32
    %c0_i32_0 = arith.constant 0 : i32
    %c0_i32_1 = arith.constant 0 : i32
    return %arg0, %arg1, %c0_i32, %c0_i32_0 : i32, i32, i32, i32
  }
}

module attributes {stable_mosaic.version = 11 : i64} {
  func.func @upconv_conv_kernel(%arg0: i32, %arg1: i32, %arg2: memref<1x18x18x4xbf16, #tpu.memory_space<vmem>>, %arg3: memref<36x128xbf16, #tpu.memory_space<vmem>>, %arg4: memref<1x128xf32, #tpu.memory_space<vmem>>, %arg5: memref<1x16x32x128xf32, #tpu.memory_space<vmem>>, %arg6: memref<1x1x8x128xf32, #tpu.memory_space<vmem>>, %arg7: memref<18x34x4xbf16, #tpu.memory_space<vmem>>) attributes {dimension_semantics = [#tpu.dimension_semantics<parallel>, #tpu.dimension_semantics<parallel>], iteration_bounds = array<i64: 2, 2>, scalar_prefetch = 0 : i64, scratch_operands = 1 : i64, tpu.core_type = #tpu.core_type<tc>, window_params = [{transform_indices = @transform_0, window_bounds = array<i64: 1, 18, 18, 4>}, {pipeline_mode = #tpu.pipeline_mode<synchronous>, transform_indices = @transform_1, window_bounds = array<i64: 36, 128>}, {pipeline_mode = #tpu.pipeline_mode<synchronous>, transform_indices = @transform_2, window_bounds = array<i64: 1, 128>}, {transform_indices = @transform_3, window_bounds = array<i64: 1, 16, 32, 128>}, {transform_indices = @transform_4, window_bounds = array<i64: 1, 1, 8, 128>}]} {
    %c8_i32 = arith.constant 8 : i32
    %0 = arith.muli %arg1, %c8_i32 : i32
    %1 = tpu.assume_multiple %0, 8 : i32
    %c0 = arith.constant 0 : index
    %2 = arith.index_cast %1 : i32 to index
    %c0_0 = arith.constant 0 : index
    %c0_1 = arith.constant 0 : index
    %3 = vector.load %arg2[%c0, %2, %c0_0, %c0_1] : memref<1x18x18x4xbf16, #tpu.memory_space<vmem>>, vector<1x10x18x4xbf16>
    %4 = vector.shape_cast %3 : vector<1x10x18x4xbf16> to vector<10x18x4xbf16>
    %5 = vector.extract_strided_slice %4 {offsets = [0, 0, 0], sizes = [1, 18, 4], strides = [1, 1, 1]} : vector<10x18x4xbf16> to vector<1x18x4xbf16>
    %6 = vector.extract_strided_slice %4 {offsets = [1, 0, 0], sizes = [8, 18, 4], strides = [1, 1, 1]} : vector<10x18x4xbf16> to vector<8x18x4xbf16>
    %7 = vector.shape_cast %6 : vector<8x18x4xbf16> to vector<8x1x18x4xbf16>
    %8 = vector.broadcast %7 : vector<8x1x18x4xbf16> to vector<8x2x18x4xbf16>
    %9 = vector.shape_cast %8 : vector<8x2x18x4xbf16> to vector<16x18x4xbf16>
    %10 = vector.extract_strided_slice %4 {offsets = [9, 0, 0], sizes = [1, 18, 4], strides = [1, 1, 1]} : vector<10x18x4xbf16> to vector<1x18x4xbf16>
    %11 = tpu.concatenate %5, %9, %10 in 0 : vector<1x18x4xbf16>, vector<16x18x4xbf16>, vector<1x18x4xbf16> -> vector<18x18x4xbf16>
    %12 = vector.extract_strided_slice %11 {offsets = [0, 0, 0], sizes = [18, 1, 4], strides = [1, 1, 1]} : vector<18x18x4xbf16> to vector<18x1x4xbf16>
    %13 = vector.extract_strided_slice %11 {offsets = [0, 1, 0], sizes = [18, 16, 4], strides = [1, 1, 1]} : vector<18x18x4xbf16> to vector<18x16x4xbf16>
    %14 = vector.shape_cast %13 : vector<18x16x4xbf16> to vector<18x16x1x4xbf16>
    %15 = vector.broadcast %14 : vector<18x16x1x4xbf16> to vector<18x16x2x4xbf16>
    %16 = vector.shape_cast %15 : vector<18x16x2x4xbf16> to vector<18x32x4xbf16>
    %17 = vector.extract_strided_slice %11 {offsets = [0, 17, 0], sizes = [18, 1, 4], strides = [1, 1, 1]} : vector<18x18x4xbf16> to vector<18x1x4xbf16>
    %18 = tpu.concatenate %12, %16, %17 in 1 : vector<18x1x4xbf16>, vector<18x32x4xbf16>, vector<18x1x4xbf16> -> vector<18x34x4xbf16>
    %c0_2 = arith.constant 0 : index
    %c0_3 = arith.constant 0 : index
    %c0_4 = arith.constant 0 : index
    %19 = vector.load %arg7[%c0_2, %c0_3, %c0_4] : memref<18x34x4xbf16, #tpu.memory_space<vmem>>, vector<18x34x4xbf16>
    tpu.vector_store %arg7[%c0_2, %c0_3, %c0_4], %18 {strides = array<i32>} : memref<18x34x4xbf16, #tpu.memory_space<vmem>>, vector<18x34x4xbf16>,
    %c0_5 = arith.constant 0 : index
    %c0_6 = arith.constant 0 : index
    %c0_7 = arith.constant 0 : index
    %20 = vector.load %arg7[%c0_5, %c0_6, %c0_7] : memref<18x34x4xbf16, #tpu.memory_space<vmem>>, vector<16x32x4xbf16>
    %21 = vector.shape_cast %20 : vector<16x32x4xbf16> to vector<512x4xbf16>
    %c0_8 = arith.constant 0 : index
    %c1 = arith.constant 1 : index
    %c0_9 = arith.constant 0 : index
    %22 = vector.load %arg7[%c0_8, %c1, %c0_9] : memref<18x34x4xbf16, #tpu.memory_space<vmem>>, vector<16x32x4xbf16>
    %23 = vector.shape_cast %22 : vector<16x32x4xbf16> to vector<512x4xbf16>
    %c0_10 = arith.constant 0 : index
    %c2 = arith.constant 2 : index
    %c0_11 = arith.constant 0 : index
    %24 = vector.load %arg7[%c0_10, %c2, %c0_11] : memref<18x34x4xbf16, #tpu.memory_space<vmem>>, vector<16x32x4xbf16>
    %25 = vector.shape_cast %24 : vector<16x32x4xbf16> to vector<512x4xbf16>
    %c1_12 = arith.constant 1 : index
    %c0_13 = arith.constant 0 : index
    %c0_14 = arith.constant 0 : index
    %26 = vector.load %arg7[%c1_12, %c0_13, %c0_14] : memref<18x34x4xbf16, #tpu.memory_space<vmem>>, vector<16x32x4xbf16>
    %27 = vector.shape_cast %26 : vector<16x32x4xbf16> to vector<512x4xbf16>
    %c1_15 = arith.constant 1 : index
    %c1_16 = arith.constant 1 : index
    %c0_17 = arith.constant 0 : index
    %28 = vector.load %arg7[%c1_15, %c1_16, %c0_17] : memref<18x34x4xbf16, #tpu.memory_space<vmem>>, vector<16x32x4xbf16>
    %29 = vector.shape_cast %28 : vector<16x32x4xbf16> to vector<512x4xbf16>
    %c1_18 = arith.constant 1 : index
    %c2_19 = arith.constant 2 : index
    %c0_20 = arith.constant 0 : index
    %30 = vector.load %arg7[%c1_18, %c2_19, %c0_20] : memref<18x34x4xbf16, #tpu.memory_space<vmem>>, vector<16x32x4xbf16>
    %31 = vector.shape_cast %30 : vector<16x32x4xbf16> to vector<512x4xbf16>
    %c2_21 = arith.constant 2 : index
    %c0_22 = arith.constant 0 : index
    %c0_23 = arith.constant 0 : index
    %32 = vector.load %arg7[%c2_21, %c0_22, %c0_23] : memref<18x34x4xbf16, #tpu.memory_space<vmem>>, vector<16x32x4xbf16>
    %33 = vector.shape_cast %32 : vector<16x32x4xbf16> to vector<512x4xbf16>
    %c2_24 = arith.constant 2 : index
    %c1_25 = arith.constant 1 : index
    %c0_26 = arith.constant 0 : index
    %34 = vector.load %arg7[%c2_24, %c1_25, %c0_26] : memref<18x34x4xbf16, #tpu.memory_space<vmem>>, vector<16x32x4xbf16>
    %35 = vector.shape_cast %34 : vector<16x32x4xbf16> to vector<512x4xbf16>
    %c2_27 = arith.constant 2 : index
    %c2_28 = arith.constant 2 : index
    %c0_29 = arith.constant 0 : index
    %36 = vector.load %arg7[%c2_27, %c2_28, %c0_29] : memref<18x34x4xbf16, #tpu.memory_space<vmem>>, vector<16x32x4xbf16>
    %37 = vector.shape_cast %36 : vector<16x32x4xbf16> to vector<512x4xbf16>
    %38 = tpu.concatenate %21, %23, %25, %27, %29, %31, %33, %35, %37 in 1 : vector<512x4xbf16>, vector<512x4xbf16>, vector<512x4xbf16>, vector<512x4xbf16>, vector<512x4xbf16>, vector<512x4xbf16>, vector<512x4xbf16>, vector<512x4xbf16>, vector<512x4xbf16> -> vector<512x36xbf16>
    %c0_30 = arith.constant 0 : index
    %c0_31 = arith.constant 0 : index
    %39 = vector.load %arg3[%c0_30, %c0_31] : memref<36x128xbf16, #tpu.memory_space<vmem>>, vector<36x128xbf16>
    %cst = arith.constant dense<0.000000e+00> : vector<512x128xf32>
    %40 = tpu.matmul %38, %39, %cst {dimension_numbers = #tpu.dot_dimension_numbers<[1], [0], [0], [1], [0, 0, 1, 1], [], []>} : vector<512x36xbf16>, vector<36x128xbf16>, vector<512x128xf32> -> vector<512x128xf32>
    %c0_32 = arith.constant 0 : index
    %c0_33 = arith.constant 0 : index
    %41 = vector.load %arg4[%c0_32, %c0_33] : memref<1x128xf32, #tpu.memory_space<vmem>>, vector<1x128xf32>
    %42 = vector.broadcast %41 : vector<1x128xf32> to vector<512x128xf32>
    %43 = arith.addf %40, %42 : vector<512x128xf32>
    %cst_34 = arith.constant dense<0.000000e+00> : vector<128xf32>
    %44 = vector.multi_reduction <add>, %43, %cst_34 [0] : vector<512x128xf32> to vector<128xf32>
    %45 = vector.shape_cast %44 : vector<128xf32> to vector<1x128xf32>
    %46 = arith.mulf %43, %43 : vector<512x128xf32>
    %cst_35 = arith.constant dense<0.000000e+00> : vector<128xf32>
    %47 = vector.multi_reduction <add>, %46, %cst_35 [0] : vector<512x128xf32> to vector<128xf32>
    %48 = vector.shape_cast %47 : vector<128xf32> to vector<1x128xf32>
    %cst_36 = arith.constant 0.000000e+00 : f32
    %49 = vector.broadcast %cst_36 : f32 to vector<6x128xf32>
    %50 = tpu.concatenate %45, %48, %49 in 0 : vector<1x128xf32>, vector<1x128xf32>, vector<6x128xf32> -> vector<8x128xf32>
    %c0_37 = arith.constant 0 : index
    %c0_38 = arith.constant 0 : index
    %c0_39 = arith.constant 0 : index
    %c0_40 = arith.constant 0 : index
    %51 = vector.load %arg6[%c0_37, %c0_38, %c0_39, %c0_40] : memref<1x1x8x128xf32, #tpu.memory_space<vmem>>, vector<1x1x8x128xf32>
    %52 = vector.shape_cast %51 : vector<1x1x8x128xf32> to vector<8x128xf32>
    %53 = vector.shape_cast %50 : vector<8x128xf32> to vector<1x1x8x128xf32>
    tpu.vector_store %arg6[%c0_37, %c0_38, %c0_39, %c0_40], %53 {strides = array<i32>} : memref<1x1x8x128xf32, #tpu.memory_space<vmem>>, vector<1x1x8x128xf32>,
    %54 = vector.shape_cast %43 : vector<512x128xf32> to vector<1x16x32x128xf32>
    %c0_41 = arith.constant 0 : index
    %c0_42 = arith.constant 0 : index
    %c0_43 = arith.constant 0 : index
    %c0_44 = arith.constant 0 : index
    %55 = vector.load %arg5[%c0_41, %c0_42, %c0_43, %c0_44] : memref<1x16x32x128xf32, #tpu.memory_space<vmem>>, vector<1x16x32x128xf32>
    tpu.vector_store %arg5[%c0_41, %c0_42, %c0_43, %c0_44], %54 {strides = array<i32>} : memref<1x16x32x128xf32, #tpu.memory_space<vmem>>, vector<1x16x32x128xf32>,
    return
  }
  func.func @transform_0(%arg0: i32, %arg1: i32) -> (i32, i32, i32, i32) {
    %c0_i32 = arith.constant 0 : i32
    %c0_i32_0 = arith.constant 0 : i32
    %c0_i32_1 = arith.constant 0 : i32
    %c0_i32_2 = arith.constant 0 : i32
    return %arg0, %c0_i32, %c0_i32_0, %c0_i32_1 : i32, i32, i32, i32
  }
  func.func @transform_1(%arg0: i32, %arg1: i32) -> (i32, i32) {
    %c0_i32 = arith.constant 0 : i32
    %c0_i32_0 = arith.constant 0 : i32
    %c0_i32_1 = arith.constant 0 : i32
    return %c0_i32, %c0_i32_0 : i32, i32
  }
  func.func @transform_2(%arg0: i32, %arg1: i32) -> (i32, i32) {
    %c0_i32 = arith.constant 0 : i32
    %c0_i32_0 = arith.constant 0 : i32
    %c0_i32_1 = arith.constant 0 : i32
    return %c0_i32, %c0_i32_0 : i32, i32
  }
  func.func @transform_3(%arg0: i32, %arg1: i32) -> (i32, i32, i32, i32) {
    %c0_i32 = arith.constant 0 : i32
    %c0_i32_0 = arith.constant 0 : i32
    %c0_i32_1 = arith.constant 0 : i32
    return %arg0, %arg1, %c0_i32, %c0_i32_0 : i32, i32, i32, i32
  }
  func.func @transform_4(%arg0: i32, %arg1: i32) -> (i32, i32, i32, i32) {
    %c0_i32 = arith.constant 0 : i32
    %c0_i32_0 = arith.constant 0 : i32
    %c0_i32_1 = arith.constant 0 : i32
    return %arg0, %arg1, %c0_i32, %c0_i32_0 : i32, i32, i32, i32
  }
}

</mosaic_0001>

<llo_original>
// kernel: upconv.3
$region0: #{upconv.3}
  #allocation0 [shape = 'u32[]', space=smem, size = 0x4, offset = 0x4, fixed_abs, tag = 'smem constant byte address 0x4 - core index']
  #allocation1 [shape = 'u32[144,128]{1,0:T(1,128)}', space=vmem, size = 0x12000, scoped, tag = 'internal scratch']
  %s0 = inlined_call_operand.vmem [shape: f32[2,32,32,128], index: 0, kind: input, shape index: {}]
  %s1 = inlined_call_operand.vmem [shape: f32[1,128], index: 1, kind: input, shape index: {}]
  %s2 = inlined_call_operand.vmem [shape: f32[1,128], index: 2, kind: input, shape index: {}]
  %s3 = inlined_call_operand.vmem [shape: f32[2,32,32,128], index: 3, kind: output, shape index: {}]
  %s4 = sld [smem:[#allocation0]]
  $region45: #{upconv.3} parent=0
    _
  %s6 = ssub.s32 1, %s4
  %s7 = scalar_select 0, %s6, %s4
  loop: start=0, step=1, limit=6
  $region2: #{upconv.3} parent=0 // loop_pre_header
    _
  $region3: #{upconv.3} parent=0 // loop_header
    %s9 = sphi 0, %s13
    %p10 = scmp.ge.s32.totalorder %s9, 6
    %s16 = sphi 0, %s28
    %s17 = sphi 0, %s24
    %s18 = sphi 0, %s16
    %s19 = sphi 0, %s17
    %s20 = sphi 0, %s18
    %s21 = sphi 0, %s19
    %s33 = sphi 0, %s35
    %s36 = sphi 0, %s33
    %s37 = sphi 0, %s36
    %s53 = sphi 0, %s37
    %s57 = sphi 0, %s57
    %s59 = sphi 0, %s57
    %s60 = sphi 0, %s59
    %s74 = sphi 0, %s60
    %s78 = sphi 0, %s78
    %s80 = sphi 0, %s78
    %s81 = sphi 0, %s80
    %s95 = sphi 0, %s81
    %s103 = sphi 0, %s105
    %s106 = sphi 0, %s103
    %s107 = sphi 0, %s106
    %s123 = sphi 0, %s107
  $region4: #{upconv.3} parent=0 // loop_header_branch
    %12 = sbr.rel (%p10) target = $region8
  $region5: #{upconv.3} parent=0 // loop_body
    %s14 = ssub.s32 %s9, 1
    %s15 = ssub.s32 %s9, 2
    %s22 = sadd.s32 1, %s17
    %p23 = scmp.ge.s32.totalorder %s22, 2
    %s24 = scalar_select %p23, 0, %s22
    %s25 = sadd.s32 1, %s16
    %s26 = scalar_select %p23, %s25, %s16
    %p27 = scmp.ge.s32.totalorder %s26, 2
    %s28 = scalar_select %p27, 0, %s26
    %s29 = ssub.s32 %s16, %s28
    %s30 = ssub.s32 %s17, %s24
    %s31 = sor.u32 %s29, %s30
    %p32 = scmp.eq.s32.totalorder %s31, 0
    %s34 = sadd.s32 %s33, 1
    %s35 = scalar_select %p32, %s33, %s34
    %p38 = pneg %p32
    %p39 = scmp.eq.s32.totalorder %s9, 3
    %p40 = por %p38, %p39
    %p41 = scmp.ne.s32.totalorder %s33, %s36
    %p42 = scmp.eq.s32.totalorder %s9, 0
    %p43 = por %p41, %p42
    %p44 = scmp.ne.s32.totalorder %s33, %s36
    %p45 = scmp.eq.s32.totalorder %s14, 3
    %p46 = por %p44, %p45
    %p47 = scmp.ne.s32.totalorder %s36, %s37
    %p48 = scmp.eq.s32.totalorder %s14, 0
    %p49 = por %p47, %p48
    %p50 = scmp.ne.s32.totalorder %s36, %s37
    %p51 = scmp.eq.s32.totalorder %s15, 3
    %p52 = por %p50, %p51
    %p54 = scmp.ne.s32.totalorder %s37, %s53
    %p55 = scmp.eq.s32.totalorder %s15, 0
    %p56 = por %p54, %p55
    %s58 = sadd.s32 %s57, 1
    %p61 = scmp.eq.s32.totalorder %s9, 3
    %p62 = scmp.ne.s32.totalorder %s57, %s59
    %p63 = scmp.eq.s32.totalorder %s9, 0
    %p64 = por %p62, %p63
    %p65 = scmp.ne.s32.totalorder %s57, %s59
    %p66 = scmp.eq.s32.totalorder %s14, 3
    %p67 = por %p65, %p66
    %p68 = scmp.ne.s32.totalorder %s59, %s60
    %p69 = scmp.eq.s32.totalorder %s14, 0
    %p70 = por %p68, %p69
    %p71 = scmp.ne.s32.totalorder %s59, %s60
    %p72 = scmp.eq.s32.totalorder %s15, 3
    %p73 = por %p71, %p72
    %p75 = scmp.ne.s32.totalorder %s60, %s74
    %p76 = scmp.eq.s32.totalorder %s15, 0
    %p77 = por %p75, %p76
    %s79 = sadd.s32 %s78, 1
    %p82 = scmp.eq.s32.totalorder %s9, 3
    %p83 = scmp.ne.s32.totalorder %s78, %s80
    %p84 = scmp.eq.s32.totalorder %s9, 0
    %p85 = por %p83, %p84
    %p86 = scmp.ne.s32.totalorder %s78, %s80
    %p87 = scmp.eq.s32.totalorder %s14, 3
    %p88 = por %p86, %p87
    %p89 = scmp.ne.s32.totalorder %s80, %s81
    %p90 = scmp.eq.s32.totalorder %s14, 0
    %p91 = por %p89, %p90
    %p92 = scmp.ne.s32.totalorder %s80, %s81
    %p93 = scmp.eq.s32.totalorder %s15, 3
    %p94 = por %p92, %p93
    %p96 = scmp.ne.s32.totalorder %s81, %s95
    %p97 = scmp.eq.s32.totalorder %s15, 0
    %p98 = por %p96, %p97
    %s99 = ssub.s32 %s16, %s28
    %s100 = ssub.s32 %s17, %s24
    %s101 = sor.u32 %s99, %s100
    %p102 = scmp.eq.s32.totalorder %s101, 0
    %s104 = sadd.s32 %s103, 1
    %s105 = scalar_select %p102, %s103, %s104
    %p108 = pneg %p102
    %p109 = scmp.eq.s32.totalorder %s9, 3
    %p110 = por %p108, %p109
    %p111 = scmp.ne.s32.totalorder %s103, %s106
    %p112 = scmp.eq.s32.totalorder %s9, 0
    %p113 = por %p111, %p112
    %p114 = scmp.ne.s32.totalorder %s103, %s106
    %p115 = scmp.eq.s32.totalorder %s14, 3
    %p116 = por %p114, %p115
    %p117 = scmp.ne.s32.totalorder %s106, %s107
    %p118 = scmp.eq.s32.totalorder %s14, 0
    %p119 = por %p117, %p118
    %p120 = scmp.ne.s32.totalorder %s106, %s107
    %p121 = scmp.eq.s32.totalorder %s15, 3
    %p122 = por %p120, %p121
    %p124 = scmp.ne.s32.totalorder %s107, %s123
    %p125 = scmp.eq.s32.totalorder %s15, 0
    %p126 = por %p124, %p125
    %p127 = scmp.le.s32.totalorder 1, %s9
    %p128 = scmp.lt.s32.totalorder %s9, 5
    %p129 = pnand %p127, %p128
    %p130 = pneg %p129
    // Predicated region
    $region9: #{upconv.3} parent=5 // pred_check
      _
    $region10: #{upconv.3} parent=5 // pred_check_branch
      %132 = sbr.rel (%p129) target = $region12
    $region11: #{upconv.3} parent=5 // pred_region
      %s133 = ssub.s32 %s9, 1
      // Predicated region
      $region13: #{upconv.3} parent=11 // pred_check
        %p134 = pneg %p70
      $region14: #{upconv.3} parent=11 // pred_check_branch
        %136 = sbr.rel (%p134) target = $region16
      $region15: #{upconv.3} parent=11 // pred_region
        _
      $region16: #{upconv.3} parent=11 // pred_fallthru
        _
      // Predicated region
      $region17: #{upconv.3} parent=11 // pred_check
        %p137 = pneg %p91
      $region18: #{upconv.3} parent=11 // pred_check_branch
        %139 = sbr.rel (%p137) target = $region20
      $region19: #{upconv.3} parent=11 // pred_region
        _
      $region20: #{upconv.3} parent=11 // pred_fallthru
        _
    $region12: #{upconv.3} parent=5 // pred_fallthru
      _
    %p140 = scmp.lt.s32.totalorder %s9, 4
    // Predicated region
    $region21: #{upconv.3} parent=5 // pred_check
      %p141 = pneg %p140
    $region22: #{upconv.3} parent=5 // pred_check_branch
      %143 = sbr.rel (%p141) target = $region24
    $region23: #{upconv.3} parent=5 // pred_region
      // Predicated region
      $region25: #{upconv.3} parent=23 // pred_check
        %p144 = pneg %p43
      $region26: #{upconv.3} parent=23 // pred_check_branch
        %146 = sbr.rel (%p144) target = $region28
      $region27: #{upconv.3} parent=23 // pred_region
        %s147 = smul.u32 16, %s17
        %p148 = scmp.lt.s32.totalorder %s16, 1
        %s149 = scalar_select %p148, %s16, 1
        %p150 = scmp.lt.s32.totalorder %s147, 31
        %s151 = scalar_select %p150, %s147, 31
        %s152 = smul.addr %s151, 4
        %s153 = smul.addr %s149, 128
        %s154 = sadd.s32 %s152, %s153
        %s155 = smul.addr %s154, 8
        %s156 = scalar_lea.vmem %s0, %s155
        %s157 = smul.u32 16, %s17
      $region28: #{upconv.3} parent=23 // pred_fallthru
        _
    $region24: #{upconv.3} parent=5 // pred_fallthru
      _
    %p158 = scmp.le.s32.totalorder 1, %s9
    %p159 = scmp.lt.s32.totalorder %s9, 5
    %p160 = pnand %p158, %p159
    %p161 = pneg %p160
    // Predicated region
    $region29: #{upconv.3} parent=5 // pred_check
      _
    $region30: #{upconv.3} parent=5 // pred_check_branch
      %163 = sbr.rel (%p160) target = $region32
    $region31: #{upconv.3} parent=5 // pred_region
      %s164 = ssub.s32 %s9, 1
      %s165 = smul.u32 16, %s19
      %p166 = scmp.lt.s32.totalorder %s18, 1
      %s167 = scalar_select %p166, %s18, 1
      %p168 = scmp.lt.s32.totalorder %s165, 31
      %s169 = scalar_select %p168, %s165, 31
      %s170 = smul.addr %s169, 4
      %s171 = smul.addr %s167, 128
      %s172 = sadd.s32 %s170, %s171
      %s173 = smul.addr %s172, 8
      %s174 = scalar_lea.vmem %s0, %s173
      %p175 = pneg %p49
      %p176 = pneg %p46
      %p177 = pneg %p70
      %p178 = pneg %p67
      %p179 = pneg %p91
      %p180 = pneg %p88
      %p181 = pneg %p119
      %p182 = pneg %p116
      %s183 = smul.u32 16, %s19
      %p184 = scmp.lt.s32.totalorder %s18, 1
      %s185 = scalar_select %p184, %s18, 1
      %p186 = scmp.lt.s32.totalorder %s183, 31
      %s187 = scalar_select %p186, %s183, 31
      %s188 = smul.addr %s187, 4
      %s189 = smul.addr %s185, 128
      %s190 = sadd.s32 %s188, %s189
      %s191 = smul.addr %s190, 8
      %s192 = scalar_lea.vmem %s3, %s191
      %s193 = smul.u32 16, %s19
      %p194 = scmp.lt.s32.totalorder %s18, 1
      %s195 = scalar_select %p194, %s18, 1
      %p196 = scmp.lt.s32.totalorder %s193, 31
      %s197 = scalar_select %p196, %s193, 31
      %s198 = smul.addr %s197, 4
      %s199 = smul.addr %s195, 128
      %s200 = sadd.s32 %s198, %s199
      %s201 = smul.addr %s200, 8
      %s202 = scalar_lea.vmem %s0, %s201
      %s203 = smul.u32 16, %s19
      %s204 = smul.u32 16, %s19
      %p205 = scmp.lt.s32.totalorder %s18, 1
      %s206 = scalar_select %p205, %s18, 1
      %p207 = scmp.lt.s32.totalorder %s204, 31
      %s208 = scalar_select %p207, %s204, 31
      %s209 = smul.addr %s208, 4
      %s210 = smul.addr %s206, 128
      %s211 = sadd.s32 %s209, %s210
      %s212 = smul.addr %s211, 8
      %s213 = scalar_lea.vmem %s3, %s212
      %s214 = smul.u32 16, %s19
      %v215 = vld [vmem:[%s202] sm:$0xff]
      %v216 = vld [vmem:[%s202 + $0x8] sm:$0xff]
      %v217 = vld [vmem:[%s202 + $0x10] sm:$0xff]
      %v218 = vld [vmem:[%s202 + $0x18] sm:$0xff]
      %v219 = vld [vmem:[%s202 + $0x20] sm:$0xff]
      %v220 = vld [vmem:[%s202 + $0x28] sm:$0xff]
      %v221 = vld [vmem:[%s202 + $0x30] sm:$0xff]
      %v222 = vld [vmem:[%s202 + $0x38] sm:$0xff]
      %v223 = vld [vmem:[%s202 + $0x40] sm:$0xff]
      %v224 = vld [vmem:[%s202 + $0x48] sm:$0xff]
      %v225 = vld [vmem:[%s202 + $0x50] sm:$0xff]
      %v226 = vld [vmem:[%s202 + $0x58] sm:$0xff]
      %v227 = vld [vmem:[%s202 + $0x60] sm:$0xff]
      %v228 = vld [vmem:[%s202 + $0x68] sm:$0xff]
      %v229 = vld [vmem:[%s202 + $0x70] sm:$0xff]
      %v230 = vld [vmem:[%s202 + $0x78] sm:$0xff]
      %v231 = vld [vmem:[%s202 + $0x80] sm:$0xff]
      %v232 = vld [vmem:[%s202 + $0x88] sm:$0xff]
      %v233 = vld [vmem:[%s202 + $0x90] sm:$0xff]
      %v234 = vld [vmem:[%s202 + $0x98] sm:$0xff]
      %v235 = vld [vmem:[%s202 + $0xa0] sm:$0xff]
      %v236 = vld [vmem:[%s202 + $0xa8] sm:$0xff]
      %v237 = vld [vmem:[%s202 + $0xb0] sm:$0xff]
      %v238 = vld [vmem:[%s202 + $0xb8] sm:$0xff]
      %v239 = vld [vmem:[%s202 + $0xc0] sm:$0xff]
      %v240 = vld [vmem:[%s202 + $0xc8] sm:$0xff]
      %v241 = vld [vmem:[%s202 + $0xd0] sm:$0xff]
      %v242 = vld [vmem:[%s202 + $0xd8] sm:$0xff]
      %v243 = vld [vmem:[%s202 + $0xe0] sm:$0xff]
      %v244 = vld [vmem:[%s202 + $0xe8] sm:$0xff]
      %v245 = vld [vmem:[%s202 + $0xf0] sm:$0xff]
      %v246 = vld [vmem:[%s202 + $0xf8] sm:$0xff]
      %v247 = vld [vmem:[%s202 + $0x100] sm:$0xff]
      %v248 = vld [vmem:[%s202 + $0x108] sm:$0xff]
      %v249 = vld [vmem:[%s202 + $0x110] sm:$0xff]
      %v250 = vld [vmem:[%s202 + $0x118] sm:$0xff]
      %v251 = vld [vmem:[%s202 + $0x120] sm:$0xff]
      %v252 = vld [vmem:[%s202 + $0x128] sm:$0xff]
      %v253 = vld [vmem:[%s202 + $0x130] sm:$0xff]
      %v254 = vld [vmem:[%s202 + $0x138] sm:$0xff]
      %v255 = vld [vmem:[%s202 + $0x140] sm:$0xff]
      %v256 = vld [vmem:[%s202 + $0x148] sm:$0xff]
      %v257 = vld [vmem:[%s202 + $0x150] sm:$0xff]
      %v258 = vld [vmem:[%s202 + $0x158] sm:$0xff]
      %v259 = vld [vmem:[%s202 + $0x160] sm:$0xff]
      %v260 = vld [vmem:[%s202 + $0x168] sm:$0xff]
      %v261 = vld [vmem:[%s202 + $0x170] sm:$0xff]
      %v262 = vld [vmem:[%s202 + $0x178] sm:$0xff]
      %v263 = vld [vmem:[%s202 + $0x180] sm:$0xff]
      %v264 = vld [vmem:[%s202 + $0x188] sm:$0xff]
      %v265 = vld [vmem:[%s202 + $0x190] sm:$0xff]
      %v266 = vld [vmem:[%s202 + $0x198] sm:$0xff]
      %v267 = vld [vmem:[%s202 + $0x1a0] sm:$0xff]
      %v268 = vld [vmem:[%s202 + $0x1a8] sm:$0xff]
      %v269 = vld [vmem:[%s202 + $0x1b0] sm:$0xff]
      %v270 = vld [vmem:[%s202 + $0x1b8] sm:$0xff]
      %v271 = vld [vmem:[%s202 + $0x1c0] sm:$0xff]
      %v272 = vld [vmem:[%s202 + $0x1c8] sm:$0xff]
      %v273 = vld [vmem:[%s202 + $0x1d0] sm:$0xff]
      %v274 = vld [vmem:[%s202 + $0x1d8] sm:$0xff]
      %v275 = vld [vmem:[%s202 + $0x1e0] sm:$0xff]
      %v276 = vld [vmem:[%s202 + $0x1e8] sm:$0xff]
      %v277 = vld [vmem:[%s202 + $0x1f0] sm:$0xff]
      %v278 = vld [vmem:[%s202 + $0x1f8] sm:$0xff]
      %v279 = vld [vmem:[%s1] sm:$0x1]
      %v281 = vlaneseq
      %v282 = vshrl.u32 %v281, 7
      %v283 = vsub.s32 0, %v282
      %v284 = vrot.slane %v279, %v283
      %v286 = vmul.f32 %v215, %v284
      %v287 = vmul.f32 %v216, %v284
      %v288 = vmul.f32 %v217, %v284
      %v289 = vmul.f32 %v218, %v284
      %v290 = vmul.f32 %v219, %v284
      %v291 = vmul.f32 %v220, %v284
      %v292 = vmul.f32 %v221, %v284
      %v293 = vmul.f32 %v222, %v284
      %v294 = vmul.f32 %v223, %v284
      %v295 = vmul.f32 %v224, %v284
      %v296 = vmul.f32 %v225, %v284
      %v297 = vmul.f32 %v226, %v284
      %v298 = vmul.f32 %v227, %v284
      %v299 = vmul.f32 %v228, %v284
      %v300 = vmul.f32 %v229, %v284
      %v301 = vmul.f32 %v230, %v284
      %v302 = vmul.f32 %v231, %v284
      %v303 = vmul.f32 %v232, %v284
      %v304 = vmul.f32 %v233, %v284
      %v305 = vmul.f32 %v234, %v284
      %v306 = vmul.f32 %v235, %v284
      %v307 = vmul.f32 %v236, %v284
      %v308 = vmul.f32 %v237, %v284
      %v309 = vmul.f32 %v238, %v284
      %v310 = vmul.f32 %v239, %v284
      %v311 = vmul.f32 %v240, %v284
      %v312 = vmul.f32 %v241, %v284
      %v313 = vmul.f32 %v242, %v284
      %v314 = vmul.f32 %v243, %v284
      %v315 = vmul.f32 %v244, %v284
      %v316 = vmul.f32 %v245, %v284
      %v317 = vmul.f32 %v246, %v284
      %v318 = vmul.f32 %v247, %v284
      %v319 = vmul.f32 %v248, %v284
      %v320 = vmul.f32 %v249, %v284
      %v321 = vmul.f32 %v250, %v284
      %v322 = vmul.f32 %v251, %v284
      %v323 = vmul.f32 %v252, %v284
      %v324 = vmul.f32 %v253, %v284
      %v325 = vmul.f32 %v254, %v284
      %v326 = vmul.f32 %v255, %v284
      %v327 = vmul.f32 %v256, %v284
      %v328 = vmul.f32 %v257, %v284
      %v329 = vmul.f32 %v258, %v284
      %v330 = vmul.f32 %v259, %v284
      %v331 = vmul.f32 %v260, %v284
      %v332 = vmul.f32 %v261, %v284
      %v333 = vmul.f32 %v262, %v284
      %v334 = vmul.f32 %v263, %v284
      %v335 = vmul.f32 %v264, %v284
      %v336 = vmul.f32 %v265, %v284
      %v337 = vmul.f32 %v266, %v284
      %v338 = vmul.f32 %v267, %v284
      %v339 = vmul.f32 %v268, %v284
      %v340 = vmul.f32 %v269, %v284
      %v341 = vmul.f32 %v270, %v284
      %v342 = vmul.f32 %v271, %v284
      %v343 = vmul.f32 %v272, %v284
      %v344 = vmul.f32 %v273, %v284
      %v345 = vmul.f32 %v274, %v284
      %v346 = vmul.f32 %v275, %v284
      %v347 = vmul.f32 %v276, %v284
      %v348 = vmul.f32 %v277, %v284
      %v349 = vmul.f32 %v278, %v284
      %v350 = vld [vmem:[%s2] sm:$0x1]
      %v352 = vlaneseq
      %v353 = vshrl.u32 %v352, 7
      %v354 = vsub.s32 0, %v353
      %v355 = vrot.slane %v350, %v354
      %v357 = vadd.f32 %v286, %v355
      %v358 = vadd.f32 %v287, %v355
      %v359 = vadd.f32 %v288, %v355
      %v360 = vadd.f32 %v289, %v355
      %v361 = vadd.f32 %v290, %v355
      %v362 = vadd.f32 %v291, %v355
      %v363 = vadd.f32 %v292, %v355
      %v364 = vadd.f32 %v293, %v355
      %v365 = vadd.f32 %v294, %v355
      %v366 = vadd.f32 %v295, %v355
      %v367 = vadd.f32 %v296, %v355
      %v368 = vadd.f32 %v297, %v355
      %v369 = vadd.f32 %v298, %v355
      %v370 = vadd.f32 %v299, %v355
      %v371 = vadd.f32 %v300, %v355
      %v372 = vadd.f32 %v301, %v355
      %v373 = vadd.f32 %v302, %v355
      %v374 = vadd.f32 %v303, %v355
      %v375 = vadd.f32 %v304, %v355
      %v376 = vadd.f32 %v305, %v355
      %v377 = vadd.f32 %v306, %v355
      %v378 = vadd.f32 %v307, %v355
      %v379 = vadd.f32 %v308, %v355
      %v380 = vadd.f32 %v309, %v355
      %v381 = vadd.f32 %v310, %v355
      %v382 = vadd.f32 %v311, %v355
      %v383 = vadd.f32 %v312, %v355
      %v384 = vadd.f32 %v313, %v355
      %v385 = vadd.f32 %v314, %v355
      %v386 = vadd.f32 %v315, %v355
      %v387 = vadd.f32 %v316, %v355
      %v388 = vadd.f32 %v317, %v355
      %v389 = vadd.f32 %v318, %v355
      %v390 = vadd.f32 %v319, %v355
      %v391 = vadd.f32 %v320, %v355
      %v392 = vadd.f32 %v321, %v355
      %v393 = vadd.f32 %v322, %v355
      %v394 = vadd.f32 %v323, %v355
      %v395 = vadd.f32 %v324, %v355
      %v396 = vadd.f32 %v325, %v355
      %v397 = vadd.f32 %v326, %v355
      %v398 = vadd.f32 %v327, %v355
      %v399 = vadd.f32 %v328, %v355
      %v400 = vadd.f32 %v329, %v355
      %v401 = vadd.f32 %v330, %v355
      %v402 = vadd.f32 %v331, %v355
      %v403 = vadd.f32 %v332, %v355
      %v404 = vadd.f32 %v333, %v355
      %v405 = vadd.f32 %v334, %v355
      %v406 = vadd.f32 %v335, %v355
      %v407 = vadd.f32 %v336, %v355
      %v408 = vadd.f32 %v337, %v355
      %v409 = vadd.f32 %v338, %v355
      %v410 = vadd.f32 %v339, %v355
      %v411 = vadd.f32 %v340, %v355
      %v412 = vadd.f32 %v341, %v355
      %v413 = vadd.f32 %v342, %v355
      %v414 = vadd.f32 %v343, %v355
      %v415 = vadd.f32 %v344, %v355
      %v416 = vadd.f32 %v345, %v355
      %v417 = vadd.f32 %v346, %v355
      %v418 = vadd.f32 %v347, %v355
      %v419 = vadd.f32 %v348, %v355
      %v420 = vadd.f32 %v349, %v355
      %v421 = vmax.f32 %v357, 0.0
      %v422 = vmax.f32 %v358, 0.0
      %v423 = vmax.f32 %v359, 0.0
      %v424 = vmax.f32 %v360, 0.0
      %v425 = vmax.f32 %v361, 0.0
      %v426 = vmax.f32 %v362, 0.0
      %v427 = vmax.f32 %v363, 0.0
      %v428 = vmax.f32 %v364, 0.0
      %v429 = vmax.f32 %v365, 0.0
      %v430 = vmax.f32 %v366, 0.0
      %v431 = vmax.f32 %v367, 0.0
      %v432 = vmax.f32 %v368, 0.0
      %v433 = vmax.f32 %v369, 0.0
      %v434 = vmax.f32 %v370, 0.0
      %v435 = vmax.f32 %v371, 0.0
      %v436 = vmax.f32 %v372, 0.0
      %v437 = vmax.f32 %v373, 0.0
      %v438 = vmax.f32 %v374, 0.0
      %v439 = vmax.f32 %v375, 0.0
      %v440 = vmax.f32 %v376, 0.0
      %v441 = vmax.f32 %v377, 0.0
      %v442 = vmax.f32 %v378, 0.0
      %v443 = vmax.f32 %v379, 0.0
      %v444 = vmax.f32 %v380, 0.0
      %v445 = vmax.f32 %v381, 0.0
      %v446 = vmax.f32 %v382, 0.0
      %v447 = vmax.f32 %v383, 0.0
      %v448 = vmax.f32 %v384, 0.0
      %v449 = vmax.f32 %v385, 0.0
      %v450 = vmax.f32 %v386, 0.0
      %v451 = vmax.f32 %v387, 0.0
      %v452 = vmax.f32 %v388, 0.0
      %v453 = vmax.f32 %v389, 0.0
      %v454 = vmax.f32 %v390, 0.0
      %v455 = vmax.f32 %v391, 0.0
      %v456 = vmax.f32 %v392, 0.0
      %v457 = vmax.f32 %v393, 0.0
      %v458 = vmax.f32 %v394, 0.0
      %v459 = vmax.f32 %v395, 0.0
      %v460 = vmax.f32 %v396, 0.0
      %v461 = vmax.f32 %v397, 0.0
      %v462 = vmax.f32 %v398, 0.0
      %v463 = vmax.f32 %v399, 0.0
      %v464 = vmax.f32 %v400, 0.0
      %v465 = vmax.f32 %v401, 0.0
      %v466 = vmax.f32 %v402, 0.0
      %v467 = vmax.f32 %v403, 0.0
      %v468 = vmax.f32 %v404, 0.0
      %v469 = vmax.f32 %v405, 0.0
      %v470 = vmax.f32 %v406, 0.0
      %v471 = vmax.f32 %v407, 0.0
      %v472 = vmax.f32 %v408, 0.0
      %v473 = vmax.f32 %v409, 0.0
      %v474 = vmax.f32 %v410, 0.0
      %v475 = vmax.f32 %v411, 0.0
      %v476 = vmax.f32 %v412, 0.0
      %v477 = vmax.f32 %v413, 0.0
      %v478 = vmax.f32 %v414, 0.0
      %v479 = vmax.f32 %v415, 0.0
      %v480 = vmax.f32 %v416, 0.0
      %v481 = vmax.f32 %v417, 0.0
      %v482 = vmax.f32 %v418, 0.0
      %v483 = vmax.f32 %v419, 0.0
      %v484 = vmax.f32 %v420, 0.0
      %485 = vst [vmem:[%s213] sm:$0xff] %v421
      %486 = vst [vmem:[%s213 + $0x8] sm:$0xff] %v422
      %487 = vst [vmem:[%s213 + $0x10] sm:$0xff] %v423
      %488 = vst [vmem:[%s213 + $0x18] sm:$0xff] %v424
      %489 = vst [vmem:[%s213 + $0x20] sm:$0xff] %v425
      %490 = vst [vmem:[%s213 + $0x28] sm:$0xff] %v426
      %491 = vst [vmem:[%s213 + $0x30] sm:$0xff] %v427
      %492 = vst [vmem:[%s213 + $0x38] sm:$0xff] %v428
      %493 = vst [vmem:[%s213 + $0x40] sm:$0xff] %v429
      %494 = vst [vmem:[%s213 + $0x48] sm:$0xff] %v430
      %495 = vst [vmem:[%s213 + $0x50] sm:$0xff] %v431
      %496 = vst [vmem:[%s213 + $0x58] sm:$0xff] %v432
      %497 = vst [vmem:[%s213 + $0x60] sm:$0xff] %v433
      %498 = vst [vmem:[%s213 + $0x68] sm:$0xff] %v434
      %499 = vst [vmem:[%s213 + $0x70] sm:$0xff] %v435
      %500 = vst [vmem:[%s213 + $0x78] sm:$0xff] %v436
      %501 = vst [vmem:[%s213 + $0x80] sm:$0xff] %v437
      %502 = vst [vmem:[%s213 + $0x88] sm:$0xff] %v438
      %503 = vst [vmem:[%s213 + $0x90] sm:$0xff] %v439
      %504 = vst [vmem:[%s213 + $0x98] sm:$0xff] %v440
      %505 = vst [vmem:[%s213 + $0xa0] sm:$0xff] %v441
      %506 = vst [vmem:[%s213 + $0xa8] sm:$0xff] %v442
      %507 = vst [vmem:[%s213 + $0xb0] sm:$0xff] %v443
      %508 = vst [vmem:[%s213 + $0xb8] sm:$0xff] %v444
      %509 = vst [vmem:[%s213 + $0xc0] sm:$0xff] %v445
      %510 = vst [vmem:[%s213 + $0xc8] sm:$0xff] %v446
      %511 = vst [vmem:[%s213 + $0xd0] sm:$0xff] %v447
      %512 = vst [vmem:[%s213 + $0xd8] sm:$0xff] %v448
      %513 = vst [vmem:[%s213 + $0xe0] sm:$0xff] %v449
      %514 = vst [vmem:[%s213 + $0xe8] sm:$0xff] %v450
      %515 = vst [vmem:[%s213 + $0xf0] sm:$0xff] %v451
      %516 = vst [vmem:[%s213 + $0xf8] sm:$0xff] %v452
      %517 = vst [vmem:[%s213 + $0x100] sm:$0xff] %v453
      %518 = vst [vmem:[%s213 + $0x108] sm:$0xff] %v454
      %519 = vst [vmem:[%s213 + $0x110] sm:$0xff] %v455
      %520 = vst [vmem:[%s213 + $0x118] sm:$0xff] %v456
      %521 = vst [vmem:[%s213 + $0x120] sm:$0xff] %v457
      %522 = vst [vmem:[%s213 + $0x128] sm:$0xff] %v458
      %523 = vst [vmem:[%s213 + $0x130] sm:$0xff] %v459
      %524 = vst [vmem:[%s213 + $0x138] sm:$0xff] %v460
      %525 = vst [vmem:[%s213 + $0x140] sm:$0xff] %v461
      %526 = vst [vmem:[%s213 + $0x148] sm:$0xff] %v462
      %527 = vst [vmem:[%s213 + $0x150] sm:$0xff] %v463
      %528 = vst [vmem:[%s213 + $0x158] sm:$0xff] %v464
      %529 = vst [vmem:[%s213 + $0x160] sm:$0xff] %v465
      %530 = vst [vmem:[%s213 + $0x168] sm:$0xff] %v466
      %531 = vst [vmem:[%s213 + $0x170] sm:$0xff] %v467
      %532 = vst [vmem:[%s213 + $0x178] sm:$0xff] %v468
      %533 = vst [vmem:[%s213 + $0x180] sm:$0xff] %v469
      %534 = vst [vmem:[%s213 + $0x188] sm:$0xff] %v470
      %535 = vst [vmem:[%s213 + $0x190] sm:$0xff] %v471
      %536 = vst [vmem:[%s213 + $0x198] sm:$0xff] %v472
      %537 = vst [vmem:[%s213 + $0x1a0] sm:$0xff] %v473
      %538 = vst [vmem:[%s213 + $0x1a8] sm:$0xff] %v474
      %539 = vst [vmem:[%s213 + $0x1b0] sm:$0xff] %v475
      %540 = vst [vmem:[%s213 + $0x1b8] sm:$0xff] %v476
      %541 = vst [vmem:[%s213 + $0x1c0] sm:$0xff] %v477
      %542 = vst [vmem:[%s213 + $0x1c8] sm:$0xff] %v478
      %543 = vst [vmem:[%s213 + $0x1d0] sm:$0xff] %v479
      %544 = vst [vmem:[%s213 + $0x1d8] sm:$0xff] %v480
      %545 = vst [vmem:[%s213 + $0x1e0] sm:$0xff] %v481
      %546 = vst [vmem:[%s213 + $0x1e8] sm:$0xff] %v482
      %547 = vst [vmem:[%s213 + $0x1f0] sm:$0xff] %v483
      %548 = vst [vmem:[%s213 + $0x1f8] sm:$0xff] %v484
      %s549 = smul.u32 16, %s19
      %p550 = scmp.lt.s32.totalorder %s18, 1
      %s551 = scalar_select %p550, %s18, 1
      %p552 = scmp.lt.s32.totalorder %s549, 31
      %s553 = scalar_select %p552, %s549, 31
      %s554 = smul.addr %s553, 4
      %s555 = smul.addr %s551, 128
      %s556 = sadd.s32 %s554, %s555
      %s557 = smul.addr %s556, 8
      %s558 = scalar_lea.vmem %s3, %s557
      // Predicated region
      $region33: #{upconv.3} parent=31 // pred_check
        %p559 = pneg %p116
      $region34: #{upconv.3} parent=31 // pred_check_branch
        %561 = sbr.rel (%p559) target = $region36
      $region35: #{upconv.3} parent=31 // pred_region
        %s562 = smul.u32 16, %s19
      $region36: #{upconv.3} parent=31 // pred_fallthru
        _
    $region32: #{upconv.3} parent=5 // pred_fallthru
      _
    %p563 = scmp.le.s32.totalorder 2, %s9
    // Predicated region
    $region37: #{upconv.3} parent=5 // pred_check
      %p564 = pneg %p563
    $region38: #{upconv.3} parent=5 // pred_check_branch
      %566 = sbr.rel (%p564) target = $region40
    $region39: #{upconv.3} parent=5 // pred_region
      %s567 = ssub.s32 %s9, 2
      // Predicated region
      $region41: #{upconv.3} parent=39 // pred_check
        %p568 = pneg %p122
      $region42: #{upconv.3} parent=39 // pred_check_branch
        %570 = sbr.rel (%p568) target = $region44
      $region43: #{upconv.3} parent=39 // pred_region
        %s571 = smul.u32 16, %s21
        %p572 = scmp.lt.s32.totalorder %s20, 1
        %s573 = scalar_select %p572, %s20, 1
        %p574 = scmp.lt.s32.totalorder %s571, 31
        %s575 = scalar_select %p574, %s571, 31
        %s576 = smul.addr %s575, 4
        %s577 = smul.addr %s573, 128
        %s578 = sadd.s32 %s576, %s577
        %s579 = smul.addr %s578, 8
        %s580 = scalar_lea.vmem %s3, %s579
      $region44: #{upconv.3} parent=39 // pred_fallthru
        _
    $region40: #{upconv.3} parent=5 // pred_fallthru
      _
  $region6: #{upconv.3} parent=0 // loop_footer
    %s13 = sadd.s32 1, %s9
  $region7: #{upconv.3} parent=0 // loop_footer_branch
    %8 = sbr.rel target = $region3
  $region8: #{upconv.3} parent=0 // loop_exit
    _

// kernel: upconv.2
$region0: #{upconv.2}
  #allocation0 [shape = 'u32[]', space=smem, size = 0x4, offset = 0x4, fixed_abs, tag = 'smem constant byte address 0x4 - core index']
  #allocation1 [shape = 'u32[144,128]{1,0:T(1,128)}', space=vmem, size = 0x12000, scoped, tag = 'internal scratch']
  #allocation2 [shape = 'bf16[18,34,4]{2,1,0:T(8,128)(2,1)}', space=vmem, size = 0x2d000, scoped, tag = 'scratch operand']
  %s0 = inlined_call_operand.vmem [shape: bf16[2,18,18,4], index: 0, kind: input, shape index: {}]
  %s1 = inlined_call_operand.vmem [shape: bf16[36,128], index: 1, kind: input, shape index: {}]
  %s2 = inlined_call_operand.vmem [shape: f32[1,128], index: 2, kind: input, shape index: {}]
  %s3 = inlined_call_operand.vmem [shape: f32[2,32,32,128], index: 3, kind: output, shape index: {0}]
  %s4 = inlined_call_operand.vmem [shape: f32[2,2,8,128], index: 4, kind: output, shape index: {1}]
  %5 = xla_tuple %s3, %s4
  %s6 = sld [smem:[#allocation0]]
  $region53: #{upconv.2} parent=0
    _
  %s8 = ssub.s32 1, %s6
  %s9 = scalar_select 0, %s8, %s6
  loop: start=0, step=1, limit=6
  $region2: #{upconv.2} parent=0 // loop_pre_header
    _
  $region3: #{upconv.2} parent=0 // loop_header
    %s11 = sphi 0, %s15
    %p12 = scmp.ge.s32.totalorder %s11, 6
    %s18 = sphi 0, %s30
    %s19 = sphi 0, %s26
    %s20 = sphi 0, %s18
    %s21 = sphi 0, %s19
    %s22 = sphi 0, %s20
    %s23 = sphi 0, %s21
    %s33 = sphi 0, %s35
    %s36 = sphi 0, %s33
    %s37 = sphi 0, %s36
    %s53 = sphi 0, %s37
    %s57 = sphi 0, %s57
    %s59 = sphi 0, %s57
    %s60 = sphi 0, %s59
    %s74 = sphi 0, %s60
    %s78 = sphi 0, %s78
    %s80 = sphi 0, %s78
    %s81 = sphi 0, %s80
    %s95 = sphi 0, %s81
    %s103 = sphi 0, %s105
    %s106 = sphi 0, %s103
    %s107 = sphi 0, %s106
    %s123 = sphi 0, %s107
    %s131 = sphi 0, %s133
    %s134 = sphi 0, %s131
    %s135 = sphi 0, %s134
    %s151 = sphi 0, %s135
  $region4: #{upconv.2} parent=0 // loop_header_branch
    %14 = sbr.rel (%p12) target = $region8
  $region5: #{upconv.2} parent=0 // loop_body
    %s16 = ssub.s32 %s11, 1
    %s17 = ssub.s32 %s11, 2
    %s24 = sadd.s32 1, %s19
    %p25 = scmp.ge.s32.totalorder %s24, 2
    %s26 = scalar_select %p25, 0, %s24
    %s27 = sadd.s32 1, %s18
    %s28 = scalar_select %p25, %s27, %s18
    %p29 = scmp.ge.s32.totalorder %s28, 2
    %s30 = scalar_select %p29, 0, %s28
    %s31 = ssub.s32 %s18, %s30
    %p32 = scmp.eq.s32.totalorder %s31, 0
    %s34 = sadd.s32 %s33, 1
    %s35 = scalar_select %p32, %s33, %s34
    %p38 = pneg %p32
    %p39 = scmp.eq.s32.totalorder %s11, 3
    %p40 = por %p38, %p39
    %p41 = scmp.ne.s32.totalorder %s33, %s36
    %p42 = scmp.eq.s32.totalorder %s11, 0
    %p43 = por %p41, %p42
    %p44 = scmp.ne.s32.totalorder %s33, %s36
    %p45 = scmp.eq.s32.totalorder %s16, 3
    %p46 = por %p44, %p45
    %p47 = scmp.ne.s32.totalorder %s36, %s37
    %p48 = scmp.eq.s32.totalorder %s16, 0
    %p49 = por %p47, %p48
    %p50 = scmp.ne.s32.totalorder %s36, %s37
    %p51 = scmp.eq.s32.totalorder %s17, 3
    %p52 = por %p50, %p51
    %p54 = scmp.ne.s32.totalorder %s37, %s53
    %p55 = scmp.eq.s32.totalorder %s17, 0
    %p56 = por %p54, %p55
    %s58 = sadd.s32 %s57, 1
    %p61 = scmp.eq.s32.totalorder %s11, 3
    %p62 = scmp.ne.s32.totalorder %s57, %s59
    %p63 = scmp.eq.s32.totalorder %s11, 0
    %p64 = por %p62, %p63
    %p65 = scmp.ne.s32.totalorder %s57, %s59
    %p66 = scmp.eq.s32.totalorder %s16, 3
    %p67 = por %p65, %p66
    %p68 = scmp.ne.s32.totalorder %s59, %s60
    %p69 = scmp.eq.s32.totalorder %s16, 0
    %p70 = por %p68, %p69
    %p71 = scmp.ne.s32.totalorder %s59, %s60
    %p72 = scmp.eq.s32.totalorder %s17, 3
    %p73 = por %p71, %p72
    %p75 = scmp.ne.s32.totalorder %s60, %s74
    %p76 = scmp.eq.s32.totalorder %s17, 0
    %p77 = por %p75, %p76
    %s79 = sadd.s32 %s78, 1
    %p82 = scmp.eq.s32.totalorder %s11, 3
    %p83 = scmp.ne.s32.totalorder %s78, %s80
    %p84 = scmp.eq.s32.totalorder %s11, 0
    %p85 = por %p83, %p84
    %p86 = scmp.ne.s32.totalorder %s78, %s80
    %p87 = scmp.eq.s32.totalorder %s16, 3
    %p88 = por %p86, %p87
    %p89 = scmp.ne.s32.totalorder %s80, %s81
    %p90 = scmp.eq.s32.totalorder %s16, 0
    %p91 = por %p89, %p90
    %p92 = scmp.ne.s32.totalorder %s80, %s81
    %p93 = scmp.eq.s32.totalorder %s17, 3
    %p94 = por %p92, %p93
    %p96 = scmp.ne.s32.totalorder %s81, %s95
    %p97 = scmp.eq.s32.totalorder %s17, 0
    %p98 = por %p96, %p97
    %s99 = ssub.s32 %s18, %s30
    %s100 = ssub.s32 %s19, %s26
    %s101 = sor.u32 %s99, %s100
    %p102 = scmp.eq.s32.totalorder %s101, 0
    %s104 = sadd.s32 %s103, 1
    %s105 = scalar_select %p102, %s103, %s104
    %p108 = pneg %p102
    %p109 = scmp.eq.s32.totalorder %s11, 3
    %p110 = por %p108, %p109
    %p111 = scmp.ne.s32.totalorder %s103, %s106
    %p112 = scmp.eq.s32.totalorder %s11, 0
    %p113 = por %p111, %p112
    %p114 = scmp.ne.s32.totalorder %s103, %s106
    %p115 = scmp.eq.s32.totalorder %s16, 3
    %p116 = por %p114, %p115
    %p117 = scmp.ne.s32.totalorder %s106, %s107
    %p118 = scmp.eq.s32.totalorder %s16, 0
    %p119 = por %p117, %p118
    %p120 = scmp.ne.s32.totalorder %s106, %s107
    %p121 = scmp.eq.s32.totalorder %s17, 3
    %p122 = por %p120, %p121
    %p124 = scmp.ne.s32.totalorder %s107, %s123
    %p125 = scmp.eq.s32.totalorder %s17, 0
    %p126 = por %p124, %p125
    %s127 = ssub.s32 %s18, %s30
    %s128 = ssub.s32 %s19, %s26
    %s129 = sor.u32 %s127, %s128
    %p130 = scmp.eq.s32.totalorder %s129, 0
    %s132 = sadd.s32 %s131, 1
    %s133 = scalar_select %p130, %s131, %s132
    %p136 = pneg %p130
    %p137 = scmp.eq.s32.totalorder %s11, 3
    %p138 = por %p136, %p137
    %p139 = scmp.ne.s32.totalorder %s131, %s134
    %p140 = scmp.eq.s32.totalorder %s11, 0
    %p141 = por %p139, %p140
    %p142 = scmp.ne.s32.totalorder %s131, %s134
    %p143 = scmp.eq.s32.totalorder %s16, 3
    %p144 = por %p142, %p143
    %p145 = scmp.ne.s32.totalorder %s134, %s135
    %p146 = scmp.eq.s32.totalorder %s16, 0
    %p147 = por %p145, %p146
    %p148 = scmp.ne.s32.totalorder %s134, %s135
    %p149 = scmp.eq.s32.totalorder %s17, 3
    %p150 = por %p148, %p149
    %p152 = scmp.ne.s32.totalorder %s135, %s151
    %p153 = scmp.eq.s32.totalorder %s17, 0
    %p154 = por %p152, %p153
    %p155 = scmp.le.s32.totalorder 1, %s11
    %p156 = scmp.lt.s32.totalorder %s11, 5
    %p157 = pnand %p155, %p156
    %p158 = pneg %p157
    // Predicated region
    $region9: #{upconv.2} parent=5 // pred_check
      _
    $region10: #{upconv.2} parent=5 // pred_check_branch
      %160 = sbr.rel (%p157) target = $region12
    $region11: #{upconv.2} parent=5 // pred_region
      %s161 = ssub.s32 %s11, 1
      // Predicated region
      $region13: #{upconv.2} parent=11 // pred_check
        %p162 = pneg %p70
      $region14: #{upconv.2} parent=11 // pred_check_branch
        %164 = sbr.rel (%p162) target = $region16
      $region15: #{upconv.2} parent=11 // pred_region
        _
      $region16: #{upconv.2} parent=11 // pred_fallthru
        _
      // Predicated region
      $region17: #{upconv.2} parent=11 // pred_check
        %p165 = pneg %p91
      $region18: #{upconv.2} parent=11 // pred_check_branch
        %167 = sbr.rel (%p165) target = $region20
      $region19: #{upconv.2} parent=11 // pred_region
        _
      $region20: #{upconv.2} parent=11 // pred_fallthru
        _
    $region12: #{upconv.2} parent=5 // pred_fallthru
      _
    %p168 = scmp.lt.s32.totalorder %s11, 4
    // Predicated region
    $region21: #{upconv.2} parent=5 // pred_check
      %p169 = pneg %p168
    $region22: #{upconv.2} parent=5 // pred_check_branch
      %171 = sbr.rel (%p169) target = $region24
    $region23: #{upconv.2} parent=5 // pred_region
      // Predicated region
      $region25: #{upconv.2} parent=23 // pred_check
        %p172 = pneg %p43
      $region26: #{upconv.2} parent=23 // pred_check_branch
        %174 = sbr.rel (%p172) target = $region28
      $region27: #{upconv.2} parent=23 // pred_region
        %p175 = scmp.lt.s32.totalorder %s18, 1
        %s176 = scalar_select %p175, %s18, 1
        %s177 = smul.addr %s176, 54
        %s178 = smul.addr %s177, 4
        %s179 = scalar_lea.vmem %s0, %s178
      $region28: #{upconv.2} parent=23 // pred_fallthru
        _
    $region24: #{upconv.2} parent=5 // pred_fallthru
      _
    %p180 = scmp.le.s32.totalorder 1, %s11
    %p181 = scmp.lt.s32.totalorder %s11, 5
    %p182 = pnand %p180, %p181
    %p183 = pneg %p182
    // Predicated region
    $region29: #{upconv.2} parent=5 // pred_check
      _
    $region30: #{upconv.2} parent=5 // pred_check_branch
      %185 = sbr.rel (%p182) target = $region32
    $region31: #{upconv.2} parent=5 // pred_region
      %s186 = ssub.s32 %s11, 1
      %p187 = scmp.lt.s32.totalorder %s20, 1
      %s188 = scalar_select %p187, %s20, 1
      %s189 = smul.addr %s188, 54
      %s190 = smul.addr %s189, 4
      %s191 = scalar_lea.vmem %s0, %s190
      %p192 = pneg %p49
      %p193 = pneg %p46
      %p194 = pneg %p70
      %p195 = pneg %p67
      %p196 = pneg %p91
      %p197 = pneg %p88
      %p198 = pneg %p119
      %p199 = pneg %p116
      %s200 = smul.u32 16, %s21
      %p201 = scmp.lt.s32.totalorder %s20, 1
      %s202 = scalar_select %p201, %s20, 1
      %p203 = scmp.lt.s32.totalorder %s200, 31
      %s204 = scalar_select %p203, %s200, 31
      %s205 = smul.addr %s204, 4
      %s206 = smul.addr %s202, 128
      %s207 = sadd.s32 %s205, %s206
      %s208 = smul.addr %s207, 8
      %s209 = scalar_lea.vmem %s3, %s208
      %p210 = pneg %p147
      %p211 = pneg %p144
      %p212 = scmp.lt.s32.totalorder %s20, 1
      %s213 = scalar_select %p212, %s20, 1
      %p214 = scmp.lt.s32.totalorder %s21, 1
      %s215 = scalar_select %p214, %s21, 1
      %s216 = smul.addr %s213, 2
      %s217 = sadd.s32 %s215, %s216
      %s218 = smul.addr %s217, 8
      %s219 = scalar_lea.vmem %s4, %s218
      %p220 = scmp.lt.s32.totalorder %s20, 1
      %s221 = scalar_select %p220, %s20, 1
      %s222 = smul.addr %s221, 54
      %s223 = smul.addr %s222, 4
      %s224 = scalar_lea.vmem %s0, %s223
      %s225 = smul.u32 16, %s21
      %p226 = scmp.lt.s32.totalorder %s20, 1
      %s227 = scalar_select %p226, %s20, 1
      %p228 = scmp.lt.s32.totalorder %s225, 31
      %s229 = scalar_select %p228, %s225, 31
      %s230 = smul.addr %s229, 4
      %s231 = smul.addr %s227, 128
      %s232 = sadd.s32 %s230, %s231
      %s233 = smul.addr %s232, 8
      %s234 = scalar_lea.vmem %s3, %s233
      %s235 = smul.u32 16, %s21
      %p236 = scmp.lt.s32.totalorder %s20, 1
      %s237 = scalar_select %p236, %s20, 1
      %p238 = scmp.lt.s32.totalorder %s21, 1
      %s239 = scalar_select %p238, %s21, 1
      %s240 = smul.addr %s237, 2
      %s241 = sadd.s32 %s239, %s240
      %s242 = smul.addr %s241, 8
      %s243 = scalar_lea.vmem %s4, %s242
      %s245 = smul.u32 %s21, 8
      %s246 = smul.u32 %s245, 3
      %s247 = smul.addr %s246, 4
      %s248 = scalar_lea.vmem %s224, %s247
      %v249 = vld [vmem:[%s248] sm:$0xf]
      %v250 = vld [vmem:[%s248 + $0x4] sm:$0xf]
      %v251 = vld [vmem:[%s248 + $0x8] sm:$0x1]
      %v252 = vld [vmem:[%s248 + $0xc] sm:$0xf]
      %v253 = vld [vmem:[%s248 + $0x10] sm:$0xf]
      %v254 = vld [vmem:[%s248 + $0x14] sm:$0x1]
      %v255 = vld [vmem:[%s248 + $0x18] sm:$0xf]
      %v256 = vld [vmem:[%s248 + $0x1c] sm:$0xf]
      %v257 = vld [vmem:[%s248 + $0x20] sm:$0x1]
      %v258 = vld [vmem:[%s248 + $0x24] sm:$0xf]
      %v259 = vld [vmem:[%s248 + $0x28] sm:$0xf]
      %v260 = vld [vmem:[%s248 + $0x2c] sm:$0x1]
      %v261 = vld [vmem:[%s248 + $0x30] sm:$0xf]
      %v262 = vld [vmem:[%s248 + $0x34] sm:$0xf]
      %v263 = vld [vmem:[%s248 + $0x38] sm:$0x1]
      %v264 = vld [vmem:[%s248 + $0x3c] sm:$0xf]
      %v265 = vld [vmem:[%s248 + $0x40] sm:$0xf]
      %v266 = vld [vmem:[%s248 + $0x44] sm:$0x1]
      %v267 = vld [vmem:[%s248 + $0x48] sm:$0xf]
      %v268 = vld [vmem:[%s248 + $0x4c] sm:$0xf]
      %v269 = vld [vmem:[%s248 + $0x50] sm:$0x1]
      %v270 = vld [vmem:[%s248 + $0x54] sm:$0xf]
      %v271 = vld [vmem:[%s248 + $0x58] sm:$0xf]
      %v272 = vld [vmem:[%s248 + $0x5c] sm:$0x1]
      %v273 = vld [vmem:[%s248 + $0x60] sm:$0xf]
      %v274 = vld [vmem:[%s248 + $0x64] sm:$0xf]
      %v275 = vld [vmem:[%s248 + $0x68] sm:$0x1]
      %v276 = vld [vmem:[%s248 + $0x6c] sm:$0xf]
      %v277 = vld [vmem:[%s248 + $0x70] sm:$0xf]
      %v278 = vld [vmem:[%s248 + $0x74] sm:$0x1]
      %v310 = vunpack.c.l.s4 1966171168
      %v311 = vunpack.c.0.s8 %v310
      %v312 = vlaneseq
      %v313 = vshrl.u32 %v312, 7
      %v314 = vsub.s32 %v311, %v313
      %v315 = vrot.slane %v249, %v314
      %v316 = vcombine.high %v315, %v315
      %v318 = vunpack.c.l.s4 1966171168
      %v319 = vunpack.c.0.s8 %v318
      %v320 = vlaneseq
      %v321 = vshrl.u32 %v320, 7
      %v322 = vsub.s32 %v319, %v321
      %v323 = vrot.slane %v315, %v322
      %v325 = vunpack.c.l.s4 1966171168
      %v326 = vunpack.c.0.s8 %v325
      %v327 = vlaneseq
      %v328 = vshrl.u32 %v327, 7
      %v329 = vsub.s32 %v326, %v328
      %v330 = vrot.slane %v316, %v329
      %v331 = vcombine.high %v323, %v323
      %v332 = vcombine.high %v330, %v330
      %v334 = vunpack.c.l.s4 1966171168
      %v335 = vunpack.c.0.s8 %v334
      %v336 = vlaneseq
      %v337 = vshrl.u32 %v336, 7
      %v338 = vsub.s32 %v335, %v337
      %v339 = vrot.slane %v250, %v338
      %v340 = vcombine.high %v339, %v339
      %v342 = vunpack.c.l.s4 1966171168
      %v343 = vunpack.c.0.s8 %v342
      %v344 = vlaneseq
      %v345 = vshrl.u32 %v344, 7
      %v346 = vsub.s32 %v343, %v345
      %v347 = vrot.slane %v339, %v346
      %v349 = vunpack.c.l.s4 1966171168
      %v350 = vunpack.c.0.s8 %v349
      %v351 = vlaneseq
      %v352 = vshrl.u32 %v351, 7
      %v353 = vsub.s32 %v350, %v352
      %v354 = vrot.slane %v340, %v353
      %v355 = vcombine.high %v347, %v347
      %v356 = vcombine.high %v354, %v354
      %v358 = vunpack.c.l.s4 1966171168
      %v359 = vunpack.c.0.s8 %v358
      %v360 = vlaneseq
      %v361 = vshrl.u32 %v360, 7
      %v362 = vsub.s32 %v359, %v361
      %v363 = vrot.slane %v251, %v362
      %v365 = vunpack.c.l.s4 1966171168
      %v366 = vunpack.c.0.s8 %v365
      %v367 = vlaneseq
      %v368 = vshrl.u32 %v367, 7
      %v369 = vsub.s32 %v366, %v368
      %v370 = vrot.slane %v363, %v369
      %v372 = vunpack.c.l.s4 1966171168
      %v373 = vunpack.c.0.s8 %v372
      %v374 = vlaneseq
      %v375 = vshrl.u32 %v374, 7
      %v376 = vsub.s32 %v373, %v375
      %v377 = vrot.slane %v252, %v376
      %v378 = vcombine.high %v377, %v377
      %v380 = vunpack.c.l.s4 1966171168
      %v381 = vunpack.c.0.s8 %v380
      %v382 = vlaneseq
      %v383 = vshrl.u32 %v382, 7
      %v384 = vsub.s32 %v381, %v383
      %v385 = vrot.slane %v377, %v384
      %v387 = vunpack.c.l.s4 1966171168
      %v388 = vunpack.c.0.s8 %v387
      %v389 = vlaneseq
      %v390 = vshrl.u32 %v389, 7
      %v391 = vsub.s32 %v388, %v390
      %v392 = vrot.slane %v378, %v391
      %v393 = vcombine.high %v385, %v385
      %v394 = vcombine.high %v392, %v392
      %v396 = vunpack.c.l.s4 1966171168
      %v397 = vunpack.c.0.s8 %v396
      %v398 = vlaneseq
      %v399 = vshrl.u32 %v398, 7
      %v400 = vsub.s32 %v397, %v399
      %v401 = vrot.slane %v253, %v400
      %v402 = vcombine.high %v401, %v401
      %v404 = vunpack.c.l.s4 1966171168
      %v405 = vunpack.c.0.s8 %v404
      %v406 = vlaneseq
      %v407 = vshrl.u32 %v406, 7
      %v408 = vsub.s32 %v405, %v407
      %v409 = vrot.slane %v401, %v408
      %v411 = vunpack.c.l.s4 1966171168
      %v412 = vunpack.c.0.s8 %v411
      %v413 = vlaneseq
      %v414 = vshrl.u32 %v413, 7
      %v415 = vsub.s32 %v412, %v414
      %v416 = vrot.slane %v402, %v415
      %v417 = vcombine.high %v409, %v409
      %v418 = vcombine.high %v416, %v416
      %v420 = vunpack.c.l.s4 1966171168
      %v421 = vunpack.c.0.s8 %v420
      %v422 = vlaneseq
      %v423 = vshrl.u32 %v422, 7
      %v424 = vsub.s32 %v421, %v423
      %v425 = vrot.slane %v254, %v424
      %v427 = vunpack.c.l.s4 1966171168
      %v428 = vunpack.c.0.s8 %v427
      %v429 = vlaneseq
      %v430 = vshrl.u32 %v429, 7
      %v431 = vsub.s32 %v428, %v430
      %v432 = vrot.slane %v425, %v431
      %v434 = vunpack.c.l.s4 1966171168
      %v435 = vunpack.c.0.s8 %v434
      %v436 = vlaneseq
      %v437 = vshrl.u32 %v436, 7
      %v438 = vsub.s32 %v435, %v437
      %v439 = vrot.slane %v255, %v438
      %v440 = vcombine.high %v439, %v439
      %v442 = vunpack.c.l.s4 1966171168
      %v443 = vunpack.c.0.s8 %v442
      %v444 = vlaneseq
      %v445 = vshrl.u32 %v444, 7
      %v446 = vsub.s32 %v443, %v445
      %v447 = vrot.slane %v439, %v446
      %v449 = vunpack.c.l.s4 1966171168
      %v450 = vunpack.c.0.s8 %v449
      %v451 = vlaneseq
      %v452 = vshrl.u32 %v451, 7
      %v453 = vsub.s32 %v450, %v452
      %v454 = vrot.slane %v440, %v453
      %v455 = vcombine.high %v447, %v447
      %v456 = vcombine.high %v454, %v454
      %v458 = vunpack.c.l.s4 1966171168
      %v459 = vunpack.c.0.s8 %v458
      %v460 = vlaneseq
      %v461 = vshrl.u32 %v460, 7
      %v462 = vsub.s32 %v459, %v461
      %v463 = vrot.slane %v256, %v462
      %v464 = vcombine.high %v463, %v463
      %v466 = vunpack.c.l.s4 1966171168
      %v467 = vunpack.c.0.s8 %v466
      %v468 = vlaneseq
      %v469 = vshrl.u32 %v468, 7
      %v470 = vsub.s32 %v467, %v469
      %v471 = vrot.slane %v463, %v470
      %v473 = vunpack.c.l.s4 1966171168
      %v474 = vunpack.c.0.s8 %v473
      %v475 = vlaneseq
      %v476 = vshrl.u32 %v475, 7
      %v477 = vsub.s32 %v474, %v476
      %v478 = vrot.slane %v464, %v477
      %v479 = vcombine.high %v471, %v471
      %v480 = vcombine.high %v478, %v478
      %v482 = vunpack.c.l.s4 1966171168
      %v483 = vunpack.c.0.s8 %v482
      %v484 = vlaneseq
      %v485 = vshrl.u32 %v484, 7
      %v486 = vsub.s32 %v483, %v485
      %v487 = vrot.slane %v257, %v486
      %v489 = vunpack.c.l.s4 1966171168
      %v490 = vunpack.c.0.s8 %v489
      %v491 = vlaneseq
      %v492 = vshrl.u32 %v491, 7
      %v493 = vsub.s32 %v490, %v492
      %v494 = vrot.slane %v487, %v493
      %v496 = vunpack.c.l.s4 1966171168
      %v497 = vunpack.c.0.s8 %v496
      %v498 = vlaneseq
      %v499 = vshrl.u32 %v498, 7
      %v500 = vsub.s32 %v497, %v499
      %v501 = vrot.slane %v258, %v500
      %v502 = vcombine.high %v501, %v501
      %v504 = vunpack.c.l.s4 1966171168
      %v505 = vunpack.c.0.s8 %v504
      %v506 = vlaneseq
      %v507 = vshrl.u32 %v506, 7
      %v508 = vsub.s32 %v505, %v507
      %v509 = vrot.slane %v501, %v508
      %v511 = vunpack.c.l.s4 1966171168
      %v512 = vunpack.c.0.s8 %v511
      %v513 = vlaneseq
      %v514 = vshrl.u32 %v513, 7
      %v515 = vsub.s32 %v512, %v514
      %v516 = vrot.slane %v502, %v515
      %v517 = vcombine.high %v509, %v509
      %v518 = vcombine.high %v516, %v516
      %v520 = vunpack.c.l.s4 1966171168
      %v521 = vunpack.c.0.s8 %v520
      %v522 = vlaneseq
      %v523 = vshrl.u32 %v522, 7
      %v524 = vsub.s32 %v521, %v523
      %v525 = vrot.slane %v259, %v524
      %v526 = vcombine.high %v525, %v525
      %v528 = vunpack.c.l.s4 1966171168
      %v529 = vunpack.c.0.s8 %v528
      %v530 = vlaneseq
      %v531 = vshrl.u32 %v530, 7
      %v532 = vsub.s32 %v529, %v531
      %v533 = vrot.slane %v525, %v532
      %v535 = vunpack.c.l.s4 1966171168
      %v536 = vunpack.c.0.s8 %v535
      %v537 = vlaneseq
      %v538 = vshrl.u32 %v537, 7
      %v539 = vsub.s32 %v536, %v538
      %v540 = vrot.slane %v526, %v539
      %v541 = vcombine.high %v533, %v533
      %v542 = vcombine.high %v540, %v540
      %v544 = vunpack.c.l.s4 1966171168
      %v545 = vunpack.c.0.s8 %v544
      %v546 = vlaneseq
      %v547 = vshrl.u32 %v546, 7
      %v548 = vsub.s32 %v545, %v547
      %v549 = vrot.slane %v260, %v548
      %v551 = vunpack.c.l.s4 1966171168
      %v552 = vunpack.c.0.s8 %v551
      %v553 = vlaneseq
      %v554 = vshrl.u32 %v553, 7
      %v555 = vsub.s32 %v552, %v554
      %v556 = vrot.slane %v549, %v555
      %v558 = vunpack.c.l.s4 1966171168
      %v559 = vunpack.c.0.s8 %v558
      %v560 = vlaneseq
      %v561 = vshrl.u32 %v560, 7
      %v562 = vsub.s32 %v559, %v561
      %v563 = vrot.slane %v261, %v562
      %v564 = vcombine.high %v563, %v563
      %v566 = vunpack.c.l.s4 1966171168
      %v567 = vunpack.c.0.s8 %v566
      %v568 = vlaneseq
      %v569 = vshrl.u32 %v568, 7
      %v570 = vsub.s32 %v567, %v569
      %v571 = vrot.slane %v563, %v570
      %v573 = vunpack.c.l.s4 1966171168
      %v574 = vunpack.c.0.s8 %v573
      %v575 = vlaneseq
      %v576 = vshrl.u32 %v575, 7
      %v577 = vsub.s32 %v574, %v576
      %v578 = vrot.slane %v564, %v577
      %v579 = vcombine.high %v571, %v571
      %v580 = vcombine.high %v578, %v578
      %v582 = vunpack.c.l.s4 1966171168
      %v583 = vunpack.c.0.s8 %v582
      %v584 = vlaneseq
      %v585 = vshrl.u32 %v584, 7
      %v586 = vsub.s32 %v583, %v585
      %v587 = vrot.slane %v262, %v586
      %v588 = vcombine.high %v587, %v587
      %v590 = vunpack.c.l.s4 1966171168
      %v591 = vunpack.c.0.s8 %v590
      %v592 = vlaneseq
      %v593 = vshrl.u32 %v592, 7
      %v594 = vsub.s32 %v591, %v593
      %v595 = vrot.slane %v587, %v594
      %v597 = vunpack.c.l.s4 1966171168
      %v598 = vunpack.c.0.s8 %v597
      %v599 = vlaneseq
      %v600 = vshrl.u32 %v599, 7
      %v601 = vsub.s32 %v598, %v600
      %v602 = vrot.slane %v588, %v601
      %v603 = vcombine.high %v595, %v595
      %v604 = vcombine.high %v602, %v602
      %v606 = vunpack.c.l.s4 1966171168
      %v607 = vunpack.c.0.s8 %v606
      %v608 = vlaneseq
      %v609 = vshrl.u32 %v608, 7
      %v610 = vsub.s32 %v607, %v609
      %v611 = vrot.slane %v263, %v610
      %v613 = vunpack.c.l.s4 1966171168
      %v614 = vunpack.c.0.s8 %v613
      %v615 = vlaneseq
      %v616 = vshrl.u32 %v615, 7
      %v617 = vsub.s32 %v614, %v616
      %v618 = vrot.slane %v611, %v617
      %v620 = vunpack.c.l.s4 1966171168
      %v621 = vunpack.c.0.s8 %v620
      %v622 = vlaneseq
      %v623 = vshrl.u32 %v622, 7
      %v624 = vsub.s32 %v621, %v623
      %v625 = vrot.slane %v264, %v624
      %v626 = vcombine.high %v625, %v625
      %v628 = vunpack.c.l.s4 1966171168
      %v629 = vunpack.c.0.s8 %v628
      %v630 = vlaneseq
      %v631 = vshrl.u32 %v630, 7
      %v632 = vsub.s32 %v629, %v631
      %v633 = vrot.slane %v625, %v632
      %v635 = vunpack.c.l.s4 1966171168
      %v636 = vunpack.c.0.s8 %v635
      %v637 = vlaneseq
      %v638 = vshrl.u32 %v637, 7
      %v639 = vsub.s32 %v636, %v638
      %v640 = vrot.slane %v626, %v639
      %v641 = vcombine.high %v633, %v633
      %v642 = vcombine.high %v640, %v640
      %v644 = vunpack.c.l.s4 1966171168
      %v645 = vunpack.c.0.s8 %v644
      %v646 = vlaneseq
      %v647 = vshrl.u32 %v646, 7
      %v648 = vsub.s32 %v645, %v647
      %v649 = vrot.slane %v265, %v648
      %v650 = vcombine.high %v649, %v649
      %v652 = vunpack.c.l.s4 1966171168
      %v653 = vunpack.c.0.s8 %v652
      %v654 = vlaneseq
      %v655 = vshrl.u32 %v654, 7
      %v656 = vsub.s32 %v653, %v655
      %v657 = vrot.slane %v649, %v656
      %v659 = vunpack.c.l.s4 1966171168
      %v660 = vunpack.c.0.s8 %v659
      %v661 = vlaneseq
      %v662 = vshrl.u32 %v661, 7
      %v663 = vsub.s32 %v660, %v662
      %v664 = vrot.slane %v650, %v663
      %v665 = vcombine.high %v657, %v657
      %v666 = vcombine.high %v664, %v664
      %v668 = vunpack.c.l.s4 1966171168
      %v669 = vunpack.c.0.s8 %v668
      %v670 = vlaneseq
      %v671 = vshrl.u32 %v670, 7
      %v672 = vsub.s32 %v669, %v671
      %v673 = vrot.slane %v266, %v672
      %v675 = vunpack.c.l.s4 1966171168
      %v676 = vunpack.c.0.s8 %v675
      %v677 = vlaneseq
      %v678 = vshrl.u32 %v677, 7
      %v679 = vsub.s32 %v676, %v678
      %v680 = vrot.slane %v673, %v679
      %v682 = vunpack.c.l.s4 1966171168
      %v683 = vunpack.c.0.s8 %v682
      %v684 = vlaneseq
      %v685 = vshrl.u32 %v684, 7
      %v686 = vsub.s32 %v683, %v685
      %v687 = vrot.slane %v267, %v686
      %v688 = vcombine.high %v687, %v687
      %v690 = vunpack.c.l.s4 1966171168
      %v691 = vunpack.c.0.s8 %v690
      %v692 = vlaneseq
      %v693 = vshrl.u32 %v692, 7
      %v694 = vsub.s32 %v691, %v693
      %v695 = vrot.slane %v687, %v694
      %v697 = vunpack.c.l.s4 1966171168
      %v698 = vunpack.c.0.s8 %v697
      %v699 = vlaneseq
      %v700 = vshrl.u32 %v699, 7
      %v701 = vsub.s32 %v698, %v700
      %v702 = vrot.slane %v688, %v701
      %v703 = vcombine.high %v695, %v695
      %v704 = vcombine.high %v702, %v702
      %v706 = vunpack.c.l.s4 1966171168
      %v707 = vunpack.c.0.s8 %v706
      %v708 = vlaneseq
      %v709 = vshrl.u32 %v708, 7
      %v710 = vsub.s32 %v707, %v709
      %v711 = vrot.slane %v268, %v710
      %v712 = vcombine.high %v711, %v711
      %v714 = vunpack.c.l.s4 1966171168
      %v715 = vunpack.c.0.s8 %v714
      %v716 = vlaneseq
      %v717 = vshrl.u32 %v716, 7
      %v718 = vsub.s32 %v715, %v717
      %v719 = vrot.slane %v711, %v718
      %v721 = vunpack.c.l.s4 1966171168
      %v722 = vunpack.c.0.s8 %v721
      %v723 = vlaneseq
      %v724 = vshrl.u32 %v723, 7
      %v725 = vsub.s32 %v722, %v724
      %v726 = vrot.slane %v712, %v725
      %v727 = vcombine.high %v719, %v719
      %v728 = vcombine.high %v726, %v726
      %v730 = vunpack.c.l.s4 1966171168
      %v731 = vunpack.c.0.s8 %v730
      %v732 = vlaneseq
      %v733 = vshrl.u32 %v732, 7
      %v734 = vsub.s32 %v731, %v733
      %v735 = vrot.slane %v269, %v734
      %v737 = vunpack.c.l.s4 1966171168
      %v738 = vunpack.c.0.s8 %v737
      %v739 = vlaneseq
      %v740 = vshrl.u32 %v739, 7
      %v741 = vsub.s32 %v738, %v740
      %v742 = vrot.slane %v735, %v741
      %v744 = vunpack.c.l.s4 1966171168
      %v745 = vunpack.c.0.s8 %v744
      %v746 = vlaneseq
      %v747 = vshrl.u32 %v746, 7
      %v748 = vsub.s32 %v745, %v747
      %v749 = vrot.slane %v270, %v748
      %v750 = vcombine.high %v749, %v749
      %v752 = vunpack.c.l.s4 1966171168
      %v753 = vunpack.c.0.s8 %v752
      %v754 = vlaneseq
      %v755 = vshrl.u32 %v754, 7
      %v756 = vsub.s32 %v753, %v755
      %v757 = vrot.slane %v749, %v756
      %v759 = vunpack.c.l.s4 1966171168
      %v760 = vunpack.c.0.s8 %v759
      %v761 = vlaneseq
      %v762 = vshrl.u32 %v761, 7
      %v763 = vsub.s32 %v760, %v762
      %v764 = vrot.slane %v750, %v763
      %v765 = vcombine.high %v757, %v757
      %v766 = vcombine.high %v764, %v764
      %v768 = vunpack.c.l.s4 1966171168
      %v769 = vunpack.c.0.s8 %v768
      %v770 = vlaneseq
      %v771 = vshrl.u32 %v770, 7
      %v772 = vsub.s32 %v769, %v771
      %v773 = vrot.slane %v271, %v772
      %v774 = vcombine.high %v773, %v773
      %v776 = vunpack.c.l.s4 1966171168
      %v777 = vunpack.c.0.s8 %v776
      %v778 = vlaneseq
      %v779 = vshrl.u32 %v778, 7
      %v780 = vsub.s32 %v777, %v779
      %v781 = vrot.slane %v773, %v780
      %v783 = vunpack.c.l.s4 1966171168
      %v784 = vunpack.c.0.s8 %v783
      %v785 = vlaneseq
      %v786 = vshrl.u32 %v785, 7
      %v787 = vsub.s32 %v784, %v786
      %v788 = vrot.slane %v774, %v787
      %v789 = vcombine.high %v781, %v781
      %v790 = vcombine.high %v788, %v788
      %v792 = vunpack.c.l.s4 1966171168
      %v793 = vunpack.c.0.s8 %v792
      %v794 = vlaneseq
      %v795 = vshrl.u32 %v794, 7
      %v796 = vsub.s32 %v793, %v795
      %v797 = vrot.slane %v272, %v796
      %v799 = vunpack.c.l.s4 1966171168
      %v800 = vunpack.c.0.s8 %v799
      %v801 = vlaneseq
      %v802 = vshrl.u32 %v801, 7
      %v803 = vsub.s32 %v800, %v802
      %v804 = vrot.slane %v797, %v803
      %v806 = vunpack.c.l.s4 1966171168
      %v807 = vunpack.c.0.s8 %v806
      %v808 = vlaneseq
      %v809 = vshrl.u32 %v808, 7
      %v810 = vsub.s32 %v807, %v809
      %v811 = vrot.slane %v273, %v810
      %v812 = vcombine.high %v811, %v811
      %v814 = vunpack.c.l.s4 1966171168
      %v815 = vunpack.c.0.s8 %v814
      %v816 = vlaneseq
      %v817 = vshrl.u32 %v816, 7
      %v818 = vsub.s32 %v815, %v817
      %v819 = vrot.slane %v811, %v818
      %v821 = vunpack.c.l.s4 1966171168
      %v822 = vunpack.c.0.s8 %v821
      %v823 = vlaneseq
      %v824 = vshrl.u32 %v823, 7
      %v825 = vsub.s32 %v822, %v824
      %v826 = vrot.slane %v812, %v825
      %v827 = vcombine.high %v819, %v819
      %v828 = vcombine.high %v826, %v826
      %v830 = vunpack.c.l.s4 1966171168
      %v831 = vunpack.c.0.s8 %v830
      %v832 = vlaneseq
      %v833 = vshrl.u32 %v832, 7
      %v834 = vsub.s32 %v831, %v833
      %v835 = vrot.slane %v274, %v834
      %v836 = vcombine.high %v835, %v835
      %v838 = vunpack.c.l.s4 1966171168
      %v839 = vunpack.c.0.s8 %v838
      %v840 = vlaneseq
      %v841 = vshrl.u32 %v840, 7
      %v842 = vsub.s32 %v839, %v841
      %v843 = vrot.slane %v835, %v842
      %v845 = vunpack.c.l.s4 1966171168
      %v846 = vunpack.c.0.s8 %v845
      %v847 = vlaneseq
      %v848 = vshrl.u32 %v847, 7
      %v849 = vsub.s32 %v846, %v848
      %v850 = vrot.slane %v836, %v849
      %v851 = vcombine.high %v843, %v843
      %v852 = vcombine.high %v850, %v850
      %v854 = vunpack.c.l.s4 1966171168
      %v855 = vunpack.c.0.s8 %v854
      %v856 = vlaneseq
      %v857 = vshrl.u32 %v856, 7
      %v858 = vsub.s32 %v855, %v857
      %v859 = vrot.slane %v275, %v858
      %v861 = vunpack.c.l.s4 1966171168
      %v862 = vunpack.c.0.s8 %v861
      %v863 = vlaneseq
      %v864 = vshrl.u32 %v863, 7
      %v865 = vsub.s32 %v862, %v864
      %v866 = vrot.slane %v859, %v865
      %v868 = vunpack.c.l.s4 1966171168
      %v869 = vunpack.c.0.s8 %v868
      %v870 = vlaneseq
      %v871 = vshrl.u32 %v870, 7
      %v872 = vsub.s32 %v869, %v871
      %v873 = vrot.slane %v276, %v872
      %v874 = vcombine.high %v873, %v873
      %v876 = vunpack.c.l.s4 1966171168
      %v877 = vunpack.c.0.s8 %v876
      %v878 = vlaneseq
      %v879 = vshrl.u32 %v878, 7
      %v880 = vsub.s32 %v877, %v879
      %v881 = vrot.slane %v873, %v880
      %v883 = vunpack.c.l.s4 1966171168
      %v884 = vunpack.c.0.s8 %v883
      %v885 = vlaneseq
      %v886 = vshrl.u32 %v885, 7
      %v887 = vsub.s32 %v884, %v886
      %v888 = vrot.slane %v874, %v887
      %v889 = vcombine.high %v881, %v881
      %v890 = vcombine.high %v888, %v888
      %v892 = vunpack.c.l.s4 1966171168
      %v893 = vunpack.c.0.s8 %v892
      %v894 = vlaneseq
      %v895 = vshrl.u32 %v894, 7
      %v896 = vsub.s32 %v893, %v895
      %v897 = vrot.slane %v277, %v896
      %v898 = vcombine.high %v897, %v897
      %v900 = vunpack.c.l.s4 1966171168
      %v901 = vunpack.c.0.s8 %v900
      %v902 = vlaneseq
      %v903 = vshrl.u32 %v902, 7
      %v904 = vsub.s32 %v901, %v903
      %v905 = vrot.slane %v897, %v904
      %v907 = vunpack.c.l.s4 1966171168
      %v908 = vunpack.c.0.s8 %v907
      %v909 = vlaneseq
      %v910 = vshrl.u32 %v909, 7
      %v911 = vsub.s32 %v908, %v910
      %v912 = vrot.slane %v898, %v911
      %v913 = vcombine.high %v905, %v905
      %v914 = vcombine.high %v912, %v912
      %v916 = vunpack.c.l.s4 1966171168
      %v917 = vunpack.c.0.s8 %v916
      %v918 = vlaneseq
      %v919 = vshrl.u32 %v918, 7
      %v920 = vsub.s32 %v917, %v919
      %v921 = vrot.slane %v278, %v920
      %v923 = vunpack.c.l.s4 1966171168
      %v924 = vunpack.c.0.s8 %v923
      %v925 = vlaneseq
      %v926 = vshrl.u32 %v925, 7
      %v927 = vsub.s32 %v924, %v926
      %v928 = vrot.slane %v921, %v927
      %v929 = vunpack.i.h.s16 %v323
      %v930 = vunpack.i.l.s16 %v330
      %v931 = vunpack.i.h.s16 %v330
      %v932 = vunpack.i.l.s16 %v331
      %v933 = vunpack.i.h.s16 %v331
      %v934 = vunpack.i.l.s16 %v332
      %v935 = vunpack.i.h.s16 %v332
      %v936 = vunpack.i.l.s16 %v347
      %v937 = vunpack.i.h.s16 %v347
      %v938 = vunpack.i.l.s16 %v354
      %v939 = vunpack.i.h.s16 %v354
      %v940 = vunpack.i.l.s16 %v355
      %v941 = vunpack.i.h.s16 %v355
      %v942 = vunpack.i.l.s16 %v356
      %v943 = vunpack.i.h.s16 %v356
      %v944 = vunpack.i.l.s16 %v370
      %v945 = vunpack.i.h.s16 %v385
      %v946 = vunpack.i.l.s16 %v392
      %v947 = vunpack.i.h.s16 %v392
      %v948 = vunpack.i.l.s16 %v393
      %v949 = vunpack.i.h.s16 %v393
      %v950 = vunpack.i.l.s16 %v394
      %v951 = vunpack.i.h.s16 %v394
      %v952 = vunpack.i.l.s16 %v409
      %v953 = vunpack.i.h.s16 %v409
      %v954 = vunpack.i.l.s16 %v416
      %v955 = vunpack.i.h.s16 %v416
      %v956 = vunpack.i.l.s16 %v417
      %v957 = vunpack.i.h.s16 %v417
      %v958 = vunpack.i.l.s16 %v418
      %v959 = vunpack.i.h.s16 %v418
      %v960 = vunpack.i.l.s16 %v432
      %v961 = vunpack.i.h.s16 %v447
      %v962 = vunpack.i.l.s16 %v454
      %v963 = vunpack.i.h.s16 %v454
      %v964 = vunpack.i.l.s16 %v455
      %v965 = vunpack.i.h.s16 %v455
      %v966 = vunpack.i.l.s16 %v456
      %v967 = vunpack.i.h.s16 %v456
      %v968 = vunpack.i.l.s16 %v471
      %v969 = vunpack.i.h.s16 %v471
      %v970 = vunpack.i.l.s16 %v478
      %v971 = vunpack.i.h.s16 %v478
      %v972 = vunpack.i.l.s16 %v479
      %v973 = vunpack.i.h.s16 %v479
      %v974 = vunpack.i.l.s16 %v480
      %v975 = vunpack.i.h.s16 %v480
      %v976 = vunpack.i.l.s16 %v494
      %v977 = vunpack.i.h.s16 %v509
      %v978 = vunpack.i.l.s16 %v516
      %v979 = vunpack.i.h.s16 %v516
      %v980 = vunpack.i.l.s16 %v517
      %v981 = vunpack.i.h.s16 %v517
      %v982 = vunpack.i.l.s16 %v518
      %v983 = vunpack.i.h.s16 %v518
      %v984 = vunpack.i.l.s16 %v533
      %v985 = vunpack.i.h.s16 %v533
      %v986 = vunpack.i.l.s16 %v540
      %v987 = vunpack.i.h.s16 %v540
      %v988 = vunpack.i.l.s16 %v541
      %v989 = vunpack.i.h.s16 %v541
      %v990 = vunpack.i.l.s16 %v542
      %v991 = vunpack.i.h.s16 %v542
      %v992 = vunpack.i.l.s16 %v556
      %v993 = vunpack.i.h.s16 %v571
      %v994 = vunpack.i.l.s16 %v578
      %v995 = vunpack.i.h.s16 %v578
      %v996 = vunpack.i.l.s16 %v579
      %v997 = vunpack.i.h.s16 %v579
      %v998 = vunpack.i.l.s16 %v580
      %v999 = vunpack.i.h.s16 %v580
      %v1000 = vunpack.i.l.s16 %v595
      %v1001 = vunpack.i.h.s16 %v595
      %v1002 = vunpack.i.l.s16 %v602
      %v1003 = vunpack.i.h.s16 %v602
      %v1004 = vunpack.i.l.s16 %v603
      %v1005 = vunpack.i.h.s16 %v603
      %v1006 = vunpack.i.l.s16 %v604
      %v1007 = vunpack.i.h.s16 %v604
      %v1008 = vunpack.i.l.s16 %v618
      %v1009 = vunpack.i.h.s16 %v633
      %v1010 = vunpack.i.l.s16 %v640
      %v1011 = vunpack.i.h.s16 %v640
      %v1012 = vunpack.i.l.s16 %v641
      %v1013 = vunpack.i.h.s16 %v641
      %v1014 = vunpack.i.l.s16 %v642
      %v1015 = vunpack.i.h.s16 %v642
      %v1016 = vunpack.i.l.s16 %v657
      %v1017 = vunpack.i.h.s16 %v657
      %v1018 = vunpack.i.l.s16 %v664
      %v1019 = vunpack.i.h.s16 %v664
      %v1020 = vunpack.i.l.s16 %v665
      %v1021 = vunpack.i.h.s16 %v665
      %v1022 = vunpack.i.l.s16 %v666
      %v1023 = vunpack.i.h.s16 %v666
      %v1024 = vunpack.i.l.s16 %v680
      %v1025 = vunpack.i.h.s16 %v695
      %v1026 = vunpack.i.l.s16 %v702
      %v1027 = vunpack.i.h.s16 %v702
      %v1028 = vunpack.i.l.s16 %v703
      %v1029 = vunpack.i.h.s16 %v703
      %v1030 = vunpack.i.l.s16 %v704
      %v1031 = vunpack.i.h.s16 %v704
      %v1032 = vunpack.i.l.s16 %v719
      %v1033 = vunpack.i.h.s16 %v719
      %v1034 = vunpack.i.l.s16 %v726
      %v1035 = vunpack.i.h.s16 %v726
      %v1036 = vunpack.i.l.s16 %v727
      %v1037 = vunpack.i.h.s16 %v727
      %v1038 = vunpack.i.l.s16 %v728
      %v1039 = vunpack.i.h.s16 %v728
      %v1040 = vunpack.i.l.s16 %v742
      %v1041 = vunpack.i.h.s16 %v757
      %v1042 = vunpack.i.l.s16 %v764
      %v1043 = vunpack.i.h.s16 %v764
      %v1044 = vunpack.i.l.s16 %v765
      %v1045 = vunpack.i.h.s16 %v765
      %v1046 = vunpack.i.l.s16 %v766
      %v1047 = vunpack.i.h.s16 %v766
      %v1048 = vunpack.i.l.s16 %v781
      %v1049 = vunpack.i.h.s16 %v781
      %v1050 = vunpack.i.l.s16 %v788
      %v1051 = vunpack.i.h.s16 %v788
      %v1052 = vunpack.i.l.s16 %v789
      %v1053 = vunpack.i.h.s16 %v789
      %v1054 = vunpack.i.l.s16 %v790
      %v1055 = vunpack.i.h.s16 %v790
      %v1056 = vunpack.i.l.s16 %v804
      %v1057 = vunpack.i.h.s16 %v819
      %v1058 = vunpack.i.l.s16 %v826
      %v1059 = vunpack.i.h.s16 %v826
      %v1060 = vunpack.i.l.s16 %v827
      %v1061 = vunpack.i.h.s16 %v827
      %v1062 = vunpack.i.l.s16 %v828
      %v1063 = vunpack.i.h.s16 %v828
      %v1064 = vunpack.i.l.s16 %v843
      %v1065 = vunpack.i.h.s16 %v843
      %v1066 = vunpack.i.l.s16 %v850
      %v1067 = vunpack.i.h.s16 %v850
      %v1068 = vunpack.i.l.s16 %v851
      %v1069 = vunpack.i.h.s16 %v851
      %v1070 = vunpack.i.l.s16 %v852
      %v1071 = vunpack.i.h.s16 %v852
      %v1072 = vunpack.i.l.s16 %v866
      %v1073 = vunpack.i.h.s16 %v881
      %v1074 = vunpack.i.l.s16 %v888
      %v1075 = vunpack.i.h.s16 %v888
      %v1076 = vunpack.i.l.s16 %v889
      %v1077 = vunpack.i.h.s16 %v889
      %v1078 = vunpack.i.l.s16 %v890
      %v1079 = vunpack.i.h.s16 %v890
      %v1080 = vunpack.i.l.s16 %v905
      %v1081 = vunpack.i.h.s16 %v905
      %v1082 = vunpack.i.l.s16 %v912
      %v1083 = vunpack.i.h.s16 %v912
      %v1084 = vunpack.i.l.s16 %v913
      %v1085 = vunpack.i.h.s16 %v913
      %v1086 = vunpack.i.l.s16 %v914
      %v1087 = vunpack.i.h.s16 %v914
      %v1088 = vunpack.i.l.s16 %v928
      %v1089 = vpack.i.b16 %v929, %v929
      %v1090 = vpack.i.b16 %v930, %v930
      %v1091 = vpack.i.b16 %v931, %v931
      %v1092 = vpack.i.b16 %v932, %v932
      %v1093 = vpack.i.b16 %v933, %v933
      %v1094 = vpack.i.b16 %v934, %v934
      %v1095 = vpack.i.b16 %v935, %v935
      %v1096 = vpack.i.b16 %v936, %v936
      %v1097 = vpack.i.b16 %v937, %v937
      %v1098 = vpack.i.b16 %v938, %v938
      %v1099 = vpack.i.b16 %v939, %v939
      %v1100 = vpack.i.b16 %v940, %v940
      %v1101 = vpack.i.b16 %v941, %v941
      %v1102 = vpack.i.b16 %v942, %v942
      %v1103 = vpack.i.b16 %v943, %v943
      %v1104 = vpack.i.b16 %v944, %v944
      %v1105 = vpack.i.b16 %v945, %v945
      %v1106 = vpack.i.b16 %v946, %v946
      %v1107 = vpack.i.b16 %v947, %v947
      %v1108 = vpack.i.b16 %v948, %v948
      %v1109 = vpack.i.b16 %v949, %v949
      %v1110 = vpack.i.b16 %v950, %v950
      %v1111 = vpack.i.b16 %v951, %v951
      %v1112 = vpack.i.b16 %v952, %v952
      %v1113 = vpack.i.b16 %v953, %v953
      %v1114 = vpack.i.b16 %v954, %v954
      %v1115 = vpack.i.b16 %v955, %v955
      %v1116 = vpack.i.b16 %v956, %v956
      %v1117 = vpack.i.b16 %v957, %v957
      %v1118 = vpack.i.b16 %v958, %v958
      %v1119 = vpack.i.b16 %v959, %v959
      %v1120 = vpack.i.b16 %v960, %v960
      %v1121 = vpack.i.b16 %v961, %v961
      %v1122 = vpack.i.b16 %v962, %v962
      %v1123 = vpack.i.b16 %v963, %v963
      %v1124 = vpack.i.b16 %v964, %v964
      %v1125 = vpack.i.b16 %v965, %v965
      %v1126 = vpack.i.b16 %v966, %v966
      %v1127 = vpack.i.b16 %v967, %v967
      %v1128 = vpack.i.b16 %v968, %v968
      %v1129 = vpack.i.b16 %v969, %v969
      %v1130 = vpack.i.b16 %v970, %v970
      %v1131 = vpack.i.b16 %v971, %v971
      %v1132 = vpack.i.b16 %v972, %v972
      %v1133 = vpack.i.b16 %v973, %v973
      %v1134 = vpack.i.b16 %v974, %v974
      %v1135 = vpack.i.b16 %v975, %v975
      %v1136 = vpack.i.b16 %v976, %v976
      %v1137 = vpack.i.b16 %v977, %v977
      %v1138 = vpack.i.b16 %v978, %v978
      %v1139 = vpack.i.b16 %v979, %v979
      %v1140 = vpack.i.b16 %v980, %v980
      %v1141 = vpack.i.b16 %v981, %v981
      %v1142 = vpack.i.b16 %v982, %v982
      %v1143 = vpack.i.b16 %v983, %v983
      %v1144 = vpack.i.b16 %v984, %v984
      %v1145 = vpack.i.b16 %v985, %v985
      %v1146 = vpack.i.b16 %v986, %v986
      %v1147 = vpack.i.b16 %v987, %v987
      %v1148 = vpack.i.b16 %v988, %v988
      %v1149 = vpack.i.b16 %v989, %v989
      %v1150 = vpack.i.b16 %v990, %v990
      %v1151 = vpack.i.b16 %v991, %v991
      %v1152 = vpack.i.b16 %v992, %v992
      %v1153 = vpack.i.b16 %v993, %v993
      %v1154 = vpack.i.b16 %v994, %v994
      %v1155 = vpack.i.b16 %v995, %v995
      %v1156 = vpack.i.b16 %v996, %v996
      %v1157 = vpack.i.b16 %v997, %v997
      %v1158 = vpack.i.b16 %v998, %v998
      %v1159 = vpack.i.b16 %v999, %v999
      %v1160 = vpack.i.b16 %v1000, %v1000
      %v1161 = vpack.i.b16 %v1001, %v1001
      %v1162 = vpack.i.b16 %v1002, %v1002
      %v1163 = vpack.i.b16 %v1003, %v1003
      %v1164 = vpack.i.b16 %v1004, %v1004
      %v1165 = vpack.i.b16 %v1005, %v1005
      %v1166 = vpack.i.b16 %v1006, %v1006
      %v1167 = vpack.i.b16 %v1007, %v1007
      %v1168 = vpack.i.b16 %v1008, %v1008
      %v1169 = vpack.i.b16 %v1009, %v1009
      %v1170 = vpack.i.b16 %v1010, %v1010
      %v1171 = vpack.i.b16 %v1011, %v1011
      %v1172 = vpack.i.b16 %v1012, %v1012
      %v1173 = vpack.i.b16 %v1013, %v1013
      %v1174 = vpack.i.b16 %v1014, %v1014
      %v1175 = vpack.i.b16 %v1015, %v1015
      %v1176 = vpack.i.b16 %v1016, %v1016
      %v1177 = vpack.i.b16 %v1017, %v1017
      %v1178 = vpack.i.b16 %v1018, %v1018
      %v1179 = vpack.i.b16 %v1019, %v1019
      %v1180 = vpack.i.b16 %v1020, %v1020
      %v1181 = vpack.i.b16 %v1021, %v1021
      %v1182 = vpack.i.b16 %v1022, %v1022
      %v1183 = vpack.i.b16 %v1023, %v1023
      %v1184 = vpack.i.b16 %v1024, %v1024
      %v1185 = vpack.i.b16 %v1025, %v1025
      %v1186 = vpack.i.b16 %v1026, %v1026
      %v1187 = vpack.i.b16 %v1027, %v1027
      %v1188 = vpack.i.b16 %v1028, %v1028
      %v1189 = vpack.i.b16 %v1029, %v1029
      %v1190 = vpack.i.b16 %v1030, %v1030
      %v1191 = vpack.i.b16 %v1031, %v1031
      %v1192 = vpack.i.b16 %v1032, %v1032
      %v1193 = vpack.i.b16 %v1033, %v1033
      %v1194 = vpack.i.b16 %v1034, %v1034
      %v1195 = vpack.i.b16 %v1035, %v1035
      %v1196 = vpack.i.b16 %v1036, %v1036
      %v1197 = vpack.i.b16 %v1037, %v1037
      %v1198 = vpack.i.b16 %v1038, %v1038
      %v1199 = vpack.i.b16 %v1039, %v1039
      %v1200 = vpack.i.b16 %v1040, %v1040
      %v1201 = vpack.i.b16 %v1041, %v1041
      %v1202 = vpack.i.b16 %v1042, %v1042
      %v1203 = vpack.i.b16 %v1043, %v1043
      %v1204 = vpack.i.b16 %v1044, %v1044
      %v1205 = vpack.i.b16 %v1045, %v1045
      %v1206 = vpack.i.b16 %v1046, %v1046
      %v1207 = vpack.i.b16 %v1047, %v1047
      %v1208 = vpack.i.b16 %v1048, %v1048
      %v1209 = vpack.i.b16 %v1049, %v1049
      %v1210 = vpack.i.b16 %v1050, %v1050
      %v1211 = vpack.i.b16 %v1051, %v1051
      %v1212 = vpack.i.b16 %v1052, %v1052
      %v1213 = vpack.i.b16 %v1053, %v1053
      %v1214 = vpack.i.b16 %v1054, %v1054
      %v1215 = vpack.i.b16 %v1055, %v1055
      %v1216 = vpack.i.b16 %v1056, %v1056
      %v1217 = vpack.i.b16 %v1057, %v1057
      %v1218 = vpack.i.b16 %v1058, %v1058
      %v1219 = vpack.i.b16 %v1059, %v1059
      %v1220 = vpack.i.b16 %v1060, %v1060
      %v1221 = vpack.i.b16 %v1061, %v1061
      %v1222 = vpack.i.b16 %v1062, %v1062
      %v1223 = vpack.i.b16 %v1063, %v1063
      %v1224 = vpack.i.b16 %v1064, %v1064
      %v1225 = vpack.i.b16 %v1065, %v1065
      %v1226 = vpack.i.b16 %v1066, %v1066
      %v1227 = vpack.i.b16 %v1067, %v1067
      %v1228 = vpack.i.b16 %v1068, %v1068
      %v1229 = vpack.i.b16 %v1069, %v1069
      %v1230 = vpack.i.b16 %v1070, %v1070
      %v1231 = vpack.i.b16 %v1071, %v1071
      %v1232 = vpack.i.b16 %v1072, %v1072
      %v1233 = vpack.i.b16 %v1073, %v1073
      %v1234 = vpack.i.b16 %v1074, %v1074
      %v1235 = vpack.i.b16 %v1075, %v1075
      %v1236 = vpack.i.b16 %v1076, %v1076
      %v1237 = vpack.i.b16 %v1077, %v1077
      %v1238 = vpack.i.b16 %v1078, %v1078
      %v1239 = vpack.i.b16 %v1079, %v1079
      %v1240 = vpack.i.b16 %v1080, %v1080
      %v1241 = vpack.i.b16 %v1081, %v1081
      %v1242 = vpack.i.b16 %v1082, %v1082
      %v1243 = vpack.i.b16 %v1083, %v1083
      %v1244 = vpack.i.b16 %v1084, %v1084
      %v1245 = vpack.i.b16 %v1085, %v1085
      %v1246 = vpack.i.b16 %v1086, %v1086
      %v1247 = vpack.i.b16 %v1087, %v1087
      %v1248 = vpack.i.b16 %v1088, %v1088
      %v1249 = vlaneseq
      %v1250 = vshrl.u32 %v1249, 7
      %v1251 = vsub.s32 0, %v1250
      %v1252 = vrot.slane %v1089, %v1251
      %v1253 = vlaneseq
      %v1254 = vshrl.u32 %v1253, 7
      %v1255 = vsub.s32 0, %v1254
      %v1256 = vrot.slane %v1090, %v1255
      %v1257 = vlaneseq
      %v1258 = vshrl.u32 %v1257, 7
      %v1259 = vsub.s32 0, %v1258
      %v1260 = vrot.slane %v1091, %v1259
      %v1261 = vlaneseq
      %v1262 = vshrl.u32 %v1261, 7
      %v1263 = vsub.s32 0, %v1262
      %v1264 = vrot.slane %v1092, %v1263
      %v1265 = vlaneseq
      %v1266 = vshrl.u32 %v1265, 7
      %v1267 = vsub.s32 0, %v1266
      %v1268 = vrot.slane %v1093, %v1267
      %v1269 = vlaneseq
      %v1270 = vshrl.u32 %v1269, 7
      %v1271 = vsub.s32 0, %v1270
      %v1272 = vrot.slane %v1094, %v1271
      %v1273 = vlaneseq
      %v1274 = vshrl.u32 %v1273, 7
      %v1275 = vsub.s32 0, %v1274
      %v1276 = vrot.slane %v1095, %v1275
      %v1277 = vlaneseq
      %v1278 = vshrl.u32 %v1277, 7
      %v1279 = vsub.s32 0, %v1278
      %v1280 = vrot.slane %v1096, %v1279
      %v1281 = vlaneseq
      %v1282 = vshrl.u32 %v1281, 7
      %v1283 = vsub.s32 0, %v1282
      %v1284 = vrot.slane %v1097, %v1283
      %v1285 = vlaneseq
      %v1286 = vshrl.u32 %v1285, 7
      %v1287 = vsub.s32 0, %v1286
      %v1288 = vrot.slane %v1098, %v1287
      %v1289 = vlaneseq
      %v1290 = vshrl.u32 %v1289, 7
      %v1291 = vsub.s32 0, %v1290
      %v1292 = vrot.slane %v1099, %v1291
      %v1293 = vlaneseq
      %v1294 = vshrl.u32 %v1293, 7
      %v1295 = vsub.s32 0, %v1294
      %v1296 = vrot.slane %v1100, %v1295
      %v1297 = vlaneseq
      %v1298 = vshrl.u32 %v1297, 7
      %v1299 = vsub.s32 0, %v1298
      %v1300 = vrot.slane %v1101, %v1299
      %v1301 = vlaneseq
      %v1302 = vshrl.u32 %v1301, 7
      %v1303 = vsub.s32 0, %v1302
      %v1304 = vrot.slane %v1102, %v1303
      %v1305 = vlaneseq
      %v1306 = vshrl.u32 %v1305, 7
      %v1307 = vsub.s32 0, %v1306
      %v1308 = vrot.slane %v1103, %v1307
      %v1309 = vlaneseq
      %v1310 = vshrl.u32 %v1309, 7
      %v1311 = vsub.s32 0, %v1310
      %v1312 = vrot.slane %v1104, %v1311
      %v1313 = vlaneseq
      %v1314 = vshrl.u32 %v1313, 7
      %v1315 = vsub.s32 0, %v1314
      %v1316 = vrot.slane %v1105, %v1315
      %v1317 = vlaneseq
      %v1318 = vshrl.u32 %v1317, 7
      %v1319 = vsub.s32 0, %v1318
      %v1320 = vrot.slane %v1106, %v1319
      %v1321 = vlaneseq
      %v1322 = vshrl.u32 %v1321, 7
      %v1323 = vsub.s32 0, %v1322
      %v1324 = vrot.slane %v1107, %v1323
      %v1325 = vlaneseq
      %v1326 = vshrl.u32 %v1325, 7
      %v1327 = vsub.s32 0, %v1326
      %v1328 = vrot.slane %v1108, %v1327
      %v1329 = vlaneseq
      %v1330 = vshrl.u32 %v1329, 7
      %v1331 = vsub.s32 0, %v1330
      %v1332 = vrot.slane %v1109, %v1331
      %v1333 = vlaneseq
      %v1334 = vshrl.u32 %v1333, 7
      %v1335 = vsub.s32 0, %v1334
      %v1336 = vrot.slane %v1110, %v1335
      %v1337 = vlaneseq
      %v1338 = vshrl.u32 %v1337, 7
      %v1339 = vsub.s32 0, %v1338
      %v1340 = vrot.slane %v1111, %v1339
      %v1341 = vlaneseq
      %v1342 = vshrl.u32 %v1341, 7
      %v1343 = vsub.s32 0, %v1342
      %v1344 = vrot.slane %v1112, %v1343
      %v1345 = vlaneseq
      %v1346 = vshrl.u32 %v1345, 7
      %v1347 = vsub.s32 0, %v1346
      %v1348 = vrot.slane %v1113, %v1347
      %v1349 = vlaneseq
      %v1350 = vshrl.u32 %v1349, 7
      %v1351 = vsub.s32 0, %v1350
      %v1352 = vrot.slane %v1114, %v1351
      %v1353 = vlaneseq
      %v1354 = vshrl.u32 %v1353, 7
      %v1355 = vsub.s32 0, %v1354
      %v1356 = vrot.slane %v1115, %v1355
      %v1357 = vlaneseq
      %v1358 = vshrl.u32 %v1357, 7
      %v1359 = vsub.s32 0, %v1358
      %v1360 = vrot.slane %v1116, %v1359
      %v1361 = vlaneseq
      %v1362 = vshrl.u32 %v1361, 7
      %v1363 = vsub.s32 0, %v1362
      %v1364 = vrot.slane %v1117, %v1363
      %v1365 = vlaneseq
      %v1366 = vshrl.u32 %v1365, 7
      %v1367 = vsub.s32 0, %v1366
      %v1368 = vrot.slane %v1118, %v1367
      %v1369 = vlaneseq
      %v1370 = vshrl.u32 %v1369, 7
      %v1371 = vsub.s32 0, %v1370
      %v1372 = vrot.slane %v1119, %v1371
      %v1373 = vlaneseq
      %v1374 = vshrl.u32 %v1373, 7
      %v1375 = vsub.s32 0, %v1374
      %v1376 = vrot.slane %v1120, %v1375
      %v1377 = vlaneseq
      %v1378 = vshrl.u32 %v1377, 7
      %v1379 = vsub.s32 0, %v1378
      %v1380 = vrot.slane %v1121, %v1379
      %v1381 = vlaneseq
      %v1382 = vshrl.u32 %v1381, 7
      %v1383 = vsub.s32 0, %v1382
      %v1384 = vrot.slane %v1122, %v1383
      %v1385 = vlaneseq
      %v1386 = vshrl.u32 %v1385, 7
      %v1387 = vsub.s32 0, %v1386
      %v1388 = vrot.slane %v1123, %v1387
      %v1389 = vlaneseq
      %v1390 = vshrl.u32 %v1389, 7
      %v1391 = vsub.s32 0, %v1390
      %v1392 = vrot.slane %v1124, %v1391
      %v1393 = vlaneseq
      %v1394 = vshrl.u32 %v1393, 7
      %v1395 = vsub.s32 0, %v1394
      %v1396 = vrot.slane %v1125, %v1395
      %v1397 = vlaneseq
      %v1398 = vshrl.u32 %v1397, 7
      %v1399 = vsub.s32 0, %v1398
      %v1400 = vrot.slane %v1126, %v1399
      %v1401 = vlaneseq
      %v1402 = vshrl.u32 %v1401, 7
      %v1403 = vsub.s32 0, %v1402
      %v1404 = vrot.slane %v1127, %v1403
      %v1405 = vlaneseq
      %v1406 = vshrl.u32 %v1405, 7
      %v1407 = vsub.s32 0, %v1406
      %v1408 = vrot.slane %v1128, %v1407
      %v1409 = vlaneseq
      %v1410 = vshrl.u32 %v1409, 7
      %v1411 = vsub.s32 0, %v1410
      %v1412 = vrot.slane %v1129, %v1411
      %v1413 = vlaneseq
      %v1414 = vshrl.u32 %v1413, 7
      %v1415 = vsub.s32 0, %v1414
      %v1416 = vrot.slane %v1130, %v1415
      %v1417 = vlaneseq
      %v1418 = vshrl.u32 %v1417, 7
      %v1419 = vsub.s32 0, %v1418
      %v1420 = vrot.slane %v1131, %v1419
      %v1421 = vlaneseq
      %v1422 = vshrl.u32 %v1421, 7
      %v1423 = vsub.s32 0, %v1422
      %v1424 = vrot.slane %v1132, %v1423
      %v1425 = vlaneseq
      %v1426 = vshrl.u32 %v1425, 7
      %v1427 = vsub.s32 0, %v1426
      %v1428 = vrot.slane %v1133, %v1427
      %v1429 = vlaneseq
      %v1430 = vshrl.u32 %v1429, 7
      %v1431 = vsub.s32 0, %v1430
      %v1432 = vrot.slane %v1134, %v1431
      %v1433 = vlaneseq
      %v1434 = vshrl.u32 %v1433, 7
      %v1435 = vsub.s32 0, %v1434
      %v1436 = vrot.slane %v1135, %v1435
      %v1437 = vlaneseq
      %v1438 = vshrl.u32 %v1437, 7
      %v1439 = vsub.s32 0, %v1438
      %v1440 = vrot.slane %v1136, %v1439
      %v1441 = vlaneseq
      %v1442 = vshrl.u32 %v1441, 7
      %v1443 = vsub.s32 0, %v1442
      %v1444 = vrot.slane %v1137, %v1443
      %v1445 = vlaneseq
      %v1446 = vshrl.u32 %v1445, 7
      %v1447 = vsub.s32 0, %v1446
      %v1448 = vrot.slane %v1138, %v1447
      %v1449 = vlaneseq
      %v1450 = vshrl.u32 %v1449, 7
      %v1451 = vsub.s32 0, %v1450
      %v1452 = vrot.slane %v1139, %v1451
      %v1453 = vlaneseq
      %v1454 = vshrl.u32 %v1453, 7
      %v1455 = vsub.s32 0, %v1454
      %v1456 = vrot.slane %v1140, %v1455
      %v1457 = vlaneseq
      %v1458 = vshrl.u32 %v1457, 7
      %v1459 = vsub.s32 0, %v1458
      %v1460 = vrot.slane %v1141, %v1459
      %v1461 = vlaneseq
      %v1462 = vshrl.u32 %v1461, 7
      %v1463 = vsub.s32 0, %v1462
      %v1464 = vrot.slane %v1142, %v1463
      %v1465 = vlaneseq
      %v1466 = vshrl.u32 %v1465, 7
      %v1467 = vsub.s32 0, %v1466
      %v1468 = vrot.slane %v1143, %v1467
      %v1469 = vlaneseq
      %v1470 = vshrl.u32 %v1469, 7
      %v1471 = vsub.s32 0, %v1470
      %v1472 = vrot.slane %v1144, %v1471
      %v1473 = vlaneseq
      %v1474 = vshrl.u32 %v1473, 7
      %v1475 = vsub.s32 0, %v1474
      %v1476 = vrot.slane %v1145, %v1475
      %v1477 = vlaneseq
      %v1478 = vshrl.u32 %v1477, 7
      %v1479 = vsub.s32 0, %v1478
      %v1480 = vrot.slane %v1146, %v1479
      %v1481 = vlaneseq
      %v1482 = vshrl.u32 %v1481, 7
      %v1483 = vsub.s32 0, %v1482
      %v1484 = vrot.slane %v1147, %v1483
      %v1485 = vlaneseq
      %v1486 = vshrl.u32 %v1485, 7
      %v1487 = vsub.s32 0, %v1486
      %v1488 = vrot.slane %v1148, %v1487
      %v1489 = vlaneseq
      %v1490 = vshrl.u32 %v1489, 7
      %v1491 = vsub.s32 0, %v1490
      %v1492 = vrot.slane %v1149, %v1491
      %v1493 = vlaneseq
      %v1494 = vshrl.u32 %v1493, 7
      %v1495 = vsub.s32 0, %v1494
      %v1496 = vrot.slane %v1150, %v1495
      %v1497 = vlaneseq
      %v1498 = vshrl.u32 %v1497, 7
      %v1499 = vsub.s32 0, %v1498
      %v1500 = vrot.slane %v1151, %v1499
      %v1501 = vlaneseq
      %v1502 = vshrl.u32 %v1501, 7
      %v1503 = vsub.s32 0, %v1502
      %v1504 = vrot.slane %v1152, %v1503
      %v1505 = vlaneseq
      %v1506 = vshrl.u32 %v1505, 7
      %v1507 = vsub.s32 0, %v1506
      %v1508 = vrot.slane %v1153, %v1507
      %v1509 = vlaneseq
      %v1510 = vshrl.u32 %v1509, 7
      %v1511 = vsub.s32 0, %v1510
      %v1512 = vrot.slane %v1154, %v1511
      %v1513 = vlaneseq
      %v1514 = vshrl.u32 %v1513, 7
      %v1515 = vsub.s32 0, %v1514
      %v1516 = vrot.slane %v1155, %v1515
      %v1517 = vlaneseq
      %v1518 = vshrl.u32 %v1517, 7
      %v1519 = vsub.s32 0, %v1518
      %v1520 = vrot.slane %v1156, %v1519
      %v1521 = vlaneseq
      %v1522 = vshrl.u32 %v1521, 7
      %v1523 = vsub.s32 0, %v1522
      %v1524 = vrot.slane %v1157, %v1523
      %v1525 = vlaneseq
      %v1526 = vshrl.u32 %v1525, 7
      %v1527 = vsub.s32 0, %v1526
      %v1528 = vrot.slane %v1158, %v1527
      %v1529 = vlaneseq
      %v1530 = vshrl.u32 %v1529, 7
      %v1531 = vsub.s32 0, %v1530
      %v1532 = vrot.slane %v1159, %v1531
      %v1533 = vlaneseq
      %v1534 = vshrl.u32 %v1533, 7
      %v1535 = vsub.s32 0, %v1534
      %v1536 = vrot.slane %v1160, %v1535
      %v1537 = vlaneseq
      %v1538 = vshrl.u32 %v1537, 7
      %v1539 = vsub.s32 0, %v1538
      %v1540 = vrot.slane %v1161, %v1539
      %v1541 = vlaneseq
      %v1542 = vshrl.u32 %v1541, 7
      %v1543 = vsub.s32 0, %v1542
      %v1544 = vrot.slane %v1162, %v1543
      %v1545 = vlaneseq
      %v1546 = vshrl.u32 %v1545, 7
      %v1547 = vsub.s32 0, %v1546
      %v1548 = vrot.slane %v1163, %v1547
      %v1549 = vlaneseq
      %v1550 = vshrl.u32 %v1549, 7
      %v1551 = vsub.s32 0, %v1550
      %v1552 = vrot.slane %v1164, %v1551
      %v1553 = vlaneseq
      %v1554 = vshrl.u32 %v1553, 7
      %v1555 = vsub.s32 0, %v1554
      %v1556 = vrot.slane %v1165, %v1555
      %v1557 = vlaneseq
      %v1558 = vshrl.u32 %v1557, 7
      %v1559 = vsub.s32 0, %v1558
      %v1560 = vrot.slane %v1166, %v1559
      %v1561 = vlaneseq
      %v1562 = vshrl.u32 %v1561, 7
      %v1563 = vsub.s32 0, %v1562
      %v1564 = vrot.slane %v1167, %v1563
      %v1565 = vlaneseq
      %v1566 = vshrl.u32 %v1565, 7
      %v1567 = vsub.s32 0, %v1566
      %v1568 = vrot.slane %v1168, %v1567
      %v1569 = vlaneseq
      %v1570 = vshrl.u32 %v1569, 7
      %v1571 = vsub.s32 0, %v1570
      %v1572 = vrot.slane %v1169, %v1571
      %v1573 = vlaneseq
      %v1574 = vshrl.u32 %v1573, 7
      %v1575 = vsub.s32 0, %v1574
      %v1576 = vrot.slane %v1170, %v1575
      %v1577 = vlaneseq
      %v1578 = vshrl.u32 %v1577, 7
      %v1579 = vsub.s32 0, %v1578
      %v1580 = vrot.slane %v1171, %v1579
      %v1581 = vlaneseq
      %v1582 = vshrl.u32 %v1581, 7
      %v1583 = vsub.s32 0, %v1582
      %v1584 = vrot.slane %v1172, %v1583
      %v1585 = vlaneseq
      %v1586 = vshrl.u32 %v1585, 7
      %v1587 = vsub.s32 0, %v1586
      %v1588 = vrot.slane %v1173, %v1587
      %v1589 = vlaneseq
      %v1590 = vshrl.u32 %v1589, 7
      %v1591 = vsub.s32 0, %v1590
      %v1592 = vrot.slane %v1174, %v1591
      %v1593 = vlaneseq
      %v1594 = vshrl.u32 %v1593, 7
      %v1595 = vsub.s32 0, %v1594
      %v1596 = vrot.slane %v1175, %v1595
      %v1597 = vlaneseq
      %v1598 = vshrl.u32 %v1597, 7
      %v1599 = vsub.s32 0, %v1598
      %v1600 = vrot.slane %v1176, %v1599
      %v1601 = vlaneseq
      %v1602 = vshrl.u32 %v1601, 7
      %v1603 = vsub.s32 0, %v1602
      %v1604 = vrot.slane %v1177, %v1603
      %v1605 = vlaneseq
      %v1606 = vshrl.u32 %v1605, 7
      %v1607 = vsub.s32 0, %v1606
      %v1608 = vrot.slane %v1178, %v1607
      %v1609 = vlaneseq
      %v1610 = vshrl.u32 %v1609, 7
      %v1611 = vsub.s32 0, %v1610
      %v1612 = vrot.slane %v1179, %v1611
      %v1613 = vlaneseq
      %v1614 = vshrl.u32 %v1613, 7
      %v1615 = vsub.s32 0, %v1614
      %v1616 = vrot.slane %v1180, %v1615
      %v1617 = vlaneseq
      %v1618 = vshrl.u32 %v1617, 7
      %v1619 = vsub.s32 0, %v1618
      %v1620 = vrot.slane %v1181, %v1619
      %v1621 = vlaneseq
      %v1622 = vshrl.u32 %v1621, 7
      %v1623 = vsub.s32 0, %v1622
      %v1624 = vrot.slane %v1182, %v1623
      %v1625 = vlaneseq
      %v1626 = vshrl.u32 %v1625, 7
      %v1627 = vsub.s32 0, %v1626
      %v1628 = vrot.slane %v1183, %v1627
      %v1629 = vlaneseq
      %v1630 = vshrl.u32 %v1629, 7
      %v1631 = vsub.s32 0, %v1630
      %v1632 = vrot.slane %v1184, %v1631
      %v1633 = vlaneseq
      %v1634 = vshrl.u32 %v1633, 7
      %v1635 = vsub.s32 0, %v1634
      %v1636 = vrot.slane %v1185, %v1635
      %v1637 = vlaneseq
      %v1638 = vshrl.u32 %v1637, 7
      %v1639 = vsub.s32 0, %v1638
      %v1640 = vrot.slane %v1186, %v1639
      %v1641 = vlaneseq
      %v1642 = vshrl.u32 %v1641, 7
      %v1643 = vsub.s32 0, %v1642
      %v1644 = vrot.slane %v1187, %v1643
      %v1645 = vlaneseq
      %v1646 = vshrl.u32 %v1645, 7
      %v1647 = vsub.s32 0, %v1646
      %v1648 = vrot.slane %v1188, %v1647
      %v1649 = vlaneseq
      %v1650 = vshrl.u32 %v1649, 7
      %v1651 = vsub.s32 0, %v1650
      %v1652 = vrot.slane %v1189, %v1651
      %v1653 = vlaneseq
      %v1654 = vshrl.u32 %v1653, 7
      %v1655 = vsub.s32 0, %v1654
      %v1656 = vrot.slane %v1190, %v1655
      %v1657 = vlaneseq
      %v1658 = vshrl.u32 %v1657, 7
      %v1659 = vsub.s32 0, %v1658
      %v1660 = vrot.slane %v1191, %v1659
      %v1661 = vlaneseq
      %v1662 = vshrl.u32 %v1661, 7
      %v1663 = vsub.s32 0, %v1662
      %v1664 = vrot.slane %v1192, %v1663
      %v1665 = vlaneseq
      %v1666 = vshrl.u32 %v1665, 7
      %v1667 = vsub.s32 0, %v1666
      %v1668 = vrot.slane %v1193, %v1667
      %v1669 = vlaneseq
      %v1670 = vshrl.u32 %v1669, 7
      %v1671 = vsub.s32 0, %v1670
      %v1672 = vrot.slane %v1194, %v1671
      %v1673 = vlaneseq
      %v1674 = vshrl.u32 %v1673, 7
      %v1675 = vsub.s32 0, %v1674
      %v1676 = vrot.slane %v1195, %v1675
      %v1677 = vlaneseq
      %v1678 = vshrl.u32 %v1677, 7
      %v1679 = vsub.s32 0, %v1678
      %v1680 = vrot.slane %v1196, %v1679
      %v1681 = vlaneseq
      %v1682 = vshrl.u32 %v1681, 7
      %v1683 = vsub.s32 0, %v1682
      %v1684 = vrot.slane %v1197, %v1683
      %v1685 = vlaneseq
      %v1686 = vshrl.u32 %v1685, 7
      %v1687 = vsub.s32 0, %v1686
      %v1688 = vrot.slane %v1198, %v1687
      %v1689 = vlaneseq
      %v1690 = vshrl.u32 %v1689, 7
      %v1691 = vsub.s32 0, %v1690
      %v1692 = vrot.slane %v1199, %v1691
      %v1693 = vlaneseq
      %v1694 = vshrl.u32 %v1693, 7
      %v1695 = vsub.s32 0, %v1694
      %v1696 = vrot.slane %v1200, %v1695
      %v1697 = vlaneseq
      %v1698 = vshrl.u32 %v1697, 7
      %v1699 = vsub.s32 0, %v1698
      %v1700 = vrot.slane %v1201, %v1699
      %v1701 = vlaneseq
      %v1702 = vshrl.u32 %v1701, 7
      %v1703 = vsub.s32 0, %v1702
      %v1704 = vrot.slane %v1202, %v1703
      %v1705 = vlaneseq
      %v1706 = vshrl.u32 %v1705, 7
      %v1707 = vsub.s32 0, %v1706
      %v1708 = vrot.slane %v1203, %v1707
      %v1709 = vlaneseq
      %v1710 = vshrl.u32 %v1709, 7
      %v1711 = vsub.s32 0, %v1710
      %v1712 = vrot.slane %v1204, %v1711
      %v1713 = vlaneseq
      %v1714 = vshrl.u32 %v1713, 7
      %v1715 = vsub.s32 0, %v1714
      %v1716 = vrot.slane %v1205, %v1715
      %v1717 = vlaneseq
      %v1718 = vshrl.u32 %v1717, 7
      %v1719 = vsub.s32 0, %v1718
      %v1720 = vrot.slane %v1206, %v1719
      %v1721 = vlaneseq
      %v1722 = vshrl.u32 %v1721, 7
      %v1723 = vsub.s32 0, %v1722
      %v1724 = vrot.slane %v1207, %v1723
      %v1725 = vlaneseq
      %v1726 = vshrl.u32 %v1725, 7
      %v1727 = vsub.s32 0, %v1726
      %v1728 = vrot.slane %v1208, %v1727
      %v1729 = vlaneseq
      %v1730 = vshrl.u32 %v1729, 7
      %v1731 = vsub.s32 0, %v1730
      %v1732 = vrot.slane %v1209, %v1731
      %v1733 = vlaneseq
      %v1734 = vshrl.u32 %v1733, 7
      %v1735 = vsub.s32 0, %v1734
      %v1736 = vrot.slane %v1210, %v1735
      %v1737 = vlaneseq
      %v1738 = vshrl.u32 %v1737, 7
      %v1739 = vsub.s32 0, %v1738
      %v1740 = vrot.slane %v1211, %v1739
      %v1741 = vlaneseq
      %v1742 = vshrl.u32 %v1741, 7
      %v1743 = vsub.s32 0, %v1742
      %v1744 = vrot.slane %v1212, %v1743
      %v1745 = vlaneseq
      %v1746 = vshrl.u32 %v1745, 7
      %v1747 = vsub.s32 0, %v1746
      %v1748 = vrot.slane %v1213, %v1747
      %v1749 = vlaneseq
      %v1750 = vshrl.u32 %v1749, 7
      %v1751 = vsub.s32 0, %v1750
      %v1752 = vrot.slane %v1214, %v1751
      %v1753 = vlaneseq
      %v1754 = vshrl.u32 %v1753, 7
      %v1755 = vsub.s32 0, %v1754
      %v1756 = vrot.slane %v1215, %v1755
      %v1757 = vlaneseq
      %v1758 = vshrl.u32 %v1757, 7
      %v1759 = vsub.s32 0, %v1758
      %v1760 = vrot.slane %v1216, %v1759
      %v1761 = vlaneseq
      %v1762 = vshrl.u32 %v1761, 7
      %v1763 = vsub.s32 0, %v1762
      %v1764 = vrot.slane %v1217, %v1763
      %v1765 = vlaneseq
      %v1766 = vshrl.u32 %v1765, 7
      %v1767 = vsub.s32 0, %v1766
      %v1768 = vrot.slane %v1218, %v1767
      %v1769 = vlaneseq
      %v1770 = vshrl.u32 %v1769, 7
      %v1771 = vsub.s32 0, %v1770
      %v1772 = vrot.slane %v1219, %v1771
      %v1773 = vlaneseq
      %v1774 = vshrl.u32 %v1773, 7
      %v1775 = vsub.s32 0, %v1774
      %v1776 = vrot.slane %v1220, %v1775
      %v1777 = vlaneseq
      %v1778 = vshrl.u32 %v1777, 7
      %v1779 = vsub.s32 0, %v1778
      %v1780 = vrot.slane %v1221, %v1779
      %v1781 = vlaneseq
      %v1782 = vshrl.u32 %v1781, 7
      %v1783 = vsub.s32 0, %v1782
      %v1784 = vrot.slane %v1222, %v1783
      %v1785 = vlaneseq
      %v1786 = vshrl.u32 %v1785, 7
      %v1787 = vsub.s32 0, %v1786
      %v1788 = vrot.slane %v1223, %v1787
      %v1789 = vlaneseq
      %v1790 = vshrl.u32 %v1789, 7
      %v1791 = vsub.s32 0, %v1790
      %v1792 = vrot.slane %v1224, %v1791
      %v1793 = vlaneseq
      %v1794 = vshrl.u32 %v1793, 7
      %v1795 = vsub.s32 0, %v1794
      %v1796 = vrot.slane %v1225, %v1795
      %v1797 = vlaneseq
      %v1798 = vshrl.u32 %v1797, 7
      %v1799 = vsub.s32 0, %v1798
      %v1800 = vrot.slane %v1226, %v1799
      %v1801 = vlaneseq
      %v1802 = vshrl.u32 %v1801, 7
      %v1803 = vsub.s32 0, %v1802
      %v1804 = vrot.slane %v1227, %v1803
      %v1805 = vlaneseq
      %v1806 = vshrl.u32 %v1805, 7
      %v1807 = vsub.s32 0, %v1806
      %v1808 = vrot.slane %v1228, %v1807
      %v1809 = vlaneseq
      %v1810 = vshrl.u32 %v1809, 7
      %v1811 = vsub.s32 0, %v1810
      %v1812 = vrot.slane %v1229, %v1811
      %v1813 = vlaneseq
      %v1814 = vshrl.u32 %v1813, 7
      %v1815 = vsub.s32 0, %v1814
      %v1816 = vrot.slane %v1230, %v1815
      %v1817 = vlaneseq
      %v1818 = vshrl.u32 %v1817, 7
      %v1819 = vsub.s32 0, %v1818
      %v1820 = vrot.slane %v1231, %v1819
      %v1821 = vlaneseq
      %v1822 = vshrl.u32 %v1821, 7
      %v1823 = vsub.s32 0, %v1822
      %v1824 = vrot.slane %v1232, %v1823
      %v1825 = vlaneseq
      %v1826 = vshrl.u32 %v1825, 7
      %v1827 = vsub.s32 0, %v1826
      %v1828 = vrot.slane %v1233, %v1827
      %v1829 = vlaneseq
      %v1830 = vshrl.u32 %v1829, 7
      %v1831 = vsub.s32 0, %v1830
      %v1832 = vrot.slane %v1234, %v1831
      %v1833 = vlaneseq
      %v1834 = vshrl.u32 %v1833, 7
      %v1835 = vsub.s32 0, %v1834
      %v1836 = vrot.slane %v1235, %v1835
      %v1837 = vlaneseq
      %v1838 = vshrl.u32 %v1837, 7
      %v1839 = vsub.s32 0, %v1838
      %v1840 = vrot.slane %v1236, %v1839
      %v1841 = vlaneseq
      %v1842 = vshrl.u32 %v1841, 7
      %v1843 = vsub.s32 0, %v1842
      %v1844 = vrot.slane %v1237, %v1843
      %v1845 = vlaneseq
      %v1846 = vshrl.u32 %v1845, 7
      %v1847 = vsub.s32 0, %v1846
      %v1848 = vrot.slane %v1238, %v1847
      %v1849 = vlaneseq
      %v1850 = vshrl.u32 %v1849, 7
      %v1851 = vsub.s32 0, %v1850
      %v1852 = vrot.slane %v1239, %v1851
      %v1853 = vlaneseq
      %v1854 = vshrl.u32 %v1853, 7
      %v1855 = vsub.s32 0, %v1854
      %v1856 = vrot.slane %v1240, %v1855
      %v1857 = vlaneseq
      %v1858 = vshrl.u32 %v1857, 7
      %v1859 = vsub.s32 0, %v1858
      %v1860 = vrot.slane %v1241, %v1859
      %v1861 = vlaneseq
      %v1862 = vshrl.u32 %v1861, 7
      %v1863 = vsub.s32 0, %v1862
      %v1864 = vrot.slane %v1242, %v1863
      %v1865 = vlaneseq
      %v1866 = vshrl.u32 %v1865, 7
      %v1867 = vsub.s32 0, %v1866
      %v1868 = vrot.slane %v1243, %v1867
      %v1869 = vlaneseq
      %v1870 = vshrl.u32 %v1869, 7
      %v1871 = vsub.s32 0, %v1870
      %v1872 = vrot.slane %v1244, %v1871
      %v1873 = vlaneseq
      %v1874 = vshrl.u32 %v1873, 7
      %v1875 = vsub.s32 0, %v1874
      %v1876 = vrot.slane %v1245, %v1875
      %v1877 = vlaneseq
      %v1878 = vshrl.u32 %v1877, 7
      %v1879 = vsub.s32 0, %v1878
      %v1880 = vrot.slane %v1246, %v1879
      %v1881 = vlaneseq
      %v1882 = vshrl.u32 %v1881, 7
      %v1883 = vsub.s32 0, %v1882
      %v1884 = vrot.slane %v1247, %v1883
      %v1885 = vlaneseq
      %v1886 = vshrl.u32 %v1885, 7
      %v1887 = vsub.s32 0, %v1886
      %v1888 = vrot.slane %v1248, %v1887
      %v1890 = vpack.i.b16 %v1252, %v1252
      %v1892 = vlaneseq
      %v1893 = vshrl.u32 %v1892, 7
      %v1894 = vsub.s32 0, %v1893
      %v1895 = vrot.slane %v1890, %v1894
      %v1897 = vpack.i.b16 %v1256, %v1256
      %v1899 = vlaneseq
      %v1900 = vshrl.u32 %v1899, 7
      %v1901 = vsub.s32 0, %v1900
      %v1902 = vrot.slane %v1897, %v1901
      %v1904 = vpack.i.b16 %v1260, %v1260
      %v1906 = vlaneseq
      %v1907 = vshrl.u32 %v1906, 7
      %v1908 = vsub.s32 0, %v1907
      %v1909 = vrot.slane %v1904, %v1908
      %v1911 = vpack.i.b16 %v1264, %v1264
      %v1913 = vlaneseq
      %v1914 = vshrl.u32 %v1913, 7
      %v1915 = vsub.s32 0, %v1914
      %v1916 = vrot.slane %v1911, %v1915
      %v1918 = vpack.i.b16 %v1268, %v1268
      %v1920 = vlaneseq
      %v1921 = vshrl.u32 %v1920, 7
      %v1922 = vsub.s32 0, %v1921
      %v1923 = vrot.slane %v1918, %v1922
      %v1925 = vpack.i.b16 %v1272, %v1272
      %v1927 = vlaneseq
      %v1928 = vshrl.u32 %v1927, 7
      %v1929 = vsub.s32 0, %v1928
      %v1930 = vrot.slane %v1925, %v1929
      %v1932 = vpack.i.b16 %v1276, %v1276
      %v1934 = vlaneseq
      %v1935 = vshrl.u32 %v1934, 7
      %v1936 = vsub.s32 0, %v1935
      %v1937 = vrot.slane %v1932, %v1936
      %v1939 = vpack.i.b16 %v1280, %v1280
      %v1941 = vlaneseq
      %v1942 = vshrl.u32 %v1941, 7
      %v1943 = vsub.s32 0, %v1942
      %v1944 = vrot.slane %v1939, %v1943
      %v1946 = vpack.i.b16 %v1284, %v1284
      %v1948 = vlaneseq
      %v1949 = vshrl.u32 %v1948, 7
      %v1950 = vsub.s32 0, %v1949
      %v1951 = vrot.slane %v1946, %v1950
      %v1953 = vpack.i.b16 %v1288, %v1288
      %v1955 = vlaneseq
      %v1956 = vshrl.u32 %v1955, 7
      %v1957 = vsub.s32 0, %v1956
      %v1958 = vrot.slane %v1953, %v1957
      %v1960 = vpack.i.b16 %v1292, %v1292
      %v1962 = vlaneseq
      %v1963 = vshrl.u32 %v1962, 7
      %v1964 = vsub.s32 0, %v1963
      %v1965 = vrot.slane %v1960, %v1964
      %v1967 = vpack.i.b16 %v1296, %v1296
      %v1969 = vlaneseq
      %v1970 = vshrl.u32 %v1969, 7
      %v1971 = vsub.s32 0, %v1970
      %v1972 = vrot.slane %v1967, %v1971
      %v1974 = vpack.i.b16 %v1300, %v1300
      %v1976 = vlaneseq
      %v1977 = vshrl.u32 %v1976, 7
      %v1978 = vsub.s32 0, %v1977
      %v1979 = vrot.slane %v1974, %v1978
      %v1981 = vpack.i.b16 %v1304, %v1304
      %v1983 = vlaneseq
      %v1984 = vshrl.u32 %v1983, 7
      %v1985 = vsub.s32 0, %v1984
      %v1986 = vrot.slane %v1981, %v1985
      %v1988 = vpack.i.b16 %v1308, %v1308
      %v1990 = vlaneseq
      %v1991 = vshrl.u32 %v1990, 7
      %v1992 = vsub.s32 0, %v1991
      %v1993 = vrot.slane %v1988, %v1992
      %v1995 = vpack.i.b16 %v1312, %v1312
      %v1997 = vlaneseq
      %v1998 = vshrl.u32 %v1997, 7
      %v1999 = vsub.s32 0, %v1998
      %v2000 = vrot.slane %v1995, %v1999
      %v2002 = vpack.i.b16 %v1316, %v1316
      %v2004 = vlaneseq
      %v2005 = vshrl.u32 %v2004, 7
      %v2006 = vsub.s32 0, %v2005
      %v2007 = vrot.slane %v2002, %v2006
      %v2009 = vpack.i.b16 %v1320, %v1320
      %v2011 = vlaneseq
      %v2012 = vshrl.u32 %v2011, 7
      %v2013 = vsub.s32 0, %v2012
      %v2014 = vrot.slane %v2009, %v2013
      %v2016 = vpack.i.b16 %v1324, %v1324
      %v2018 = vlaneseq
      %v2019 = vshrl.u32 %v2018, 7
      %v2020 = vsub.s32 0, %v2019
      %v2021 = vrot.slane %v2016, %v2020
      %v2023 = vpack.i.b16 %v1328, %v1328
      %v2025 = vlaneseq
      %v2026 = vshrl.u32 %v2025, 7
      %v2027 = vsub.s32 0, %v2026
      %v2028 = vrot.slane %v2023, %v2027
      %v2030 = vpack.i.b16 %v1332, %v1332
      %v2032 = vlaneseq
      %v2033 = vshrl.u32 %v2032, 7
      %v2034 = vsub.s32 0, %v2033
      %v2035 = vrot.slane %v2030, %v2034
      %v2037 = vpack.i.b16 %v1336, %v1336
      %v2039 = vlaneseq
      %v2040 = vshrl.u32 %v2039, 7
      %v2041 = vsub.s32 0, %v2040
      %v2042 = vrot.slane %v2037, %v2041
      %v2044 = vpack.i.b16 %v1340, %v1340
      %v2046 = vlaneseq
      %v2047 = vshrl.u32 %v2046, 7
      %v2048 = vsub.s32 0, %v2047
      %v2049 = vrot.slane %v2044, %v2048
      %v2051 = vpack.i.b16 %v1344, %v1344
      %v2053 = vlaneseq
      %v2054 = vshrl.u32 %v2053, 7
      %v2055 = vsub.s32 0, %v2054
      %v2056 = vrot.slane %v2051, %v2055
      %v2058 = vpack.i.b16 %v1348, %v1348
      %v2060 = vlaneseq
      %v2061 = vshrl.u32 %v2060, 7
      %v2062 = vsub.s32 0, %v2061
      %v2063 = vrot.slane %v2058, %v2062
      %v2065 = vpack.i.b16 %v1352, %v1352
      %v2067 = vlaneseq
      %v2068 = vshrl.u32 %v2067, 7
      %v2069 = vsub.s32 0, %v2068
      %v2070 = vrot.slane %v2065, %v2069
      %v2072 = vpack.i.b16 %v1356, %v1356
      %v2074 = vlaneseq
      %v2075 = vshrl.u32 %v2074, 7
      %v2076 = vsub.s32 0, %v2075
      %v2077 = vrot.slane %v2072, %v2076
      %v2079 = vpack.i.b16 %v1360, %v1360
      %v2081 = vlaneseq
      %v2082 = vshrl.u32 %v2081, 7
      %v2083 = vsub.s32 0, %v2082
      %v2084 = vrot.slane %v2079, %v2083
      %v2086 = vpack.i.b16 %v1364, %v1364
      %v2088 = vlaneseq
      %v2089 = vshrl.u32 %v2088, 7
      %v2090 = vsub.s32 0, %v2089
      %v2091 = vrot.slane %v2086, %v2090
      %v2093 = vpack.i.b16 %v1368, %v1368
      %v2095 = vlaneseq
      %v2096 = vshrl.u32 %v2095, 7
      %v2097 = vsub.s32 0, %v2096
      %v2098 = vrot.slane %v2093, %v2097
      %v2100 = vpack.i.b16 %v1372, %v1372
      %v2102 = vlaneseq
      %v2103 = vshrl.u32 %v2102, 7
      %v2104 = vsub.s32 0, %v2103
      %v2105 = vrot.slane %v2100, %v2104
      %v2107 = vpack.i.b16 %v1376, %v1376
      %v2109 = vlaneseq
      %v2110 = vshrl.u32 %v2109, 7
      %v2111 = vsub.s32 0, %v2110
      %v2112 = vrot.slane %v2107, %v2111
      %v2114 = vpack.i.b16 %v1380, %v1380
      %v2116 = vlaneseq
      %v2117 = vshrl.u32 %v2116, 7
      %v2118 = vsub.s32 0, %v2117
      %v2119 = vrot.slane %v2114, %v2118
      %v2121 = vpack.i.b16 %v1384, %v1384
      %v2123 = vlaneseq
      %v2124 = vshrl.u32 %v2123, 7
      %v2125 = vsub.s32 0, %v2124
      %v2126 = vrot.slane %v2121, %v2125
      %v2128 = vpack.i.b16 %v1388, %v1388
      %v2130 = vlaneseq
      %v2131 = vshrl.u32 %v2130, 7
      %v2132 = vsub.s32 0, %v2131
      %v2133 = vrot.slane %v2128, %v2132
      %v2135 = vpack.i.b16 %v1392, %v1392
      %v2137 = vlaneseq
      %v2138 = vshrl.u32 %v2137, 7
      %v2139 = vsub.s32 0, %v2138
      %v2140 = vrot.slane %v2135, %v2139
      %v2142 = vpack.i.b16 %v1396, %v1396
      %v2144 = vlaneseq
      %v2145 = vshrl.u32 %v2144, 7
      %v2146 = vsub.s32 0, %v2145
      %v2147 = vrot.slane %v2142, %v2146
      %v2149 = vpack.i.b16 %v1400, %v1400
      %v2151 = vlaneseq
      %v2152 = vshrl.u32 %v2151, 7
      %v2153 = vsub.s32 0, %v2152
      %v2154 = vrot.slane %v2149, %v2153
      %v2156 = vpack.i.b16 %v1404, %v1404
      %v2158 = vlaneseq
      %v2159 = vshrl.u32 %v2158, 7
      %v2160 = vsub.s32 0, %v2159
      %v2161 = vrot.slane %v2156, %v2160
      %v2163 = vpack.i.b16 %v1408, %v1408
      %v2165 = vlaneseq
      %v2166 = vshrl.u32 %v2165, 7
      %v2167 = vsub.s32 0, %v2166
      %v2168 = vrot.slane %v2163, %v2167
      %v2170 = vpack.i.b16 %v1412, %v1412
      %v2172 = vlaneseq
      %v2173 = vshrl.u32 %v2172, 7
      %v2174 = vsub.s32 0, %v2173
      %v2175 = vrot.slane %v2170, %v2174
      %v2177 = vpack.i.b16 %v1416, %v1416
      %v2179 = vlaneseq
      %v2180 = vshrl.u32 %v2179, 7
      %v2181 = vsub.s32 0, %v2180
      %v2182 = vrot.slane %v2177, %v2181
      %v2184 = vpack.i.b16 %v1420, %v1420
      %v2186 = vlaneseq
      %v2187 = vshrl.u32 %v2186, 7
      %v2188 = vsub.s32 0, %v2187
      %v2189 = vrot.slane %v2184, %v2188
      %v2191 = vpack.i.b16 %v1424, %v1424
      %v2193 = vlaneseq
      %v2194 = vshrl.u32 %v2193, 7
      %v2195 = vsub.s32 0, %v2194
      %v2196 = vrot.slane %v2191, %v2195
      %v2198 = vpack.i.b16 %v1428, %v1428
      %v2200 = vlaneseq
      %v2201 = vshrl.u32 %v2200, 7
      %v2202 = vsub.s32 0, %v2201
      %v2203 = vrot.slane %v2198, %v2202
      %v2205 = vpack.i.b16 %v1432, %v1432
      %v2207 = vlaneseq
      %v2208 = vshrl.u32 %v2207, 7
      %v2209 = vsub.s32 0, %v2208
      %v2210 = vrot.slane %v2205, %v2209
      %v2212 = vpack.i.b16 %v1436, %v1436
      %v2214 = vlaneseq
      %v2215 = vshrl.u32 %v2214, 7
      %v2216 = vsub.s32 0, %v2215
      %v2217 = vrot.slane %v2212, %v2216
      %v2219 = vpack.i.b16 %v1440, %v1440
      %v2221 = vlaneseq
      %v2222 = vshrl.u32 %v2221, 7
      %v2223 = vsub.s32 0, %v2222
      %v2224 = vrot.slane %v2219, %v2223
      %v2226 = vpack.i.b16 %v1444, %v1444
      %v2228 = vlaneseq
      %v2229 = vshrl.u32 %v2228, 7
      %v2230 = vsub.s32 0, %v2229
      %v2231 = vrot.slane %v2226, %v2230
      %v2233 = vpack.i.b16 %v1448, %v1448
      %v2235 = vlaneseq
      %v2236 = vshrl.u32 %v2235, 7
      %v2237 = vsub.s32 0, %v2236
      %v2238 = vrot.slane %v2233, %v2237
      %v2240 = vpack.i.b16 %v1452, %v1452
      %v2242 = vlaneseq
      %v2243 = vshrl.u32 %v2242, 7
      %v2244 = vsub.s32 0, %v2243
      %v2245 = vrot.slane %v2240, %v2244
      %v2247 = vpack.i.b16 %v1456, %v1456
      %v2249 = vlaneseq
      %v2250 = vshrl.u32 %v2249, 7
      %v2251 = vsub.s32 0, %v2250
      %v2252 = vrot.slane %v2247, %v2251
      %v2254 = vpack.i.b16 %v1460, %v1460
      %v2256 = vlaneseq
      %v2257 = vshrl.u32 %v2256, 7
      %v2258 = vsub.s32 0, %v2257
      %v2259 = vrot.slane %v2254, %v2258
      %v2261 = vpack.i.b16 %v1464, %v1464
      %v2263 = vlaneseq
      %v2264 = vshrl.u32 %v2263, 7
      %v2265 = vsub.s32 0, %v2264
      %v2266 = vrot.slane %v2261, %v2265
      %v2268 = vpack.i.b16 %v1468, %v1468
      %v2270 = vlaneseq
      %v2271 = vshrl.u32 %v2270, 7
      %v2272 = vsub.s32 0, %v2271
      %v2273 = vrot.slane %v2268, %v2272
      %v2275 = vpack.i.b16 %v1472, %v1472
      %v2277 = vlaneseq
      %v2278 = vshrl.u32 %v2277, 7
      %v2279 = vsub.s32 0, %v2278
      %v2280 = vrot.slane %v2275, %v2279
      %v2282 = vpack.i.b16 %v1476, %v1476
      %v2284 = vlaneseq
      %v2285 = vshrl.u32 %v2284, 7
      %v2286 = vsub.s32 0, %v2285
      %v2287 = vrot.slane %v2282, %v2286
      %v2289 = vpack.i.b16 %v1480, %v1480
      %v2291 = vlaneseq
      %v2292 = vshrl.u32 %v2291, 7
      %v2293 = vsub.s32 0, %v2292
      %v2294 = vrot.slane %v2289, %v2293
      %v2296 = vpack.i.b16 %v1484, %v1484
      %v2298 = vlaneseq
      %v2299 = vshrl.u32 %v2298, 7
      %v2300 = vsub.s32 0, %v2299
      %v2301 = vrot.slane %v2296, %v2300
      %v2303 = vpack.i.b16 %v1488, %v1488
      %v2305 = vlaneseq
      %v2306 = vshrl.u32 %v2305, 7
      %v2307 = vsub.s32 0, %v2306
      %v2308 = vrot.slane %v2303, %v2307
      %v2310 = vpack.i.b16 %v1492, %v1492
      %v2312 = vlaneseq
      %v2313 = vshrl.u32 %v2312, 7
      %v2314 = vsub.s32 0, %v2313
      %v2315 = vrot.slane %v2310, %v2314
      %v2317 = vpack.i.b16 %v1496, %v1496
      %v2319 = vlaneseq
      %v2320 = vshrl.u32 %v2319, 7
      %v2321 = vsub.s32 0, %v2320
      %v2322 = vrot.slane %v2317, %v2321
      %v2324 = vpack.i.b16 %v1500, %v1500
      %v2326 = vlaneseq
      %v2327 = vshrl.u32 %v2326, 7
      %v2328 = vsub.s32 0, %v2327
      %v2329 = vrot.slane %v2324, %v2328
      %v2331 = vpack.i.b16 %v1504, %v1504
      %v2333 = vlaneseq
      %v2334 = vshrl.u32 %v2333, 7
      %v2335 = vsub.s32 0, %v2334
      %v2336 = vrot.slane %v2331, %v2335
      %v2338 = vpack.i.b16 %v1508, %v1508
      %v2340 = vlaneseq
      %v2341 = vshrl.u32 %v2340, 7
      %v2342 = vsub.s32 0, %v2341
      %v2343 = vrot.slane %v2338, %v2342
      %v2345 = vpack.i.b16 %v1512, %v1512
      %v2347 = vlaneseq
      %v2348 = vshrl.u32 %v2347, 7
      %v2349 = vsub.s32 0, %v2348
      %v2350 = vrot.slane %v2345, %v2349
      %v2352 = vpack.i.b16 %v1516, %v1516
      %v2354 = vlaneseq
      %v2355 = vshrl.u32 %v2354, 7
      %v2356 = vsub.s32 0, %v2355
      %v2357 = vrot.slane %v2352, %v2356
      %v2359 = vpack.i.b16 %v1520, %v1520
      %v2361 = vlaneseq
      %v2362 = vshrl.u32 %v2361, 7
      %v2363 = vsub.s32 0, %v2362
      %v2364 = vrot.slane %v2359, %v2363
      %v2366 = vpack.i.b16 %v1524, %v1524
      %v2368 = vlaneseq
      %v2369 = vshrl.u32 %v2368, 7
      %v2370 = vsub.s32 0, %v2369
      %v2371 = vrot.slane %v2366, %v2370
      %v2373 = vpack.i.b16 %v1528, %v1528
      %v2375 = vlaneseq
      %v2376 = vshrl.u32 %v2375, 7
      %v2377 = vsub.s32 0, %v2376
      %v2378 = vrot.slane %v2373, %v2377
      %v2380 = vpack.i.b16 %v1532, %v1532
      %v2382 = vlaneseq
      %v2383 = vshrl.u32 %v2382, 7
      %v2384 = vsub.s32 0, %v2383
      %v2385 = vrot.slane %v2380, %v2384
      %v2387 = vpack.i.b16 %v1536, %v1536
      %v2389 = vlaneseq
      %v2390 = vshrl.u32 %v2389, 7
      %v2391 = vsub.s32 0, %v2390
      %v2392 = vrot.slane %v2387, %v2391
      %v2394 = vpack.i.b16 %v1540, %v1540
      %v2396 = vlaneseq
      %v2397 = vshrl.u32 %v2396, 7
      %v2398 = vsub.s32 0, %v2397
      %v2399 = vrot.slane %v2394, %v2398
      %v2401 = vpack.i.b16 %v1544, %v1544
      %v2403 = vlaneseq
      %v2404 = vshrl.u32 %v2403, 7
      %v2405 = vsub.s32 0, %v2404
      %v2406 = vrot.slane %v2401, %v2405
      %v2408 = vpack.i.b16 %v1548, %v1548
      %v2410 = vlaneseq
      %v2411 = vshrl.u32 %v2410, 7
      %v2412 = vsub.s32 0, %v2411
      %v2413 = vrot.slane %v2408, %v2412
      %v2415 = vpack.i.b16 %v1552, %v1552
      %v2417 = vlaneseq
      %v2418 = vshrl.u32 %v2417, 7
      %v2419 = vsub.s32 0, %v2418
      %v2420 = vrot.slane %v2415, %v2419
      %v2422 = vpack.i.b16 %v1556, %v1556
      %v2424 = vlaneseq
      %v2425 = vshrl.u32 %v2424, 7
      %v2426 = vsub.s32 0, %v2425
      %v2427 = vrot.slane %v2422, %v2426
      %v2429 = vpack.i.b16 %v1560, %v1560
      %v2431 = vlaneseq
      %v2432 = vshrl.u32 %v2431, 7
      %v2433 = vsub.s32 0, %v2432
      %v2434 = vrot.slane %v2429, %v2433
      %v2436 = vpack.i.b16 %v1564, %v1564
      %v2438 = vlaneseq
      %v2439 = vshrl.u32 %v2438, 7
      %v2440 = vsub.s32 0, %v2439
      %v2441 = vrot.slane %v2436, %v2440
      %v2443 = vpack.i.b16 %v1568, %v1568
      %v2445 = vlaneseq
      %v2446 = vshrl.u32 %v2445, 7
      %v2447 = vsub.s32 0, %v2446
      %v2448 = vrot.slane %v2443, %v2447
      %v2450 = vpack.i.b16 %v1572, %v1572
      %v2452 = vlaneseq
      %v2453 = vshrl.u32 %v2452, 7
      %v2454 = vsub.s32 0, %v2453
      %v2455 = vrot.slane %v2450, %v2454
      %v2457 = vpack.i.b16 %v1576, %v1576
      %v2459 = vlaneseq
      %v2460 = vshrl.u32 %v2459, 7
      %v2461 = vsub.s32 0, %v2460
      %v2462 = vrot.slane %v2457, %v2461
      %v2464 = vpack.i.b16 %v1580, %v1580
      %v2466 = vlaneseq
      %v2467 = vshrl.u32 %v2466, 7
      %v2468 = vsub.s32 0, %v2467
      %v2469 = vrot.slane %v2464, %v2468
      %v2471 = vpack.i.b16 %v1584, %v1584
      %v2473 = vlaneseq
      %v2474 = vshrl.u32 %v2473, 7
      %v2475 = vsub.s32 0, %v2474
      %v2476 = vrot.slane %v2471, %v2475
      %v2478 = vpack.i.b16 %v1588, %v1588
      %v2480 = vlaneseq
      %v2481 = vshrl.u32 %v2480, 7
      %v2482 = vsub.s32 0, %v2481
      %v2483 = vrot.slane %v2478, %v2482
      %v2485 = vpack.i.b16 %v1592, %v1592
      %v2487 = vlaneseq
      %v2488 = vshrl.u32 %v2487, 7
      %v2489 = vsub.s32 0, %v2488
      %v2490 = vrot.slane %v2485, %v2489
      %v2492 = vpack.i.b16 %v1596, %v1596
      %v2494 = vlaneseq
      %v2495 = vshrl.u32 %v2494, 7
      %v2496 = vsub.s32 0, %v2495
      %v2497 = vrot.slane %v2492, %v2496
      %v2499 = vpack.i.b16 %v1600, %v1600
      %v2501 = vlaneseq
      %v2502 = vshrl.u32 %v2501, 7
      %v2503 = vsub.s32 0, %v2502
      %v2504 = vrot.slane %v2499, %v2503
      %v2506 = vpack.i.b16 %v1604, %v1604
      %v2508 = vlaneseq
      %v2509 = vshrl.u32 %v2508, 7
      %v2510 = vsub.s32 0, %v2509
      %v2511 = vrot.slane %v2506, %v2510
      %v2513 = vpack.i.b16 %v1608, %v1608
      %v2515 = vlaneseq
      %v2516 = vshrl.u32 %v2515, 7
      %v2517 = vsub.s32 0, %v2516
      %v2518 = vrot.slane %v2513, %v2517
      %v2520 = vpack.i.b16 %v1612, %v1612
      %v2522 = vlaneseq
      %v2523 = vshrl.u32 %v2522, 7
      %v2524 = vsub.s32 0, %v2523
      %v2525 = vrot.slane %v2520, %v2524
      %v2527 = vpack.i.b16 %v1616, %v1616
      %v2529 = vlaneseq
      %v2530 = vshrl.u32 %v2529, 7
      %v2531 = vsub.s32 0, %v2530
      %v2532 = vrot.slane %v2527, %v2531
      %v2534 = vpack.i.b16 %v1620, %v1620
      %v2536 = vlaneseq
      %v2537 = vshrl.u32 %v2536, 7
      %v2538 = vsub.s32 0, %v2537
      %v2539 = vrot.slane %v2534, %v2538
      %v2541 = vpack.i.b16 %v1624, %v1624
      %v2543 = vlaneseq
      %v2544 = vshrl.u32 %v2543, 7
      %v2545 = vsub.s32 0, %v2544
      %v2546 = vrot.slane %v2541, %v2545
      %v2548 = vpack.i.b16 %v1628, %v1628
      %v2550 = vlaneseq
      %v2551 = vshrl.u32 %v2550, 7
      %v2552 = vsub.s32 0, %v2551
      %v2553 = vrot.slane %v2548, %v2552
      %v2555 = vpack.i.b16 %v1632, %v1632
      %v2557 = vlaneseq
      %v2558 = vshrl.u32 %v2557, 7
      %v2559 = vsub.s32 0, %v2558
      %v2560 = vrot.slane %v2555, %v2559
      %v2562 = vpack.i.b16 %v1636, %v1636
      %v2564 = vlaneseq
      %v2565 = vshrl.u32 %v2564, 7
      %v2566 = vsub.s32 0, %v2565
      %v2567 = vrot.slane %v2562, %v2566
      %v2569 = vpack.i.b16 %v1640, %v1640
      %v2571 = vlaneseq
      %v2572 = vshrl.u32 %v2571, 7
      %v2573 = vsub.s32 0, %v2572
      %v2574 = vrot.slane %v2569, %v2573
      %v2576 = vpack.i.b16 %v1644, %v1644
      %v2578 = vlaneseq
      %v2579 = vshrl.u32 %v2578, 7
      %v2580 = vsub.s32 0, %v2579
      %v2581 = vrot.slane %v2576, %v2580
      %v2583 = vpack.i.b16 %v1648, %v1648
      %v2585 = vlaneseq
      %v2586 = vshrl.u32 %v2585, 7
      %v2587 = vsub.s32 0, %v2586
      %v2588 = vrot.slane %v2583, %v2587
      %v2590 = vpack.i.b16 %v1652, %v1652
      %v2592 = vlaneseq
      %v2593 = vshrl.u32 %v2592, 7
      %v2594 = vsub.s32 0, %v2593
      %v2595 = vrot.slane %v2590, %v2594
      %v2597 = vpack.i.b16 %v1656, %v1656
      %v2599 = vlaneseq
      %v2600 = vshrl.u32 %v2599, 7
      %v2601 = vsub.s32 0, %v2600
      %v2602 = vrot.slane %v2597, %v2601
      %v2604 = vpack.i.b16 %v1660, %v1660
      %v2606 = vlaneseq
      %v2607 = vshrl.u32 %v2606, 7
      %v2608 = vsub.s32 0, %v2607
      %v2609 = vrot.slane %v2604, %v2608
      %v2611 = vpack.i.b16 %v1664, %v1664
      %v2613 = vlaneseq
      %v2614 = vshrl.u32 %v2613, 7
      %v2615 = vsub.s32 0, %v2614
      %v2616 = vrot.slane %v2611, %v2615
      %v2618 = vpack.i.b16 %v1668, %v1668
      %v2620 = vlaneseq
      %v2621 = vshrl.u32 %v2620, 7
      %v2622 = vsub.s32 0, %v2621
      %v2623 = vrot.slane %v2618, %v2622
      %v2625 = vpack.i.b16 %v1672, %v1672
      %v2627 = vlaneseq
      %v2628 = vshrl.u32 %v2627, 7
      %v2629 = vsub.s32 0, %v2628
      %v2630 = vrot.slane %v2625, %v2629
      %v2632 = vpack.i.b16 %v1676, %v1676
      %v2634 = vlaneseq
      %v2635 = vshrl.u32 %v2634, 7
      %v2636 = vsub.s32 0, %v2635
      %v2637 = vrot.slane %v2632, %v2636
      %v2639 = vpack.i.b16 %v1680, %v1680
      %v2641 = vlaneseq
      %v2642 = vshrl.u32 %v2641, 7
      %v2643 = vsub.s32 0, %v2642
      %v2644 = vrot.slane %v2639, %v2643
      %v2646 = vpack.i.b16 %v1684, %v1684
      %v2648 = vlaneseq
      %v2649 = vshrl.u32 %v2648, 7
      %v2650 = vsub.s32 0, %v2649
      %v2651 = vrot.slane %v2646, %v2650
      %v2653 = vpack.i.b16 %v1688, %v1688
      %v2655 = vlaneseq
      %v2656 = vshrl.u32 %v2655, 7
      %v2657 = vsub.s32 0, %v2656
      %v2658 = vrot.slane %v2653, %v2657
      %v2660 = vpack.i.b16 %v1692, %v1692
      %v2662 = vlaneseq
      %v2663 = vshrl.u32 %v2662, 7
      %v2664 = vsub.s32 0, %v2663
      %v2665 = vrot.slane %v2660, %v2664
      %v2667 = vpack.i.b16 %v1696, %v1696
      %v2669 = vlaneseq
      %v2670 = vshrl.u32 %v2669, 7
      %v2671 = vsub.s32 0, %v2670
      %v2672 = vrot.slane %v2667, %v2671
      %v2674 = vpack.i.b16 %v1700, %v1700
      %v2676 = vlaneseq
      %v2677 = vshrl.u32 %v2676, 7
      %v2678 = vsub.s32 0, %v2677
      %v2679 = vrot.slane %v2674, %v2678
      %v2681 = vpack.i.b16 %v1704, %v1704
      %v2683 = vlaneseq
      %v2684 = vshrl.u32 %v2683, 7
      %v2685 = vsub.s32 0, %v2684
      %v2686 = vrot.slane %v2681, %v2685
      %v2688 = vpack.i.b16 %v1708, %v1708
      %v2690 = vlaneseq
      %v2691 = vshrl.u32 %v2690, 7
      %v2692 = vsub.s32 0, %v2691
      %v2693 = vrot.slane %v2688, %v2692
      %v2695 = vpack.i.b16 %v1712, %v1712
      %v2697 = vlaneseq
      %v2698 = vshrl.u32 %v2697, 7
      %v2699 = vsub.s32 0, %v2698
      %v2700 = vrot.slane %v2695, %v2699
      %v2702 = vpack.i.b16 %v1716, %v1716
      %v2704 = vlaneseq
      %v2705 = vshrl.u32 %v2704, 7
      %v2706 = vsub.s32 0, %v2705
      %v2707 = vrot.slane %v2702, %v2706
      %v2709 = vpack.i.b16 %v1720, %v1720
      %v2711 = vlaneseq
      %v2712 = vshrl.u32 %v2711, 7
      %v2713 = vsub.s32 0, %v2712
      %v2714 = vrot.slane %v2709, %v2713
      %v2716 = vpack.i.b16 %v1724, %v1724
      %v2718 = vlaneseq
      %v2719 = vshrl.u32 %v2718, 7
      %v2720 = vsub.s32 0, %v2719
      %v2721 = vrot.slane %v2716, %v2720
      %v2723 = vpack.i.b16 %v1728, %v1728
      %v2725 = vlaneseq
      %v2726 = vshrl.u32 %v2725, 7
      %v2727 = vsub.s32 0, %v2726
      %v2728 = vrot.slane %v2723, %v2727
      %v2730 = vpack.i.b16 %v1732, %v1732
      %v2732 = vlaneseq
      %v2733 = vshrl.u32 %v2732, 7
      %v2734 = vsub.s32 0, %v2733
      %v2735 = vrot.slane %v2730, %v2734
      %v2737 = vpack.i.b16 %v1736, %v1736
      %v2739 = vlaneseq
      %v2740 = vshrl.u32 %v2739, 7
      %v2741 = vsub.s32 0, %v2740
      %v2742 = vrot.slane %v2737, %v2741
      %v2744 = vpack.i.b16 %v1740, %v1740
      %v2746 = vlaneseq
      %v2747 = vshrl.u32 %v2746, 7
      %v2748 = vsub.s32 0, %v2747
      %v2749 = vrot.slane %v2744, %v2748
      %v2751 = vpack.i.b16 %v1744, %v1744
      %v2753 = vlaneseq
      %v2754 = vshrl.u32 %v2753, 7
      %v2755 = vsub.s32 0, %v2754
      %v2756 = vrot.slane %v2751, %v2755
      %v2758 = vpack.i.b16 %v1748, %v1748
      %v2760 = vlaneseq
      %v2761 = vshrl.u32 %v2760, 7
      %v2762 = vsub.s32 0, %v2761
      %v2763 = vrot.slane %v2758, %v2762
      %v2765 = vpack.i.b16 %v1752, %v1752
      %v2767 = vlaneseq
      %v2768 = vshrl.u32 %v2767, 7
      %v2769 = vsub.s32 0, %v2768
      %v2770 = vrot.slane %v2765, %v2769
      %v2772 = vpack.i.b16 %v1756, %v1756
      %v2774 = vlaneseq
      %v2775 = vshrl.u32 %v2774, 7
      %v2776 = vsub.s32 0, %v2775
      %v2777 = vrot.slane %v2772, %v2776
      %v2779 = vpack.i.b16 %v1760, %v1760
      %v2781 = vlaneseq
      %v2782 = vshrl.u32 %v2781, 7
      %v2783 = vsub.s32 0, %v2782
      %v2784 = vrot.slane %v2779, %v2783
      %v2786 = vpack.i.b16 %v1764, %v1764
      %v2788 = vlaneseq
      %v2789 = vshrl.u32 %v2788, 7
      %v2790 = vsub.s32 0, %v2789
      %v2791 = vrot.slane %v2786, %v2790
      %v2793 = vpack.i.b16 %v1768, %v1768
      %v2795 = vlaneseq
      %v2796 = vshrl.u32 %v2795, 7
      %v2797 = vsub.s32 0, %v2796
      %v2798 = vrot.slane %v2793, %v2797
      %v2800 = vpack.i.b16 %v1772, %v1772
      %v2802 = vlaneseq
      %v2803 = vshrl.u32 %v2802, 7
      %v2804 = vsub.s32 0, %v2803
      %v2805 = vrot.slane %v2800, %v2804
      %v2807 = vpack.i.b16 %v1776, %v1776
      %v2809 = vlaneseq
      %v2810 = vshrl.u32 %v2809, 7
      %v2811 = vsub.s32 0, %v2810
      %v2812 = vrot.slane %v2807, %v2811
      %v2814 = vpack.i.b16 %v1780, %v1780
      %v2816 = vlaneseq
      %v2817 = vshrl.u32 %v2816, 7
      %v2818 = vsub.s32 0, %v2817
      %v2819 = vrot.slane %v2814, %v2818
      %v2821 = vpack.i.b16 %v1784, %v1784
      %v2823 = vlaneseq
      %v2824 = vshrl.u32 %v2823, 7
      %v2825 = vsub.s32 0, %v2824
      %v2826 = vrot.slane %v2821, %v2825
      %v2828 = vpack.i.b16 %v1788, %v1788
      %v2830 = vlaneseq
      %v2831 = vshrl.u32 %v2830, 7
      %v2832 = vsub.s32 0, %v2831
      %v2833 = vrot.slane %v2828, %v2832
      %v2835 = vpack.i.b16 %v1792, %v1792
      %v2837 = vlaneseq
      %v2838 = vshrl.u32 %v2837, 7
      %v2839 = vsub.s32 0, %v2838
      %v2840 = vrot.slane %v2835, %v2839
      %v2842 = vpack.i.b16 %v1796, %v1796
      %v2844 = vlaneseq
      %v2845 = vshrl.u32 %v2844, 7
      %v2846 = vsub.s32 0, %v2845
      %v2847 = vrot.slane %v2842, %v2846
      %v2849 = vpack.i.b16 %v1800, %v1800
      %v2851 = vlaneseq
      %v2852 = vshrl.u32 %v2851, 7
      %v2853 = vsub.s32 0, %v2852
      %v2854 = vrot.slane %v2849, %v2853
      %v2856 = vpack.i.b16 %v1804, %v1804
      %v2858 = vlaneseq
      %v2859 = vshrl.u32 %v2858, 7
      %v2860 = vsub.s32 0, %v2859
      %v2861 = vrot.slane %v2856, %v2860
      %v2863 = vpack.i.b16 %v1808, %v1808
      %v2865 = vlaneseq
      %v2866 = vshrl.u32 %v2865, 7
      %v2867 = vsub.s32 0, %v2866
      %v2868 = vrot.slane %v2863, %v2867
      %v2870 = vpack.i.b16 %v1812, %v1812
      %v2872 = vlaneseq
      %v2873 = vshrl.u32 %v2872, 7
      %v2874 = vsub.s32 0, %v2873
      %v2875 = vrot.slane %v2870, %v2874
      %v2877 = vpack.i.b16 %v1816, %v1816
      %v2879 = vlaneseq
      %v2880 = vshrl.u32 %v2879, 7
      %v2881 = vsub.s32 0, %v2880
      %v2882 = vrot.slane %v2877, %v2881
      %v2884 = vpack.i.b16 %v1820, %v1820
      %v2886 = vlaneseq
      %v2887 = vshrl.u32 %v2886, 7
      %v2888 = vsub.s32 0, %v2887
      %v2889 = vrot.slane %v2884, %v2888
      %v2891 = vpack.i.b16 %v1824, %v1824
      %v2893 = vlaneseq
      %v2894 = vshrl.u32 %v2893, 7
      %v2895 = vsub.s32 0, %v2894
      %v2896 = vrot.slane %v2891, %v2895
      %v2898 = vpack.i.b16 %v1828, %v1828
      %v2900 = vlaneseq
      %v2901 = vshrl.u32 %v2900, 7
      %v2902 = vsub.s32 0, %v2901
      %v2903 = vrot.slane %v2898, %v2902
      %v2905 = vpack.i.b16 %v1832, %v1832
      %v2907 = vlaneseq
      %v2908 = vshrl.u32 %v2907, 7
      %v2909 = vsub.s32 0, %v2908
      %v2910 = vrot.slane %v2905, %v2909
      %v2912 = vpack.i.b16 %v1836, %v1836
      %v2914 = vlaneseq
      %v2915 = vshrl.u32 %v2914, 7
      %v2916 = vsub.s32 0, %v2915
      %v2917 = vrot.slane %v2912, %v2916
      %v2919 = vpack.i.b16 %v1840, %v1840
      %v2921 = vlaneseq
      %v2922 = vshrl.u32 %v2921, 7
      %v2923 = vsub.s32 0, %v2922
      %v2924 = vrot.slane %v2919, %v2923
      %v2926 = vpack.i.b16 %v1844, %v1844
      %v2928 = vlaneseq
      %v2929 = vshrl.u32 %v2928, 7
      %v2930 = vsub.s32 0, %v2929
      %v2931 = vrot.slane %v2926, %v2930
      %v2933 = vpack.i.b16 %v1848, %v1848
      %v2935 = vlaneseq
      %v2936 = vshrl.u32 %v2935, 7
      %v2937 = vsub.s32 0, %v2936
      %v2938 = vrot.slane %v2933, %v2937
      %v2940 = vpack.i.b16 %v1852, %v1852
      %v2942 = vlaneseq
      %v2943 = vshrl.u32 %v2942, 7
      %v2944 = vsub.s32 0, %v2943
      %v2945 = vrot.slane %v2940, %v2944
      %v2947 = vpack.i.b16 %v1856, %v1856
      %v2949 = vlaneseq
      %v2950 = vshrl.u32 %v2949, 7
      %v2951 = vsub.s32 0, %v2950
      %v2952 = vrot.slane %v2947, %v2951
      %v2954 = vpack.i.b16 %v1860, %v1860
      %v2956 = vlaneseq
      %v2957 = vshrl.u32 %v2956, 7
      %v2958 = vsub.s32 0, %v2957
      %v2959 = vrot.slane %v2954, %v2958
      %v2961 = vpack.i.b16 %v1864, %v1864
      %v2963 = vlaneseq
      %v2964 = vshrl.u32 %v2963, 7
      %v2965 = vsub.s32 0, %v2964
      %v2966 = vrot.slane %v2961, %v2965
      %v2968 = vpack.i.b16 %v1868, %v1868
      %v2970 = vlaneseq
      %v2971 = vshrl.u32 %v2970, 7
      %v2972 = vsub.s32 0, %v2971
      %v2973 = vrot.slane %v2968, %v2972
      %v2975 = vpack.i.b16 %v1872, %v1872
      %v2977 = vlaneseq
      %v2978 = vshrl.u32 %v2977, 7
      %v2979 = vsub.s32 0, %v2978
      %v2980 = vrot.slane %v2975, %v2979
      %v2982 = vpack.i.b16 %v1876, %v1876
      %v2984 = vlaneseq
      %v2985 = vshrl.u32 %v2984, 7
      %v2986 = vsub.s32 0, %v2985
      %v2987 = vrot.slane %v2982, %v2986
      %v2989 = vpack.i.b16 %v1880, %v1880
      %v2991 = vlaneseq
      %v2992 = vshrl.u32 %v2991, 7
      %v2993 = vsub.s32 0, %v2992
      %v2994 = vrot.slane %v2989, %v2993
      %v2996 = vpack.i.b16 %v1884, %v1884
      %v2998 = vlaneseq
      %v2999 = vshrl.u32 %v2998, 7
      %v3000 = vsub.s32 0, %v2999
      %v3001 = vrot.slane %v2996, %v3000
      %v3003 = vpack.i.b16 %v1888, %v1888
      %v3005 = vlaneseq
      %v3006 = vshrl.u32 %v3005, 7
      %v3007 = vsub.s32 0, %v3006
      %v3008 = vrot.slane %v3003, %v3007
      %v3169 = vcombine.low %v1895, %v1902
      %v3170 = vcombine.low %v1909, %v1916
      %v3171 = vcombine.low %v1923, %v1930
      %v3172 = vcombine.low %v1937, %v1944
      %v3174 = vunpack.c.l.s4 1966171168
      %v3175 = vunpack.c.0.s8 %v3174
      %v3176 = vlaneseq
      %v3177 = vshrl.u32 %v3176, 7
      %v3178 = vsub.s32 %v3175, %v3177
      %v3179 = vrot.slane %v3169, %v3178
      %v3181 = vunpack.c.l.s4 1966171168
      %v3182 = vunpack.c.0.s8 %v3181
      %v3183 = vlaneseq
      %v3184 = vshrl.u32 %v3183, 7
      %v3185 = vsub.s32 %v3182, %v3184
      %v3186 = vrot.slane %v3170, %v3185
      %v3188 = vunpack.c.l.s4 1966171168
      %v3189 = vunpack.c.0.s8 %v3188
      %v3190 = vlaneseq
      %v3191 = vshrl.u32 %v3190, 7
      %v3192 = vsub.s32 %v3189, %v3191
      %v3193 = vrot.slane %v3171, %v3192
      %v3195 = vunpack.c.l.s4 1966171168
      %v3196 = vunpack.c.0.s8 %v3195
      %v3197 = vlaneseq
      %v3198 = vshrl.u32 %v3197, 7
      %v3199 = vsub.s32 %v3196, %v3198
      %v3200 = vrot.slane %v3172, %v3199
      %v3201 = vcombine.low %v3179, %v3186
      %v3202 = vcombine.low %v3193, %v3200
      %v3204 = vunpack.c.l.s4 1966171168
      %v3205 = vunpack.c.0.s8 %v3204
      %v3206 = vlaneseq
      %v3207 = vshrl.u32 %v3206, 7
      %v3208 = vsub.s32 %v3205, %v3207
      %v3209 = vrot.slane %v3201, %v3208
      %v3211 = vunpack.c.l.s4 1966171168
      %v3212 = vunpack.c.0.s8 %v3211
      %v3213 = vlaneseq
      %v3214 = vshrl.u32 %v3213, 7
      %v3215 = vsub.s32 %v3212, %v3214
      %v3216 = vrot.slane %v3202, %v3215
      %v3217 = vcombine.low %v3209, %v3216
      %v3218 = vcombine.low %v1951, %v1958
      %v3219 = vcombine.low %v1965, %v1972
      %v3220 = vcombine.low %v1979, %v1986
      %v3221 = vcombine.low %v1993, %v2000
      %v3223 = vunpack.c.l.s4 1966171168
      %v3224 = vunpack.c.0.s8 %v3223
      %v3225 = vlaneseq
      %v3226 = vshrl.u32 %v3225, 7
      %v3227 = vsub.s32 %v3224, %v3226
      %v3228 = vrot.slane %v3218, %v3227
      %v3230 = vunpack.c.l.s4 1966171168
      %v3231 = vunpack.c.0.s8 %v3230
      %v3232 = vlaneseq
      %v3233 = vshrl.u32 %v3232, 7
      %v3234 = vsub.s32 %v3231, %v3233
      %v3235 = vrot.slane %v3219, %v3234
      %v3237 = vunpack.c.l.s4 1966171168
      %v3238 = vunpack.c.0.s8 %v3237
      %v3239 = vlaneseq
      %v3240 = vshrl.u32 %v3239, 7
      %v3241 = vsub.s32 %v3238, %v3240
      %v3242 = vrot.slane %v3220, %v3241
      %v3244 = vunpack.c.l.s4 1966171168
      %v3245 = vunpack.c.0.s8 %v3244
      %v3246 = vlaneseq
      %v3247 = vshrl.u32 %v3246, 7
      %v3248 = vsub.s32 %v3245, %v3247
      %v3249 = vrot.slane %v3221, %v3248
      %v3250 = vcombine.low %v3228, %v3235
      %v3251 = vcombine.low %v3242, %v3249
      %v3253 = vunpack.c.l.s4 1966171168
      %v3254 = vunpack.c.0.s8 %v3253
      %v3255 = vlaneseq
      %v3256 = vshrl.u32 %v3255, 7
      %v3257 = vsub.s32 %v3254, %v3256
      %v3258 = vrot.slane %v3250, %v3257
      %v3260 = vunpack.c.l.s4 1966171168
      %v3261 = vunpack.c.0.s8 %v3260
      %v3262 = vlaneseq
      %v3263 = vshrl.u32 %v3262, 7
      %v3264 = vsub.s32 %v3261, %v3263
      %v3265 = vrot.slane %v3251, %v3264
      %v3266 = vcombine.low %v3258, %v3265
      %v3267 = vcombine.low %v2007, %v2014
      %v3268 = vcombine.low %v2021, %v2028
      %v3269 = vcombine.low %v2035, %v2042
      %v3270 = vcombine.low %v2049, %v2056
      %v3272 = vunpack.c.l.s4 1966171168
      %v3273 = vunpack.c.0.s8 %v3272
      %v3274 = vlaneseq
      %v3275 = vshrl.u32 %v3274, 7
      %v3276 = vsub.s32 %v3273, %v3275
      %v3277 = vrot.slane %v3267, %v3276
      %v3279 = vunpack.c.l.s4 1966171168
      %v3280 = vunpack.c.0.s8 %v3279
      %v3281 = vlaneseq
      %v3282 = vshrl.u32 %v3281, 7
      %v3283 = vsub.s32 %v3280, %v3282
      %v3284 = vrot.slane %v3268, %v3283
      %v3286 = vunpack.c.l.s4 1966171168
      %v3287 = vunpack.c.0.s8 %v3286
      %v3288 = vlaneseq
      %v3289 = vshrl.u32 %v3288, 7
      %v3290 = vsub.s32 %v3287, %v3289
      %v3291 = vrot.slane %v3269, %v3290
      %v3293 = vunpack.c.l.s4 1966171168
      %v3294 = vunpack.c.0.s8 %v3293
      %v3295 = vlaneseq
      %v3296 = vshrl.u32 %v3295, 7
      %v3297 = vsub.s32 %v3294, %v3296
      %v3298 = vrot.slane %v3270, %v3297
      %v3299 = vcombine.low %v3277, %v3284
      %v3300 = vcombine.low %v3291, %v3298
      %v3302 = vunpack.c.l.s4 1966171168
      %v3303 = vunpack.c.0.s8 %v3302
      %v3304 = vlaneseq
      %v3305 = vshrl.u32 %v3304, 7
      %v3306 = vsub.s32 %v3303, %v3305
      %v3307 = vrot.slane %v3299, %v3306
      %v3309 = vunpack.c.l.s4 1966171168
      %v3310 = vunpack.c.0.s8 %v3309
      %v3311 = vlaneseq
      %v3312 = vshrl.u32 %v3311, 7
      %v3313 = vsub.s32 %v3310, %v3312
      %v3314 = vrot.slane %v3300, %v3313
      %v3315 = vcombine.low %v3307, %v3314
      %v3316 = vcombine.low %v2063, %v2070
      %v3317 = vcombine.low %v2077, %v2084
      %v3318 = vcombine.low %v2091, %v2098
      %v3319 = vcombine.low %v2105, %v2112
      %v3321 = vunpack.c.l.s4 1966171168
      %v3322 = vunpack.c.0.s8 %v3321
      %v3323 = vlaneseq
      %v3324 = vshrl.u32 %v3323, 7
      %v3325 = vsub.s32 %v3322, %v3324
      %v3326 = vrot.slane %v3316, %v3325
      %v3328 = vunpack.c.l.s4 1966171168
      %v3329 = vunpack.c.0.s8 %v3328
      %v3330 = vlaneseq
      %v3331 = vshrl.u32 %v3330, 7
      %v3332 = vsub.s32 %v3329, %v3331
      %v3333 = vrot.slane %v3317, %v3332
      %v3335 = vunpack.c.l.s4 1966171168
      %v3336 = vunpack.c.0.s8 %v3335
      %v3337 = vlaneseq
      %v3338 = vshrl.u32 %v3337, 7
      %v3339 = vsub.s32 %v3336, %v3338
      %v3340 = vrot.slane %v3318, %v3339
      %v3342 = vunpack.c.l.s4 1966171168
      %v3343 = vunpack.c.0.s8 %v3342
      %v3344 = vlaneseq
      %v3345 = vshrl.u32 %v3344, 7
      %v3346 = vsub.s32 %v3343, %v3345
      %v3347 = vrot.slane %v3319, %v3346
      %v3348 = vcombine.low %v3326, %v3333
      %v3349 = vcombine.low %v3340, %v3347
      %v3351 = vunpack.c.l.s4 1966171168
      %v3352 = vunpack.c.0.s8 %v3351
      %v3353 = vlaneseq
      %v3354 = vshrl.u32 %v3353, 7
      %v3355 = vsub.s32 %v3352, %v3354
      %v3356 = vrot.slane %v3348, %v3355
      %v3358 = vunpack.c.l.s4 1966171168
      %v3359 = vunpack.c.0.s8 %v3358
      %v3360 = vlaneseq
      %v3361 = vshrl.u32 %v3360, 7
      %v3362 = vsub.s32 %v3359, %v3361
      %v3363 = vrot.slane %v3349, %v3362
      %v3364 = vcombine.low %v3356, %v3363
      %v3365 = vcombine.low %v2119, %v2126
      %v3366 = vcombine.low %v2133, %v2140
      %v3367 = vcombine.low %v2147, %v2154
      %v3368 = vcombine.low %v2161, %v2168
      %v3370 = vunpack.c.l.s4 1966171168
      %v3371 = vunpack.c.0.s8 %v3370
      %v3372 = vlaneseq
      %v3373 = vshrl.u32 %v3372, 7
      %v3374 = vsub.s32 %v3371, %v3373
      %v3375 = vrot.slane %v3365, %v3374
      %v3377 = vunpack.c.l.s4 1966171168
      %v3378 = vunpack.c.0.s8 %v3377
      %v3379 = vlaneseq
      %v3380 = vshrl.u32 %v3379, 7
      %v3381 = vsub.s32 %v3378, %v3380
      %v3382 = vrot.slane %v3366, %v3381
      %v3384 = vunpack.c.l.s4 1966171168
      %v3385 = vunpack.c.0.s8 %v3384
      %v3386 = vlaneseq
      %v3387 = vshrl.u32 %v3386, 7
      %v3388 = vsub.s32 %v3385, %v3387
      %v3389 = vrot.slane %v3367, %v3388
      %v3391 = vunpack.c.l.s4 1966171168
      %v3392 = vunpack.c.0.s8 %v3391
      %v3393 = vlaneseq
      %v3394 = vshrl.u32 %v3393, 7
      %v3395 = vsub.s32 %v3392, %v3394
      %v3396 = vrot.slane %v3368, %v3395
      %v3397 = vcombine.low %v3375, %v3382
      %v3398 = vcombine.low %v3389, %v3396
      %v3400 = vunpack.c.l.s4 1966171168
      %v3401 = vunpack.c.0.s8 %v3400
      %v3402 = vlaneseq
      %v3403 = vshrl.u32 %v3402, 7
      %v3404 = vsub.s32 %v3401, %v3403
      %v3405 = vrot.slane %v3397, %v3404
      %v3407 = vunpack.c.l.s4 1966171168
      %v3408 = vunpack.c.0.s8 %v3407
      %v3409 = vlaneseq
      %v3410 = vshrl.u32 %v3409, 7
      %v3411 = vsub.s32 %v3408, %v3410
      %v3412 = vrot.slane %v3398, %v3411
      %v3413 = vcombine.low %v3405, %v3412
      %v3414 = vcombine.low %v2175, %v2182
      %v3415 = vcombine.low %v2189, %v2196
      %v3416 = vcombine.low %v2203, %v2210
      %v3417 = vcombine.low %v2217, %v2224
      %v3419 = vunpack.c.l.s4 1966171168
      %v3420 = vunpack.c.0.s8 %v3419
      %v3421 = vlaneseq
      %v3422 = vshrl.u32 %v3421, 7
      %v3423 = vsub.s32 %v3420, %v3422
      %v3424 = vrot.slane %v3414, %v3423
      %v3426 = vunpack.c.l.s4 1966171168
      %v3427 = vunpack.c.0.s8 %v3426
      %v3428 = vlaneseq
      %v3429 = vshrl.u32 %v3428, 7
      %v3430 = vsub.s32 %v3427, %v3429
      %v3431 = vrot.slane %v3415, %v3430
      %v3433 = vunpack.c.l.s4 1966171168
      %v3434 = vunpack.c.0.s8 %v3433
      %v3435 = vlaneseq
      %v3436 = vshrl.u32 %v3435, 7
      %v3437 = vsub.s32 %v3434, %v3436
      %v3438 = vrot.slane %v3416, %v3437
      %v3440 = vunpack.c.l.s4 1966171168
      %v3441 = vunpack.c.0.s8 %v3440
      %v3442 = vlaneseq
      %v3443 = vshrl.u32 %v3442, 7
      %v3444 = vsub.s32 %v3441, %v3443
      %v3445 = vrot.slane %v3417, %v3444
      %v3446 = vcombine.low %v3424, %v3431
      %v3447 = vcombine.low %v3438, %v3445
      %v3449 = vunpack.c.l.s4 1966171168
      %v3450 = vunpack.c.0.s8 %v3449
      %v3451 = vlaneseq
      %v3452 = vshrl.u32 %v3451, 7
      %v3453 = vsub.s32 %v3450, %v3452
      %v3454 = vrot.slane %v3446, %v3453
      %v3456 = vunpack.c.l.s4 1966171168
      %v3457 = vunpack.c.0.s8 %v3456
      %v3458 = vlaneseq
      %v3459 = vshrl.u32 %v3458, 7
      %v3460 = vsub.s32 %v3457, %v3459
      %v3461 = vrot.slane %v3447, %v3460
      %v3462 = vcombine.low %v3454, %v3461
      %v3463 = vcombine.low %v2231, %v2238
      %v3464 = vcombine.low %v2245, %v2252
      %v3465 = vcombine.low %v2259, %v2266
      %v3466 = vcombine.low %v2273, %v2280
      %v3468 = vunpack.c.l.s4 1966171168
      %v3469 = vunpack.c.0.s8 %v3468
      %v3470 = vlaneseq
      %v3471 = vshrl.u32 %v3470, 7
      %v3472 = vsub.s32 %v3469, %v3471
      %v3473 = vrot.slane %v3463, %v3472
      %v3475 = vunpack.c.l.s4 1966171168
      %v3476 = vunpack.c.0.s8 %v3475
      %v3477 = vlaneseq
      %v3478 = vshrl.u32 %v3477, 7
      %v3479 = vsub.s32 %v3476, %v3478
      %v3480 = vrot.slane %v3464, %v3479
      %v3482 = vunpack.c.l.s4 1966171168
      %v3483 = vunpack.c.0.s8 %v3482
      %v3484 = vlaneseq
      %v3485 = vshrl.u32 %v3484, 7
      %v3486 = vsub.s32 %v3483, %v3485
      %v3487 = vrot.slane %v3465, %v3486
      %v3489 = vunpack.c.l.s4 1966171168
      %v3490 = vunpack.c.0.s8 %v3489
      %v3491 = vlaneseq
      %v3492 = vshrl.u32 %v3491, 7
      %v3493 = vsub.s32 %v3490, %v3492
      %v3494 = vrot.slane %v3466, %v3493
      %v3495 = vcombine.low %v3473, %v3480
      %v3496 = vcombine.low %v3487, %v3494
      %v3498 = vunpack.c.l.s4 1966171168
      %v3499 = vunpack.c.0.s8 %v3498
      %v3500 = vlaneseq
      %v3501 = vshrl.u32 %v3500, 7
      %v3502 = vsub.s32 %v3499, %v3501
      %v3503 = vrot.slane %v3495, %v3502
      %v3505 = vunpack.c.l.s4 1966171168
      %v3506 = vunpack.c.0.s8 %v3505
      %v3507 = vlaneseq
      %v3508 = vshrl.u32 %v3507, 7
      %v3509 = vsub.s32 %v3506, %v3508
      %v3510 = vrot.slane %v3496, %v3509
      %v3511 = vcombine.low %v3503, %v3510
      %v3512 = vcombine.low %v2287, %v2294
      %v3513 = vcombine.low %v2301, %v2308
      %v3514 = vcombine.low %v2315, %v2322
      %v3515 = vcombine.low %v2329, %v2336
      %v3517 = vunpack.c.l.s4 1966171168
      %v3518 = vunpack.c.0.s8 %v3517
      %v3519 = vlaneseq
      %v3520 = vshrl.u32 %v3519, 7
      %v3521 = vsub.s32 %v3518, %v3520
      %v3522 = vrot.slane %v3512, %v3521
      %v3524 = vunpack.c.l.s4 1966171168
      %v3525 = vunpack.c.0.s8 %v3524
      %v3526 = vlaneseq
      %v3527 = vshrl.u32 %v3526, 7
      %v3528 = vsub.s32 %v3525, %v3527
      %v3529 = vrot.slane %v3513, %v3528
      %v3531 = vunpack.c.l.s4 1966171168
      %v3532 = vunpack.c.0.s8 %v3531
      %v3533 = vlaneseq
      %v3534 = vshrl.u32 %v3533, 7
      %v3535 = vsub.s32 %v3532, %v3534
      %v3536 = vrot.slane %v3514, %v3535
      %v3538 = vunpack.c.l.s4 1966171168
      %v3539 = vunpack.c.0.s8 %v3538
      %v3540 = vlaneseq
      %v3541 = vshrl.u32 %v3540, 7
      %v3542 = vsub.s32 %v3539, %v3541
      %v3543 = vrot.slane %v3515, %v3542
      %v3544 = vcombine.low %v3522, %v3529
      %v3545 = vcombine.low %v3536, %v3543
      %v3547 = vunpack.c.l.s4 1966171168
      %v3548 = vunpack.c.0.s8 %v3547
      %v3549 = vlaneseq
      %v3550 = vshrl.u32 %v3549, 7
      %v3551 = vsub.s32 %v3548, %v3550
      %v3552 = vrot.slane %v3544, %v3551
      %v3554 = vunpack.c.l.s4 1966171168
      %v3555 = vunpack.c.0.s8 %v3554
      %v3556 = vlaneseq
      %v3557 = vshrl.u32 %v3556, 7
      %v3558 = vsub.s32 %v3555, %v3557
      %v3559 = vrot.slane %v3545, %v3558
      %v3560 = vcombine.low %v3552, %v3559
      %v3561 = vcombine.low %v2343, %v2350
      %v3562 = vcombine.low %v2357, %v2364
      %v3563 = vcombine.low %v2371, %v2378
      %v3564 = vcombine.low %v2385, %v2392
      %v3566 = vunpack.c.l.s4 1966171168
      %v3567 = vunpack.c.0.s8 %v3566
      %v3568 = vlaneseq
      %v3569 = vshrl.u32 %v3568, 7
      %v3570 = vsub.s32 %v3567, %v3569
      %v3571 = vrot.slane %v3561, %v3570
      %v3573 = vunpack.c.l.s4 1966171168
      %v3574 = vunpack.c.0.s8 %v3573
      %v3575 = vlaneseq
      %v3576 = vshrl.u32 %v3575, 7
      %v3577 = vsub.s32 %v3574, %v3576
      %v3578 = vrot.slane %v3562, %v3577
      %v3580 = vunpack.c.l.s4 1966171168
      %v3581 = vunpack.c.0.s8 %v3580
      %v3582 = vlaneseq
      %v3583 = vshrl.u32 %v3582, 7
      %v3584 = vsub.s32 %v3581, %v3583
      %v3585 = vrot.slane %v3563, %v3584
      %v3587 = vunpack.c.l.s4 1966171168
      %v3588 = vunpack.c.0.s8 %v3587
      %v3589 = vlaneseq
      %v3590 = vshrl.u32 %v3589, 7
      %v3591 = vsub.s32 %v3588, %v3590
      %v3592 = vrot.slane %v3564, %v3591
      %v3593 = vcombine.low %v3571, %v3578
      %v3594 = vcombine.low %v3585, %v3592
      %v3596 = vunpack.c.l.s4 1966171168
      %v3597 = vunpack.c.0.s8 %v3596
      %v3598 = vlaneseq
      %v3599 = vshrl.u32 %v3598, 7
      %v3600 = vsub.s32 %v3597, %v3599
      %v3601 = vrot.slane %v3593, %v3600
      %v3603 = vunpack.c.l.s4 1966171168
      %v3604 = vunpack.c.0.s8 %v3603
      %v3605 = vlaneseq
      %v3606 = vshrl.u32 %v3605, 7
      %v3607 = vsub.s32 %v3604, %v3606
      %v3608 = vrot.slane %v3594, %v3607
      %v3609 = vcombine.low %v3601, %v3608
      %v3610 = vcombine.low %v2399, %v2406
      %v3611 = vcombine.low %v2413, %v2420
      %v3612 = vcombine.low %v2427, %v2434
      %v3613 = vcombine.low %v2441, %v2448
      %v3615 = vunpack.c.l.s4 1966171168
      %v3616 = vunpack.c.0.s8 %v3615
      %v3617 = vlaneseq
      %v3618 = vshrl.u32 %v3617, 7
      %v3619 = vsub.s32 %v3616, %v3618
      %v3620 = vrot.slane %v3610, %v3619
      %v3622 = vunpack.c.l.s4 1966171168
      %v3623 = vunpack.c.0.s8 %v3622
      %v3624 = vlaneseq
      %v3625 = vshrl.u32 %v3624, 7
      %v3626 = vsub.s32 %v3623, %v3625
      %v3627 = vrot.slane %v3611, %v3626
      %v3629 = vunpack.c.l.s4 1966171168
      %v3630 = vunpack.c.0.s8 %v3629
      %v3631 = vlaneseq
      %v3632 = vshrl.u32 %v3631, 7
      %v3633 = vsub.s32 %v3630, %v3632
      %v3634 = vrot.slane %v3612, %v3633
      %v3636 = vunpack.c.l.s4 1966171168
      %v3637 = vunpack.c.0.s8 %v3636
      %v3638 = vlaneseq
      %v3639 = vshrl.u32 %v3638, 7
      %v3640 = vsub.s32 %v3637, %v3639
      %v3641 = vrot.slane %v3613, %v3640
      %v3642 = vcombine.low %v3620, %v3627
      %v3643 = vcombine.low %v3634, %v3641
      %v3645 = vunpack.c.l.s4 1966171168
      %v3646 = vunpack.c.0.s8 %v3645
      %v3647 = vlaneseq
      %v3648 = vshrl.u32 %v3647, 7
      %v3649 = vsub.s32 %v3646, %v3648
      %v3650 = vrot.slane %v3642, %v3649
      %v3652 = vunpack.c.l.s4 1966171168
      %v3653 = vunpack.c.0.s8 %v3652
      %v3654 = vlaneseq
      %v3655 = vshrl.u32 %v3654, 7
      %v3656 = vsub.s32 %v3653, %v3655
      %v3657 = vrot.slane %v3643, %v3656
      %v3658 = vcombine.low %v3650, %v3657
      %v3659 = vcombine.low %v2455, %v2462
      %v3660 = vcombine.low %v2469, %v2476
      %v3661 = vcombine.low %v2483, %v2490
      %v3662 = vcombine.low %v2497, %v2504
      %v3664 = vunpack.c.l.s4 1966171168
      %v3665 = vunpack.c.0.s8 %v3664
      %v3666 = vlaneseq
      %v3667 = vshrl.u32 %v3666, 7
      %v3668 = vsub.s32 %v3665, %v3667
      %v3669 = vrot.slane %v3659, %v3668
      %v3671 = vunpack.c.l.s4 1966171168
      %v3672 = vunpack.c.0.s8 %v3671
      %v3673 = vlaneseq
      %v3674 = vshrl.u32 %v3673, 7
      %v3675 = vsub.s32 %v3672, %v3674
      %v3676 = vrot.slane %v3660, %v3675
      %v3678 = vunpack.c.l.s4 1966171168
      %v3679 = vunpack.c.0.s8 %v3678
      %v3680 = vlaneseq
      %v3681 = vshrl.u32 %v3680, 7
      %v3682 = vsub.s32 %v3679, %v3681
      %v3683 = vrot.slane %v3661, %v3682
      %v3685 = vunpack.c.l.s4 1966171168
      %v3686 = vunpack.c.0.s8 %v3685
      %v3687 = vlaneseq
      %v3688 = vshrl.u32 %v3687, 7
      %v3689 = vsub.s32 %v3686, %v3688
      %v3690 = vrot.slane %v3662, %v3689
      %v3691 = vcombine.low %v3669, %v3676
      %v3692 = vcombine.low %v3683, %v3690
      %v3694 = vunpack.c.l.s4 1966171168
      %v3695 = vunpack.c.0.s8 %v3694
      %v3696 = vlaneseq
      %v3697 = vshrl.u32 %v3696, 7
      %v3698 = vsub.s32 %v3695, %v3697
      %v3699 = vrot.slane %v3691, %v3698
      %v3701 = vunpack.c.l.s4 1966171168
      %v3702 = vunpack.c.0.s8 %v3701
      %v3703 = vlaneseq
      %v3704 = vshrl.u32 %v3703, 7
      %v3705 = vsub.s32 %v3702, %v3704
      %v3706 = vrot.slane %v3692, %v3705
      %v3707 = vcombine.low %v3699, %v3706
      %v3708 = vcombine.low %v2511, %v2518
      %v3709 = vcombine.low %v2525, %v2532
      %v3710 = vcombine.low %v2539, %v2546
      %v3711 = vcombine.low %v2553, %v2560
      %v3713 = vunpack.c.l.s4 1966171168
      %v3714 = vunpack.c.0.s8 %v3713
      %v3715 = vlaneseq
      %v3716 = vshrl.u32 %v3715, 7
      %v3717 = vsub.s32 %v3714, %v3716
      %v3718 = vrot.slane %v3708, %v3717
      %v3720 = vunpack.c.l.s4 1966171168
      %v3721 = vunpack.c.0.s8 %v3720
      %v3722 = vlaneseq
      %v3723 = vshrl.u32 %v3722, 7
      %v3724 = vsub.s32 %v3721, %v3723
      %v3725 = vrot.slane %v3709, %v3724
      %v3727 = vunpack.c.l.s4 1966171168
      %v3728 = vunpack.c.0.s8 %v3727
      %v3729 = vlaneseq
      %v3730 = vshrl.u32 %v3729, 7
      %v3731 = vsub.s32 %v3728, %v3730
      %v3732 = vrot.slane %v3710, %v3731
      %v3734 = vunpack.c.l.s4 1966171168
      %v3735 = vunpack.c.0.s8 %v3734
      %v3736 = vlaneseq
      %v3737 = vshrl.u32 %v3736, 7
      %v3738 = vsub.s32 %v3735, %v3737
      %v3739 = vrot.slane %v3711, %v3738
      %v3740 = vcombine.low %v3718, %v3725
      %v3741 = vcombine.low %v3732, %v3739
      %v3743 = vunpack.c.l.s4 1966171168
      %v3744 = vunpack.c.0.s8 %v3743
      %v3745 = vlaneseq
      %v3746 = vshrl.u32 %v3745, 7
      %v3747 = vsub.s32 %v3744, %v3746
      %v3748 = vrot.slane %v3740, %v3747
      %v3750 = vunpack.c.l.s4 1966171168
      %v3751 = vunpack.c.0.s8 %v3750
      %v3752 = vlaneseq
      %v3753 = vshrl.u32 %v3752, 7
      %v3754 = vsub.s32 %v3751, %v3753
      %v3755 = vrot.slane %v3741, %v3754
      %v3756 = vcombine.low %v3748, %v3755
      %v3757 = vcombine.low %v2567, %v2574
      %v3758 = vcombine.low %v2581, %v2588
      %v3759 = vcombine.low %v2595, %v2602
      %v3760 = vcombine.low %v2609, %v2616
      %v3762 = vunpack.c.l.s4 1966171168
      %v3763 = vunpack.c.0.s8 %v3762
      %v3764 = vlaneseq
      %v3765 = vshrl.u32 %v3764, 7
      %v3766 = vsub.s32 %v3763, %v3765
      %v3767 = vrot.slane %v3757, %v3766
      %v3769 = vunpack.c.l.s4 1966171168
      %v3770 = vunpack.c.0.s8 %v3769
      %v3771 = vlaneseq
      %v3772 = vshrl.u32 %v3771, 7
      %v3773 = vsub.s32 %v3770, %v3772
      %v3774 = vrot.slane %v3758, %v3773
      %v3776 = vunpack.c.l.s4 1966171168
      %v3777 = vunpack.c.0.s8 %v3776
      %v3778 = vlaneseq
      %v3779 = vshrl.u32 %v3778, 7
      %v3780 = vsub.s32 %v3777, %v3779
      %v3781 = vrot.slane %v3759, %v3780
      %v3783 = vunpack.c.l.s4 1966171168
      %v3784 = vunpack.c.0.s8 %v3783
      %v3785 = vlaneseq
      %v3786 = vshrl.u32 %v3785, 7
      %v3787 = vsub.s32 %v3784, %v3786
      %v3788 = vrot.slane %v3760, %v3787
      %v3789 = vcombine.low %v3767, %v3774
      %v3790 = vcombine.low %v3781, %v3788
      %v3792 = vunpack.c.l.s4 1966171168
      %v3793 = vunpack.c.0.s8 %v3792
      %v3794 = vlaneseq
      %v3795 = vshrl.u32 %v3794, 7
      %v3796 = vsub.s32 %v3793, %v3795
      %v3797 = vrot.slane %v3789, %v3796
      %v3799 = vunpack.c.l.s4 1966171168
      %v3800 = vunpack.c.0.s8 %v3799
      %v3801 = vlaneseq
      %v3802 = vshrl.u32 %v3801, 7
      %v3803 = vsub.s32 %v3800, %v3802
      %v3804 = vrot.slane %v3790, %v3803
      %v3805 = vcombine.low %v3797, %v3804
      %v3806 = vcombine.low %v2623, %v2630
      %v3807 = vcombine.low %v2637, %v2644
      %v3808 = vcombine.low %v2651, %v2658
      %v3809 = vcombine.low %v2665, %v2672
      %v3811 = vunpack.c.l.s4 1966171168
      %v3812 = vunpack.c.0.s8 %v3811
      %v3813 = vlaneseq
      %v3814 = vshrl.u32 %v3813, 7
      %v3815 = vsub.s32 %v3812, %v3814
      %v3816 = vrot.slane %v3806, %v3815
      %v3818 = vunpack.c.l.s4 1966171168
      %v3819 = vunpack.c.0.s8 %v3818
      %v3820 = vlaneseq
      %v3821 = vshrl.u32 %v3820, 7
      %v3822 = vsub.s32 %v3819, %v3821
      %v3823 = vrot.slane %v3807, %v3822
      %v3825 = vunpack.c.l.s4 1966171168
      %v3826 = vunpack.c.0.s8 %v3825
      %v3827 = vlaneseq
      %v3828 = vshrl.u32 %v3827, 7
      %v3829 = vsub.s32 %v3826, %v3828
      %v3830 = vrot.slane %v3808, %v3829
      %v3832 = vunpack.c.l.s4 1966171168
      %v3833 = vunpack.c.0.s8 %v3832
      %v3834 = vlaneseq
      %v3835 = vshrl.u32 %v3834, 7
      %v3836 = vsub.s32 %v3833, %v3835
      %v3837 = vrot.slane %v3809, %v3836
      %v3838 = vcombine.low %v3816, %v3823
      %v3839 = vcombine.low %v3830, %v3837
      %v3841 = vunpack.c.l.s4 1966171168
      %v3842 = vunpack.c.0.s8 %v3841
      %v3843 = vlaneseq
      %v3844 = vshrl.u32 %v3843, 7
      %v3845 = vsub.s32 %v3842, %v3844
      %v3846 = vrot.slane %v3838, %v3845
      %v3848 = vunpack.c.l.s4 1966171168
      %v3849 = vunpack.c.0.s8 %v3848
      %v3850 = vlaneseq
      %v3851 = vshrl.u32 %v3850, 7
      %v3852 = vsub.s32 %v3849, %v3851
      %v3853 = vrot.slane %v3839, %v3852
      %v3854 = vcombine.low %v3846, %v3853
      %v3855 = vcombine.low %v2679, %v2686
      %v3856 = vcombine.low %v2693, %v2700
      %v3857 = vcombine.low %v2707, %v2714
      %v3858 = vcombine.low %v2721, %v2728
      %v3860 = vunpack.c.l.s4 1966171168
      %v3861 = vunpack.c.0.s8 %v3860
      %v3862 = vlaneseq
      %v3863 = vshrl.u32 %v3862, 7
      %v3864 = vsub.s32 %v3861, %v3863
      %v3865 = vrot.slane %v3855, %v3864
      %v3867 = vunpack.c.l.s4 1966171168
      %v3868 = vunpack.c.0.s8 %v3867
      %v3869 = vlaneseq
      %v3870 = vshrl.u32 %v3869, 7
      %v3871 = vsub.s32 %v3868, %v3870
      %v3872 = vrot.slane %v3856, %v3871
      %v3874 = vunpack.c.l.s4 1966171168
      %v3875 = vunpack.c.0.s8 %v3874
      %v3876 = vlaneseq
      %v3877 = vshrl.u32 %v3876, 7
      %v3878 = vsub.s32 %v3875, %v3877
      %v3879 = vrot.slane %v3857, %v3878
      %v3881 = vunpack.c.l.s4 1966171168
      %v3882 = vunpack.c.0.s8 %v3881
      %v3883 = vlaneseq
      %v3884 = vshrl.u32 %v3883, 7
      %v3885 = vsub.s32 %v3882, %v3884
      %v3886 = vrot.slane %v3858, %v3885
      %v3887 = vcombine.low %v3865, %v3872
      %v3888 = vcombine.low %v3879, %v3886
      %v3890 = vunpack.c.l.s4 1966171168
      %v3891 = vunpack.c.0.s8 %v3890
      %v3892 = vlaneseq
      %v3893 = vshrl.u32 %v3892, 7
      %v3894 = vsub.s32 %v3891, %v3893
      %v3895 = vrot.slane %v3887, %v3894
      %v3897 = vunpack.c.l.s4 1966171168
      %v3898 = vunpack.c.0.s8 %v3897
      %v3899 = vlaneseq
      %v3900 = vshrl.u32 %v3899, 7
      %v3901 = vsub.s32 %v3898, %v3900
      %v3902 = vrot.slane %v3888, %v3901
      %v3903 = vcombine.low %v3895, %v3902
      %v3904 = vcombine.low %v2735, %v2742
      %v3905 = vcombine.low %v2749, %v2756
      %v3906 = vcombine.low %v2763, %v2770
      %v3907 = vcombine.low %v2777, %v2784
      %v3909 = vunpack.c.l.s4 1966171168
      %v3910 = vunpack.c.0.s8 %v3909
      %v3911 = vlaneseq
      %v3912 = vshrl.u32 %v3911, 7
      %v3913 = vsub.s32 %v3910, %v3912
      %v3914 = vrot.slane %v3904, %v3913
      %v3916 = vunpack.c.l.s4 1966171168
      %v3917 = vunpack.c.0.s8 %v3916
      %v3918 = vlaneseq
      %v3919 = vshrl.u32 %v3918, 7
      %v3920 = vsub.s32 %v3917, %v3919
      %v3921 = vrot.slane %v3905, %v3920
      %v3923 = vunpack.c.l.s4 1966171168
      %v3924 = vunpack.c.0.s8 %v3923
      %v3925 = vlaneseq
      %v3926 = vshrl.u32 %v3925, 7
      %v3927 = vsub.s32 %v3924, %v3926
      %v3928 = vrot.slane %v3906, %v3927
      %v3930 = vunpack.c.l.s4 1966171168
      %v3931 = vunpack.c.0.s8 %v3930
      %v3932 = vlaneseq
      %v3933 = vshrl.u32 %v3932, 7
      %v3934 = vsub.s32 %v3931, %v3933
      %v3935 = vrot.slane %v3907, %v3934
      %v3936 = vcombine.low %v3914, %v3921
      %v3937 = vcombine.low %v3928, %v3935
      %v3939 = vunpack.c.l.s4 1966171168
      %v3940 = vunpack.c.0.s8 %v3939
      %v3941 = vlaneseq
      %v3942 = vshrl.u32 %v3941, 7
      %v3943 = vsub.s32 %v3940, %v3942
      %v3944 = vrot.slane %v3936, %v3943
      %v3946 = vunpack.c.l.s4 1966171168
      %v3947 = vunpack.c.0.s8 %v3946
      %v3948 = vlaneseq
      %v3949 = vshrl.u32 %v3948, 7
      %v3950 = vsub.s32 %v3947, %v3949
      %v3951 = vrot.slane %v3937, %v3950
      %v3952 = vcombine.low %v3944, %v3951
      %v3953 = vcombine.low %v2791, %v2798
      %v3954 = vcombine.low %v2805, %v2812
      %v3955 = vcombine.low %v2819, %v2826
      %v3956 = vcombine.low %v2833, %v2840
      %v3958 = vunpack.c.l.s4 1966171168
      %v3959 = vunpack.c.0.s8 %v3958
      %v3960 = vlaneseq
      %v3961 = vshrl.u32 %v3960, 7
      %v3962 = vsub.s32 %v3959, %v3961
      %v3963 = vrot.slane %v3953, %v3962
      %v3965 = vunpack.c.l.s4 1966171168
      %v3966 = vunpack.c.0.s8 %v3965
      %v3967 = vlaneseq
      %v3968 = vshrl.u32 %v3967, 7
      %v3969 = vsub.s32 %v3966, %v3968
      %v3970 = vrot.slane %v3954, %v3969
      %v3972 = vunpack.c.l.s4 1966171168
      %v3973 = vunpack.c.0.s8 %v3972
      %v3974 = vlaneseq
      %v3975 = vshrl.u32 %v3974, 7
      %v3976 = vsub.s32 %v3973, %v3975
      %v3977 = vrot.slane %v3955, %v3976
      %v3979 = vunpack.c.l.s4 1966171168
      %v3980 = vunpack.c.0.s8 %v3979
      %v3981 = vlaneseq
      %v3982 = vshrl.u32 %v3981, 7
      %v3983 = vsub.s32 %v3980, %v3982
      %v3984 = vrot.slane %v3956, %v3983
      %v3985 = vcombine.low %v3963, %v3970
      %v3986 = vcombine.low %v3977, %v3984
      %v3988 = vunpack.c.l.s4 1966171168
      %v3989 = vunpack.c.0.s8 %v3988
      %v3990 = vlaneseq
      %v3991 = vshrl.u32 %v3990, 7
      %v3992 = vsub.s32 %v3989, %v3991
      %v3993 = vrot.slane %v3985, %v3992
      %v3995 = vunpack.c.l.s4 1966171168
      %v3996 = vunpack.c.0.s8 %v3995
      %v3997 = vlaneseq
      %v3998 = vshrl.u32 %v3997, 7
      %v3999 = vsub.s32 %v3996, %v3998
      %v4000 = vrot.slane %v3986, %v3999
      %v4001 = vcombine.low %v3993, %v4000
      %v4002 = vcombine.low %v2847, %v2854
      %v4003 = vcombine.low %v2861, %v2868
      %v4004 = vcombine.low %v2875, %v2882
      %v4005 = vcombine.low %v2889, %v2896
      %v4007 = vunpack.c.l.s4 1966171168
      %v4008 = vunpack.c.0.s8 %v4007
      %v4009 = vlaneseq
      %v4010 = vshrl.u32 %v4009, 7
      %v4011 = vsub.s32 %v4008, %v4010
      %v4012 = vrot.slane %v4002, %v4011
      %v4014 = vunpack.c.l.s4 1966171168
      %v4015 = vunpack.c.0.s8 %v4014
      %v4016 = vlaneseq
      %v4017 = vshrl.u32 %v4016, 7
      %v4018 = vsub.s32 %v4015, %v4017
      %v4019 = vrot.slane %v4003, %v4018
      %v4021 = vunpack.c.l.s4 1966171168
      %v4022 = vunpack.c.0.s8 %v4021
      %v4023 = vlaneseq
      %v4024 = vshrl.u32 %v4023, 7
      %v4025 = vsub.s32 %v4022, %v4024
      %v4026 = vrot.slane %v4004, %v4025
      %v4028 = vunpack.c.l.s4 1966171168
      %v4029 = vunpack.c.0.s8 %v4028
      %v4030 = vlaneseq
      %v4031 = vshrl.u32 %v4030, 7
      %v4032 = vsub.s32 %v4029, %v4031
      %v4033 = vrot.slane %v4005, %v4032
      %v4034 = vcombine.low %v4012, %v4019
      %v4035 = vcombine.low %v4026, %v4033
      %v4037 = vunpack.c.l.s4 1966171168
      %v4038 = vunpack.c.0.s8 %v4037
      %v4039 = vlaneseq
      %v4040 = vshrl.u32 %v4039, 7
      %v4041 = vsub.s32 %v4038, %v4040
      %v4042 = vrot.slane %v4034, %v4041
      %v4044 = vunpack.c.l.s4 1966171168
      %v4045 = vunpack.c.0.s8 %v4044
      %v4046 = vlaneseq
      %v4047 = vshrl.u32 %v4046, 7
      %v4048 = vsub.s32 %v4045, %v4047
      %v4049 = vrot.slane %v4035, %v4048
      %v4050 = vcombine.low %v4042, %v4049
      %v4051 = vcombine.low %v2903, %v2910
      %v4052 = vcombine.low %v2917, %v2924
      %v4053 = vcombine.low %v2931, %v2938
      %v4054 = vcombine.low %v2945, %v2952
      %v4056 = vunpack.c.l.s4 1966171168
      %v4057 = vunpack.c.0.s8 %v4056
      %v4058 = vlaneseq
      %v4059 = vshrl.u32 %v4058, 7
      %v4060 = vsub.s32 %v4057, %v4059
      %v4061 = vrot.slane %v4051, %v4060
      %v4063 = vunpack.c.l.s4 1966171168
      %v4064 = vunpack.c.0.s8 %v4063
      %v4065 = vlaneseq
      %v4066 = vshrl.u32 %v4065, 7
      %v4067 = vsub.s32 %v4064, %v4066
      %v4068 = vrot.slane %v4052, %v4067
      %v4070 = vunpack.c.l.s4 1966171168
      %v4071 = vunpack.c.0.s8 %v4070
      %v4072 = vlaneseq
      %v4073 = vshrl.u32 %v4072, 7
      %v4074 = vsub.s32 %v4071, %v4073
      %v4075 = vrot.slane %v4053, %v4074
      %v4077 = vunpack.c.l.s4 1966171168
      %v4078 = vunpack.c.0.s8 %v4077
      %v4079 = vlaneseq
      %v4080 = vshrl.u32 %v4079, 7
      %v4081 = vsub.s32 %v4078, %v4080
      %v4082 = vrot.slane %v4054, %v4081
      %v4083 = vcombine.low %v4061, %v4068
      %v4084 = vcombine.low %v4075, %v4082
      %v4086 = vunpack.c.l.s4 1966171168
      %v4087 = vunpack.c.0.s8 %v4086
      %v4088 = vlaneseq
      %v4089 = vshrl.u32 %v4088, 7
      %v4090 = vsub.s32 %v4087, %v4089
      %v4091 = vrot.slane %v4083, %v4090
      %v4093 = vunpack.c.l.s4 1966171168
      %v4094 = vunpack.c.0.s8 %v4093
      %v4095 = vlaneseq
      %v4096 = vshrl.u32 %v4095, 7
      %v4097 = vsub.s32 %v4094, %v4096
      %v4098 = vrot.slane %v4084, %v4097
      %v4099 = vcombine.low %v4091, %v4098
      %v4100 = vcombine.low %v2959, %v2966
      %v4101 = vcombine.low %v2973, %v2980
      %v4102 = vcombine.low %v2987, %v2994
      %v4103 = vcombine.low %v3001, %v3008
      %v4105 = vunpack.c.l.s4 1966171168
      %v4106 = vunpack.c.0.s8 %v4105
      %v4107 = vlaneseq
      %v4108 = vshrl.u32 %v4107, 7
      %v4109 = vsub.s32 %v4106, %v4108
      %v4110 = vrot.slane %v4100, %v4109
      %v4112 = vunpack.c.l.s4 1966171168
      %v4113 = vunpack.c.0.s8 %v4112
      %v4114 = vlaneseq
      %v4115 = vshrl.u32 %v4114, 7
      %v4116 = vsub.s32 %v4113, %v4115
      %v4117 = vrot.slane %v4101, %v4116
      %v4119 = vunpack.c.l.s4 1966171168
      %v4120 = vunpack.c.0.s8 %v4119
      %v4121 = vlaneseq
      %v4122 = vshrl.u32 %v4121, 7
      %v4123 = vsub.s32 %v4120, %v4122
      %v4124 = vrot.slane %v4102, %v4123
      %v4126 = vunpack.c.l.s4 1966171168
      %v4127 = vunpack.c.0.s8 %v4126
      %v4128 = vlaneseq
      %v4129 = vshrl.u32 %v4128, 7
      %v4130 = vsub.s32 %v4127, %v4129
      %v4131 = vrot.slane %v4103, %v4130
      %v4132 = vcombine.low %v4110, %v4117
      %v4133 = vcombine.low %v4124, %v4131
      %v4135 = vunpack.c.l.s4 1966171168
      %v4136 = vunpack.c.0.s8 %v4135
      %v4137 = vlaneseq
      %v4138 = vshrl.u32 %v4137, 7
      %v4139 = vsub.s32 %v4136, %v4138
      %v4140 = vrot.slane %v4132, %v4139
      %v4142 = vunpack.c.l.s4 1966171168
      %v4143 = vunpack.c.0.s8 %v4142
      %v4144 = vlaneseq
      %v4145 = vshrl.u32 %v4144, 7
      %v4146 = vsub.s32 %v4143, %v4145
      %v4147 = vrot.slane %v4133, %v4146
      %v4148 = vcombine.low %v4140, %v4147
      %vm4149 = vsmask.f32 256
      %v4151 = vshrl.u32 %v3217, 16
      %v4153 = vrot.slane %v4151, 7
      %v4154 = vshll.u32 %v3217, 16
      %v4156 = vor.u32 %v4153, %v4154
      %v4158 = vshrl.u32 %v3266, 16
      %v4160 = vrot.slane %v4158, 7
      %v4161 = vshll.u32 %v3266, 16
      %v4163 = vor.u32 %v4160, %v4161
      %v4164 = vsel %vm4149, %v4153, %v4163
      %v4166 = vshrl.u32 %v3315, 16
      %v4168 = vrot.slane %v4166, 7
      %v4169 = vshll.u32 %v3315, 16
      %v4171 = vor.u32 %v4168, %v4169
      %v4173 = vshrl.u32 %v3364, 16
      %v4175 = vrot.slane %v4173, 7
      %v4176 = vshll.u32 %v3364, 16
      %v4178 = vor.u32 %v4175, %v4176
      %v4179 = vsel %vm4149, %v4168, %v4178
      %v4181 = vshrl.u32 %v3413, 16
      %v4183 = vrot.slane %v4181, 7
      %v4184 = vshll.u32 %v3413, 16
      %v4186 = vor.u32 %v4183, %v4184
      %v4188 = vshrl.u32 %v3462, 16
      %v4190 = vrot.slane %v4188, 7
      %v4191 = vshll.u32 %v3462, 16
      %v4193 = vor.u32 %v4190, %v4191
      %v4194 = vsel %vm4149, %v4183, %v4193
      %v4196 = vshrl.u32 %v3511, 16
      %v4198 = vrot.slane %v4196, 7
      %v4199 = vshll.u32 %v3511, 16
      %v4201 = vor.u32 %v4198, %v4199
      %v4203 = vshrl.u32 %v3560, 16
      %v4205 = vrot.slane %v4203, 7
      %v4206 = vshll.u32 %v3560, 16
      %v4208 = vor.u32 %v4205, %v4206
      %v4209 = vsel %vm4149, %v4198, %v4208
      %v4211 = vshrl.u32 %v3609, 16
      %v4213 = vrot.slane %v4211, 7
      %v4214 = vshll.u32 %v3609, 16
      %v4216 = vor.u32 %v4213, %v4214
      %v4218 = vshrl.u32 %v3658, 16
      %v4220 = vrot.slane %v4218, 7
      %v4221 = vshll.u32 %v3658, 16
      %v4223 = vor.u32 %v4220, %v4221
      %v4224 = vsel %vm4149, %v4213, %v4223
      %v4226 = vshrl.u32 %v3707, 16
      %v4228 = vrot.slane %v4226, 7
      %v4229 = vshll.u32 %v3707, 16
      %v4231 = vor.u32 %v4228, %v4229
      %v4233 = vshrl.u32 %v3756, 16
      %v4235 = vrot.slane %v4233, 7
      %v4236 = vshll.u32 %v3756, 16
      %v4238 = vor.u32 %v4235, %v4236
      %v4239 = vsel %vm4149, %v4228, %v4238
      %v4241 = vshrl.u32 %v3805, 16
      %v4243 = vrot.slane %v4241, 7
      %v4244 = vshll.u32 %v3805, 16
      %v4246 = vor.u32 %v4243, %v4244
      %v4248 = vshrl.u32 %v3854, 16
      %v4250 = vrot.slane %v4248, 7
      %v4251 = vshll.u32 %v3854, 16
      %v4253 = vor.u32 %v4250, %v4251
      %v4254 = vsel %vm4149, %v4243, %v4253
      %v4256 = vshrl.u32 %v3903, 16
      %v4258 = vrot.slane %v4256, 7
      %v4259 = vshll.u32 %v3903, 16
      %v4261 = vor.u32 %v4258, %v4259
      %v4263 = vshrl.u32 %v3952, 16
      %v4265 = vrot.slane %v4263, 7
      %v4266 = vshll.u32 %v3952, 16
      %v4268 = vor.u32 %v4265, %v4266
      %v4269 = vsel %vm4149, %v4258, %v4268
      %v4271 = vshrl.u32 %v4001, 16
      %v4273 = vrot.slane %v4271, 7
      %v4274 = vshll.u32 %v4001, 16
      %v4276 = vor.u32 %v4273, %v4274
      %v4278 = vshrl.u32 %v4050, 16
      %v4280 = vrot.slane %v4278, 7
      %v4281 = vshll.u32 %v4050, 16
      %v4283 = vor.u32 %v4280, %v4281
      %v4284 = vsel %vm4149, %v4273, %v4283
      %v4286 = vshrl.u32 %v4099, 16
      %v4288 = vrot.slane %v4286, 7
      %v4289 = vshll.u32 %v4099, 16
      %v4291 = vor.u32 %v4288, %v4289
      %v4293 = vshrl.u32 %v4148, 16
      %v4295 = vrot.slane %v4293, 7
      %v4296 = vshll.u32 %v4148, 16
      %v4298 = vor.u32 %v4295, %v4296
      %v4299 = vsel %vm4149, %v4288, %v4298
      %vm4320 = vcmask 1040384
      %vm4321 = vmand %vm4320, %vm4149
      %v4322 = vsel %vm4321, %v249, %v4156
      %v4323 = vsel %vm4321, %v252, %v4171
      %v4324 = vsel %vm4321, %v255, %v4186
      %v4325 = vsel %vm4321, %v258, %v4201
      %v4326 = vsel %vm4321, %v261, %v4216
      %v4327 = vsel %vm4321, %v264, %v4231
      %v4328 = vsel %vm4321, %v267, %v4246
      %v4329 = vsel %vm4321, %v270, %v4261
      %v4330 = vsel %vm4321, %v273, %v4276
      %v4331 = vsel %vm4321, %v276, %v4291
      %v4332 = vsel %vm4321, %v4160, %v251
      %v4333 = vsel %vm4321, %v4175, %v254
      %v4334 = vsel %vm4321, %v4190, %v257
      %v4335 = vsel %vm4321, %v4205, %v260
      %v4336 = vsel %vm4321, %v4220, %v263
      %v4337 = vsel %vm4321, %v4235, %v266
      %v4338 = vsel %vm4321, %v4250, %v269
      %v4339 = vsel %vm4321, %v4265, %v272
      %v4340 = vsel %vm4321, %v4280, %v275
      %v4341 = vsel %vm4321, %v4295, %v278
      %v4362 = vunpack.c.l.b16 %v4322
      %v4363 = vunpack.c.h.b16 %v4322
      %v4364 = vunpack.c.l.b16 %v4164
      %v4365 = vunpack.c.h.b16 %v4164
      %v4366 = vunpack.c.l.b16 %v4332
      %v4367 = vunpack.c.l.b16 %v4323
      %v4368 = vunpack.c.h.b16 %v4323
      %v4369 = vunpack.c.l.b16 %v4179
      %v4370 = vunpack.c.h.b16 %v4179
      %v4371 = vunpack.c.l.b16 %v4333
      %v4372 = vunpack.c.l.b16 %v4324
      %v4373 = vunpack.c.h.b16 %v4324
      %v4374 = vunpack.c.l.b16 %v4194
      %v4375 = vunpack.c.h.b16 %v4194
      %v4376 = vunpack.c.l.b16 %v4334
      %v4377 = vunpack.c.l.b16 %v4325
      %v4378 = vunpack.c.h.b16 %v4325
      %v4379 = vunpack.c.l.b16 %v4209
      %v4380 = vunpack.c.h.b16 %v4209
      %v4381 = vunpack.c.l.b16 %v4335
      %v4382 = vunpack.c.l.b16 %v4326
      %v4383 = vunpack.c.h.b16 %v4326
      %v4384 = vunpack.c.l.b16 %v4224
      %v4385 = vunpack.c.h.b16 %v4224
      %v4386 = vunpack.c.l.b16 %v4336
      %v4387 = vunpack.c.l.b16 %v4327
      %v4388 = vunpack.c.h.b16 %v4327
      %v4389 = vunpack.c.l.b16 %v4239
      %v4390 = vunpack.c.h.b16 %v4239
      %v4391 = vunpack.c.l.b16 %v4337
      %v4392 = vunpack.c.l.b16 %v4328
      %v4393 = vunpack.c.h.b16 %v4328
      %v4394 = vunpack.c.l.b16 %v4254
      %v4395 = vunpack.c.h.b16 %v4254
      %v4396 = vunpack.c.l.b16 %v4338
      %v4397 = vunpack.c.l.b16 %v4329
      %v4398 = vunpack.c.h.b16 %v4329
      %v4399 = vunpack.c.l.b16 %v4269
      %v4400 = vunpack.c.h.b16 %v4269
      %v4401 = vunpack.c.l.b16 %v4339
      %v4402 = vunpack.c.l.b16 %v4330
      %v4403 = vunpack.c.h.b16 %v4330
      %v4404 = vunpack.c.l.b16 %v4284
      %v4405 = vunpack.c.h.b16 %v4284
      %v4406 = vunpack.c.l.b16 %v4340
      %v4407 = vunpack.c.l.b16 %v4331
      %v4408 = vunpack.c.h.b16 %v4331
      %v4409 = vunpack.c.l.b16 %v4299
      %v4410 = vunpack.c.h.b16 %v4299
      %v4411 = vunpack.c.l.b16 %v4341
      %v4412 = vpack.c.b16 %v4362, %v4362
      %v4413 = vpack.c.b16 %v4363, %v4363
      %v4414 = vpack.c.b16 %v4364, %v4364
      %v4415 = vpack.c.b16 %v4365, %v4365
      %v4416 = vpack.c.b16 %v4366, %v4366
      %v4417 = vpack.c.b16 %v4367, %v4367
      %v4418 = vpack.c.b16 %v4368, %v4368
      %v4419 = vpack.c.b16 %v4369, %v4369
      %v4420 = vpack.c.b16 %v4370, %v4370
      %v4421 = vpack.c.b16 %v4371, %v4371
      %v4422 = vpack.c.b16 %v4372, %v4372
      %v4423 = vpack.c.b16 %v4373, %v4373
      %v4424 = vpack.c.b16 %v4374, %v4374
      %v4425 = vpack.c.b16 %v4375, %v4375
      %v4426 = vpack.c.b16 %v4376, %v4376
      %v4427 = vpack.c.b16 %v4377, %v4377
      %v4428 = vpack.c.b16 %v4378, %v4378
      %v4429 = vpack.c.b16 %v4379, %v4379
      %v4430 = vpack.c.b16 %v4380, %v4380
      %v4431 = vpack.c.b16 %v4381, %v4381
      %v4432 = vpack.c.b16 %v4382, %v4382
      %v4433 = vpack.c.b16 %v4383, %v4383
      %v4434 = vpack.c.b16 %v4384, %v4384
      %v4435 = vpack.c.b16 %v4385, %v4385
      %v4436 = vpack.c.b16 %v4386, %v4386
      %v4437 = vpack.c.b16 %v4387, %v4387
      %v4438 = vpack.c.b16 %v4388, %v4388
      %v4439 = vpack.c.b16 %v4389, %v4389
      %v4440 = vpack.c.b16 %v4390, %v4390
      %v4441 = vpack.c.b16 %v4391, %v4391
      %v4442 = vpack.c.b16 %v4392, %v4392
      %v4443 = vpack.c.b16 %v4393, %v4393
      %v4444 = vpack.c.b16 %v4394, %v4394
      %v4445 = vpack.c.b16 %v4395, %v4395
      %v4446 = vpack.c.b16 %v4396, %v4396
      %v4447 = vpack.c.b16 %v4397, %v4397
      %v4448 = vpack.c.b16 %v4398, %v4398
      %v4449 = vpack.c.b16 %v4399, %v4399
      %v4450 = vpack.c.b16 %v4400, %v4400
      %v4451 = vpack.c.b16 %v4401, %v4401
      %v4452 = vpack.c.b16 %v4402, %v4402
      %v4453 = vpack.c.b16 %v4403, %v4403
      %v4454 = vpack.c.b16 %v4404, %v4404
      %v4455 = vpack.c.b16 %v4405, %v4405
      %v4456 = vpack.c.b16 %v4406, %v4406
      %v4457 = vpack.c.b16 %v4407, %v4407
      %v4458 = vpack.c.b16 %v4408, %v4408
      %v4459 = vpack.c.b16 %v4409, %v4409
      %v4460 = vpack.c.b16 %v4410, %v4410
      %v4461 = vpack.c.b16 %v4411, %v4411
      %vm4512 = vcmask 27648
      %4513 = vst.msk [vmem:[#allocation2] sm:$0xf] %vm4512, %v4412
      %4514 = vst.msk [vmem:[#allocation2 + $0x4] sm:$0xf] %vm4512, %v4413
      %4515 = vst.msk [vmem:[#allocation2 + $0x8] sm:$0xf] %vm4512, %v4414
      %4516 = vst.msk [vmem:[#allocation2 + $0xc] sm:$0xf] %vm4512, %v4415
      %vm4517 = vcmask 24576
      %4518 = vst.msk [vmem:[#allocation2 + $0x10] sm:$0x1] %vm4517, %v4416
      %4519 = vst.msk [vmem:[#allocation2 + $0x14] sm:$0xf] %vm4512, %v4417
      %4520 = vst.msk [vmem:[#allocation2 + $0x18] sm:$0xf] %vm4512, %v4418
      %4521 = vst.msk [vmem:[#allocation2 + $0x1c] sm:$0xf] %vm4512, %v4419
      %4522 = vst.msk [vmem:[#allocation2 + $0x20] sm:$0xf] %vm4512, %v4420
      %4523 = vst.msk [vmem:[#allocation2 + $0x24] sm:$0x1] %vm4517, %v4421
      %4524 = vst.msk [vmem:[#allocation2 + $0x28] sm:$0xf] %vm4512, %v4417
      %4525 = vst.msk [vmem:[#allocation2 + $0x2c] sm:$0xf] %vm4512, %v4418
      %4526 = vst.msk [vmem:[#allocation2 + $0x30] sm:$0xf] %vm4512, %v4419
      %4527 = vst.msk [vmem:[#allocation2 + $0x34] sm:$0xf] %vm4512, %v4420
      %4528 = vst.msk [vmem:[#allocation2 + $0x38] sm:$0x1] %vm4517, %v4421
      %4529 = vst.msk [vmem:[#allocation2 + $0x3c] sm:$0xf] %vm4512, %v4422
      %4530 = vst.msk [vmem:[#allocation2 + $0x40] sm:$0xf] %vm4512, %v4423
      %4531 = vst.msk [vmem:[#allocation2 + $0x44] sm:$0xf] %vm4512, %v4424
      %4532 = vst.msk [vmem:[#allocation2 + $0x48] sm:$0xf] %vm4512, %v4425
      %4533 = vst.msk [vmem:[#allocation2 + $0x4c] sm:$0x1] %vm4517, %v4426
      %4534 = vst.msk [vmem:[#allocation2 + $0x50] sm:$0xf] %vm4512, %v4422
      %4535 = vst.msk [vmem:[#allocation2 + $0x54] sm:$0xf] %vm4512, %v4423
      %4536 = vst.msk [vmem:[#allocation2 + $0x58] sm:$0xf] %vm4512, %v4424
      %4537 = vst.msk [vmem:[#allocation2 + $0x5c] sm:$0xf] %vm4512, %v4425
      %4538 = vst.msk [vmem:[#allocation2 + $0x60] sm:$0x1] %vm4517, %v4426
      %4539 = vst.msk [vmem:[#allocation2 + $0x64] sm:$0xf] %vm4512, %v4427
      %4540 = vst.msk [vmem:[#allocation2 + $0x68] sm:$0xf] %vm4512, %v4428
      %4541 = vst.msk [vmem:[#allocation2 + $0x6c] sm:$0xf] %vm4512, %v4429
      %4542 = vst.msk [vmem:[#allocation2 + $0x70] sm:$0xf] %vm4512, %v4430
      %4543 = vst.msk [vmem:[#allocation2 + $0x74] sm:$0x1] %vm4517, %v4431
      %4544 = vst.msk [vmem:[#allocation2 + $0x78] sm:$0xf] %vm4512, %v4427
      %4545 = vst.msk [vmem:[#allocation2 + $0x7c] sm:$0xf] %vm4512, %v4428
      %4546 = vst.msk [vmem:[#allocation2 + $0x80] sm:$0xf] %vm4512, %v4429
      %4547 = vst.msk [vmem:[#allocation2 + $0x84] sm:$0xf] %vm4512, %v4430
      %4548 = vst.msk [vmem:[#allocation2 + $0x88] sm:$0x1] %vm4517, %v4431
      %4549 = vst.msk [vmem:[#allocation2 + $0x8c] sm:$0xf] %vm4512, %v4432
      %4550 = vst.msk [vmem:[#allocation2 + $0x90] sm:$0xf] %vm4512, %v4433
      %4551 = vst.msk [vmem:[#allocation2 + $0x94] sm:$0xf] %vm4512, %v4434
      %4552 = vst.msk [vmem:[#allocation2 + $0x98] sm:$0xf] %vm4512, %v4435
      %4553 = vst.msk [vmem:[#allocation2 + $0x9c] sm:$0x1] %vm4517, %v4436
      %4554 = vst.msk [vmem:[#allocation2 + $0xa0] sm:$0xf] %vm4512, %v4432
      %4555 = vst.msk [vmem:[#allocation2 + $0xa4] sm:$0xf] %vm4512, %v4433
      %4556 = vst.msk [vmem:[#allocation2 + $0xa8] sm:$0xf] %vm4512, %v4434
      %4557 = vst.msk [vmem:[#allocation2 + $0xac] sm:$0xf] %vm4512, %v4435
      %4558 = vst.msk [vmem:[#allocation2 + $0xb0] sm:$0x1] %vm4517, %v4436
      %4559 = vst.msk [vmem:[#allocation2 + $0xb4] sm:$0xf] %vm4512, %v4437
      %4560 = vst.msk [vmem:[#allocation2 + $0xb8] sm:$0xf] %vm4512, %v4438
      %4561 = vst.msk [vmem:[#allocation2 + $0xbc] sm:$0xf] %vm4512, %v4439
      %4562 = vst.msk [vmem:[#allocation2 + $0xc0] sm:$0xf] %vm4512, %v4440
      %4563 = vst.msk [vmem:[#allocation2 + $0xc4] sm:$0x1] %vm4517, %v4441
      %4564 = vst.msk [vmem:[#allocation2 + $0xc8] sm:$0xf] %vm4512, %v4437
      %4565 = vst.msk [vmem:[#allocation2 + $0xcc] sm:$0xf] %vm4512, %v4438
      %4566 = vst.msk [vmem:[#allocation2 + $0xd0] sm:$0xf] %vm4512, %v4439
      %4567 = vst.msk [vmem:[#allocation2 + $0xd4] sm:$0xf] %vm4512, %v4440
      %4568 = vst.msk [vmem:[#allocation2 + $0xd8] sm:$0x1] %vm4517, %v4441
      %4569 = vst.msk [vmem:[#allocation2 + $0xdc] sm:$0xf] %vm4512, %v4442
      %4570 = vst.msk [vmem:[#allocation2 + $0xe0] sm:$0xf] %vm4512, %v4443
      %4571 = vst.msk [vmem:[#allocation2 + $0xe4] sm:$0xf] %vm4512, %v4444
      %4572 = vst.msk [vmem:[#allocation2 + $0xe8] sm:$0xf] %vm4512, %v4445
      %4573 = vst.msk [vmem:[#allocation2 + $0xec] sm:$0x1] %vm4517, %v4446
      %4574 = vst.msk [vmem:[#allocation2 + $0xf0] sm:$0xf] %vm4512, %v4442
      %4575 = vst.msk [vmem:[#allocation2 + $0xf4] sm:$0xf] %vm4512, %v4443
      %4576 = vst.msk [vmem:[#allocation2 + $0xf8] sm:$0xf] %vm4512, %v4444
      %4577 = vst.msk [vmem:[#allocation2 + $0xfc] sm:$0xf] %vm4512, %v4445
      %4578 = vst.msk [vmem:[#allocation2 + $0x100] sm:$0x1] %vm4517, %v4446
      %4579 = vst.msk [vmem:[#allocation2 + $0x104] sm:$0xf] %vm4512, %v4447
      %4580 = vst.msk [vmem:[#allocation2 + $0x108] sm:$0xf] %vm4512, %v4448
      %4581 = vst.msk [vmem:[#allocation2 + $0x10c] sm:$0xf] %vm4512, %v4449
      %4582 = vst.msk [vmem:[#allocation2 + $0x110] sm:$0xf] %vm4512, %v4450
      %4583 = vst.msk [vmem:[#allocation2 + $0x114] sm:$0x1] %vm4517, %v4451
      %4584 = vst.msk [vmem:[#allocation2 + $0x118] sm:$0xf] %vm4512, %v4447
      %4585 = vst.msk [vmem:[#allocation2 + $0x11c] sm:$0xf] %vm4512, %v4448
      %4586 = vst.msk [vmem:[#allocation2 + $0x120] sm:$0xf] %vm4512, %v4449
      %4587 = vst.msk [vmem:[#allocation2 + $0x124] sm:$0xf] %vm4512, %v4450
      %4588 = vst.msk [vmem:[#allocation2 + $0x128] sm:$0x1] %vm4517, %v4451
      %4589 = vst.msk [vmem:[#allocation2 + $0x12c] sm:$0xf] %vm4512, %v4452
      %4590 = vst.msk [vmem:[#allocation2 + $0x130] sm:$0xf] %vm4512, %v4453
      %4591 = vst.msk [vmem:[#allocation2 + $0x134] sm:$0xf] %vm4512, %v4454
      %4592 = vst.msk [vmem:[#allocation2 + $0x138] sm:$0xf] %vm4512, %v4455
      %4593 = vst.msk [vmem:[#allocation2 + $0x13c] sm:$0x1] %vm4517, %v4456
      %4594 = vst.msk [vmem:[#allocation2 + $0x140] sm:$0xf] %vm4512, %v4452
      %4595 = vst.msk [vmem:[#allocation2 + $0x144] sm:$0xf] %vm4512, %v4453
      %4596 = vst.msk [vmem:[#allocation2 + $0x148] sm:$0xf] %vm4512, %v4454
      %4597 = vst.msk [vmem:[#allocation2 + $0x14c] sm:$0xf] %vm4512, %v4455
      %4598 = vst.msk [vmem:[#allocation2 + $0x150] sm:$0x1] %vm4517, %v4456
      %4599 = vst.msk [vmem:[#allocation2 + $0x154] sm:$0xf] %vm4512, %v4457
      %4600 = vst.msk [vmem:[#allocation2 + $0x158] sm:$0xf] %vm4512, %v4458
      %4601 = vst.msk [vmem:[#allocation2 + $0x15c] sm:$0xf] %vm4512, %v4459
      %4602 = vst.msk [vmem:[#allocation2 + $0x160] sm:$0xf] %vm4512, %v4460
      %4603 = vst.msk [vmem:[#allocation2 + $0x164] sm:$0x1] %vm4517, %v4461
      %v4604 = vld [vmem:[#allocation2] sm:$0xf]
      %v4605 = vld [vmem:[#allocation2 + $0x4] sm:$0xf]
      %v4606 = vld [vmem:[#allocation2 + $0x8] sm:$0xf]
      %v4607 = vld [vmem:[#allocation2 + $0xc] sm:$0xf]
      %v4608 = vld [vmem:[#allocation2 + $0x14] sm:$0xf]
      %v4609 = vld [vmem:[#allocation2 + $0x18] sm:$0xf]
      %v4610 = vld [vmem:[#allocation2 + $0x1c] sm:$0xf]
      %v4611 = vld [vmem:[#allocation2 + $0x20] sm:$0xf]
      %v4612 = vld [vmem:[#allocation2 + $0x28] sm:$0xf]
      %v4613 = vld [vmem:[#allocation2 + $0x2c] sm:$0xf]
      %v4614 = vld [vmem:[#allocation2 + $0x30] sm:$0xf]
      %v4615 = vld [vmem:[#allocation2 + $0x34] sm:$0xf]
      %v4616 = vld [vmem:[#allocation2 + $0x3c] sm:$0xf]
      %v4617 = vld [vmem:[#allocation2 + $0x40] sm:$0xf]
      %v4618 = vld [vmem:[#allocation2 + $0x44] sm:$0xf]
      %v4619 = vld [vmem:[#allocation2 + $0x48] sm:$0xf]
      %v4620 = vld [vmem:[#allocation2 + $0x50] sm:$0xf]
      %v4621 = vld [vmem:[#allocation2 + $0x54] sm:$0xf]
      %v4622 = vld [vmem:[#allocation2 + $0x58] sm:$0xf]
      %v4623 = vld [vmem:[#allocation2 + $0x5c] sm:$0xf]
      %v4624 = vld [vmem:[#allocation2 + $0x64] sm:$0xf]
      %v4625 = vld [vmem:[#allocation2 + $0x68] sm:$0xf]
      %v4626 = vld [vmem:[#allocation2 + $0x6c] sm:$0xf]
      %v4627 = vld [vmem:[#allocation2 + $0x70] sm:$0xf]
      %v4628 = vld [vmem:[#allocation2 + $0x78] sm:$0xf]
      %v4629 = vld [vmem:[#allocation2 + $0x7c] sm:$0xf]
      %v4630 = vld [vmem:[#allocation2 + $0x80] sm:$0xf]
      %v4631 = vld [vmem:[#allocation2 + $0x84] sm:$0xf]
      %v4632 = vld [vmem:[#allocation2 + $0x8c] sm:$0xf]
      %v4633 = vld [vmem:[#allocation2 + $0x90] sm:$0xf]
      %v4634 = vld [vmem:[#allocation2 + $0x94] sm:$0xf]
      %v4635 = vld [vmem:[#allocation2 + $0x98] sm:$0xf]
      %v4636 = vld [vmem:[#allocation2 + $0xa0] sm:$0xf]
      %v4637 = vld [vmem:[#allocation2 + $0xa4] sm:$0xf]
      %v4638 = vld [vmem:[#allocation2 + $0xa8] sm:$0xf]
      %v4639 = vld [vmem:[#allocation2 + $0xac] sm:$0xf]
      %v4640 = vld [vmem:[#allocation2 + $0xb4] sm:$0xf]
      %v4641 = vld [vmem:[#allocation2 + $0xb8] sm:$0xf]
      %v4642 = vld [vmem:[#allocation2 + $0xbc] sm:$0xf]
      %v4643 = vld [vmem:[#allocation2 + $0xc0] sm:$0xf]
      %v4644 = vld [vmem:[#allocation2 + $0xc8] sm:$0xf]
      %v4645 = vld [vmem:[#allocation2 + $0xcc] sm:$0xf]
      %v4646 = vld [vmem:[#allocation2 + $0xd0] sm:$0xf]
      %v4647 = vld [vmem:[#allocation2 + $0xd4] sm:$0xf]
      %v4648 = vld [vmem:[#allocation2 + $0xdc] sm:$0xf]
      %v4649 = vld [vmem:[#allocation2 + $0xe0] sm:$0xf]
      %v4650 = vld [vmem:[#allocation2 + $0xe4] sm:$0xf]
      %v4651 = vld [vmem:[#allocation2 + $0xe8] sm:$0xf]
      %v4652 = vld [vmem:[#allocation2 + $0xf0] sm:$0xf]
      %v4653 = vld [vmem:[#allocation2 + $0xf4] sm:$0xf]
      %v4654 = vld [vmem:[#allocation2 + $0xf8] sm:$0xf]
      %v4655 = vld [vmem:[#allocation2 + $0xfc] sm:$0xf]
      %v4656 = vld [vmem:[#allocation2 + $0x104] sm:$0xf]
      %v4657 = vld [vmem:[#allocation2 + $0x108] sm:$0xf]
      %v4658 = vld [vmem:[#allocation2 + $0x10c] sm:$0xf]
      %v4659 = vld [vmem:[#allocation2 + $0x110] sm:$0xf]
      %v4660 = vld [vmem:[#allocation2 + $0x118] sm:$0xf]
      %v4661 = vld [vmem:[#allocation2 + $0x11c] sm:$0xf]
      %v4662 = vld [vmem:[#allocation2 + $0x120] sm:$0xf]
      %v4663 = vld [vmem:[#allocation2 + $0x124] sm:$0xf]
      %v4664 = vld [vmem:[#allocation2 + $0x12c] sm:$0xf]
      %v4665 = vld [vmem:[#allocation2 + $0x130] sm:$0xf]
      %v4666 = vld [vmem:[#allocation2 + $0x134] sm:$0xf]
      %v4667 = vld [vmem:[#allocation2 + $0x138] sm:$0xf]
      %v4668 = vld [vmem:[#allocation2 + $0x10] sm:$0x1]
      %v4669 = vld [vmem:[#allocation2 + $0x24] sm:$0x1]
      %v4670 = vld [vmem:[#allocation2 + $0x38] sm:$0x1]
      %v4671 = vld [vmem:[#allocation2 + $0x4c] sm:$0x1]
      %v4672 = vld [vmem:[#allocation2 + $0x60] sm:$0x1]
      %v4673 = vld [vmem:[#allocation2 + $0x74] sm:$0x1]
      %v4674 = vld [vmem:[#allocation2 + $0x88] sm:$0x1]
      %v4675 = vld [vmem:[#allocation2 + $0x9c] sm:$0x1]
      %v4676 = vld [vmem:[#allocation2 + $0xb0] sm:$0x1]
      %v4677 = vld [vmem:[#allocation2 + $0xc4] sm:$0x1]
      %v4678 = vld [vmem:[#allocation2 + $0xd8] sm:$0x1]
      %v4679 = vld [vmem:[#allocation2 + $0xec] sm:$0x1]
      %v4680 = vld [vmem:[#allocation2 + $0x100] sm:$0x1]
      %v4681 = vld [vmem:[#allocation2 + $0x114] sm:$0x1]
      %v4682 = vld [vmem:[#allocation2 + $0x128] sm:$0x1]
      %v4683 = vld [vmem:[#allocation2 + $0x13c] sm:$0x1]
      %vm4684 = vsmask.f32 3328
      %vm4685 = vsmask.f32 7440
      %vm4686 = vmor %vm4684, %vm4685
      %v4688 = vshrl.u32 %v4604, 16
      %v4690 = vrot.slane %v4688, 4
      %v4691 = vshll.u32 %v4604, 16
      %v4693 = vrot.slane %v4691, 5
      %v4694 = vor.u32 %v4690, %v4693
      %v4695 = vrot.slane %v4694, 4
      %v4697 = vshll.u32 %v4605, 16
      %v4699 = vrot.slane %v4697, 5
      %v4700 = vsel %vm4686, %v4695, %v4699
      %v4701 = vshrl.u32 %v4605, 16
      %v4703 = vrot.slane %v4701, 4
      %v4704 = vor.u32 %v4703, %v4699
      %v4705 = vrot.slane %v4704, 4
      %v4707 = vshll.u32 %v4606, 16
      %v4709 = vrot.slane %v4707, 5
      %v4710 = vsel %vm4686, %v4705, %v4709
      %v4711 = vshrl.u32 %v4606, 16
      %v4713 = vrot.slane %v4711, 4
      %v4714 = vor.u32 %v4713, %v4709
      %v4715 = vrot.slane %v4714, 4
      %v4717 = vshll.u32 %v4607, 16
      %v4719 = vrot.slane %v4717, 5
      %v4720 = vsel %vm4686, %v4715, %v4719
      %v4721 = vshrl.u32 %v4607, 16
      %v4723 = vrot.slane %v4721, 4
      %v4724 = vor.u32 %v4723, %v4719
      %v4725 = vrot.slane %v4724, 4
      %v4727 = vshll.u32 %v4668, 16
      %v4729 = vrot.slane %v4727, 5
      %v4730 = vsel %vm4686, %v4725, %v4729
      %v4732 = vshrl.u32 %v4608, 16
      %v4734 = vrot.slane %v4732, 4
      %v4735 = vshll.u32 %v4608, 16
      %v4737 = vrot.slane %v4735, 5
      %v4738 = vor.u32 %v4734, %v4737
      %v4739 = vrot.slane %v4738, 4
      %v4741 = vshll.u32 %v4609, 16
      %v4743 = vrot.slane %v4741, 5
      %v4744 = vsel %vm4686, %v4739, %v4743
      %v4745 = vshrl.u32 %v4609, 16
      %v4747 = vrot.slane %v4745, 4
      %v4748 = vor.u32 %v4747, %v4743
      %v4749 = vrot.slane %v4748, 4
      %v4751 = vshll.u32 %v4610, 16
      %v4753 = vrot.slane %v4751, 5
      %v4754 = vsel %vm4686, %v4749, %v4753
      %v4755 = vshrl.u32 %v4610, 16
      %v4757 = vrot.slane %v4755, 4
      %v4758 = vor.u32 %v4757, %v4753
      %v4759 = vrot.slane %v4758, 4
      %v4761 = vshll.u32 %v4611, 16
      %v4763 = vrot.slane %v4761, 5
      %v4764 = vsel %vm4686, %v4759, %v4763
      %v4765 = vshrl.u32 %v4611, 16
      %v4767 = vrot.slane %v4765, 4
      %v4768 = vor.u32 %v4767, %v4763
      %v4769 = vrot.slane %v4768, 4
      %v4771 = vshll.u32 %v4669, 16
      %v4773 = vrot.slane %v4771, 5
      %v4774 = vsel %vm4686, %v4769, %v4773
      %v4776 = vshrl.u32 %v4612, 16
      %v4778 = vrot.slane %v4776, 4
      %v4779 = vshll.u32 %v4612, 16
      %v4781 = vrot.slane %v4779, 5
      %v4782 = vor.u32 %v4778, %v4781
      %v4783 = vrot.slane %v4782, 4
      %v4785 = vshll.u32 %v4613, 16
      %v4787 = vrot.slane %v4785, 5
      %v4788 = vsel %vm4686, %v4783, %v4787
      %v4789 = vshrl.u32 %v4613, 16
      %v4791 = vrot.slane %v4789, 4
      %v4792 = vor.u32 %v4791, %v4787
      %v4793 = vrot.slane %v4792, 4
      %v4795 = vshll.u32 %v4614, 16
      %v4797 = vrot.slane %v4795, 5
      %v4798 = vsel %vm4686, %v4793, %v4797
      %v4799 = vshrl.u32 %v4614, 16
      %v4801 = vrot.slane %v4799, 4
      %v4802 = vor.u32 %v4801, %v4797
      %v4803 = vrot.slane %v4802, 4
      %v4805 = vshll.u32 %v4615, 16
      %v4807 = vrot.slane %v4805, 5
      %v4808 = vsel %vm4686, %v4803, %v4807
      %v4809 = vshrl.u32 %v4615, 16
      %v4811 = vrot.slane %v4809, 4
      %v4812 = vor.u32 %v4811, %v4807
      %v4813 = vrot.slane %v4812, 4
      %v4815 = vshll.u32 %v4670, 16
      %v4817 = vrot.slane %v4815, 5
      %v4818 = vsel %vm4686, %v4813, %v4817
      %v4820 = vshrl.u32 %v4616, 16
      %v4822 = vrot.slane %v4820, 4
      %v4823 = vshll.u32 %v4616, 16
      %v4825 = vrot.slane %v4823, 5
      %v4826 = vor.u32 %v4822, %v4825
      %v4827 = vrot.slane %v4826, 4
      %v4829 = vshll.u32 %v4617, 16
      %v4831 = vrot.slane %v4829, 5
      %v4832 = vsel %vm4686, %v4827, %v4831
      %v4833 = vshrl.u32 %v4617, 16
      %v4835 = vrot.slane %v4833, 4
      %v4836 = vor.u32 %v4835, %v4831
      %v4837 = vrot.slane %v4836, 4
      %v4839 = vshll.u32 %v4618, 16
      %v4841 = vrot.slane %v4839, 5
      %v4842 = vsel %vm4686, %v4837, %v4841
      %v4843 = vshrl.u32 %v4618, 16
      %v4845 = vrot.slane %v4843, 4
      %v4846 = vor.u32 %v4845, %v4841
      %v4847 = vrot.slane %v4846, 4
      %v4849 = vshll.u32 %v4619, 16
      %v4851 = vrot.slane %v4849, 5
      %v4852 = vsel %vm4686, %v4847, %v4851
      %v4853 = vshrl.u32 %v4619, 16
      %v4855 = vrot.slane %v4853, 4
      %v4856 = vor.u32 %v4855, %v4851
      %v4857 = vrot.slane %v4856, 4
      %v4859 = vshll.u32 %v4671, 16
      %v4861 = vrot.slane %v4859, 5
      %v4862 = vsel %vm4686, %v4857, %v4861
      %v4864 = vshrl.u32 %v4620, 16
      %v4866 = vrot.slane %v4864, 4
      %v4867 = vshll.u32 %v4620, 16
      %v4869 = vrot.slane %v4867, 5
      %v4870 = vor.u32 %v4866, %v4869
      %v4871 = vrot.slane %v4870, 4
      %v4873 = vshll.u32 %v4621, 16
      %v4875 = vrot.slane %v4873, 5
      %v4876 = vsel %vm4686, %v4871, %v4875
      %v4877 = vshrl.u32 %v4621, 16
      %v4879 = vrot.slane %v4877, 4
      %v4880 = vor.u32 %v4879, %v4875
      %v4881 = vrot.slane %v4880, 4
      %v4883 = vshll.u32 %v4622, 16
      %v4885 = vrot.slane %v4883, 5
      %v4886 = vsel %vm4686, %v4881, %v4885
      %v4887 = vshrl.u32 %v4622, 16
      %v4889 = vrot.slane %v4887, 4
      %v4890 = vor.u32 %v4889, %v4885
      %v4891 = vrot.slane %v4890, 4
      %v4893 = vshll.u32 %v4623, 16
      %v4895 = vrot.slane %v4893, 5
      %v4896 = vsel %vm4686, %v4891, %v4895
      %v4897 = vshrl.u32 %v4623, 16
      %v4899 = vrot.slane %v4897, 4
      %v4900 = vor.u32 %v4899, %v4895
      %v4901 = vrot.slane %v4900, 4
      %v4903 = vshll.u32 %v4672, 16
      %v4905 = vrot.slane %v4903, 5
      %v4906 = vsel %vm4686, %v4901, %v4905
      %v4908 = vshrl.u32 %v4624, 16
      %v4910 = vrot.slane %v4908, 4
      %v4911 = vshll.u32 %v4624, 16
      %v4913 = vrot.slane %v4911, 5
      %v4914 = vor.u32 %v4910, %v4913
      %v4915 = vrot.slane %v4914, 4
      %v4917 = vshll.u32 %v4625, 16
      %v4919 = vrot.slane %v4917, 5
      %v4920 = vsel %vm4686, %v4915, %v4919
      %v4921 = vshrl.u32 %v4625, 16
      %v4923 = vrot.slane %v4921, 4
      %v4924 = vor.u32 %v4923, %v4919
      %v4925 = vrot.slane %v4924, 4
      %v4927 = vshll.u32 %v4626, 16
      %v4929 = vrot.slane %v4927, 5
      %v4930 = vsel %vm4686, %v4925, %v4929
      %v4931 = vshrl.u32 %v4626, 16
      %v4933 = vrot.slane %v4931, 4
      %v4934 = vor.u32 %v4933, %v4929
      %v4935 = vrot.slane %v4934, 4
      %v4937 = vshll.u32 %v4627, 16
      %v4939 = vrot.slane %v4937, 5
      %v4940 = vsel %vm4686, %v4935, %v4939
      %v4941 = vshrl.u32 %v4627, 16
      %v4943 = vrot.slane %v4941, 4
      %v4944 = vor.u32 %v4943, %v4939
      %v4945 = vrot.slane %v4944, 4
      %v4947 = vshll.u32 %v4673, 16
      %v4949 = vrot.slane %v4947, 5
      %v4950 = vsel %vm4686, %v4945, %v4949
      %v4952 = vshrl.u32 %v4628, 16
      %v4954 = vrot.slane %v4952, 4
      %v4955 = vshll.u32 %v4628, 16
      %v4957 = vrot.slane %v4955, 5
      %v4958 = vor.u32 %v4954, %v4957
      %v4959 = vrot.slane %v4958, 4
      %v4961 = vshll.u32 %v4629, 16
      %v4963 = vrot.slane %v4961, 5
      %v4964 = vsel %vm4686, %v4959, %v4963
      %v4965 = vshrl.u32 %v4629, 16
      %v4967 = vrot.slane %v4965, 4
      %v4968 = vor.u32 %v4967, %v4963
      %v4969 = vrot.slane %v4968, 4
      %v4971 = vshll.u32 %v4630, 16
      %v4973 = vrot.slane %v4971, 5
      %v4974 = vsel %vm4686, %v4969, %v4973
      %v4975 = vshrl.u32 %v4630, 16
      %v4977 = vrot.slane %v4975, 4
      %v4978 = vor.u32 %v4977, %v4973
      %v4979 = vrot.slane %v4978, 4
      %v4981 = vshll.u32 %v4631, 16
      %v4983 = vrot.slane %v4981, 5
      %v4984 = vsel %vm4686, %v4979, %v4983
      %v4985 = vshrl.u32 %v4631, 16
      %v4987 = vrot.slane %v4985, 4
      %v4988 = vor.u32 %v4987, %v4983
      %v4989 = vrot.slane %v4988, 4
      %v4991 = vshll.u32 %v4674, 16
      %v4993 = vrot.slane %v4991, 5
      %v4994 = vsel %vm4686, %v4989, %v4993
      %v4996 = vshrl.u32 %v4632, 16
      %v4998 = vrot.slane %v4996, 4
      %v4999 = vshll.u32 %v4632, 16
      %v5001 = vrot.slane %v4999, 5
      %v5002 = vor.u32 %v4998, %v5001
      %v5003 = vrot.slane %v5002, 4
      %v5005 = vshll.u32 %v4633, 16
      %v5007 = vrot.slane %v5005, 5
      %v5008 = vsel %vm4686, %v5003, %v5007
      %v5009 = vshrl.u32 %v4633, 16
      %v5011 = vrot.slane %v5009, 4
      %v5012 = vor.u32 %v5011, %v5007
      %v5013 = vrot.slane %v5012, 4
      %v5015 = vshll.u32 %v4634, 16
      %v5017 = vrot.slane %v5015, 5
      %v5018 = vsel %vm4686, %v5013, %v5017
      %v5019 = vshrl.u32 %v4634, 16
      %v5021 = vrot.slane %v5019, 4
      %v5022 = vor.u32 %v5021, %v5017
      %v5023 = vrot.slane %v5022, 4
      %v5025 = vshll.u32 %v4635, 16
      %v5027 = vrot.slane %v5025, 5
      %v5028 = vsel %vm4686, %v5023, %v5027
      %v5029 = vshrl.u32 %v4635, 16
      %v5031 = vrot.slane %v5029, 4
      %v5032 = vor.u32 %v5031, %v5027
      %v5033 = vrot.slane %v5032, 4
      %v5035 = vshll.u32 %v4675, 16
      %v5037 = vrot.slane %v5035, 5
      %v5038 = vsel %vm4686, %v5033, %v5037
      %v5040 = vshrl.u32 %v4636, 16
      %v5042 = vrot.slane %v5040, 4
      %v5043 = vshll.u32 %v4636, 16
      %v5045 = vrot.slane %v5043, 5
      %v5046 = vor.u32 %v5042, %v5045
      %v5047 = vrot.slane %v5046, 4
      %v5049 = vshll.u32 %v4637, 16
      %v5051 = vrot.slane %v5049, 5
      %v5052 = vsel %vm4686, %v5047, %v5051
      %v5053 = vshrl.u32 %v4637, 16
      %v5055 = vrot.slane %v5053, 4
      %v5056 = vor.u32 %v5055, %v5051
      %v5057 = vrot.slane %v5056, 4
      %v5059 = vshll.u32 %v4638, 16
      %v5061 = vrot.slane %v5059, 5
      %v5062 = vsel %vm4686, %v5057, %v5061
      %v5063 = vshrl.u32 %v4638, 16
      %v5065 = vrot.slane %v5063, 4
      %v5066 = vor.u32 %v5065, %v5061
      %v5067 = vrot.slane %v5066, 4
      %v5069 = vshll.u32 %v4639, 16
      %v5071 = vrot.slane %v5069, 5
      %v5072 = vsel %vm4686, %v5067, %v5071
      %v5073 = vshrl.u32 %v4639, 16
      %v5075 = vrot.slane %v5073, 4
      %v5076 = vor.u32 %v5075, %v5071
      %v5077 = vrot.slane %v5076, 4
      %v5079 = vshll.u32 %v4676, 16
      %v5081 = vrot.slane %v5079, 5
      %v5082 = vsel %vm4686, %v5077, %v5081
      %v5084 = vshrl.u32 %v4640, 16
      %v5086 = vrot.slane %v5084, 4
      %v5087 = vshll.u32 %v4640, 16
      %v5089 = vrot.slane %v5087, 5
      %v5090 = vor.u32 %v5086, %v5089
      %v5091 = vrot.slane %v5090, 4
      %v5093 = vshll.u32 %v4641, 16
      %v5095 = vrot.slane %v5093, 5
      %v5096 = vsel %vm4686, %v5091, %v5095
      %v5097 = vshrl.u32 %v4641, 16
      %v5099 = vrot.slane %v5097, 4
      %v5100 = vor.u32 %v5099, %v5095
      %v5101 = vrot.slane %v5100, 4
      %v5103 = vshll.u32 %v4642, 16
      %v5105 = vrot.slane %v5103, 5
      %v5106 = vsel %vm4686, %v5101, %v5105
      %v5107 = vshrl.u32 %v4642, 16
      %v5109 = vrot.slane %v5107, 4
      %v5110 = vor.u32 %v5109, %v5105
      %v5111 = vrot.slane %v5110, 4
      %v5113 = vshll.u32 %v4643, 16
      %v5115 = vrot.slane %v5113, 5
      %v5116 = vsel %vm4686, %v5111, %v5115
      %v5117 = vshrl.u32 %v4643, 16
      %v5119 = vrot.slane %v5117, 4
      %v5120 = vor.u32 %v5119, %v5115
      %v5121 = vrot.slane %v5120, 4
      %v5123 = vshll.u32 %v4677, 16
      %v5125 = vrot.slane %v5123, 5
      %v5126 = vsel %vm4686, %v5121, %v5125
      %v5128 = vshrl.u32 %v4644, 16
      %v5130 = vrot.slane %v5128, 4
      %v5131 = vshll.u32 %v4644, 16
      %v5133 = vrot.slane %v5131, 5
      %v5134 = vor.u32 %v5130, %v5133
      %v5135 = vrot.slane %v5134, 4
      %v5137 = vshll.u32 %v4645, 16
      %v5139 = vrot.slane %v5137, 5
      %v5140 = vsel %vm4686, %v5135, %v5139
      %v5141 = vshrl.u32 %v4645, 16
      %v5143 = vrot.slane %v5141, 4
      %v5144 = vor.u32 %v5143, %v5139
      %v5145 = vrot.slane %v5144, 4
      %v5147 = vshll.u32 %v4646, 16
      %v5149 = vrot.slane %v5147, 5
      %v5150 = vsel %vm4686, %v5145, %v5149
      %v5151 = vshrl.u32 %v4646, 16
      %v5153 = vrot.slane %v5151, 4
      %v5154 = vor.u32 %v5153, %v5149
      %v5155 = vrot.slane %v5154, 4
      %v5157 = vshll.u32 %v4647, 16
      %v5159 = vrot.slane %v5157, 5
      %v5160 = vsel %vm4686, %v5155, %v5159
      %v5161 = vshrl.u32 %v4647, 16
      %v5163 = vrot.slane %v5161, 4
      %v5164 = vor.u32 %v5163, %v5159
      %v5165 = vrot.slane %v5164, 4
      %v5167 = vshll.u32 %v4678, 16
      %v5169 = vrot.slane %v5167, 5
      %v5170 = vsel %vm4686, %v5165, %v5169
      %v5172 = vshrl.u32 %v4648, 16
      %v5174 = vrot.slane %v5172, 4
      %v5175 = vshll.u32 %v4648, 16
      %v5177 = vrot.slane %v5175, 5
      %v5178 = vor.u32 %v5174, %v5177
      %v5179 = vrot.slane %v5178, 4
      %v5181 = vshll.u32 %v4649, 16
      %v5183 = vrot.slane %v5181, 5
      %v5184 = vsel %vm4686, %v5179, %v5183
      %v5185 = vshrl.u32 %v4649, 16
      %v5187 = vrot.slane %v5185, 4
      %v5188 = vor.u32 %v5187, %v5183
      %v5189 = vrot.slane %v5188, 4
      %v5191 = vshll.u32 %v4650, 16
      %v5193 = vrot.slane %v5191, 5
      %v5194 = vsel %vm4686, %v5189, %v5193
      %v5195 = vshrl.u32 %v4650, 16
      %v5197 = vrot.slane %v5195, 4
      %v5198 = vor.u32 %v5197, %v5193
      %v5199 = vrot.slane %v5198, 4
      %v5201 = vshll.u32 %v4651, 16
      %v5203 = vrot.slane %v5201, 5
      %v5204 = vsel %vm4686, %v5199, %v5203
      %v5205 = vshrl.u32 %v4651, 16
      %v5207 = vrot.slane %v5205, 4
      %v5208 = vor.u32 %v5207, %v5203
      %v5209 = vrot.slane %v5208, 4
      %v5211 = vshll.u32 %v4679, 16
      %v5213 = vrot.slane %v5211, 5
      %v5214 = vsel %vm4686, %v5209, %v5213
      %v5216 = vshrl.u32 %v4652, 16
      %v5218 = vrot.slane %v5216, 4
      %v5219 = vshll.u32 %v4652, 16
      %v5221 = vrot.slane %v5219, 5
      %v5222 = vor.u32 %v5218, %v5221
      %v5223 = vrot.slane %v5222, 4
      %v5225 = vshll.u32 %v4653, 16
      %v5227 = vrot.slane %v5225, 5
      %v5228 = vsel %vm4686, %v5223, %v5227
      %v5229 = vshrl.u32 %v4653, 16
      %v5231 = vrot.slane %v5229, 4
      %v5232 = vor.u32 %v5231, %v5227
      %v5233 = vrot.slane %v5232, 4
      %v5235 = vshll.u32 %v4654, 16
      %v5237 = vrot.slane %v5235, 5
      %v5238 = vsel %vm4686, %v5233, %v5237
      %v5239 = vshrl.u32 %v4654, 16
      %v5241 = vrot.slane %v5239, 4
      %v5242 = vor.u32 %v5241, %v5237
      %v5243 = vrot.slane %v5242, 4
      %v5245 = vshll.u32 %v4655, 16
      %v5247 = vrot.slane %v5245, 5
      %v5248 = vsel %vm4686, %v5243, %v5247
      %v5249 = vshrl.u32 %v4655, 16
      %v5251 = vrot.slane %v5249, 4
      %v5252 = vor.u32 %v5251, %v5247
      %v5253 = vrot.slane %v5252, 4
      %v5255 = vshll.u32 %v4680, 16
      %v5257 = vrot.slane %v5255, 5
      %v5258 = vsel %vm4686, %v5253, %v5257
      %v5260 = vshrl.u32 %v4656, 16
      %v5262 = vrot.slane %v5260, 4
      %v5263 = vshll.u32 %v4656, 16
      %v5265 = vrot.slane %v5263, 5
      %v5266 = vor.u32 %v5262, %v5265
      %v5267 = vrot.slane %v5266, 4
      %v5269 = vshll.u32 %v4657, 16
      %v5271 = vrot.slane %v5269, 5
      %v5272 = vsel %vm4686, %v5267, %v5271
      %v5273 = vshrl.u32 %v4657, 16
      %v5275 = vrot.slane %v5273, 4
      %v5276 = vor.u32 %v5275, %v5271
      %v5277 = vrot.slane %v5276, 4
      %v5279 = vshll.u32 %v4658, 16
      %v5281 = vrot.slane %v5279, 5
      %v5282 = vsel %vm4686, %v5277, %v5281
      %v5283 = vshrl.u32 %v4658, 16
      %v5285 = vrot.slane %v5283, 4
      %v5286 = vor.u32 %v5285, %v5281
      %v5287 = vrot.slane %v5286, 4
      %v5289 = vshll.u32 %v4659, 16
      %v5291 = vrot.slane %v5289, 5
      %v5292 = vsel %vm4686, %v5287, %v5291
      %v5293 = vshrl.u32 %v4659, 16
      %v5295 = vrot.slane %v5293, 4
      %v5296 = vor.u32 %v5295, %v5291
      %v5297 = vrot.slane %v5296, 4
      %v5299 = vshll.u32 %v4681, 16
      %v5301 = vrot.slane %v5299, 5
      %v5302 = vsel %vm4686, %v5297, %v5301
      %v5304 = vshrl.u32 %v4660, 16
      %v5306 = vrot.slane %v5304, 4
      %v5307 = vshll.u32 %v4660, 16
      %v5309 = vrot.slane %v5307, 5
      %v5310 = vor.u32 %v5306, %v5309
      %v5311 = vrot.slane %v5310, 4
      %v5313 = vshll.u32 %v4661, 16
      %v5315 = vrot.slane %v5313, 5
      %v5316 = vsel %vm4686, %v5311, %v5315
      %v5317 = vshrl.u32 %v4661, 16
      %v5319 = vrot.slane %v5317, 4
      %v5320 = vor.u32 %v5319, %v5315
      %v5321 = vrot.slane %v5320, 4
      %v5323 = vshll.u32 %v4662, 16
      %v5325 = vrot.slane %v5323, 5
      %v5326 = vsel %vm4686, %v5321, %v5325
      %v5327 = vshrl.u32 %v4662, 16
      %v5329 = vrot.slane %v5327, 4
      %v5330 = vor.u32 %v5329, %v5325
      %v5331 = vrot.slane %v5330, 4
      %v5333 = vshll.u32 %v4663, 16
      %v5335 = vrot.slane %v5333, 5
      %v5336 = vsel %vm4686, %v5331, %v5335
      %v5337 = vshrl.u32 %v4663, 16
      %v5339 = vrot.slane %v5337, 4
      %v5340 = vor.u32 %v5339, %v5335
      %v5341 = vrot.slane %v5340, 4
      %v5343 = vshll.u32 %v4682, 16
      %v5345 = vrot.slane %v5343, 5
      %v5346 = vsel %vm4686, %v5341, %v5345
      %v5348 = vshrl.u32 %v4664, 16
      %v5350 = vrot.slane %v5348, 4
      %v5351 = vshll.u32 %v4664, 16
      %v5353 = vrot.slane %v5351, 5
      %v5354 = vor.u32 %v5350, %v5353
      %v5355 = vrot.slane %v5354, 4
      %v5357 = vshll.u32 %v4665, 16
      %v5359 = vrot.slane %v5357, 5
      %v5360 = vsel %vm4686, %v5355, %v5359
      %v5361 = vshrl.u32 %v4665, 16
      %v5363 = vrot.slane %v5361, 4
      %v5364 = vor.u32 %v5363, %v5359
      %v5365 = vrot.slane %v5364, 4
      %v5367 = vshll.u32 %v4666, 16
      %v5369 = vrot.slane %v5367, 5
      %v5370 = vsel %vm4686, %v5365, %v5369
      %v5371 = vshrl.u32 %v4666, 16
      %v5373 = vrot.slane %v5371, 4
      %v5374 = vor.u32 %v5373, %v5369
      %v5375 = vrot.slane %v5374, 4
      %v5377 = vshll.u32 %v4667, 16
      %v5379 = vrot.slane %v5377, 5
      %v5380 = vsel %vm4686, %v5375, %v5379
      %v5381 = vshrl.u32 %v4667, 16
      %v5383 = vrot.slane %v5381, 4
      %v5384 = vor.u32 %v5383, %v5379
      %v5385 = vrot.slane %v5384, 4
      %v5387 = vshll.u32 %v4683, 16
      %v5389 = vrot.slane %v5387, 5
      %v5390 = vsel %vm4686, %v5385, %v5389
      %v5391 = vld [vmem:[#allocation2] sm:$0xe]
      %v5392 = vld [vmem:[#allocation2 + $0x14] sm:$0xe]
      %v5393 = vld [vmem:[#allocation2 + $0x28] sm:$0xe]
      %v5394 = vld [vmem:[#allocation2 + $0x3c] sm:$0xe]
      %v5395 = vld [vmem:[#allocation2 + $0x50] sm:$0xe]
      %v5396 = vld [vmem:[#allocation2 + $0x64] sm:$0xe]
      %v5397 = vld [vmem:[#allocation2 + $0x78] sm:$0xe]
      %v5398 = vld [vmem:[#allocation2 + $0x8c] sm:$0xe]
      %v5399 = vld [vmem:[#allocation2 + $0xa0] sm:$0xe]
      %v5400 = vld [vmem:[#allocation2 + $0xb4] sm:$0xe]
      %v5401 = vld [vmem:[#allocation2 + $0xc8] sm:$0xe]
      %v5402 = vld [vmem:[#allocation2 + $0xdc] sm:$0xe]
      %v5403 = vld [vmem:[#allocation2 + $0xf0] sm:$0xe]
      %v5404 = vld [vmem:[#allocation2 + $0x104] sm:$0xe]
      %v5405 = vld [vmem:[#allocation2 + $0x118] sm:$0xe]
      %v5406 = vld [vmem:[#allocation2 + $0x12c] sm:$0xe]
      %vm5487 = vcmask 1042432
      %vm5488 = vcmask 1046532
      %vm5489 = vmor %vm5487, %vm5488
      %v5490 = vrot.slane %v5391, 5
      %v5491 = vrot.slane %v5490, 4
      %v5492 = vrot.slane %v4605, 5
      %v5493 = vsel %vm5489, %v5491, %v5492
      %v5494 = vrot.slane %v5492, 4
      %v5495 = vrot.slane %v4606, 5
      %v5496 = vsel %vm5489, %v5494, %v5495
      %v5497 = vrot.slane %v5495, 4
      %v5498 = vrot.slane %v4607, 5
      %v5499 = vsel %vm5489, %v5497, %v5498
      %v5500 = vrot.slane %v5498, 4
      %v5501 = vrot.slane %v4668, 5
      %v5502 = vsel %vm5489, %v5500, %v5501
      %v5503 = vrot.slane %v5392, 5
      %v5504 = vrot.slane %v5503, 4
      %v5505 = vrot.slane %v4609, 5
      %v5506 = vsel %vm5489, %v5504, %v5505
      %v5507 = vrot.slane %v5505, 4
      %v5508 = vrot.slane %v4610, 5
      %v5509 = vsel %vm5489, %v5507, %v5508
      %v5510 = vrot.slane %v5508, 4
      %v5511 = vrot.slane %v4611, 5
      %v5512 = vsel %vm5489, %v5510, %v5511
      %v5513 = vrot.slane %v5511, 4
      %v5514 = vrot.slane %v4669, 5
      %v5515 = vsel %vm5489, %v5513, %v5514
      %v5516 = vrot.slane %v5393, 5
      %v5517 = vrot.slane %v5516, 4
      %v5518 = vrot.slane %v4613, 5
      %v5519 = vsel %vm5489, %v5517, %v5518
      %v5520 = vrot.slane %v5518, 4
      %v5521 = vrot.slane %v4614, 5
      %v5522 = vsel %vm5489, %v5520, %v5521
      %v5523 = vrot.slane %v5521, 4
      %v5524 = vrot.slane %v4615, 5
      %v5525 = vsel %vm5489, %v5523, %v5524
      %v5526 = vrot.slane %v5524, 4
      %v5527 = vrot.slane %v4670, 5
      %v5528 = vsel %vm5489, %v5526, %v5527
      %v5529 = vrot.slane %v5394, 5
      %v5530 = vrot.slane %v5529, 4
      %v5531 = vrot.slane %v4617, 5
      %v5532 = vsel %vm5489, %v5530, %v5531
      %v5533 = vrot.slane %v5531, 4
      %v5534 = vrot.slane %v4618, 5
      %v5535 = vsel %vm5489, %v5533, %v5534
      %v5536 = vrot.slane %v5534, 4
      %v5537 = vrot.slane %v4619, 5
      %v5538 = vsel %vm5489, %v5536, %v5537
      %v5539 = vrot.slane %v5537, 4
      %v5540 = vrot.slane %v4671, 5
      %v5541 = vsel %vm5489, %v5539, %v5540
      %v5542 = vrot.slane %v5395, 5
      %v5543 = vrot.slane %v5542, 4
      %v5544 = vrot.slane %v4621, 5
      %v5545 = vsel %vm5489, %v5543, %v5544
      %v5546 = vrot.slane %v5544, 4
      %v5547 = vrot.slane %v4622, 5
      %v5548 = vsel %vm5489, %v5546, %v5547
      %v5549 = vrot.slane %v5547, 4
      %v5550 = vrot.slane %v4623, 5
      %v5551 = vsel %vm5489, %v5549, %v5550
      %v5552 = vrot.slane %v5550, 4
      %v5553 = vrot.slane %v4672, 5
      %v5554 = vsel %vm5489, %v5552, %v5553
      %v5555 = vrot.slane %v5396, 5
      %v5556 = vrot.slane %v5555, 4
      %v5557 = vrot.slane %v4625, 5
      %v5558 = vsel %vm5489, %v5556, %v5557
      %v5559 = vrot.slane %v5557, 4
      %v5560 = vrot.slane %v4626, 5
      %v5561 = vsel %vm5489, %v5559, %v5560
      %v5562 = vrot.slane %v5560, 4
      %v5563 = vrot.slane %v4627, 5
      %v5564 = vsel %vm5489, %v5562, %v5563
      %v5565 = vrot.slane %v5563, 4
      %v5566 = vrot.slane %v4673, 5
      %v5567 = vsel %vm5489, %v5565, %v5566
      %v5568 = vrot.slane %v5397, 5
      %v5569 = vrot.slane %v5568, 4
      %v5570 = vrot.slane %v4629, 5
      %v5571 = vsel %vm5489, %v5569, %v5570
      %v5572 = vrot.slane %v5570, 4
      %v5573 = vrot.slane %v4630, 5
      %v5574 = vsel %vm5489, %v5572, %v5573
      %v5575 = vrot.slane %v5573, 4
      %v5576 = vrot.slane %v4631, 5
      %v5577 = vsel %vm5489, %v5575, %v5576
      %v5578 = vrot.slane %v5576, 4
      %v5579 = vrot.slane %v4674, 5
      %v5580 = vsel %vm5489, %v5578, %v5579
      %v5581 = vrot.slane %v5398, 5
      %v5582 = vrot.slane %v5581, 4
      %v5583 = vrot.slane %v4633, 5
      %v5584 = vsel %vm5489, %v5582, %v5583
      %v5585 = vrot.slane %v5583, 4
      %v5586 = vrot.slane %v4634, 5
      %v5587 = vsel %vm5489, %v5585, %v5586
      %v5588 = vrot.slane %v5586, 4
      %v5589 = vrot.slane %v4635, 5
      %v5590 = vsel %vm5489, %v5588, %v5589
      %v5591 = vrot.slane %v5589, 4
      %v5592 = vrot.slane %v4675, 5
      %v5593 = vsel %vm5489, %v5591, %v5592
      %v5594 = vrot.slane %v5399, 5
      %v5595 = vrot.slane %v5594, 4
      %v5596 = vrot.slane %v4637, 5
      %v5597 = vsel %vm5489, %v5595, %v5596
      %v5598 = vrot.slane %v5596, 4
      %v5599 = vrot.slane %v4638, 5
      %v5600 = vsel %vm5489, %v5598, %v5599
      %v5601 = vrot.slane %v5599, 4
      %v5602 = vrot.slane %v4639, 5
      %v5603 = vsel %vm5489, %v5601, %v5602
      %v5604 = vrot.slane %v5602, 4
      %v5605 = vrot.slane %v4676, 5
      %v5606 = vsel %vm5489, %v5604, %v5605
      %v5607 = vrot.slane %v5400, 5
      %v5608 = vrot.slane %v5607, 4
      %v5609 = vrot.slane %v4641, 5
      %v5610 = vsel %vm5489, %v5608, %v5609
      %v5611 = vrot.slane %v5609, 4
      %v5612 = vrot.slane %v4642, 5
      %v5613 = vsel %vm5489, %v5611, %v5612
      %v5614 = vrot.slane %v5612, 4
      %v5615 = vrot.slane %v4643, 5
      %v5616 = vsel %vm5489, %v5614, %v5615
      %v5617 = vrot.slane %v5615, 4
      %v5618 = vrot.slane %v4677, 5
      %v5619 = vsel %vm5489, %v5617, %v5618
      %v5620 = vrot.slane %v5401, 5
      %v5621 = vrot.slane %v5620, 4
      %v5622 = vrot.slane %v4645, 5
      %v5623 = vsel %vm5489, %v5621, %v5622
      %v5624 = vrot.slane %v5622, 4
      %v5625 = vrot.slane %v4646, 5
      %v5626 = vsel %vm5489, %v5624, %v5625
      %v5627 = vrot.slane %v5625, 4
      %v5628 = vrot.slane %v4647, 5
      %v5629 = vsel %vm5489, %v5627, %v5628
      %v5630 = vrot.slane %v5628, 4
      %v5631 = vrot.slane %v4678, 5
      %v5632 = vsel %vm5489, %v5630, %v5631
      %v5633 = vrot.slane %v5402, 5
      %v5634 = vrot.slane %v5633, 4
      %v5635 = vrot.slane %v4649, 5
      %v5636 = vsel %vm5489, %v5634, %v5635
      %v5637 = vrot.slane %v5635, 4
      %v5638 = vrot.slane %v4650, 5
      %v5639 = vsel %vm5489, %v5637, %v5638
      %v5640 = vrot.slane %v5638, 4
      %v5641 = vrot.slane %v4651, 5
      %v5642 = vsel %vm5489, %v5640, %v5641
      %v5643 = vrot.slane %v5641, 4
      %v5644 = vrot.slane %v4679, 5
      %v5645 = vsel %vm5489, %v5643, %v5644
      %v5646 = vrot.slane %v5403, 5
      %v5647 = vrot.slane %v5646, 4
      %v5648 = vrot.slane %v4653, 5
      %v5649 = vsel %vm5489, %v5647, %v5648
      %v5650 = vrot.slane %v5648, 4
      %v5651 = vrot.slane %v4654, 5
      %v5652 = vsel %vm5489, %v5650, %v5651
      %v5653 = vrot.slane %v5651, 4
      %v5654 = vrot.slane %v4655, 5
      %v5655 = vsel %vm5489, %v5653, %v5654
      %v5656 = vrot.slane %v5654, 4
      %v5657 = vrot.slane %v4680, 5
      %v5658 = vsel %vm5489, %v5656, %v5657
      %v5659 = vrot.slane %v5404, 5
      %v5660 = vrot.slane %v5659, 4
      %v5661 = vrot.slane %v4657, 5
      %v5662 = vsel %vm5489, %v5660, %v5661
      %v5663 = vrot.slane %v5661, 4
      %v5664 = vrot.slane %v4658, 5
      %v5665 = vsel %vm5489, %v5663, %v5664
      %v5666 = vrot.slane %v5664, 4
      %v5667 = vrot.slane %v4659, 5
      %v5668 = vsel %vm5489, %v5666, %v5667
      %v5669 = vrot.slane %v5667, 4
      %v5670 = vrot.slane %v4681, 5
      %v5671 = vsel %vm5489, %v5669, %v5670
      %v5672 = vrot.slane %v5405, 5
      %v5673 = vrot.slane %v5672, 4
      %v5674 = vrot.slane %v4661, 5
      %v5675 = vsel %vm5489, %v5673, %v5674
      %v5676 = vrot.slane %v5674, 4
      %v5677 = vrot.slane %v4662, 5
      %v5678 = vsel %vm5489, %v5676, %v5677
      %v5679 = vrot.slane %v5677, 4
      %v5680 = vrot.slane %v4663, 5
      %v5681 = vsel %vm5489, %v5679, %v5680
      %v5682 = vrot.slane %v5680, 4
      %v5683 = vrot.slane %v4682, 5
      %v5684 = vsel %vm5489, %v5682, %v5683
      %v5685 = vrot.slane %v5406, 5
      %v5686 = vrot.slane %v5685, 4
      %v5687 = vrot.slane %v4665, 5
      %v5688 = vsel %vm5489, %v5686, %v5687
      %v5689 = vrot.slane %v5687, 4
      %v5690 = vrot.slane %v4666, 5
      %v5691 = vsel %vm5489, %v5689, %v5690
      %v5692 = vrot.slane %v5690, 4
      %v5693 = vrot.slane %v4667, 5
      %v5694 = vsel %vm5489, %v5692, %v5693
      %v5695 = vrot.slane %v5693, 4
      %v5696 = vrot.slane %v4683, 5
      %v5697 = vsel %vm5489, %v5695, %v5696
      %s5698 = scalar_lea.vmem [#allocation2], 20
      %v5699 = vld [vmem:[%s5698] sm:$0xf]
      %v5700 = vld [vmem:[%s5698 + $0x4] sm:$0xf]
      %v5701 = vld [vmem:[%s5698 + $0x8] sm:$0xf]
      %v5702 = vld [vmem:[%s5698 + $0xc] sm:$0xf]
      %v5703 = vld [vmem:[%s5698 + $0x14] sm:$0xf]
      %v5704 = vld [vmem:[%s5698 + $0x18] sm:$0xf]
      %v5705 = vld [vmem:[%s5698 + $0x1c] sm:$0xf]
      %v5706 = vld [vmem:[%s5698 + $0x20] sm:$0xf]
      %v5707 = vld [vmem:[%s5698 + $0x28] sm:$0xf]
      %v5708 = vld [vmem:[%s5698 + $0x2c] sm:$0xf]
      %v5709 = vld [vmem:[%s5698 + $0x30] sm:$0xf]
      %v5710 = vld [vmem:[%s5698 + $0x34] sm:$0xf]
      %v5711 = vld [vmem:[%s5698 + $0x3c] sm:$0xf]
      %v5712 = vld [vmem:[%s5698 + $0x40] sm:$0xf]
      %v5713 = vld [vmem:[%s5698 + $0x44] sm:$0xf]
      %v5714 = vld [vmem:[%s5698 + $0x48] sm:$0xf]
      %v5715 = vld [vmem:[%s5698 + $0x50] sm:$0xf]
      %v5716 = vld [vmem:[%s5698 + $0x54] sm:$0xf]
      %v5717 = vld [vmem:[%s5698 + $0x58] sm:$0xf]
      %v5718 = vld [vmem:[%s5698 + $0x5c] sm:$0xf]
      %v5719 = vld [vmem:[%s5698 + $0x64] sm:$0xf]
      %v5720 = vld [vmem:[%s5698 + $0x68] sm:$0xf]
      %v5721 = vld [vmem:[%s5698 + $0x6c] sm:$0xf]
      %v5722 = vld [vmem:[%s5698 + $0x70] sm:$0xf]
      %v5723 = vld [vmem:[%s5698 + $0x78] sm:$0xf]
      %v5724 = vld [vmem:[%s5698 + $0x7c] sm:$0xf]
      %v5725 = vld [vmem:[%s5698 + $0x80] sm:$0xf]
      %v5726 = vld [vmem:[%s5698 + $0x84] sm:$0xf]
      %v5727 = vld [vmem:[%s5698 + $0x8c] sm:$0xf]
      %v5728 = vld [vmem:[%s5698 + $0x90] sm:$0xf]
      %v5729 = vld [vmem:[%s5698 + $0x94] sm:$0xf]
      %v5730 = vld [vmem:[%s5698 + $0x98] sm:$0xf]
      %v5731 = vld [vmem:[%s5698 + $0xa0] sm:$0xf]
      %v5732 = vld [vmem:[%s5698 + $0xa4] sm:$0xf]
      %v5733 = vld [vmem:[%s5698 + $0xa8] sm:$0xf]
      %v5734 = vld [vmem:[%s5698 + $0xac] sm:$0xf]
      %v5735 = vld [vmem:[%s5698 + $0xb4] sm:$0xf]
      %v5736 = vld [vmem:[%s5698 + $0xb8] sm:$0xf]
      %v5737 = vld [vmem:[%s5698 + $0xbc] sm:$0xf]
      %v5738 = vld [vmem:[%s5698 + $0xc0] sm:$0xf]
      %v5739 = vld [vmem:[%s5698 + $0xc8] sm:$0xf]
      %v5740 = vld [vmem:[%s5698 + $0xcc] sm:$0xf]
      %v5741 = vld [vmem:[%s5698 + $0xd0] sm:$0xf]
      %v5742 = vld [vmem:[%s5698 + $0xd4] sm:$0xf]
      %v5743 = vld [vmem:[%s5698 + $0xdc] sm:$0xf]
      %v5744 = vld [vmem:[%s5698 + $0xe0] sm:$0xf]
      %v5745 = vld [vmem:[%s5698 + $0xe4] sm:$0xf]
      %v5746 = vld [vmem:[%s5698 + $0xe8] sm:$0xf]
      %v5747 = vld [vmem:[%s5698 + $0xf0] sm:$0xf]
      %v5748 = vld [vmem:[%s5698 + $0xf4] sm:$0xf]
      %v5749 = vld [vmem:[%s5698 + $0xf8] sm:$0xf]
      %v5750 = vld [vmem:[%s5698 + $0xfc] sm:$0xf]
      %v5751 = vld [vmem:[%s5698 + $0x104] sm:$0xf]
      %v5752 = vld [vmem:[%s5698 + $0x108] sm:$0xf]
      %v5753 = vld [vmem:[%s5698 + $0x10c] sm:$0xf]
      %v5754 = vld [vmem:[%s5698 + $0x110] sm:$0xf]
      %v5755 = vld [vmem:[%s5698 + $0x118] sm:$0xf]
      %v5756 = vld [vmem:[%s5698 + $0x11c] sm:$0xf]
      %v5757 = vld [vmem:[%s5698 + $0x120] sm:$0xf]
      %v5758 = vld [vmem:[%s5698 + $0x124] sm:$0xf]
      %v5759 = vld [vmem:[%s5698 + $0x12c] sm:$0xf]
      %v5760 = vld [vmem:[%s5698 + $0x130] sm:$0xf]
      %v5761 = vld [vmem:[%s5698 + $0x134] sm:$0xf]
      %v5762 = vld [vmem:[%s5698 + $0x138] sm:$0xf]
      %v5763 = vld [vmem:[%s5698 + $0x10] sm:$0x1]
      %v5764 = vld [vmem:[%s5698 + $0x24] sm:$0x1]
      %v5765 = vld [vmem:[%s5698 + $0x38] sm:$0x1]
      %v5766 = vld [vmem:[%s5698 + $0x4c] sm:$0x1]
      %v5767 = vld [vmem:[%s5698 + $0x60] sm:$0x1]
      %v5768 = vld [vmem:[%s5698 + $0x74] sm:$0x1]
      %v5769 = vld [vmem:[%s5698 + $0x88] sm:$0x1]
      %v5770 = vld [vmem:[%s5698 + $0x9c] sm:$0x1]
      %v5771 = vld [vmem:[%s5698 + $0xb0] sm:$0x1]
      %v5772 = vld [vmem:[%s5698 + $0xc4] sm:$0x1]
      %v5773 = vld [vmem:[%s5698 + $0xd8] sm:$0x1]
      %v5774 = vld [vmem:[%s5698 + $0xec] sm:$0x1]
      %v5775 = vld [vmem:[%s5698 + $0x100] sm:$0x1]
      %v5776 = vld [vmem:[%s5698 + $0x114] sm:$0x1]
      %v5777 = vld [vmem:[%s5698 + $0x128] sm:$0x1]
      %v5778 = vld [vmem:[%s5698 + $0x13c] sm:$0x1]
      %v5780 = vshrl.u32 %v5699, 16
      %v5782 = vrot.slane %v5780, 4
      %v5783 = vshll.u32 %v5699, 16
      %v5785 = vrot.slane %v5783, 5
      %v5786 = vor.u32 %v5782, %v5785
      %v5787 = vrot.slane %v5786, 4
      %v5789 = vshll.u32 %v5700, 16
      %v5791 = vrot.slane %v5789, 5
      %v5792 = vsel %vm4686, %v5787, %v5791
      %v5793 = vshrl.u32 %v5700, 16
      %v5795 = vrot.slane %v5793, 4
      %v5796 = vor.u32 %v5795, %v5791
      %v5797 = vrot.slane %v5796, 4
      %v5799 = vshll.u32 %v5701, 16
      %v5801 = vrot.slane %v5799, 5
      %v5802 = vsel %vm4686, %v5797, %v5801
      %v5803 = vshrl.u32 %v5701, 16
      %v5805 = vrot.slane %v5803, 4
      %v5806 = vor.u32 %v5805, %v5801
      %v5807 = vrot.slane %v5806, 4
      %v5809 = vshll.u32 %v5702, 16
      %v5811 = vrot.slane %v5809, 5
      %v5812 = vsel %vm4686, %v5807, %v5811
      %v5813 = vshrl.u32 %v5702, 16
      %v5815 = vrot.slane %v5813, 4
      %v5816 = vor.u32 %v5815, %v5811
      %v5817 = vrot.slane %v5816, 4
      %v5819 = vshll.u32 %v5763, 16
      %v5821 = vrot.slane %v5819, 5
      %v5822 = vsel %vm4686, %v5817, %v5821
      %v5824 = vshrl.u32 %v5703, 16
      %v5826 = vrot.slane %v5824, 4
      %v5827 = vshll.u32 %v5703, 16
      %v5829 = vrot.slane %v5827, 5
      %v5830 = vor.u32 %v5826, %v5829
      %v5831 = vrot.slane %v5830, 4
      %v5833 = vshll.u32 %v5704, 16
      %v5835 = vrot.slane %v5833, 5
      %v5836 = vsel %vm4686, %v5831, %v5835
      %v5837 = vshrl.u32 %v5704, 16
      %v5839 = vrot.slane %v5837, 4
      %v5840 = vor.u32 %v5839, %v5835
      %v5841 = vrot.slane %v5840, 4
      %v5843 = vshll.u32 %v5705, 16
      %v5845 = vrot.slane %v5843, 5
      %v5846 = vsel %vm4686, %v5841, %v5845
      %v5847 = vshrl.u32 %v5705, 16
      %v5849 = vrot.slane %v5847, 4
      %v5850 = vor.u32 %v5849, %v5845
      %v5851 = vrot.slane %v5850, 4
      %v5853 = vshll.u32 %v5706, 16
      %v5855 = vrot.slane %v5853, 5
      %v5856 = vsel %vm4686, %v5851, %v5855
      %v5857 = vshrl.u32 %v5706, 16
      %v5859 = vrot.slane %v5857, 4
      %v5860 = vor.u32 %v5859, %v5855
      %v5861 = vrot.slane %v5860, 4
      %v5863 = vshll.u32 %v5764, 16
      %v5865 = vrot.slane %v5863, 5
      %v5866 = vsel %vm4686, %v5861, %v5865
      %v5868 = vshrl.u32 %v5707, 16
      %v5870 = vrot.slane %v5868, 4
      %v5871 = vshll.u32 %v5707, 16
      %v5873 = vrot.slane %v5871, 5
      %v5874 = vor.u32 %v5870, %v5873
      %v5875 = vrot.slane %v5874, 4
      %v5877 = vshll.u32 %v5708, 16
      %v5879 = vrot.slane %v5877, 5
      %v5880 = vsel %vm4686, %v5875, %v5879
      %v5881 = vshrl.u32 %v5708, 16
      %v5883 = vrot.slane %v5881, 4
      %v5884 = vor.u32 %v5883, %v5879
      %v5885 = vrot.slane %v5884, 4
      %v5887 = vshll.u32 %v5709, 16
      %v5889 = vrot.slane %v5887, 5
      %v5890 = vsel %vm4686, %v5885, %v5889
      %v5891 = vshrl.u32 %v5709, 16
      %v5893 = vrot.slane %v5891, 4
      %v5894 = vor.u32 %v5893, %v5889
      %v5895 = vrot.slane %v5894, 4
      %v5897 = vshll.u32 %v5710, 16
      %v5899 = vrot.slane %v5897, 5
      %v5900 = vsel %vm4686, %v5895, %v5899
      %v5901 = vshrl.u32 %v5710, 16
      %v5903 = vrot.slane %v5901, 4
      %v5904 = vor.u32 %v5903, %v5899
      %v5905 = vrot.slane %v5904, 4
      %v5907 = vshll.u32 %v5765, 16
      %v5909 = vrot.slane %v5907, 5
      %v5910 = vsel %vm4686, %v5905, %v5909
      %v5912 = vshrl.u32 %v5711, 16
      %v5914 = vrot.slane %v5912, 4
      %v5915 = vshll.u32 %v5711, 16
      %v5917 = vrot.slane %v5915, 5
      %v5918 = vor.u32 %v5914, %v5917
      %v5919 = vrot.slane %v5918, 4
      %v5921 = vshll.u32 %v5712, 16
      %v5923 = vrot.slane %v5921, 5
      %v5924 = vsel %vm4686, %v5919, %v5923
      %v5925 = vshrl.u32 %v5712, 16
      %v5927 = vrot.slane %v5925, 4
      %v5928 = vor.u32 %v5927, %v5923
      %v5929 = vrot.slane %v5928, 4
      %v5931 = vshll.u32 %v5713, 16
      %v5933 = vrot.slane %v5931, 5
      %v5934 = vsel %vm4686, %v5929, %v5933
      %v5935 = vshrl.u32 %v5713, 16
      %v5937 = vrot.slane %v5935, 4
      %v5938 = vor.u32 %v5937, %v5933
      %v5939 = vrot.slane %v5938, 4
      %v5941 = vshll.u32 %v5714, 16
      %v5943 = vrot.slane %v5941, 5
      %v5944 = vsel %vm4686, %v5939, %v5943
      %v5945 = vshrl.u32 %v5714, 16
      %v5947 = vrot.slane %v5945, 4
      %v5948 = vor.u32 %v5947, %v5943
      %v5949 = vrot.slane %v5948, 4
      %v5951 = vshll.u32 %v5766, 16
      %v5953 = vrot.slane %v5951, 5
      %v5954 = vsel %vm4686, %v5949, %v5953
      %v5956 = vshrl.u32 %v5715, 16
      %v5958 = vrot.slane %v5956, 4
      %v5959 = vshll.u32 %v5715, 16
      %v5961 = vrot.slane %v5959, 5
      %v5962 = vor.u32 %v5958, %v5961
      %v5963 = vrot.slane %v5962, 4
      %v5965 = vshll.u32 %v5716, 16
      %v5967 = vrot.slane %v5965, 5
      %v5968 = vsel %vm4686, %v5963, %v5967
      %v5969 = vshrl.u32 %v5716, 16
      %v5971 = vrot.slane %v5969, 4
      %v5972 = vor.u32 %v5971, %v5967
      %v5973 = vrot.slane %v5972, 4
      %v5975 = vshll.u32 %v5717, 16
      %v5977 = vrot.slane %v5975, 5
      %v5978 = vsel %vm4686, %v5973, %v5977
      %v5979 = vshrl.u32 %v5717, 16
      %v5981 = vrot.slane %v5979, 4
      %v5982 = vor.u32 %v5981, %v5977
      %v5983 = vrot.slane %v5982, 4
      %v5985 = vshll.u32 %v5718, 16
      %v5987 = vrot.slane %v5985, 5
      %v5988 = vsel %vm4686, %v5983, %v5987
      %v5989 = vshrl.u32 %v5718, 16
      %v5991 = vrot.slane %v5989, 4
      %v5992 = vor.u32 %v5991, %v5987
      %v5993 = vrot.slane %v5992, 4
      %v5995 = vshll.u32 %v5767, 16
      %v5997 = vrot.slane %v5995, 5
      %v5998 = vsel %vm4686, %v5993, %v5997
      %v6000 = vshrl.u32 %v5719, 16
      %v6002 = vrot.slane %v6000, 4
      %v6003 = vshll.u32 %v5719, 16
      %v6005 = vrot.slane %v6003, 5
      %v6006 = vor.u32 %v6002, %v6005
      %v6007 = vrot.slane %v6006, 4
      %v6009 = vshll.u32 %v5720, 16
      %v6011 = vrot.slane %v6009, 5
      %v6012 = vsel %vm4686, %v6007, %v6011
      %v6013 = vshrl.u32 %v5720, 16
      %v6015 = vrot.slane %v6013, 4
      %v6016 = vor.u32 %v6015, %v6011
      %v6017 = vrot.slane %v6016, 4
      %v6019 = vshll.u32 %v5721, 16
      %v6021 = vrot.slane %v6019, 5
      %v6022 = vsel %vm4686, %v6017, %v6021
      %v6023 = vshrl.u32 %v5721, 16
      %v6025 = vrot.slane %v6023, 4
      %v6026 = vor.u32 %v6025, %v6021
      %v6027 = vrot.slane %v6026, 4
      %v6029 = vshll.u32 %v5722, 16
      %v6031 = vrot.slane %v6029, 5
      %v6032 = vsel %vm4686, %v6027, %v6031
      %v6033 = vshrl.u32 %v5722, 16
      %v6035 = vrot.slane %v6033, 4
      %v6036 = vor.u32 %v6035, %v6031
      %v6037 = vrot.slane %v6036, 4
      %v6039 = vshll.u32 %v5768, 16
      %v6041 = vrot.slane %v6039, 5
      %v6042 = vsel %vm4686, %v6037, %v6041
      %v6044 = vshrl.u32 %v5723, 16
      %v6046 = vrot.slane %v6044, 4
      %v6047 = vshll.u32 %v5723, 16
      %v6049 = vrot.slane %v6047, 5
      %v6050 = vor.u32 %v6046, %v6049
      %v6051 = vrot.slane %v6050, 4
      %v6053 = vshll.u32 %v5724, 16
      %v6055 = vrot.slane %v6053, 5
      %v6056 = vsel %vm4686, %v6051, %v6055
      %v6057 = vshrl.u32 %v5724, 16
      %v6059 = vrot.slane %v6057, 4
      %v6060 = vor.u32 %v6059, %v6055
      %v6061 = vrot.slane %v6060, 4
      %v6063 = vshll.u32 %v5725, 16
      %v6065 = vrot.slane %v6063, 5
      %v6066 = vsel %vm4686, %v6061, %v6065
      %v6067 = vshrl.u32 %v5725, 16
      %v6069 = vrot.slane %v6067, 4
      %v6070 = vor.u32 %v6069, %v6065
      %v6071 = vrot.slane %v6070, 4
      %v6073 = vshll.u32 %v5726, 16
      %v6075 = vrot.slane %v6073, 5
      %v6076 = vsel %vm4686, %v6071, %v6075
      %v6077 = vshrl.u32 %v5726, 16
      %v6079 = vrot.slane %v6077, 4
      %v6080 = vor.u32 %v6079, %v6075
      %v6081 = vrot.slane %v6080, 4
      %v6083 = vshll.u32 %v5769, 16
      %v6085 = vrot.slane %v6083, 5
      %v6086 = vsel %vm4686, %v6081, %v6085
      %v6088 = vshrl.u32 %v5727, 16
      %v6090 = vrot.slane %v6088, 4
      %v6091 = vshll.u32 %v5727, 16
      %v6093 = vrot.slane %v6091, 5
      %v6094 = vor.u32 %v6090, %v6093
      %v6095 = vrot.slane %v6094, 4
      %v6097 = vshll.u32 %v5728, 16
      %v6099 = vrot.slane %v6097, 5
      %v6100 = vsel %vm4686, %v6095, %v6099
      %v6101 = vshrl.u32 %v5728, 16
      %v6103 = vrot.slane %v6101, 4
      %v6104 = vor.u32 %v6103, %v6099
      %v6105 = vrot.slane %v6104, 4
      %v6107 = vshll.u32 %v5729, 16
      %v6109 = vrot.slane %v6107, 5
      %v6110 = vsel %vm4686, %v6105, %v6109
      %v6111 = vshrl.u32 %v5729, 16
      %v6113 = vrot.slane %v6111, 4
      %v6114 = vor.u32 %v6113, %v6109
      %v6115 = vrot.slane %v6114, 4
      %v6117 = vshll.u32 %v5730, 16
      %v6119 = vrot.slane %v6117, 5
      %v6120 = vsel %vm4686, %v6115, %v6119
      %v6121 = vshrl.u32 %v5730, 16
      %v6123 = vrot.slane %v6121, 4
      %v6124 = vor.u32 %v6123, %v6119
      %v6125 = vrot.slane %v6124, 4
      %v6127 = vshll.u32 %v5770, 16
      %v6129 = vrot.slane %v6127, 5
      %v6130 = vsel %vm4686, %v6125, %v6129
      %v6132 = vshrl.u32 %v5731, 16
      %v6134 = vrot.slane %v6132, 4
      %v6135 = vshll.u32 %v5731, 16
      %v6137 = vrot.slane %v6135, 5
      %v6138 = vor.u32 %v6134, %v6137
      %v6139 = vrot.slane %v6138, 4
      %v6141 = vshll.u32 %v5732, 16
      %v6143 = vrot.slane %v6141, 5
      %v6144 = vsel %vm4686, %v6139, %v6143
      %v6145 = vshrl.u32 %v5732, 16
      %v6147 = vrot.slane %v6145, 4
      %v6148 = vor.u32 %v6147, %v6143
      %v6149 = vrot.slane %v6148, 4
      %v6151 = vshll.u32 %v5733, 16
      %v6153 = vrot.slane %v6151, 5
      %v6154 = vsel %vm4686, %v6149, %v6153
      %v6155 = vshrl.u32 %v5733, 16
      %v6157 = vrot.slane %v6155, 4
      %v6158 = vor.u32 %v6157, %v6153
      %v6159 = vrot.slane %v6158, 4
      %v6161 = vshll.u32 %v5734, 16
      %v6163 = vrot.slane %v6161, 5
      %v6164 = vsel %vm4686, %v6159, %v6163
      %v6165 = vshrl.u32 %v5734, 16
      %v6167 = vrot.slane %v6165, 4
      %v6168 = vor.u32 %v6167, %v6163
      %v6169 = vrot.slane %v6168, 4
      %v6171 = vshll.u32 %v5771, 16
      %v6173 = vrot.slane %v6171, 5
      %v6174 = vsel %vm4686, %v6169, %v6173
      %v6176 = vshrl.u32 %v5735, 16
      %v6178 = vrot.slane %v6176, 4
      %v6179 = vshll.u32 %v5735, 16
      %v6181 = vrot.slane %v6179, 5
      %v6182 = vor.u32 %v6178, %v6181
      %v6183 = vrot.slane %v6182, 4
      %v6185 = vshll.u32 %v5736, 16
      %v6187 = vrot.slane %v6185, 5
      %v6188 = vsel %vm4686, %v6183, %v6187
      %v6189 = vshrl.u32 %v5736, 16
      %v6191 = vrot.slane %v6189, 4
      %v6192 = vor.u32 %v6191, %v6187
      %v6193 = vrot.slane %v6192, 4
      %v6195 = vshll.u32 %v5737, 16
      %v6197 = vrot.slane %v6195, 5
      %v6198 = vsel %vm4686, %v6193, %v6197
      %v6199 = vshrl.u32 %v5737, 16
      %v6201 = vrot.slane %v6199, 4
      %v6202 = vor.u32 %v6201, %v6197
      %v6203 = vrot.slane %v6202, 4
      %v6205 = vshll.u32 %v5738, 16
      %v6207 = vrot.slane %v6205, 5
      %v6208 = vsel %vm4686, %v6203, %v6207
      %v6209 = vshrl.u32 %v5738, 16
      %v6211 = vrot.slane %v6209, 4
      %v6212 = vor.u32 %v6211, %v6207
      %v6213 = vrot.slane %v6212, 4
      %v6215 = vshll.u32 %v5772, 16
      %v6217 = vrot.slane %v6215, 5
      %v6218 = vsel %vm4686, %v6213, %v6217
      %v6220 = vshrl.u32 %v5739, 16
      %v6222 = vrot.slane %v6220, 4
      %v6223 = vshll.u32 %v5739, 16
      %v6225 = vrot.slane %v6223, 5
      %v6226 = vor.u32 %v6222, %v6225
      %v6227 = vrot.slane %v6226, 4
      %v6229 = vshll.u32 %v5740, 16
      %v6231 = vrot.slane %v6229, 5
      %v6232 = vsel %vm4686, %v6227, %v6231
      %v6233 = vshrl.u32 %v5740, 16
      %v6235 = vrot.slane %v6233, 4
      %v6236 = vor.u32 %v6235, %v6231
      %v6237 = vrot.slane %v6236, 4
      %v6239 = vshll.u32 %v5741, 16
      %v6241 = vrot.slane %v6239, 5
      %v6242 = vsel %vm4686, %v6237, %v6241
      %v6243 = vshrl.u32 %v5741, 16
      %v6245 = vrot.slane %v6243, 4
      %v6246 = vor.u32 %v6245, %v6241
      %v6247 = vrot.slane %v6246, 4
      %v6249 = vshll.u32 %v5742, 16
      %v6251 = vrot.slane %v6249, 5
      %v6252 = vsel %vm4686, %v6247, %v6251
      %v6253 = vshrl.u32 %v5742, 16
      %v6255 = vrot.slane %v6253, 4
      %v6256 = vor.u32 %v6255, %v6251
      %v6257 = vrot.slane %v6256, 4
      %v6259 = vshll.u32 %v5773, 16
      %v6261 = vrot.slane %v6259, 5
      %v6262 = vsel %vm4686, %v6257, %v6261
      %v6264 = vshrl.u32 %v5743, 16
      %v6266 = vrot.slane %v6264, 4
      %v6267 = vshll.u32 %v5743, 16
      %v6269 = vrot.slane %v6267, 5
      %v6270 = vor.u32 %v6266, %v6269
      %v6271 = vrot.slane %v6270, 4
      %v6273 = vshll.u32 %v5744, 16
      %v6275 = vrot.slane %v6273, 5
      %v6276 = vsel %vm4686, %v6271, %v6275
      %v6277 = vshrl.u32 %v5744, 16
      %v6279 = vrot.slane %v6277, 4
      %v6280 = vor.u32 %v6279, %v6275
      %v6281 = vrot.slane %v6280, 4
      %v6283 = vshll.u32 %v5745, 16
      %v6285 = vrot.slane %v6283, 5
      %v6286 = vsel %vm4686, %v6281, %v6285
      %v6287 = vshrl.u32 %v5745, 16
      %v6289 = vrot.slane %v6287, 4
      %v6290 = vor.u32 %v6289, %v6285
      %v6291 = vrot.slane %v6290, 4
      %v6293 = vshll.u32 %v5746, 16
      %v6295 = vrot.slane %v6293, 5
      %v6296 = vsel %vm4686, %v6291, %v6295
      %v6297 = vshrl.u32 %v5746, 16
      %v6299 = vrot.slane %v6297, 4
      %v6300 = vor.u32 %v6299, %v6295
      %v6301 = vrot.slane %v6300, 4
      %v6303 = vshll.u32 %v5774, 16
      %v6305 = vrot.slane %v6303, 5
      %v6306 = vsel %vm4686, %v6301, %v6305
      %v6308 = vshrl.u32 %v5747, 16
      %v6310 = vrot.slane %v6308, 4
      %v6311 = vshll.u32 %v5747, 16
      %v6313 = vrot.slane %v6311, 5
      %v6314 = vor.u32 %v6310, %v6313
      %v6315 = vrot.slane %v6314, 4
      %v6317 = vshll.u32 %v5748, 16
      %v6319 = vrot.slane %v6317, 5
      %v6320 = vsel %vm4686, %v6315, %v6319
      %v6321 = vshrl.u32 %v5748, 16
      %v6323 = vrot.slane %v6321, 4
      %v6324 = vor.u32 %v6323, %v6319
      %v6325 = vrot.slane %v6324, 4
      %v6327 = vshll.u32 %v5749, 16
      %v6329 = vrot.slane %v6327, 5
      %v6330 = vsel %vm4686, %v6325, %v6329
      %v6331 = vshrl.u32 %v5749, 16
      %v6333 = vrot.slane %v6331, 4
      %v6334 = vor.u32 %v6333, %v6329
      %v6335 = vrot.slane %v6334, 4
      %v6337 = vshll.u32 %v5750, 16
      %v6339 = vrot.slane %v6337, 5
      %v6340 = vsel %vm4686, %v6335, %v6339
      %v6341 = vshrl.u32 %v5750, 16
      %v6343 = vrot.slane %v6341, 4
      %v6344 = vor.u32 %v6343, %v6339
      %v6345 = vrot.slane %v6344, 4
      %v6347 = vshll.u32 %v5775, 16
      %v6349 = vrot.slane %v6347, 5
      %v6350 = vsel %vm4686, %v6345, %v6349
      %v6352 = vshrl.u32 %v5751, 16
      %v6354 = vrot.slane %v6352, 4
      %v6355 = vshll.u32 %v5751, 16
      %v6357 = vrot.slane %v6355, 5
      %v6358 = vor.u32 %v6354, %v6357
      %v6359 = vrot.slane %v6358, 4
      %v6361 = vshll.u32 %v5752, 16
      %v6363 = vrot.slane %v6361, 5
      %v6364 = vsel %vm4686, %v6359, %v6363
      %v6365 = vshrl.u32 %v5752, 16
      %v6367 = vrot.slane %v6365, 4
      %v6368 = vor.u32 %v6367, %v6363
      %v6369 = vrot.slane %v6368, 4
      %v6371 = vshll.u32 %v5753, 16
      %v6373 = vrot.slane %v6371, 5
      %v6374 = vsel %vm4686, %v6369, %v6373
      %v6375 = vshrl.u32 %v5753, 16
      %v6377 = vrot.slane %v6375, 4
      %v6378 = vor.u32 %v6377, %v6373
      %v6379 = vrot.slane %v6378, 4
      %v6381 = vshll.u32 %v5754, 16
      %v6383 = vrot.slane %v6381, 5
      %v6384 = vsel %vm4686, %v6379, %v6383
      %v6385 = vshrl.u32 %v5754, 16
      %v6387 = vrot.slane %v6385, 4
      %v6388 = vor.u32 %v6387, %v6383
      %v6389 = vrot.slane %v6388, 4
      %v6391 = vshll.u32 %v5776, 16
      %v6393 = vrot.slane %v6391, 5
      %v6394 = vsel %vm4686, %v6389, %v6393
      %v6396 = vshrl.u32 %v5755, 16
      %v6398 = vrot.slane %v6396, 4
      %v6399 = vshll.u32 %v5755, 16
      %v6401 = vrot.slane %v6399, 5
      %v6402 = vor.u32 %v6398, %v6401
      %v6403 = vrot.slane %v6402, 4
      %v6405 = vshll.u32 %v5756, 16
      %v6407 = vrot.slane %v6405, 5
      %v6408 = vsel %vm4686, %v6403, %v6407
      %v6409 = vshrl.u32 %v5756, 16
      %v6411 = vrot.slane %v6409, 4
      %v6412 = vor.u32 %v6411, %v6407
      %v6413 = vrot.slane %v6412, 4
      %v6415 = vshll.u32 %v5757, 16
      %v6417 = vrot.slane %v6415, 5
      %v6418 = vsel %vm4686, %v6413, %v6417
      %v6419 = vshrl.u32 %v5757, 16
      %v6421 = vrot.slane %v6419, 4
      %v6422 = vor.u32 %v6421, %v6417
      %v6423 = vrot.slane %v6422, 4
      %v6425 = vshll.u32 %v5758, 16
      %v6427 = vrot.slane %v6425, 5
      %v6428 = vsel %vm4686, %v6423, %v6427
      %v6429 = vshrl.u32 %v5758, 16
      %v6431 = vrot.slane %v6429, 4
      %v6432 = vor.u32 %v6431, %v6427
      %v6433 = vrot.slane %v6432, 4
      %v6435 = vshll.u32 %v5777, 16
      %v6437 = vrot.slane %v6435, 5
      %v6438 = vsel %vm4686, %v6433, %v6437
      %v6440 = vshrl.u32 %v5759, 16
      %v6442 = vrot.slane %v6440, 4
      %v6443 = vshll.u32 %v5759, 16
      %v6445 = vrot.slane %v6443, 5
      %v6446 = vor.u32 %v6442, %v6445
      %v6447 = vrot.slane %v6446, 4
      %v6449 = vshll.u32 %v5760, 16
      %v6451 = vrot.slane %v6449, 5
      %v6452 = vsel %vm4686, %v6447, %v6451
      %v6453 = vshrl.u32 %v5760, 16
      %v6455 = vrot.slane %v6453, 4
      %v6456 = vor.u32 %v6455, %v6451
      %v6457 = vrot.slane %v6456, 4
      %v6459 = vshll.u32 %v5761, 16
      %v6461 = vrot.slane %v6459, 5
      %v6462 = vsel %vm4686, %v6457, %v6461
      %v6463 = vshrl.u32 %v5761, 16
      %v6465 = vrot.slane %v6463, 4
      %v6466 = vor.u32 %v6465, %v6461
      %v6467 = vrot.slane %v6466, 4
      %v6469 = vshll.u32 %v5762, 16
      %v6471 = vrot.slane %v6469, 5
      %v6472 = vsel %vm4686, %v6467, %v6471
      %v6473 = vshrl.u32 %v5762, 16
      %v6475 = vrot.slane %v6473, 4
      %v6476 = vor.u32 %v6475, %v6471
      %v6477 = vrot.slane %v6476, 4
      %v6479 = vshll.u32 %v5778, 16
      %v6481 = vrot.slane %v6479, 5
      %v6482 = vsel %vm4686, %v6477, %v6481
      %v6483 = vld [vmem:[%s5698] sm:$0xe]
      %v6484 = vld [vmem:[%s5698 + $0x14] sm:$0xe]
      %v6485 = vld [vmem:[%s5698 + $0x28] sm:$0xe]
      %v6486 = vld [vmem:[%s5698 + $0x3c] sm:$0xe]
      %v6487 = vld [vmem:[%s5698 + $0x50] sm:$0xe]
      %v6488 = vld [vmem:[%s5698 + $0x64] sm:$0xe]
      %v6489 = vld [vmem:[%s5698 + $0x78] sm:$0xe]
      %v6490 = vld [vmem:[%s5698 + $0x8c] sm:$0xe]
      %v6491 = vld [vmem:[%s5698 + $0xa0] sm:$0xe]
      %v6492 = vld [vmem:[%s5698 + $0xb4] sm:$0xe]
      %v6493 = vld [vmem:[%s5698 + $0xc8] sm:$0xe]
      %v6494 = vld [vmem:[%s5698 + $0xdc] sm:$0xe]
      %v6495 = vld [vmem:[%s5698 + $0xf0] sm:$0xe]
      %v6496 = vld [vmem:[%s5698 + $0x104] sm:$0xe]
      %v6497 = vld [vmem:[%s5698 + $0x118] sm:$0xe]
      %v6498 = vld [vmem:[%s5698 + $0x12c] sm:$0xe]
      %v6579 = vrot.slane %v6483, 5
      %v6580 = vrot.slane %v6579, 4
      %v6581 = vrot.slane %v5700, 5
      %v6582 = vsel %vm5489, %v6580, %v6581
      %v6583 = vrot.slane %v6581, 4
      %v6584 = vrot.slane %v5701, 5
      %v6585 = vsel %vm5489, %v6583, %v6584
      %v6586 = vrot.slane %v6584, 4
      %v6587 = vrot.slane %v5702, 5
      %v6588 = vsel %vm5489, %v6586, %v6587
      %v6589 = vrot.slane %v6587, 4
      %v6590 = vrot.slane %v5763, 5
      %v6591 = vsel %vm5489, %v6589, %v6590
      %v6592 = vrot.slane %v6484, 5
      %v6593 = vrot.slane %v6592, 4
      %v6594 = vrot.slane %v5704, 5
      %v6595 = vsel %vm5489, %v6593, %v6594
      %v6596 = vrot.slane %v6594, 4
      %v6597 = vrot.slane %v5705, 5
      %v6598 = vsel %vm5489, %v6596, %v6597
      %v6599 = vrot.slane %v6597, 4
      %v6600 = vrot.slane %v5706, 5
      %v6601 = vsel %vm5489, %v6599, %v6600
      %v6602 = vrot.slane %v6600, 4
      %v6603 = vrot.slane %v5764, 5
      %v6604 = vsel %vm5489, %v6602, %v6603
      %v6605 = vrot.slane %v6485, 5
      %v6606 = vrot.slane %v6605, 4
      %v6607 = vrot.slane %v5708, 5
      %v6608 = vsel %vm5489, %v6606, %v6607
      %v6609 = vrot.slane %v6607, 4
      %v6610 = vrot.slane %v5709, 5
      %v6611 = vsel %vm5489, %v6609, %v6610
      %v6612 = vrot.slane %v6610, 4
      %v6613 = vrot.slane %v5710, 5
      %v6614 = vsel %vm5489, %v6612, %v6613
      %v6615 = vrot.slane %v6613, 4
      %v6616 = vrot.slane %v5765, 5
      %v6617 = vsel %vm5489, %v6615, %v6616
      %v6618 = vrot.slane %v6486, 5
      %v6619 = vrot.slane %v6618, 4
      %v6620 = vrot.slane %v5712, 5
      %v6621 = vsel %vm5489, %v6619, %v6620
      %v6622 = vrot.slane %v6620, 4
      %v6623 = vrot.slane %v5713, 5
      %v6624 = vsel %vm5489, %v6622, %v6623
      %v6625 = vrot.slane %v6623, 4
      %v6626 = vrot.slane %v5714, 5
      %v6627 = vsel %vm5489, %v6625, %v6626
      %v6628 = vrot.slane %v6626, 4
      %v6629 = vrot.slane %v5766, 5
      %v6630 = vsel %vm5489, %v6628, %v6629
      %v6631 = vrot.slane %v6487, 5
      %v6632 = vrot.slane %v6631, 4
      %v6633 = vrot.slane %v5716, 5
      %v6634 = vsel %vm5489, %v6632, %v6633
      %v6635 = vrot.slane %v6633, 4
      %v6636 = vrot.slane %v5717, 5
      %v6637 = vsel %vm5489, %v6635, %v6636
      %v6638 = vrot.slane %v6636, 4
      %v6639 = vrot.slane %v5718, 5
      %v6640 = vsel %vm5489, %v6638, %v6639
      %v6641 = vrot.slane %v6639, 4
      %v6642 = vrot.slane %v5767, 5
      %v6643 = vsel %vm5489, %v6641, %v6642
      %v6644 = vrot.slane %v6488, 5
      %v6645 = vrot.slane %v6644, 4
      %v6646 = vrot.slane %v5720, 5
      %v6647 = vsel %vm5489, %v6645, %v6646
      %v6648 = vrot.slane %v6646, 4
      %v6649 = vrot.slane %v5721, 5
      %v6650 = vsel %vm5489, %v6648, %v6649
      %v6651 = vrot.slane %v6649, 4
      %v6652 = vrot.slane %v5722, 5
      %v6653 = vsel %vm5489, %v6651, %v6652
      %v6654 = vrot.slane %v6652, 4
      %v6655 = vrot.slane %v5768, 5
      %v6656 = vsel %vm5489, %v6654, %v6655
      %v6657 = vrot.slane %v6489, 5
      %v6658 = vrot.slane %v6657, 4
      %v6659 = vrot.slane %v5724, 5
      %v6660 = vsel %vm5489, %v6658, %v6659
      %v6661 = vrot.slane %v6659, 4
      %v6662 = vrot.slane %v5725, 5
      %v6663 = vsel %vm5489, %v6661, %v6662
      %v6664 = vrot.slane %v6662, 4
      %v6665 = vrot.slane %v5726, 5
      %v6666 = vsel %vm5489, %v6664, %v6665
      %v6667 = vrot.slane %v6665, 4
      %v6668 = vrot.slane %v5769, 5
      %v6669 = vsel %vm5489, %v6667, %v6668
      %v6670 = vrot.slane %v6490, 5
      %v6671 = vrot.slane %v6670, 4
      %v6672 = vrot.slane %v5728, 5
      %v6673 = vsel %vm5489, %v6671, %v6672
      %v6674 = vrot.slane %v6672, 4
      %v6675 = vrot.slane %v5729, 5
      %v6676 = vsel %vm5489, %v6674, %v6675
      %v6677 = vrot.slane %v6675, 4
      %v6678 = vrot.slane %v5730, 5
      %v6679 = vsel %vm5489, %v6677, %v6678
      %v6680 = vrot.slane %v6678, 4
      %v6681 = vrot.slane %v5770, 5
      %v6682 = vsel %vm5489, %v6680, %v6681
      %v6683 = vrot.slane %v6491, 5
      %v6684 = vrot.slane %v6683, 4
      %v6685 = vrot.slane %v5732, 5
      %v6686 = vsel %vm5489, %v6684, %v6685
      %v6687 = vrot.slane %v6685, 4
      %v6688 = vrot.slane %v5733, 5
      %v6689 = vsel %vm5489, %v6687, %v6688
      %v6690 = vrot.slane %v6688, 4
      %v6691 = vrot.slane %v5734, 5
      %v6692 = vsel %vm5489, %v6690, %v6691
      %v6693 = vrot.slane %v6691, 4
      %v6694 = vrot.slane %v5771, 5
      %v6695 = vsel %vm5489, %v6693, %v6694
      %v6696 = vrot.slane %v6492, 5
      %v6697 = vrot.slane %v6696, 4
      %v6698 = vrot.slane %v5736, 5
      %v6699 = vsel %vm5489, %v6697, %v6698
      %v6700 = vrot.slane %v6698, 4
      %v6701 = vrot.slane %v5737, 5
      %v6702 = vsel %vm5489, %v6700, %v6701
      %v6703 = vrot.slane %v6701, 4
      %v6704 = vrot.slane %v5738, 5
      %v6705 = vsel %vm5489, %v6703, %v6704
      %v6706 = vrot.slane %v6704, 4
      %v6707 = vrot.slane %v5772, 5
      %v6708 = vsel %vm5489, %v6706, %v6707
      %v6709 = vrot.slane %v6493, 5
      %v6710 = vrot.slane %v6709, 4
      %v6711 = vrot.slane %v5740, 5
      %v6712 = vsel %vm5489, %v6710, %v6711
      %v6713 = vrot.slane %v6711, 4
      %v6714 = vrot.slane %v5741, 5
      %v6715 = vsel %vm5489, %v6713, %v6714
      %v6716 = vrot.slane %v6714, 4
      %v6717 = vrot.slane %v5742, 5
      %v6718 = vsel %vm5489, %v6716, %v6717
      %v6719 = vrot.slane %v6717, 4
      %v6720 = vrot.slane %v5773, 5
      %v6721 = vsel %vm5489, %v6719, %v6720
      %v6722 = vrot.slane %v6494, 5
      %v6723 = vrot.slane %v6722, 4
      %v6724 = vrot.slane %v5744, 5
      %v6725 = vsel %vm5489, %v6723, %v6724
      %v6726 = vrot.slane %v6724, 4
      %v6727 = vrot.slane %v5745, 5
      %v6728 = vsel %vm5489, %v6726, %v6727
      %v6729 = vrot.slane %v6727, 4
      %v6730 = vrot.slane %v5746, 5
      %v6731 = vsel %vm5489, %v6729, %v6730
      %v6732 = vrot.slane %v6730, 4
      %v6733 = vrot.slane %v5774, 5
      %v6734 = vsel %vm5489, %v6732, %v6733
      %v6735 = vrot.slane %v6495, 5
      %v6736 = vrot.slane %v6735, 4
      %v6737 = vrot.slane %v5748, 5
      %v6738 = vsel %vm5489, %v6736, %v6737
      %v6739 = vrot.slane %v6737, 4
      %v6740 = vrot.slane %v5749, 5
      %v6741 = vsel %vm5489, %v6739, %v6740
      %v6742 = vrot.slane %v6740, 4
      %v6743 = vrot.slane %v5750, 5
      %v6744 = vsel %vm5489, %v6742, %v6743
      %v6745 = vrot.slane %v6743, 4
      %v6746 = vrot.slane %v5775, 5
      %v6747 = vsel %vm5489, %v6745, %v6746
      %v6748 = vrot.slane %v6496, 5
      %v6749 = vrot.slane %v6748, 4
      %v6750 = vrot.slane %v5752, 5
      %v6751 = vsel %vm5489, %v6749, %v6750
      %v6752 = vrot.slane %v6750, 4
      %v6753 = vrot.slane %v5753, 5
      %v6754 = vsel %vm5489, %v6752, %v6753
      %v6755 = vrot.slane %v6753, 4
      %v6756 = vrot.slane %v5754, 5
      %v6757 = vsel %vm5489, %v6755, %v6756
      %v6758 = vrot.slane %v6756, 4
      %v6759 = vrot.slane %v5776, 5
      %v6760 = vsel %vm5489, %v6758, %v6759
      %v6761 = vrot.slane %v6497, 5
      %v6762 = vrot.slane %v6761, 4
      %v6763 = vrot.slane %v5756, 5
      %v6764 = vsel %vm5489, %v6762, %v6763
      %v6765 = vrot.slane %v6763, 4
      %v6766 = vrot.slane %v5757, 5
      %v6767 = vsel %vm5489, %v6765, %v6766
      %v6768 = vrot.slane %v6766, 4
      %v6769 = vrot.slane %v5758, 5
      %v6770 = vsel %vm5489, %v6768, %v6769
      %v6771 = vrot.slane %v6769, 4
      %v6772 = vrot.slane %v5777, 5
      %v6773 = vsel %vm5489, %v6771, %v6772
      %v6774 = vrot.slane %v6498, 5
      %v6775 = vrot.slane %v6774, 4
      %v6776 = vrot.slane %v5760, 5
      %v6777 = vsel %vm5489, %v6775, %v6776
      %v6778 = vrot.slane %v6776, 4
      %v6779 = vrot.slane %v5761, 5
      %v6780 = vsel %vm5489, %v6778, %v6779
      %v6781 = vrot.slane %v6779, 4
      %v6782 = vrot.slane %v5762, 5
      %v6783 = vsel %vm5489, %v6781, %v6782
      %v6784 = vrot.slane %v6782, 4
      %v6785 = vrot.slane %v5778, 5
      %v6786 = vsel %vm5489, %v6784, %v6785
      %s6787 = scalar_lea.vmem [#allocation2], 40
      %v6788 = vld [vmem:[%s6787] sm:$0xf]
      %v6789 = vld [vmem:[%s6787 + $0x4] sm:$0xf]
      %v6790 = vld [vmem:[%s6787 + $0x8] sm:$0xf]
      %v6791 = vld [vmem:[%s6787 + $0xc] sm:$0xf]
      %v6792 = vld [vmem:[%s6787 + $0x14] sm:$0xf]
      %v6793 = vld [vmem:[%s6787 + $0x18] sm:$0xf]
      %v6794 = vld [vmem:[%s6787 + $0x1c] sm:$0xf]
      %v6795 = vld [vmem:[%s6787 + $0x20] sm:$0xf]
      %v6796 = vld [vmem:[%s6787 + $0x28] sm:$0xf]
      %v6797 = vld [vmem:[%s6787 + $0x2c] sm:$0xf]
      %v6798 = vld [vmem:[%s6787 + $0x30] sm:$0xf]
      %v6799 = vld [vmem:[%s6787 + $0x34] sm:$0xf]
      %v6800 = vld [vmem:[%s6787 + $0x3c] sm:$0xf]
      %v6801 = vld [vmem:[%s6787 + $0x40] sm:$0xf]
      %v6802 = vld [vmem:[%s6787 + $0x44] sm:$0xf]
      %v6803 = vld [vmem:[%s6787 + $0x48] sm:$0xf]
      %v6804 = vld [vmem:[%s6787 + $0x50] sm:$0xf]
      %v6805 = vld [vmem:[%s6787 + $0x54] sm:$0xf]
      %v6806 = vld [vmem:[%s6787 + $0x58] sm:$0xf]
      %v6807 = vld [vmem:[%s6787 + $0x5c] sm:$0xf]
      %v6808 = vld [vmem:[%s6787 + $0x64] sm:$0xf]
      %v6809 = vld [vmem:[%s6787 + $0x68] sm:$0xf]
      %v6810 = vld [vmem:[%s6787 + $0x6c] sm:$0xf]
      %v6811 = vld [vmem:[%s6787 + $0x70] sm:$0xf]
      %v6812 = vld [vmem:[%s6787 + $0x78] sm:$0xf]
      %v6813 = vld [vmem:[%s6787 + $0x7c] sm:$0xf]
      %v6814 = vld [vmem:[%s6787 + $0x80] sm:$0xf]
      %v6815 = vld [vmem:[%s6787 + $0x84] sm:$0xf]
      %v6816 = vld [vmem:[%s6787 + $0x8c] sm:$0xf]
      %v6817 = vld [vmem:[%s6787 + $0x90] sm:$0xf]
      %v6818 = vld [vmem:[%s6787 + $0x94] sm:$0xf]
      %v6819 = vld [vmem:[%s6787 + $0x98] sm:$0xf]
      %v6820 = vld [vmem:[%s6787 + $0xa0] sm:$0xf]
      %v6821 = vld [vmem:[%s6787 + $0xa4] sm:$0xf]
      %v6822 = vld [vmem:[%s6787 + $0xa8] sm:$0xf]
      %v6823 = vld [vmem:[%s6787 + $0xac] sm:$0xf]
      %v6824 = vld [vmem:[%s6787 + $0xb4] sm:$0xf]
      %v6825 = vld [vmem:[%s6787 + $0xb8] sm:$0xf]
      %v6826 = vld [vmem:[%s6787 + $0xbc] sm:$0xf]
      %v6827 = vld [vmem:[%s6787 + $0xc0] sm:$0xf]
      %v6828 = vld [vmem:[%s6787 + $0xc8] sm:$0xf]
      %v6829 = vld [vmem:[%s6787 + $0xcc] sm:$0xf]
      %v6830 = vld [vmem:[%s6787 + $0xd0] sm:$0xf]
      %v6831 = vld [vmem:[%s6787 + $0xd4] sm:$0xf]
      %v6832 = vld [vmem:[%s6787 + $0xdc] sm:$0xf]
      %v6833 = vld [vmem:[%s6787 + $0xe0] sm:$0xf]
      %v6834 = vld [vmem:[%s6787 + $0xe4] sm:$0xf]
      %v6835 = vld [vmem:[%s6787 + $0xe8] sm:$0xf]
      %v6836 = vld [vmem:[%s6787 + $0xf0] sm:$0xf]
      %v6837 = vld [vmem:[%s6787 + $0xf4] sm:$0xf]
      %v6838 = vld [vmem:[%s6787 + $0xf8] sm:$0xf]
      %v6839 = vld [vmem:[%s6787 + $0xfc] sm:$0xf]
      %v6840 = vld [vmem:[%s6787 + $0x104] sm:$0xf]
      %v6841 = vld [vmem:[%s6787 + $0x108] sm:$0xf]
      %v6842 = vld [vmem:[%s6787 + $0x10c] sm:$0xf]
      %v6843 = vld [vmem:[%s6787 + $0x110] sm:$0xf]
      %v6844 = vld [vmem:[%s6787 + $0x118] sm:$0xf]
      %v6845 = vld [vmem:[%s6787 + $0x11c] sm:$0xf]
      %v6846 = vld [vmem:[%s6787 + $0x120] sm:$0xf]
      %v6847 = vld [vmem:[%s6787 + $0x124] sm:$0xf]
      %v6848 = vld [vmem:[%s6787 + $0x12c] sm:$0xf]
      %v6849 = vld [vmem:[%s6787 + $0x130] sm:$0xf]
      %v6850 = vld [vmem:[%s6787 + $0x134] sm:$0xf]
      %v6851 = vld [vmem:[%s6787 + $0x138] sm:$0xf]
      %v6852 = vld [vmem:[%s6787 + $0x10] sm:$0x1]
      %v6853 = vld [vmem:[%s6787 + $0x24] sm:$0x1]
      %v6854 = vld [vmem:[%s6787 + $0x38] sm:$0x1]
      %v6855 = vld [vmem:[%s6787 + $0x4c] sm:$0x1]
      %v6856 = vld [vmem:[%s6787 + $0x60] sm:$0x1]
      %v6857 = vld [vmem:[%s6787 + $0x74] sm:$0x1]
      %v6858 = vld [vmem:[%s6787 + $0x88] sm:$0x1]
      %v6859 = vld [vmem:[%s6787 + $0x9c] sm:$0x1]
      %v6860 = vld [vmem:[%s6787 + $0xb0] sm:$0x1]
      %v6861 = vld [vmem:[%s6787 + $0xc4] sm:$0x1]
      %v6862 = vld [vmem:[%s6787 + $0xd8] sm:$0x1]
      %v6863 = vld [vmem:[%s6787 + $0xec] sm:$0x1]
      %v6864 = vld [vmem:[%s6787 + $0x100] sm:$0x1]
      %v6865 = vld [vmem:[%s6787 + $0x114] sm:$0x1]
      %v6866 = vld [vmem:[%s6787 + $0x128] sm:$0x1]
      %v6867 = vld [vmem:[%s6787 + $0x13c] sm:$0x1]
      %v6869 = vshrl.u32 %v6788, 16
      %v6871 = vrot.slane %v6869, 4
      %v6872 = vshll.u32 %v6788, 16
      %v6874 = vrot.slane %v6872, 5
      %v6875 = vor.u32 %v6871, %v6874
      %v6876 = vrot.slane %v6875, 4
      %v6878 = vshll.u32 %v6789, 16
      %v6880 = vrot.slane %v6878, 5
      %v6881 = vsel %vm4686, %v6876, %v6880
      %v6882 = vshrl.u32 %v6789, 16
      %v6884 = vrot.slane %v6882, 4
      %v6885 = vor.u32 %v6884, %v6880
      %v6886 = vrot.slane %v6885, 4
      %v6888 = vshll.u32 %v6790, 16
      %v6890 = vrot.slane %v6888, 5
      %v6891 = vsel %vm4686, %v6886, %v6890
      %v6892 = vshrl.u32 %v6790, 16
      %v6894 = vrot.slane %v6892, 4
      %v6895 = vor.u32 %v6894, %v6890
      %v6896 = vrot.slane %v6895, 4
      %v6898 = vshll.u32 %v6791, 16
      %v6900 = vrot.slane %v6898, 5
      %v6901 = vsel %vm4686, %v6896, %v6900
      %v6902 = vshrl.u32 %v6791, 16
      %v6904 = vrot.slane %v6902, 4
      %v6905 = vor.u32 %v6904, %v6900
      %v6906 = vrot.slane %v6905, 4
      %v6908 = vshll.u32 %v6852, 16
      %v6910 = vrot.slane %v6908, 5
      %v6911 = vsel %vm4686, %v6906, %v6910
      %v6913 = vshrl.u32 %v6792, 16
      %v6915 = vrot.slane %v6913, 4
      %v6916 = vshll.u32 %v6792, 16
      %v6918 = vrot.slane %v6916, 5
      %v6919 = vor.u32 %v6915, %v6918
      %v6920 = vrot.slane %v6919, 4
      %v6922 = vshll.u32 %v6793, 16
      %v6924 = vrot.slane %v6922, 5
      %v6925 = vsel %vm4686, %v6920, %v6924
      %v6926 = vshrl.u32 %v6793, 16
      %v6928 = vrot.slane %v6926, 4
      %v6929 = vor.u32 %v6928, %v6924
      %v6930 = vrot.slane %v6929, 4
      %v6932 = vshll.u32 %v6794, 16
      %v6934 = vrot.slane %v6932, 5
      %v6935 = vsel %vm4686, %v6930, %v6934
      %v6936 = vshrl.u32 %v6794, 16
      %v6938 = vrot.slane %v6936, 4
      %v6939 = vor.u32 %v6938, %v6934
      %v6940 = vrot.slane %v6939, 4
      %v6942 = vshll.u32 %v6795, 16
      %v6944 = vrot.slane %v6942, 5
      %v6945 = vsel %vm4686, %v6940, %v6944
      %v6946 = vshrl.u32 %v6795, 16
      %v6948 = vrot.slane %v6946, 4
      %v6949 = vor.u32 %v6948, %v6944
      %v6950 = vrot.slane %v6949, 4
      %v6952 = vshll.u32 %v6853, 16
      %v6954 = vrot.slane %v6952, 5
      %v6955 = vsel %vm4686, %v6950, %v6954
      %v6957 = vshrl.u32 %v6796, 16
      %v6959 = vrot.slane %v6957, 4
      %v6960 = vshll.u32 %v6796, 16
      %v6962 = vrot.slane %v6960, 5
      %v6963 = vor.u32 %v6959, %v6962
      %v6964 = vrot.slane %v6963, 4
      %v6966 = vshll.u32 %v6797, 16
      %v6968 = vrot.slane %v6966, 5
      %v6969 = vsel %vm4686, %v6964, %v6968
      %v6970 = vshrl.u32 %v6797, 16
      %v6972 = vrot.slane %v6970, 4
      %v6973 = vor.u32 %v6972, %v6968
      %v6974 = vrot.slane %v6973, 4
      %v6976 = vshll.u32 %v6798, 16
      %v6978 = vrot.slane %v6976, 5
      %v6979 = vsel %vm4686, %v6974, %v6978
      %v6980 = vshrl.u32 %v6798, 16
      %v6982 = vrot.slane %v6980, 4
      %v6983 = vor.u32 %v6982, %v6978
      %v6984 = vrot.slane %v6983, 4
      %v6986 = vshll.u32 %v6799, 16
      %v6988 = vrot.slane %v6986, 5
      %v6989 = vsel %vm4686, %v6984, %v6988
      %v6990 = vshrl.u32 %v6799, 16
      %v6992 = vrot.slane %v6990, 4
      %v6993 = vor.u32 %v6992, %v6988
      %v6994 = vrot.slane %v6993, 4
      %v6996 = vshll.u32 %v6854, 16
      %v6998 = vrot.slane %v6996, 5
      %v6999 = vsel %vm4686, %v6994, %v6998
      %v7001 = vshrl.u32 %v6800, 16
      %v7003 = vrot.slane %v7001, 4
      %v7004 = vshll.u32 %v6800, 16
      %v7006 = vrot.slane %v7004, 5
      %v7007 = vor.u32 %v7003, %v7006
      %v7008 = vrot.slane %v7007, 4
      %v7010 = vshll.u32 %v6801, 16
      %v7012 = vrot.slane %v7010, 5
      %v7013 = vsel %vm4686, %v7008, %v7012
      %v7014 = vshrl.u32 %v6801, 16
      %v7016 = vrot.slane %v7014, 4
      %v7017 = vor.u32 %v7016, %v7012
      %v7018 = vrot.slane %v7017, 4
      %v7020 = vshll.u32 %v6802, 16
      %v7022 = vrot.slane %v7020, 5
      %v7023 = vsel %vm4686, %v7018, %v7022
      %v7024 = vshrl.u32 %v6802, 16
      %v7026 = vrot.slane %v7024, 4
      %v7027 = vor.u32 %v7026, %v7022
      %v7028 = vrot.slane %v7027, 4
      %v7030 = vshll.u32 %v6803, 16
      %v7032 = vrot.slane %v7030, 5
      %v7033 = vsel %vm4686, %v7028, %v7032
      %v7034 = vshrl.u32 %v6803, 16
      %v7036 = vrot.slane %v7034, 4
      %v7037 = vor.u32 %v7036, %v7032
      %v7038 = vrot.slane %v7037, 4
      %v7040 = vshll.u32 %v6855, 16
      %v7042 = vrot.slane %v7040, 5
      %v7043 = vsel %vm4686, %v7038, %v7042
      %v7045 = vshrl.u32 %v6804, 16
      %v7047 = vrot.slane %v7045, 4
      %v7048 = vshll.u32 %v6804, 16
      %v7050 = vrot.slane %v7048, 5
      %v7051 = vor.u32 %v7047, %v7050
      %v7052 = vrot.slane %v7051, 4
      %v7054 = vshll.u32 %v6805, 16
      %v7056 = vrot.slane %v7054, 5
      %v7057 = vsel %vm4686, %v7052, %v7056
      %v7058 = vshrl.u32 %v6805, 16
      %v7060 = vrot.slane %v7058, 4
      %v7061 = vor.u32 %v7060, %v7056
      %v7062 = vrot.slane %v7061, 4
      %v7064 = vshll.u32 %v6806, 16
      %v7066 = vrot.slane %v7064, 5
      %v7067 = vsel %vm4686, %v7062, %v7066
      %v7068 = vshrl.u32 %v6806, 16
      %v7070 = vrot.slane %v7068, 4
      %v7071 = vor.u32 %v7070, %v7066
      %v7072 = vrot.slane %v7071, 4
      %v7074 = vshll.u32 %v6807, 16
      %v7076 = vrot.slane %v7074, 5
      %v7077 = vsel %vm4686, %v7072, %v7076
      %v7078 = vshrl.u32 %v6807, 16
      %v7080 = vrot.slane %v7078, 4
      %v7081 = vor.u32 %v7080, %v7076
      %v7082 = vrot.slane %v7081, 4
      %v7084 = vshll.u32 %v6856, 16
      %v7086 = vrot.slane %v7084, 5
      %v7087 = vsel %vm4686, %v7082, %v7086
      %v7089 = vshrl.u32 %v6808, 16
      %v7091 = vrot.slane %v7089, 4
      %v7092 = vshll.u32 %v6808, 16
      %v7094 = vrot.slane %v7092, 5
      %v7095 = vor.u32 %v7091, %v7094
      %v7096 = vrot.slane %v7095, 4
      %v7098 = vshll.u32 %v6809, 16
      %v7100 = vrot.slane %v7098, 5
      %v7101 = vsel %vm4686, %v7096, %v7100
      %v7102 = vshrl.u32 %v6809, 16
      %v7104 = vrot.slane %v7102, 4
      %v7105 = vor.u32 %v7104, %v7100
      %v7106 = vrot.slane %v7105, 4
      %v7108 = vshll.u32 %v6810, 16
      %v7110 = vrot.slane %v7108, 5
      %v7111 = vsel %vm4686, %v7106, %v7110
      %v7112 = vshrl.u32 %v6810, 16
      %v7114 = vrot.slane %v7112, 4
      %v7115 = vor.u32 %v7114, %v7110
      %v7116 = vrot.slane %v7115, 4
      %v7118 = vshll.u32 %v6811, 16
      %v7120 = vrot.slane %v7118, 5
      %v7121 = vsel %vm4686, %v7116, %v7120
      %v7122 = vshrl.u32 %v6811, 16
      %v7124 = vrot.slane %v7122, 4
      %v7125 = vor.u32 %v7124, %v7120
      %v7126 = vrot.slane %v7125, 4
      %v7128 = vshll.u32 %v6857, 16
      %v7130 = vrot.slane %v7128, 5
      %v7131 = vsel %vm4686, %v7126, %v7130
      %v7133 = vshrl.u32 %v6812, 16
      %v7135 = vrot.slane %v7133, 4
      %v7136 = vshll.u32 %v6812, 16
      %v7138 = vrot.slane %v7136, 5
      %v7139 = vor.u32 %v7135, %v7138
      %v7140 = vrot.slane %v7139, 4
      %v7142 = vshll.u32 %v6813, 16
      %v7144 = vrot.slane %v7142, 5
      %v7145 = vsel %vm4686, %v7140, %v7144
      %v7146 = vshrl.u32 %v6813, 16
      %v7148 = vrot.slane %v7146, 4
      %v7149 = vor.u32 %v7148, %v7144
      %v7150 = vrot.slane %v7149, 4
      %v7152 = vshll.u32 %v6814, 16
      %v7154 = vrot.slane %v7152, 5
      %v7155 = vsel %vm4686, %v7150, %v7154
      %v7156 = vshrl.u32 %v6814, 16
      %v7158 = vrot.slane %v7156, 4
      %v7159 = vor.u32 %v7158, %v7154
      %v7160 = vrot.slane %v7159, 4
      %v7162 = vshll.u32 %v6815, 16
      %v7164 = vrot.slane %v7162, 5
      %v7165 = vsel %vm4686, %v7160, %v7164
      %v7166 = vshrl.u32 %v6815, 16
      %v7168 = vrot.slane %v7166, 4
      %v7169 = vor.u32 %v7168, %v7164
      %v7170 = vrot.slane %v7169, 4
      %v7172 = vshll.u32 %v6858, 16
      %v7174 = vrot.slane %v7172, 5
      %v7175 = vsel %vm4686, %v7170, %v7174
      %v7177 = vshrl.u32 %v6816, 16
      %v7179 = vrot.slane %v7177, 4
      %v7180 = vshll.u32 %v6816, 16
      %v7182 = vrot.slane %v7180, 5
      %v7183 = vor.u32 %v7179, %v7182
      %v7184 = vrot.slane %v7183, 4
      %v7186 = vshll.u32 %v6817, 16
      %v7188 = vrot.slane %v7186, 5
      %v7189 = vsel %vm4686, %v7184, %v7188
      %v7190 = vshrl.u32 %v6817, 16
      %v7192 = vrot.slane %v7190, 4
      %v7193 = vor.u32 %v7192, %v7188
      %v7194 = vrot.slane %v7193, 4
      %v7196 = vshll.u32 %v6818, 16
      %v7198 = vrot.slane %v7196, 5
      %v7199 = vsel %vm4686, %v7194, %v7198
      %v7200 = vshrl.u32 %v6818, 16
      %v7202 = vrot.slane %v7200, 4
      %v7203 = vor.u32 %v7202, %v7198
      %v7204 = vrot.slane %v7203, 4
      %v7206 = vshll.u32 %v6819, 16
      %v7208 = vrot.slane %v7206, 5
      %v7209 = vsel %vm4686, %v7204, %v7208
      %v7210 = vshrl.u32 %v6819, 16
      %v7212 = vrot.slane %v7210, 4
      %v7213 = vor.u32 %v7212, %v7208
      %v7214 = vrot.slane %v7213, 4
      %v7216 = vshll.u32 %v6859, 16
      %v7218 = vrot.slane %v7216, 5
      %v7219 = vsel %vm4686, %v7214, %v7218
      %v7221 = vshrl.u32 %v6820, 16
      %v7223 = vrot.slane %v7221, 4
      %v7224 = vshll.u32 %v6820, 16
      %v7226 = vrot.slane %v7224, 5
      %v7227 = vor.u32 %v7223, %v7226
      %v7228 = vrot.slane %v7227, 4
      %v7230 = vshll.u32 %v6821, 16
      %v7232 = vrot.slane %v7230, 5
      %v7233 = vsel %vm4686, %v7228, %v7232
      %v7234 = vshrl.u32 %v6821, 16
      %v7236 = vrot.slane %v7234, 4
      %v7237 = vor.u32 %v7236, %v7232
      %v7238 = vrot.slane %v7237, 4
      %v7240 = vshll.u32 %v6822, 16
      %v7242 = vrot.slane %v7240, 5
      %v7243 = vsel %vm4686, %v7238, %v7242
      %v7244 = vshrl.u32 %v6822, 16
      %v7246 = vrot.slane %v7244, 4
      %v7247 = vor.u32 %v7246, %v7242
      %v7248 = vrot.slane %v7247, 4
      %v7250 = vshll.u32 %v6823, 16
      %v7252 = vrot.slane %v7250, 5
      %v7253 = vsel %vm4686, %v7248, %v7252
      %v7254 = vshrl.u32 %v6823, 16
      %v7256 = vrot.slane %v7254, 4
      %v7257 = vor.u32 %v7256, %v7252
      %v7258 = vrot.slane %v7257, 4
      %v7260 = vshll.u32 %v6860, 16
      %v7262 = vrot.slane %v7260, 5
      %v7263 = vsel %vm4686, %v7258, %v7262
      %v7265 = vshrl.u32 %v6824, 16
      %v7267 = vrot.slane %v7265, 4
      %v7268 = vshll.u32 %v6824, 16
      %v7270 = vrot.slane %v7268, 5
      %v7271 = vor.u32 %v7267, %v7270
      %v7272 = vrot.slane %v7271, 4
      %v7274 = vshll.u32 %v6825, 16
      %v7276 = vrot.slane %v7274, 5
      %v7277 = vsel %vm4686, %v7272, %v7276
      %v7278 = vshrl.u32 %v6825, 16
      %v7280 = vrot.slane %v7278, 4
      %v7281 = vor.u32 %v7280, %v7276
      %v7282 = vrot.slane %v7281, 4
      %v7284 = vshll.u32 %v6826, 16
      %v7286 = vrot.slane %v7284, 5
      %v7287 = vsel %vm4686, %v7282, %v7286
      %v7288 = vshrl.u32 %v6826, 16
      %v7290 = vrot.slane %v7288, 4
      %v7291 = vor.u32 %v7290, %v7286
      %v7292 = vrot.slane %v7291, 4
      %v7294 = vshll.u32 %v6827, 16
      %v7296 = vrot.slane %v7294, 5
      %v7297 = vsel %vm4686, %v7292, %v7296
      %v7298 = vshrl.u32 %v6827, 16
      %v7300 = vrot.slane %v7298, 4
      %v7301 = vor.u32 %v7300, %v7296
      %v7302 = vrot.slane %v7301, 4
      %v7304 = vshll.u32 %v6861, 16
      %v7306 = vrot.slane %v7304, 5
      %v7307 = vsel %vm4686, %v7302, %v7306
      %v7309 = vshrl.u32 %v6828, 16
      %v7311 = vrot.slane %v7309, 4
      %v7312 = vshll.u32 %v6828, 16
      %v7314 = vrot.slane %v7312, 5
      %v7315 = vor.u32 %v7311, %v7314
      %v7316 = vrot.slane %v7315, 4
      %v7318 = vshll.u32 %v6829, 16
      %v7320 = vrot.slane %v7318, 5
      %v7321 = vsel %vm4686, %v7316, %v7320
      %v7322 = vshrl.u32 %v6829, 16
      %v7324 = vrot.slane %v7322, 4
      %v7325 = vor.u32 %v7324, %v7320
      %v7326 = vrot.slane %v7325, 4
      %v7328 = vshll.u32 %v6830, 16
      %v7330 = vrot.slane %v7328, 5
      %v7331 = vsel %vm4686, %v7326, %v7330
      %v7332 = vshrl.u32 %v6830, 16
      %v7334 = vrot.slane %v7332, 4
      %v7335 = vor.u32 %v7334, %v7330
      %v7336 = vrot.slane %v7335, 4
      %v7338 = vshll.u32 %v6831, 16
      %v7340 = vrot.slane %v7338, 5
      %v7341 = vsel %vm4686, %v7336, %v7340
      %v7342 = vshrl.u32 %v6831, 16
      %v7344 = vrot.slane %v7342, 4
      %v7345 = vor.u32 %v7344, %v7340
      %v7346 = vrot.slane %v7345, 4
      %v7348 = vshll.u32 %v6862, 16
      %v7350 = vrot.slane %v7348, 5
      %v7351 = vsel %vm4686, %v7346, %v7350
      %v7353 = vshrl.u32 %v6832, 16
      %v7355 = vrot.slane %v7353, 4
      %v7356 = vshll.u32 %v6832, 16
      %v7358 = vrot.slane %v7356, 5
      %v7359 = vor.u32 %v7355, %v7358
      %v7360 = vrot.slane %v7359, 4
      %v7362 = vshll.u32 %v6833, 16
      %v7364 = vrot.slane %v7362, 5
      %v7365 = vsel %vm4686, %v7360, %v7364
      %v7366 = vshrl.u32 %v6833, 16
      %v7368 = vrot.slane %v7366, 4
      %v7369 = vor.u32 %v7368, %v7364
      %v7370 = vrot.slane %v7369, 4
      %v7372 = vshll.u32 %v6834, 16
      %v7374 = vrot.slane %v7372, 5
      %v7375 = vsel %vm4686, %v7370, %v7374
      %v7376 = vshrl.u32 %v6834, 16
      %v7378 = vrot.slane %v7376, 4
      %v7379 = vor.u32 %v7378, %v7374
      %v7380 = vrot.slane %v7379, 4
      %v7382 = vshll.u32 %v6835, 16
      %v7384 = vrot.slane %v7382, 5
      %v7385 = vsel %vm4686, %v7380, %v7384
      %v7386 = vshrl.u32 %v6835, 16
      %v7388 = vrot.slane %v7386, 4
      %v7389 = vor.u32 %v7388, %v7384
      %v7390 = vrot.slane %v7389, 4
      %v7392 = vshll.u32 %v6863, 16
      %v7394 = vrot.slane %v7392, 5
      %v7395 = vsel %vm4686, %v7390, %v7394
      %v7397 = vshrl.u32 %v6836, 16
      %v7399 = vrot.slane %v7397, 4
      %v7400 = vshll.u32 %v6836, 16
      %v7402 = vrot.slane %v7400, 5
      %v7403 = vor.u32 %v7399, %v7402
      %v7404 = vrot.slane %v7403, 4
      %v7406 = vshll.u32 %v6837, 16
      %v7408 = vrot.slane %v7406, 5
      %v7409 = vsel %vm4686, %v7404, %v7408
      %v7410 = vshrl.u32 %v6837, 16
      %v7412 = vrot.slane %v7410, 4
      %v7413 = vor.u32 %v7412, %v7408
      %v7414 = vrot.slane %v7413, 4
      %v7416 = vshll.u32 %v6838, 16
      %v7418 = vrot.slane %v7416, 5
      %v7419 = vsel %vm4686, %v7414, %v7418
      %v7420 = vshrl.u32 %v6838, 16
      %v7422 = vrot.slane %v7420, 4
      %v7423 = vor.u32 %v7422, %v7418
      %v7424 = vrot.slane %v7423, 4
      %v7426 = vshll.u32 %v6839, 16
      %v7428 = vrot.slane %v7426, 5
      %v7429 = vsel %vm4686, %v7424, %v7428
      %v7430 = vshrl.u32 %v6839, 16
      %v7432 = vrot.slane %v7430, 4
      %v7433 = vor.u32 %v7432, %v7428
      %v7434 = vrot.slane %v7433, 4
      %v7436 = vshll.u32 %v6864, 16
      %v7438 = vrot.slane %v7436, 5
      %v7439 = vsel %vm4686, %v7434, %v7438
      %v7441 = vshrl.u32 %v6840, 16
      %v7443 = vrot.slane %v7441, 4
      %v7444 = vshll.u32 %v6840, 16
      %v7446 = vrot.slane %v7444, 5
      %v7447 = vor.u32 %v7443, %v7446
      %v7448 = vrot.slane %v7447, 4
      %v7450 = vshll.u32 %v6841, 16
      %v7452 = vrot.slane %v7450, 5
      %v7453 = vsel %vm4686, %v7448, %v7452
      %v7454 = vshrl.u32 %v6841, 16
      %v7456 = vrot.slane %v7454, 4
      %v7457 = vor.u32 %v7456, %v7452
      %v7458 = vrot.slane %v7457, 4
      %v7460 = vshll.u32 %v6842, 16
      %v7462 = vrot.slane %v7460, 5
      %v7463 = vsel %vm4686, %v7458, %v7462
      %v7464 = vshrl.u32 %v6842, 16
      %v7466 = vrot.slane %v7464, 4
      %v7467 = vor.u32 %v7466, %v7462
      %v7468 = vrot.slane %v7467, 4
      %v7470 = vshll.u32 %v6843, 16
      %v7472 = vrot.slane %v7470, 5
      %v7473 = vsel %vm4686, %v7468, %v7472
      %v7474 = vshrl.u32 %v6843, 16
      %v7476 = vrot.slane %v7474, 4
      %v7477 = vor.u32 %v7476, %v7472
      %v7478 = vrot.slane %v7477, 4
      %v7480 = vshll.u32 %v6865, 16
      %v7482 = vrot.slane %v7480, 5
      %v7483 = vsel %vm4686, %v7478, %v7482
      %v7485 = vshrl.u32 %v6844, 16
      %v7487 = vrot.slane %v7485, 4
      %v7488 = vshll.u32 %v6844, 16
      %v7490 = vrot.slane %v7488, 5
      %v7491 = vor.u32 %v7487, %v7490
      %v7492 = vrot.slane %v7491, 4
      %v7494 = vshll.u32 %v6845, 16
      %v7496 = vrot.slane %v7494, 5
      %v7497 = vsel %vm4686, %v7492, %v7496
      %v7498 = vshrl.u32 %v6845, 16
      %v7500 = vrot.slane %v7498, 4
      %v7501 = vor.u32 %v7500, %v7496
      %v7502 = vrot.slane %v7501, 4
      %v7504 = vshll.u32 %v6846, 16
      %v7506 = vrot.slane %v7504, 5
      %v7507 = vsel %vm4686, %v7502, %v7506
      %v7508 = vshrl.u32 %v6846, 16
      %v7510 = vrot.slane %v7508, 4
      %v7511 = vor.u32 %v7510, %v7506
      %v7512 = vrot.slane %v7511, 4
      %v7514 = vshll.u32 %v6847, 16
      %v7516 = vrot.slane %v7514, 5
      %v7517 = vsel %vm4686, %v7512, %v7516
      %v7518 = vshrl.u32 %v6847, 16
      %v7520 = vrot.slane %v7518, 4
      %v7521 = vor.u32 %v7520, %v7516
      %v7522 = vrot.slane %v7521, 4
      %v7524 = vshll.u32 %v6866, 16
      %v7526 = vrot.slane %v7524, 5
      %v7527 = vsel %vm4686, %v7522, %v7526
      %v7529 = vshrl.u32 %v6848, 16
      %v7531 = vrot.slane %v7529, 4
      %v7532 = vshll.u32 %v6848, 16
      %v7534 = vrot.slane %v7532, 5
      %v7535 = vor.u32 %v7531, %v7534
      %v7536 = vrot.slane %v7535, 4
      %v7538 = vshll.u32 %v6849, 16
      %v7540 = vrot.slane %v7538, 5
      %v7541 = vsel %vm4686, %v7536, %v7540
      %v7542 = vshrl.u32 %v6849, 16
      %v7544 = vrot.slane %v7542, 4
      %v7545 = vor.u32 %v7544, %v7540
      %v7546 = vrot.slane %v7545, 4
      %v7548 = vshll.u32 %v6850, 16
      %v7550 = vrot.slane %v7548, 5
      %v7551 = vsel %vm4686, %v7546, %v7550
      %v7552 = vshrl.u32 %v6850, 16
      %v7554 = vrot.slane %v7552, 4
      %v7555 = vor.u32 %v7554, %v7550
      %v7556 = vrot.slane %v7555, 4
      %v7558 = vshll.u32 %v6851, 16
      %v7560 = vrot.slane %v7558, 5
      %v7561 = vsel %vm4686, %v7556, %v7560
      %v7562 = vshrl.u32 %v6851, 16
      %v7564 = vrot.slane %v7562, 4
      %v7565 = vor.u32 %v7564, %v7560
      %v7566 = vrot.slane %v7565, 4
      %v7568 = vshll.u32 %v6867, 16
      %v7570 = vrot.slane %v7568, 5
      %v7571 = vsel %vm4686, %v7566, %v7570
      %v7572 = vld [vmem:[%s6787] sm:$0xe]
      %v7573 = vld [vmem:[%s6787 + $0x14] sm:$0xe]
      %v7574 = vld [vmem:[%s6787 + $0x28] sm:$0xe]
      %v7575 = vld [vmem:[%s6787 + $0x3c] sm:$0xe]
      %v7576 = vld [vmem:[%s6787 + $0x50] sm:$0xe]
      %v7577 = vld [vmem:[%s6787 + $0x64] sm:$0xe]
      %v7578 = vld [vmem:[%s6787 + $0x78] sm:$0xe]
      %v7579 = vld [vmem:[%s6787 + $0x8c] sm:$0xe]
      %v7580 = vld [vmem:[%s6787 + $0xa0] sm:$0xe]
      %v7581 = vld [vmem:[%s6787 + $0xb4] sm:$0xe]
      %v7582 = vld [vmem:[%s6787 + $0xc8] sm:$0xe]
      %v7583 = vld [vmem:[%s6787 + $0xdc] sm:$0xe]
      %v7584 = vld [vmem:[%s6787 + $0xf0] sm:$0xe]
      %v7585 = vld [vmem:[%s6787 + $0x104] sm:$0xe]
      %v7586 = vld [vmem:[%s6787 + $0x118] sm:$0xe]
      %v7587 = vld [vmem:[%s6787 + $0x12c] sm:$0xe]
      %v7668 = vrot.slane %v7572, 5
      %v7669 = vrot.slane %v7668, 4
      %v7670 = vrot.slane %v6789, 5
      %v7671 = vsel %vm5489, %v7669, %v7670
      %v7672 = vrot.slane %v7670, 4
      %v7673 = vrot.slane %v6790, 5
      %v7674 = vsel %vm5489, %v7672, %v7673
      %v7675 = vrot.slane %v7673, 4
      %v7676 = vrot.slane %v6791, 5
      %v7677 = vsel %vm5489, %v7675, %v7676
      %v7678 = vrot.slane %v7676, 4
      %v7679 = vrot.slane %v6852, 5
      %v7680 = vsel %vm5489, %v7678, %v7679
      %v7681 = vrot.slane %v7573, 5
      %v7682 = vrot.slane %v7681, 4
      %v7683 = vrot.slane %v6793, 5
      %v7684 = vsel %vm5489, %v7682, %v7683
      %v7685 = vrot.slane %v7683, 4
      %v7686 = vrot.slane %v6794, 5
      %v7687 = vsel %vm5489, %v7685, %v7686
      %v7688 = vrot.slane %v7686, 4
      %v7689 = vrot.slane %v6795, 5
      %v7690 = vsel %vm5489, %v7688, %v7689
      %v7691 = vrot.slane %v7689, 4
      %v7692 = vrot.slane %v6853, 5
      %v7693 = vsel %vm5489, %v7691, %v7692
      %v7694 = vrot.slane %v7574, 5
      %v7695 = vrot.slane %v7694, 4
      %v7696 = vrot.slane %v6797, 5
      %v7697 = vsel %vm5489, %v7695, %v7696
      %v7698 = vrot.slane %v7696, 4
      %v7699 = vrot.slane %v6798, 5
      %v7700 = vsel %vm5489, %v7698, %v7699
      %v7701 = vrot.slane %v7699, 4
      %v7702 = vrot.slane %v6799, 5
      %v7703 = vsel %vm5489, %v7701, %v7702
      %v7704 = vrot.slane %v7702, 4
      %v7705 = vrot.slane %v6854, 5
      %v7706 = vsel %vm5489, %v7704, %v7705
      %v7707 = vrot.slane %v7575, 5
      %v7708 = vrot.slane %v7707, 4
      %v7709 = vrot.slane %v6801, 5
      %v7710 = vsel %vm5489, %v7708, %v7709
      %v7711 = vrot.slane %v7709, 4
      %v7712 = vrot.slane %v6802, 5
      %v7713 = vsel %vm5489, %v7711, %v7712
      %v7714 = vrot.slane %v7712, 4
      %v7715 = vrot.slane %v6803, 5
      %v7716 = vsel %vm5489, %v7714, %v7715
      %v7717 = vrot.slane %v7715, 4
      %v7718 = vrot.slane %v6855, 5
      %v7719 = vsel %vm5489, %v7717, %v7718
      %v7720 = vrot.slane %v7576, 5
      %v7721 = vrot.slane %v7720, 4
      %v7722 = vrot.slane %v6805, 5
      %v7723 = vsel %vm5489, %v7721, %v7722
      %v7724 = vrot.slane %v7722, 4
      %v7725 = vrot.slane %v6806, 5
      %v7726 = vsel %vm5489, %v7724, %v7725
      %v7727 = vrot.slane %v7725, 4
      %v7728 = vrot.slane %v6807, 5
      %v7729 = vsel %vm5489, %v7727, %v7728
      %v7730 = vrot.slane %v7728, 4
      %v7731 = vrot.slane %v6856, 5
      %v7732 = vsel %vm5489, %v7730, %v7731
      %v7733 = vrot.slane %v7577, 5
      %v7734 = vrot.slane %v7733, 4
      %v7735 = vrot.slane %v6809, 5
      %v7736 = vsel %vm5489, %v7734, %v7735
      %v7737 = vrot.slane %v7735, 4
      %v7738 = vrot.slane %v6810, 5
      %v7739 = vsel %vm5489, %v7737, %v7738
      %v7740 = vrot.slane %v7738, 4
      %v7741 = vrot.slane %v6811, 5
      %v7742 = vsel %vm5489, %v7740, %v7741
      %v7743 = vrot.slane %v7741, 4
      %v7744 = vrot.slane %v6857, 5
      %v7745 = vsel %vm5489, %v7743, %v7744
      %v7746 = vrot.slane %v7578, 5
      %v7747 = vrot.slane %v7746, 4
      %v7748 = vrot.slane %v6813, 5
      %v7749 = vsel %vm5489, %v7747, %v7748
      %v7750 = vrot.slane %v7748, 4
      %v7751 = vrot.slane %v6814, 5
      %v7752 = vsel %vm5489, %v7750, %v7751
      %v7753 = vrot.slane %v7751, 4
      %v7754 = vrot.slane %v6815, 5
      %v7755 = vsel %vm5489, %v7753, %v7754
      %v7756 = vrot.slane %v7754, 4
      %v7757 = vrot.slane %v6858, 5
      %v7758 = vsel %vm5489, %v7756, %v7757
      %v7759 = vrot.slane %v7579, 5
      %v7760 = vrot.slane %v7759, 4
      %v7761 = vrot.slane %v6817, 5
      %v7762 = vsel %vm5489, %v7760, %v7761
      %v7763 = vrot.slane %v7761, 4
      %v7764 = vrot.slane %v6818, 5
      %v7765 = vsel %vm5489, %v7763, %v7764
      %v7766 = vrot.slane %v7764, 4
      %v7767 = vrot.slane %v6819, 5
      %v7768 = vsel %vm5489, %v7766, %v7767
      %v7769 = vrot.slane %v7767, 4
      %v7770 = vrot.slane %v6859, 5
      %v7771 = vsel %vm5489, %v7769, %v7770
      %v7772 = vrot.slane %v7580, 5
      %v7773 = vrot.slane %v7772, 4
      %v7774 = vrot.slane %v6821, 5
      %v7775 = vsel %vm5489, %v7773, %v7774
      %v7776 = vrot.slane %v7774, 4
      %v7777 = vrot.slane %v6822, 5
      %v7778 = vsel %vm5489, %v7776, %v7777
      %v7779 = vrot.slane %v7777, 4
      %v7780 = vrot.slane %v6823, 5
      %v7781 = vsel %vm5489, %v7779, %v7780
      %v7782 = vrot.slane %v7780, 4
      %v7783 = vrot.slane %v6860, 5
      %v7784 = vsel %vm5489, %v7782, %v7783
      %v7785 = vrot.slane %v7581, 5
      %v7786 = vrot.slane %v7785, 4
      %v7787 = vrot.slane %v6825, 5
      %v7788 = vsel %vm5489, %v7786, %v7787
      %v7789 = vrot.slane %v7787, 4
      %v7790 = vrot.slane %v6826, 5
      %v7791 = vsel %vm5489, %v7789, %v7790
      %v7792 = vrot.slane %v7790, 4
      %v7793 = vrot.slane %v6827, 5
      %v7794 = vsel %vm5489, %v7792, %v7793
      %v7795 = vrot.slane %v7793, 4
      %v7796 = vrot.slane %v6861, 5
      %v7797 = vsel %vm5489, %v7795, %v7796
      %v7798 = vrot.slane %v7582, 5
      %v7799 = vrot.slane %v7798, 4
      %v7800 = vrot.slane %v6829, 5
      %v7801 = vsel %vm5489, %v7799, %v7800
      %v7802 = vrot.slane %v7800, 4
      %v7803 = vrot.slane %v6830, 5
      %v7804 = vsel %vm5489, %v7802, %v7803
      %v7805 = vrot.slane %v7803, 4
      %v7806 = vrot.slane %v6831, 5
      %v7807 = vsel %vm5489, %v7805, %v7806
      %v7808 = vrot.slane %v7806, 4
      %v7809 = vrot.slane %v6862, 5
      %v7810 = vsel %vm5489, %v7808, %v7809
      %v7811 = vrot.slane %v7583, 5
      %v7812 = vrot.slane %v7811, 4
      %v7813 = vrot.slane %v6833, 5
      %v7814 = vsel %vm5489, %v7812, %v7813
      %v7815 = vrot.slane %v7813, 4
      %v7816 = vrot.slane %v6834, 5
      %v7817 = vsel %vm5489, %v7815, %v7816
      %v7818 = vrot.slane %v7816, 4
      %v7819 = vrot.slane %v6835, 5
      %v7820 = vsel %vm5489, %v7818, %v7819
      %v7821 = vrot.slane %v7819, 4
      %v7822 = vrot.slane %v6863, 5
      %v7823 = vsel %vm5489, %v7821, %v7822
      %v7824 = vrot.slane %v7584, 5
      %v7825 = vrot.slane %v7824, 4
      %v7826 = vrot.slane %v6837, 5
      %v7827 = vsel %vm5489, %v7825, %v7826
      %v7828 = vrot.slane %v7826, 4
      %v7829 = vrot.slane %v6838, 5
      %v7830 = vsel %vm5489, %v7828, %v7829
      %v7831 = vrot.slane %v7829, 4
      %v7832 = vrot.slane %v6839, 5
      %v7833 = vsel %vm5489, %v7831, %v7832
      %v7834 = vrot.slane %v7832, 4
      %v7835 = vrot.slane %v6864, 5
      %v7836 = vsel %vm5489, %v7834, %v7835
      %v7837 = vrot.slane %v7585, 5
      %v7838 = vrot.slane %v7837, 4
      %v7839 = vrot.slane %v6841, 5
      %v7840 = vsel %vm5489, %v7838, %v7839
      %v7841 = vrot.slane %v7839, 4
      %v7842 = vrot.slane %v6842, 5
      %v7843 = vsel %vm5489, %v7841, %v7842
      %v7844 = vrot.slane %v7842, 4
      %v7845 = vrot.slane %v6843, 5
      %v7846 = vsel %vm5489, %v7844, %v7845
      %v7847 = vrot.slane %v7845, 4
      %v7848 = vrot.slane %v6865, 5
      %v7849 = vsel %vm5489, %v7847, %v7848
      %v7850 = vrot.slane %v7586, 5
      %v7851 = vrot.slane %v7850, 4
      %v7852 = vrot.slane %v6845, 5
      %v7853 = vsel %vm5489, %v7851, %v7852
      %v7854 = vrot.slane %v7852, 4
      %v7855 = vrot.slane %v6846, 5
      %v7856 = vsel %vm5489, %v7854, %v7855
      %v7857 = vrot.slane %v7855, 4
      %v7858 = vrot.slane %v6847, 5
      %v7859 = vsel %vm5489, %v7857, %v7858
      %v7860 = vrot.slane %v7858, 4
      %v7861 = vrot.slane %v6866, 5
      %v7862 = vsel %vm5489, %v7860, %v7861
      %v7863 = vrot.slane %v7587, 5
      %v7864 = vrot.slane %v7863, 4
      %v7865 = vrot.slane %v6849, 5
      %v7866 = vsel %vm5489, %v7864, %v7865
      %v7867 = vrot.slane %v7865, 4
      %v7868 = vrot.slane %v6850, 5
      %v7869 = vsel %vm5489, %v7867, %v7868
      %v7870 = vrot.slane %v7868, 4
      %v7871 = vrot.slane %v6851, 5
      %v7872 = vsel %vm5489, %v7870, %v7871
      %v7873 = vrot.slane %v7871, 4
      %v7874 = vrot.slane %v6867, 5
      %v7875 = vsel %vm5489, %v7873, %v7874
      %v7892 = vunpack.c.l.b16 %v4604
      %v7893 = vunpack.c.l.b16 %v4605
      %v7894 = vunpack.c.l.b16 %v4606
      %v7895 = vunpack.c.l.b16 %v4607
      %v7896 = vunpack.c.l.b16 %v4608
      %v7897 = vunpack.c.l.b16 %v4609
      %v7898 = vunpack.c.l.b16 %v4610
      %v7899 = vunpack.c.l.b16 %v4611
      %v7900 = vunpack.c.l.b16 %v4612
      %v7901 = vunpack.c.l.b16 %v4613
      %v7902 = vunpack.c.l.b16 %v4614
      %v7903 = vunpack.c.l.b16 %v4615
      %v7904 = vunpack.c.l.b16 %v4616
      %v7905 = vunpack.c.l.b16 %v4617
      %v7906 = vunpack.c.l.b16 %v4618
      %v7907 = vunpack.c.l.b16 %v4619
      %v7908 = vunpack.c.l.b16 %v4620
      %v7909 = vunpack.c.l.b16 %v4621
      %v7910 = vunpack.c.l.b16 %v4622
      %v7911 = vunpack.c.l.b16 %v4623
      %v7912 = vunpack.c.l.b16 %v4624
      %v7913 = vunpack.c.l.b16 %v4625
      %v7914 = vunpack.c.l.b16 %v4626
      %v7915 = vunpack.c.l.b16 %v4627
      %v7916 = vunpack.c.l.b16 %v4628
      %v7917 = vunpack.c.l.b16 %v4629
      %v7918 = vunpack.c.l.b16 %v4630
      %v7919 = vunpack.c.l.b16 %v4631
      %v7920 = vunpack.c.l.b16 %v4632
      %v7921 = vunpack.c.l.b16 %v4633
      %v7922 = vunpack.c.l.b16 %v4634
      %v7923 = vunpack.c.l.b16 %v4635
      %v7924 = vunpack.c.l.b16 %v4636
      %v7925 = vunpack.c.l.b16 %v4637
      %v7926 = vunpack.c.l.b16 %v4638
      %v7927 = vunpack.c.l.b16 %v4639
      %v7928 = vunpack.c.l.b16 %v4640
      %v7929 = vunpack.c.l.b16 %v4641
      %v7930 = vunpack.c.l.b16 %v4642
      %v7931 = vunpack.c.l.b16 %v4643
      %v7932 = vunpack.c.l.b16 %v4644
      %v7933 = vunpack.c.l.b16 %v4645
      %v7934 = vunpack.c.l.b16 %v4646
      %v7935 = vunpack.c.l.b16 %v4647
      %v7936 = vunpack.c.l.b16 %v4648
      %v7937 = vunpack.c.l.b16 %v4649
      %v7938 = vunpack.c.l.b16 %v4650
      %v7939 = vunpack.c.l.b16 %v4651
      %v7940 = vunpack.c.l.b16 %v4652
      %v7941 = vunpack.c.l.b16 %v4653
      %v7942 = vunpack.c.l.b16 %v4654
      %v7943 = vunpack.c.l.b16 %v4655
      %v7944 = vunpack.c.l.b16 %v4656
      %v7945 = vunpack.c.l.b16 %v4657
      %v7946 = vunpack.c.l.b16 %v4658
      %v7947 = vunpack.c.l.b16 %v4659
      %v7948 = vunpack.c.l.b16 %v4660
      %v7949 = vunpack.c.l.b16 %v4661
      %v7950 = vunpack.c.l.b16 %v4662
      %v7951 = vunpack.c.l.b16 %v4663
      %v7952 = vunpack.c.l.b16 %v4664
      %v7953 = vunpack.c.l.b16 %v4665
      %v7954 = vunpack.c.l.b16 %v4666
      %v7955 = vunpack.c.l.b16 %v4667
      %v7956 = vpack.c.b16 %v7893, %v7892
      %v7957 = vpack.c.b16 %v7895, %v7894
      %v7958 = vpack.c.b16 %v7897, %v7896
      %v7959 = vpack.c.b16 %v7899, %v7898
      %v7960 = vpack.c.b16 %v7901, %v7900
      %v7961 = vpack.c.b16 %v7903, %v7902
      %v7962 = vpack.c.b16 %v7905, %v7904
      %v7963 = vpack.c.b16 %v7907, %v7906
      %v7964 = vpack.c.b16 %v7909, %v7908
      %v7965 = vpack.c.b16 %v7911, %v7910
      %v7966 = vpack.c.b16 %v7913, %v7912
      %v7967 = vpack.c.b16 %v7915, %v7914
      %v7968 = vpack.c.b16 %v7917, %v7916
      %v7969 = vpack.c.b16 %v7919, %v7918
      %v7970 = vpack.c.b16 %v7921, %v7920
      %v7971 = vpack.c.b16 %v7923, %v7922
      %v7972 = vpack.c.b16 %v7925, %v7924
      %v7973 = vpack.c.b16 %v7927, %v7926
      %v7974 = vpack.c.b16 %v7929, %v7928
      %v7975 = vpack.c.b16 %v7931, %v7930
      %v7976 = vpack.c.b16 %v7933, %v7932
      %v7977 = vpack.c.b16 %v7935, %v7934
      %v7978 = vpack.c.b16 %v7937, %v7936
      %v7979 = vpack.c.b16 %v7939, %v7938
      %v7980 = vpack.c.b16 %v7941, %v7940
      %v7981 = vpack.c.b16 %v7943, %v7942
      %v7982 = vpack.c.b16 %v7945, %v7944
      %v7983 = vpack.c.b16 %v7947, %v7946
      %v7984 = vpack.c.b16 %v7949, %v7948
      %v7985 = vpack.c.b16 %v7951, %v7950
      %v7986 = vpack.c.b16 %v7953, %v7952
      %v7987 = vpack.c.b16 %v7955, %v7954
      %v7988 = vunpack.c.l.b16 %v4700
      %v7989 = vunpack.c.l.b16 %v4710
      %v7990 = vunpack.c.l.b16 %v4720
      %v7991 = vunpack.c.l.b16 %v4730
      %v7992 = vunpack.c.l.b16 %v4744
      %v7993 = vunpack.c.l.b16 %v4754
      %v7994 = vunpack.c.l.b16 %v4764
      %v7995 = vunpack.c.l.b16 %v4774
      %v7996 = vunpack.c.l.b16 %v4788
      %v7997 = vunpack.c.l.b16 %v4798
      %v7998 = vunpack.c.l.b16 %v4808
      %v7999 = vunpack.c.l.b16 %v4818
      %v8000 = vunpack.c.l.b16 %v4832
      %v8001 = vunpack.c.l.b16 %v4842
      %v8002 = vunpack.c.l.b16 %v4852
      %v8003 = vunpack.c.l.b16 %v4862
      %v8004 = vunpack.c.l.b16 %v4876
      %v8005 = vunpack.c.l.b16 %v4886
      %v8006 = vunpack.c.l.b16 %v4896
      %v8007 = vunpack.c.l.b16 %v4906
      %v8008 = vunpack.c.l.b16 %v4920
      %v8009 = vunpack.c.l.b16 %v4930
      %v8010 = vunpack.c.l.b16 %v4940
      %v8011 = vunpack.c.l.b16 %v4950
      %v8012 = vunpack.c.l.b16 %v4964
      %v8013 = vunpack.c.l.b16 %v4974
      %v8014 = vunpack.c.l.b16 %v4984
      %v8015 = vunpack.c.l.b16 %v4994
      %v8016 = vunpack.c.l.b16 %v5008
      %v8017 = vunpack.c.l.b16 %v5018
      %v8018 = vunpack.c.l.b16 %v5028
      %v8019 = vunpack.c.l.b16 %v5038
      %v8020 = vunpack.c.l.b16 %v5052
      %v8021 = vunpack.c.l.b16 %v5062
      %v8022 = vunpack.c.l.b16 %v5072
      %v8023 = vunpack.c.l.b16 %v5082
      %v8024 = vunpack.c.l.b16 %v5096
      %v8025 = vunpack.c.l.b16 %v5106
      %v8026 = vunpack.c.l.b16 %v5116
      %v8027 = vunpack.c.l.b16 %v5126
      %v8028 = vunpack.c.l.b16 %v5140
      %v8029 = vunpack.c.l.b16 %v5150
      %v8030 = vunpack.c.l.b16 %v5160
      %v8031 = vunpack.c.l.b16 %v5170
      %v8032 = vunpack.c.l.b16 %v5184
      %v8033 = vunpack.c.l.b16 %v5194
      %v8034 = vunpack.c.l.b16 %v5204
      %v8035 = vunpack.c.l.b16 %v5214
      %v8036 = vunpack.c.l.b16 %v5228
      %v8037 = vunpack.c.l.b16 %v5238
      %v8038 = vunpack.c.l.b16 %v5248
      %v8039 = vunpack.c.l.b16 %v5258
      %v8040 = vunpack.c.l.b16 %v5272
      %v8041 = vunpack.c.l.b16 %v5282
      %v8042 = vunpack.c.l.b16 %v5292
      %v8043 = vunpack.c.l.b16 %v5302
      %v8044 = vunpack.c.l.b16 %v5316
      %v8045 = vunpack.c.l.b16 %v5326
      %v8046 = vunpack.c.l.b16 %v5336
      %v8047 = vunpack.c.l.b16 %v5346
      %v8048 = vunpack.c.l.b16 %v5360
      %v8049 = vunpack.c.l.b16 %v5370
      %v8050 = vunpack.c.l.b16 %v5380
      %v8051 = vunpack.c.l.b16 %v5390
      %v8052 = vpack.c.b16 %v7989, %v7988
      %v8053 = vpack.c.b16 %v7991, %v7990
      %v8054 = vpack.c.b16 %v7993, %v7992
      %v8055 = vpack.c.b16 %v7995, %v7994
      %v8056 = vpack.c.b16 %v7997, %v7996
      %v8057 = vpack.c.b16 %v7999, %v7998
      %v8058 = vpack.c.b16 %v8001, %v8000
      %v8059 = vpack.c.b16 %v8003, %v8002
      %v8060 = vpack.c.b16 %v8005, %v8004
      %v8061 = vpack.c.b16 %v8007, %v8006
      %v8062 = vpack.c.b16 %v8009, %v8008
      %v8063 = vpack.c.b16 %v8011, %v8010
      %v8064 = vpack.c.b16 %v8013, %v8012
      %v8065 = vpack.c.b16 %v8015, %v8014
      %v8066 = vpack.c.b16 %v8017, %v8016
      %v8067 = vpack.c.b16 %v8019, %v8018
      %v8068 = vpack.c.b16 %v8021, %v8020
      %v8069 = vpack.c.b16 %v8023, %v8022
      %v8070 = vpack.c.b16 %v8025, %v8024
      %v8071 = vpack.c.b16 %v8027, %v8026
      %v8072 = vpack.c.b16 %v8029, %v8028
      %v8073 = vpack.c.b16 %v8031, %v8030
      %v8074 = vpack.c.b16 %v8033, %v8032
      %v8075 = vpack.c.b16 %v8035, %v8034
      %v8076 = vpack.c.b16 %v8037, %v8036
      %v8077 = vpack.c.b16 %v8039, %v8038
      %v8078 = vpack.c.b16 %v8041, %v8040
      %v8079 = vpack.c.b16 %v8043, %v8042
      %v8080 = vpack.c.b16 %v8045, %v8044
      %v8081 = vpack.c.b16 %v8047, %v8046
      %v8082 = vpack.c.b16 %v8049, %v8048
      %v8083 = vpack.c.b16 %v8051, %v8050
      %8084 = vrot.lane.b32.xlu0 %v8052, 4
      %v8085 = vpop.permute.xlu0 %8084
      %8086 = vrot.lane.b32.xlu0 %v8053, 4
      %v8087 = vpop.permute.xlu0 %8086
      %8088 = vrot.lane.b32.xlu0 %v8054, 4
      %v8089 = vpop.permute.xlu0 %8088
      %8090 = vrot.lane.b32.xlu0 %v8055, 4
      %v8091 = vpop.permute.xlu0 %8090
      %8092 = vrot.lane.b32.xlu0 %v8056, 4
      %v8093 = vpop.permute.xlu0 %8092
      %8094 = vrot.lane.b32.xlu0 %v8057, 4
      %v8095 = vpop.permute.xlu0 %8094
      %8096 = vrot.lane.b32.xlu0 %v8058, 4
      %v8097 = vpop.permute.xlu0 %8096
      %8098 = vrot.lane.b32.xlu0 %v8059, 4
      %v8099 = vpop.permute.xlu0 %8098
      %8100 = vrot.lane.b32.xlu0 %v8060, 4
      %v8101 = vpop.permute.xlu0 %8100
      %8102 = vrot.lane.b32.xlu0 %v8061, 4
      %v8103 = vpop.permute.xlu0 %8102
      %8104 = vrot.lane.b32.xlu0 %v8062, 4
      %v8105 = vpop.permute.xlu0 %8104
      %8106 = vrot.lane.b32.xlu0 %v8063, 4
      %v8107 = vpop.permute.xlu0 %8106
      %8108 = vrot.lane.b32.xlu0 %v8064, 4
      %v8109 = vpop.permute.xlu0 %8108
      %8110 = vrot.lane.b32.xlu0 %v8065, 4
      %v8111 = vpop.permute.xlu0 %8110
      %8112 = vrot.lane.b32.xlu0 %v8066, 4
      %v8113 = vpop.permute.xlu0 %8112
      %8114 = vrot.lane.b32.xlu0 %v8067, 4
      %v8115 = vpop.permute.xlu0 %8114
      %8116 = vrot.lane.b32.xlu0 %v8068, 4
      %v8117 = vpop.permute.xlu0 %8116
      %8118 = vrot.lane.b32.xlu0 %v8069, 4
      %v8119 = vpop.permute.xlu0 %8118
      %8120 = vrot.lane.b32.xlu0 %v8070, 4
      %v8121 = vpop.permute.xlu0 %8120
      %8122 = vrot.lane.b32.xlu0 %v8071, 4
      %v8123 = vpop.permute.xlu0 %8122
      %8124 = vrot.lane.b32.xlu0 %v8072, 4
      %v8125 = vpop.permute.xlu0 %8124
      %8126 = vrot.lane.b32.xlu0 %v8073, 4
      %v8127 = vpop.permute.xlu0 %8126
      %8128 = vrot.lane.b32.xlu0 %v8074, 4
      %v8129 = vpop.permute.xlu0 %8128
      %8130 = vrot.lane.b32.xlu0 %v8075, 4
      %v8131 = vpop.permute.xlu0 %8130
      %8132 = vrot.lane.b32.xlu0 %v8076, 4
      %v8133 = vpop.permute.xlu0 %8132
      %8134 = vrot.lane.b32.xlu0 %v8077, 4
      %v8135 = vpop.permute.xlu0 %8134
      %8136 = vrot.lane.b32.xlu0 %v8078, 4
      %v8137 = vpop.permute.xlu0 %8136
      %8138 = vrot.lane.b32.xlu0 %v8079, 4
      %v8139 = vpop.permute.xlu0 %8138
      %8140 = vrot.lane.b32.xlu0 %v8080, 4
      %v8141 = vpop.permute.xlu0 %8140
      %8142 = vrot.lane.b32.xlu0 %v8081, 4
      %v8143 = vpop.permute.xlu0 %8142
      %8144 = vrot.lane.b32.xlu0 %v8082, 4
      %v8145 = vpop.permute.xlu0 %8144
      %8146 = vrot.lane.b32.xlu0 %v8083, 4
      %v8147 = vpop.permute.xlu0 %8146
      %v8148 = vunpack.c.l.b16 %v5493
      %v8149 = vunpack.c.l.b16 %v5496
      %v8150 = vunpack.c.l.b16 %v5499
      %v8151 = vunpack.c.l.b16 %v5502
      %v8152 = vunpack.c.l.b16 %v5506
      %v8153 = vunpack.c.l.b16 %v5509
      %v8154 = vunpack.c.l.b16 %v5512
      %v8155 = vunpack.c.l.b16 %v5515
      %v8156 = vunpack.c.l.b16 %v5519
      %v8157 = vunpack.c.l.b16 %v5522
      %v8158 = vunpack.c.l.b16 %v5525
      %v8159 = vunpack.c.l.b16 %v5528
      %v8160 = vunpack.c.l.b16 %v5532
      %v8161 = vunpack.c.l.b16 %v5535
      %v8162 = vunpack.c.l.b16 %v5538
      %v8163 = vunpack.c.l.b16 %v5541
      %v8164 = vunpack.c.l.b16 %v5545
      %v8165 = vunpack.c.l.b16 %v5548
      %v8166 = vunpack.c.l.b16 %v5551
      %v8167 = vunpack.c.l.b16 %v5554
      %v8168 = vunpack.c.l.b16 %v5558
      %v8169 = vunpack.c.l.b16 %v5561
      %v8170 = vunpack.c.l.b16 %v5564
      %v8171 = vunpack.c.l.b16 %v5567
      %v8172 = vunpack.c.l.b16 %v5571
      %v8173 = vunpack.c.l.b16 %v5574
      %v8174 = vunpack.c.l.b16 %v5577
      %v8175 = vunpack.c.l.b16 %v5580
      %v8176 = vunpack.c.l.b16 %v5584
      %v8177 = vunpack.c.l.b16 %v5587
      %v8178 = vunpack.c.l.b16 %v5590
      %v8179 = vunpack.c.l.b16 %v5593
      %v8180 = vunpack.c.l.b16 %v5597
      %v8181 = vunpack.c.l.b16 %v5600
      %v8182 = vunpack.c.l.b16 %v5603
      %v8183 = vunpack.c.l.b16 %v5606
      %v8184 = vunpack.c.l.b16 %v5610
      %v8185 = vunpack.c.l.b16 %v5613
      %v8186 = vunpack.c.l.b16 %v5616
      %v8187 = vunpack.c.l.b16 %v5619
      %v8188 = vunpack.c.l.b16 %v5623
      %v8189 = vunpack.c.l.b16 %v5626
      %v8190 = vunpack.c.l.b16 %v5629
      %v8191 = vunpack.c.l.b16 %v5632
      %v8192 = vunpack.c.l.b16 %v5636
      %v8193 = vunpack.c.l.b16 %v5639
      %v8194 = vunpack.c.l.b16 %v5642
      %v8195 = vunpack.c.l.b16 %v5645
      %v8196 = vunpack.c.l.b16 %v5649
      %v8197 = vunpack.c.l.b16 %v5652
      %v8198 = vunpack.c.l.b16 %v5655
      %v8199 = vunpack.c.l.b16 %v5658
      %v8200 = vunpack.c.l.b16 %v5662
      %v8201 = vunpack.c.l.b16 %v5665
      %v8202 = vunpack.c.l.b16 %v5668
      %v8203 = vunpack.c.l.b16 %v5671
      %v8204 = vunpack.c.l.b16 %v5675
      %v8205 = vunpack.c.l.b16 %v5678
      %v8206 = vunpack.c.l.b16 %v5681
      %v8207 = vunpack.c.l.b16 %v5684
      %v8208 = vunpack.c.l.b16 %v5688
      %v8209 = vunpack.c.l.b16 %v5691
      %v8210 = vunpack.c.l.b16 %v5694
      %v8211 = vunpack.c.l.b16 %v5697
      %v8212 = vpack.c.b16 %v8149, %v8148
      %v8213 = vpack.c.b16 %v8151, %v8150
      %v8214 = vpack.c.b16 %v8153, %v8152
      %v8215 = vpack.c.b16 %v8155, %v8154
      %v8216 = vpack.c.b16 %v8157, %v8156
      %v8217 = vpack.c.b16 %v8159, %v8158
      %v8218 = vpack.c.b16 %v8161, %v8160
      %v8219 = vpack.c.b16 %v8163, %v8162
      %v8220 = vpack.c.b16 %v8165, %v8164
      %v8221 = vpack.c.b16 %v8167, %v8166
      %v8222 = vpack.c.b16 %v8169, %v8168
      %v8223 = vpack.c.b16 %v8171, %v8170
      %v8224 = vpack.c.b16 %v8173, %v8172
      %v8225 = vpack.c.b16 %v8175, %v8174
      %v8226 = vpack.c.b16 %v8177, %v8176
      %v8227 = vpack.c.b16 %v8179, %v8178
      %v8228 = vpack.c.b16 %v8181, %v8180
      %v8229 = vpack.c.b16 %v8183, %v8182
      %v8230 = vpack.c.b16 %v8185, %v8184
      %v8231 = vpack.c.b16 %v8187, %v8186
      %v8232 = vpack.c.b16 %v8189, %v8188
      %v8233 = vpack.c.b16 %v8191, %v8190
      %v8234 = vpack.c.b16 %v8193, %v8192
      %v8235 = vpack.c.b16 %v8195, %v8194
      %v8236 = vpack.c.b16 %v8197, %v8196
      %v8237 = vpack.c.b16 %v8199, %v8198
      %v8238 = vpack.c.b16 %v8201, %v8200
      %v8239 = vpack.c.b16 %v8203, %v8202
      %v8240 = vpack.c.b16 %v8205, %v8204
      %v8241 = vpack.c.b16 %v8207, %v8206
      %v8242 = vpack.c.b16 %v8209, %v8208
      %v8243 = vpack.c.b16 %v8211, %v8210
      %8244 = vrot.lane.b32.xlu0 %v8212, 8
      %v8245 = vpop.permute.xlu0 %8244
      %8246 = vrot.lane.b32.xlu0 %v8213, 8
      %v8247 = vpop.permute.xlu0 %8246
      %8248 = vrot.lane.b32.xlu0 %v8214, 8
      %v8249 = vpop.permute.xlu0 %8248
      %8250 = vrot.lane.b32.xlu0 %v8215, 8
      %v8251 = vpop.permute.xlu0 %8250
      %8252 = vrot.lane.b32.xlu0 %v8216, 8
      %v8253 = vpop.permute.xlu0 %8252
      %8254 = vrot.lane.b32.xlu0 %v8217, 8
      %v8255 = vpop.permute.xlu0 %8254
      %8256 = vrot.lane.b32.xlu0 %v8218, 8
      %v8257 = vpop.permute.xlu0 %8256
      %8258 = vrot.lane.b32.xlu0 %v8219, 8
      %v8259 = vpop.permute.xlu0 %8258
      %8260 = vrot.lane.b32.xlu0 %v8220, 8
      %v8261 = vpop.permute.xlu0 %8260
      %8262 = vrot.lane.b32.xlu0 %v8221, 8
      %v8263 = vpop.permute.xlu0 %8262
      %8264 = vrot.lane.b32.xlu0 %v8222, 8
      %v8265 = vpop.permute.xlu0 %8264
      %8266 = vrot.lane.b32.xlu0 %v8223, 8
      %v8267 = vpop.permute.xlu0 %8266
      %8268 = vrot.lane.b32.xlu0 %v8224, 8
      %v8269 = vpop.permute.xlu0 %8268
      %8270 = vrot.lane.b32.xlu0 %v8225, 8
      %v8271 = vpop.permute.xlu0 %8270
      %8272 = vrot.lane.b32.xlu0 %v8226, 8
      %v8273 = vpop.permute.xlu0 %8272
      %8274 = vrot.lane.b32.xlu0 %v8227, 8
      %v8275 = vpop.permute.xlu0 %8274
      %8276 = vrot.lane.b32.xlu0 %v8228, 8
      %v8277 = vpop.permute.xlu0 %8276
      %8278 = vrot.lane.b32.xlu0 %v8229, 8
      %v8279 = vpop.permute.xlu0 %8278
      %8280 = vrot.lane.b32.xlu0 %v8230, 8
      %v8281 = vpop.permute.xlu0 %8280
      %8282 = vrot.lane.b32.xlu0 %v8231, 8
      %v8283 = vpop.permute.xlu0 %8282
      %8284 = vrot.lane.b32.xlu0 %v8232, 8
      %v8285 = vpop.permute.xlu0 %8284
      %8286 = vrot.lane.b32.xlu0 %v8233, 8
      %v8287 = vpop.permute.xlu0 %8286
      %8288 = vrot.lane.b32.xlu0 %v8234, 8
      %v8289 = vpop.permute.xlu0 %8288
      %8290 = vrot.lane.b32.xlu0 %v8235, 8
      %v8291 = vpop.permute.xlu0 %8290
      %8292 = vrot.lane.b32.xlu0 %v8236, 8
      %v8293 = vpop.permute.xlu0 %8292
      %8294 = vrot.lane.b32.xlu0 %v8237, 8
      %v8295 = vpop.permute.xlu0 %8294
      %8296 = vrot.lane.b32.xlu0 %v8238, 8
      %v8297 = vpop.permute.xlu0 %8296
      %8298 = vrot.lane.b32.xlu0 %v8239, 8
      %v8299 = vpop.permute.xlu0 %8298
      %8300 = vrot.lane.b32.xlu0 %v8240, 8
      %v8301 = vpop.permute.xlu0 %8300
      %8302 = vrot.lane.b32.xlu0 %v8241, 8
      %v8303 = vpop.permute.xlu0 %8302
      %8304 = vrot.lane.b32.xlu0 %v8242, 8
      %v8305 = vpop.permute.xlu0 %8304
      %8306 = vrot.lane.b32.xlu0 %v8243, 8
      %v8307 = vpop.permute.xlu0 %8306
      %v8324 = vunpack.c.l.b16 %v5699
      %v8325 = vunpack.c.l.b16 %v5700
      %v8326 = vunpack.c.l.b16 %v5701
      %v8327 = vunpack.c.l.b16 %v5702
      %v8328 = vunpack.c.l.b16 %v5703
      %v8329 = vunpack.c.l.b16 %v5704
      %v8330 = vunpack.c.l.b16 %v5705
      %v8331 = vunpack.c.l.b16 %v5706
      %v8332 = vunpack.c.l.b16 %v5707
      %v8333 = vunpack.c.l.b16 %v5708
      %v8334 = vunpack.c.l.b16 %v5709
      %v8335 = vunpack.c.l.b16 %v5710
      %v8336 = vunpack.c.l.b16 %v5711
      %v8337 = vunpack.c.l.b16 %v5712
      %v8338 = vunpack.c.l.b16 %v5713
      %v8339 = vunpack.c.l.b16 %v5714
      %v8340 = vunpack.c.l.b16 %v5715
      %v8341 = vunpack.c.l.b16 %v5716
      %v8342 = vunpack.c.l.b16 %v5717
      %v8343 = vunpack.c.l.b16 %v5718
      %v8344 = vunpack.c.l.b16 %v5719
      %v8345 = vunpack.c.l.b16 %v5720
      %v8346 = vunpack.c.l.b16 %v5721
      %v8347 = vunpack.c.l.b16 %v5722
      %v8348 = vunpack.c.l.b16 %v5723
      %v8349 = vunpack.c.l.b16 %v5724
      %v8350 = vunpack.c.l.b16 %v5725
      %v8351 = vunpack.c.l.b16 %v5726
      %v8352 = vunpack.c.l.b16 %v5727
      %v8353 = vunpack.c.l.b16 %v5728
      %v8354 = vunpack.c.l.b16 %v5729
      %v8355 = vunpack.c.l.b16 %v5730
      %v8356 = vunpack.c.l.b16 %v5731
      %v8357 = vunpack.c.l.b16 %v5732
      %v8358 = vunpack.c.l.b16 %v5733
      %v8359 = vunpack.c.l.b16 %v5734
      %v8360 = vunpack.c.l.b16 %v5735
      %v8361 = vunpack.c.l.b16 %v5736
      %v8362 = vunpack.c.l.b16 %v5737
      %v8363 = vunpack.c.l.b16 %v5738
      %v8364 = vunpack.c.l.b16 %v5739
      %v8365 = vunpack.c.l.b16 %v5740
      %v8366 = vunpack.c.l.b16 %v5741
      %v8367 = vunpack.c.l.b16 %v5742
      %v8368 = vunpack.c.l.b16 %v5743
      %v8369 = vunpack.c.l.b16 %v5744
      %v8370 = vunpack.c.l.b16 %v5745
      %v8371 = vunpack.c.l.b16 %v5746
      %v8372 = vunpack.c.l.b16 %v5747
      %v8373 = vunpack.c.l.b16 %v5748
      %v8374 = vunpack.c.l.b16 %v5749
      %v8375 = vunpack.c.l.b16 %v5750
      %v8376 = vunpack.c.l.b16 %v5751
      %v8377 = vunpack.c.l.b16 %v5752
      %v8378 = vunpack.c.l.b16 %v5753
      %v8379 = vunpack.c.l.b16 %v5754
      %v8380 = vunpack.c.l.b16 %v5755
      %v8381 = vunpack.c.l.b16 %v5756
      %v8382 = vunpack.c.l.b16 %v5757
      %v8383 = vunpack.c.l.b16 %v5758
      %v8384 = vunpack.c.l.b16 %v5759
      %v8385 = vunpack.c.l.b16 %v5760
      %v8386 = vunpack.c.l.b16 %v5761
      %v8387 = vunpack.c.l.b16 %v5762
      %v8388 = vpack.c.b16 %v8325, %v8324
      %v8389 = vpack.c.b16 %v8327, %v8326
      %v8390 = vpack.c.b16 %v8329, %v8328
      %v8391 = vpack.c.b16 %v8331, %v8330
      %v8392 = vpack.c.b16 %v8333, %v8332
      %v8393 = vpack.c.b16 %v8335, %v8334
      %v8394 = vpack.c.b16 %v8337, %v8336
      %v8395 = vpack.c.b16 %v8339, %v8338
      %v8396 = vpack.c.b16 %v8341, %v8340
      %v8397 = vpack.c.b16 %v8343, %v8342
      %v8398 = vpack.c.b16 %v8345, %v8344
      %v8399 = vpack.c.b16 %v8347, %v8346
      %v8400 = vpack.c.b16 %v8349, %v8348
      %v8401 = vpack.c.b16 %v8351, %v8350
      %v8402 = vpack.c.b16 %v8353, %v8352
      %v8403 = vpack.c.b16 %v8355, %v8354
      %v8404 = vpack.c.b16 %v8357, %v8356
      %v8405 = vpack.c.b16 %v8359, %v8358
      %v8406 = vpack.c.b16 %v8361, %v8360
      %v8407 = vpack.c.b16 %v8363, %v8362
      %v8408 = vpack.c.b16 %v8365, %v8364
      %v8409 = vpack.c.b16 %v8367, %v8366
      %v8410 = vpack.c.b16 %v8369, %v8368
      %v8411 = vpack.c.b16 %v8371, %v8370
      %v8412 = vpack.c.b16 %v8373, %v8372
      %v8413 = vpack.c.b16 %v8375, %v8374
      %v8414 = vpack.c.b16 %v8377, %v8376
      %v8415 = vpack.c.b16 %v8379, %v8378
      %v8416 = vpack.c.b16 %v8381, %v8380
      %v8417 = vpack.c.b16 %v8383, %v8382
      %v8418 = vpack.c.b16 %v8385, %v8384
      %v8419 = vpack.c.b16 %v8387, %v8386
      %8420 = vrot.lane.b32.xlu0 %v8388, 12
      %v8421 = vpop.permute.xlu0 %8420
      %8422 = vrot.lane.b32.xlu0 %v8389, 12
      %v8423 = vpop.permute.xlu0 %8422
      %8424 = vrot.lane.b32.xlu0 %v8390, 12
      %v8425 = vpop.permute.xlu0 %8424
      %8426 = vrot.lane.b32.xlu0 %v8391, 12
      %v8427 = vpop.permute.xlu0 %8426
      %8428 = vrot.lane.b32.xlu0 %v8392, 12
      %v8429 = vpop.permute.xlu0 %8428
      %8430 = vrot.lane.b32.xlu0 %v8393, 12
      %v8431 = vpop.permute.xlu0 %8430
      %8432 = vrot.lane.b32.xlu0 %v8394, 12
      %v8433 = vpop.permute.xlu0 %8432
      %8434 = vrot.lane.b32.xlu0 %v8395, 12
      %v8435 = vpop.permute.xlu0 %8434
      %8436 = vrot.lane.b32.xlu0 %v8396, 12
      %v8437 = vpop.permute.xlu0 %8436
      %8438 = vrot.lane.b32.xlu0 %v8397, 12
      %v8439 = vpop.permute.xlu0 %8438
      %8440 = vrot.lane.b32.xlu0 %v8398, 12
      %v8441 = vpop.permute.xlu0 %8440
      %8442 = vrot.lane.b32.xlu0 %v8399, 12
      %v8443 = vpop.permute.xlu0 %8442
      %8444 = vrot.lane.b32.xlu0 %v8400, 12
      %v8445 = vpop.permute.xlu0 %8444
      %8446 = vrot.lane.b32.xlu0 %v8401, 12
      %v8447 = vpop.permute.xlu0 %8446
      %8448 = vrot.lane.b32.xlu0 %v8402, 12
      %v8449 = vpop.permute.xlu0 %8448
      %8450 = vrot.lane.b32.xlu0 %v8403, 12
      %v8451 = vpop.permute.xlu0 %8450
      %8452 = vrot.lane.b32.xlu0 %v8404, 12
      %v8453 = vpop.permute.xlu0 %8452
      %8454 = vrot.lane.b32.xlu0 %v8405, 12
      %v8455 = vpop.permute.xlu0 %8454
      %8456 = vrot.lane.b32.xlu0 %v8406, 12
      %v8457 = vpop.permute.xlu0 %8456
      %8458 = vrot.lane.b32.xlu0 %v8407, 12
      %v8459 = vpop.permute.xlu0 %8458
      %8460 = vrot.lane.b32.xlu0 %v8408, 12
      %v8461 = vpop.permute.xlu0 %8460
      %8462 = vrot.lane.b32.xlu0 %v8409, 12
      %v8463 = vpop.permute.xlu0 %8462
      %8464 = vrot.lane.b32.xlu0 %v8410, 12
      %v8465 = vpop.permute.xlu0 %8464
      %8466 = vrot.lane.b32.xlu0 %v8411, 12
      %v8467 = vpop.permute.xlu0 %8466
      %8468 = vrot.lane.b32.xlu0 %v8412, 12
      %v8469 = vpop.permute.xlu0 %8468
      %8470 = vrot.lane.b32.xlu0 %v8413, 12
      %v8471 = vpop.permute.xlu0 %8470
      %8472 = vrot.lane.b32.xlu0 %v8414, 12
      %v8473 = vpop.permute.xlu0 %8472
      %8474 = vrot.lane.b32.xlu0 %v8415, 12
      %v8475 = vpop.permute.xlu0 %8474
      %8476 = vrot.lane.b32.xlu0 %v8416, 12
      %v8477 = vpop.permute.xlu0 %8476
      %8478 = vrot.lane.b32.xlu0 %v8417, 12
      %v8479 = vpop.permute.xlu0 %8478
      %8480 = vrot.lane.b32.xlu0 %v8418, 12
      %v8481 = vpop.permute.xlu0 %8480
      %8482 = vrot.lane.b32.xlu0 %v8419, 12
      %v8483 = vpop.permute.xlu0 %8482
      %v8484 = vunpack.c.l.b16 %v5792
      %v8485 = vunpack.c.l.b16 %v5802
      %v8486 = vunpack.c.l.b16 %v5812
      %v8487 = vunpack.c.l.b16 %v5822
      %v8488 = vunpack.c.l.b16 %v5836
      %v8489 = vunpack.c.l.b16 %v5846
      %v8490 = vunpack.c.l.b16 %v5856
      %v8491 = vunpack.c.l.b16 %v5866
      %v8492 = vunpack.c.l.b16 %v5880
      %v8493 = vunpack.c.l.b16 %v5890
      %v8494 = vunpack.c.l.b16 %v5900
      %v8495 = vunpack.c.l.b16 %v5910
      %v8496 = vunpack.c.l.b16 %v5924
      %v8497 = vunpack.c.l.b16 %v5934
      %v8498 = vunpack.c.l.b16 %v5944
      %v8499 = vunpack.c.l.b16 %v5954
      %v8500 = vunpack.c.l.b16 %v5968
      %v8501 = vunpack.c.l.b16 %v5978
      %v8502 = vunpack.c.l.b16 %v5988
      %v8503 = vunpack.c.l.b16 %v5998
      %v8504 = vunpack.c.l.b16 %v6012
      %v8505 = vunpack.c.l.b16 %v6022
      %v8506 = vunpack.c.l.b16 %v6032
      %v8507 = vunpack.c.l.b16 %v6042
      %v8508 = vunpack.c.l.b16 %v6056
      %v8509 = vunpack.c.l.b16 %v6066
      %v8510 = vunpack.c.l.b16 %v6076
      %v8511 = vunpack.c.l.b16 %v6086
      %v8512 = vunpack.c.l.b16 %v6100
      %v8513 = vunpack.c.l.b16 %v6110
      %v8514 = vunpack.c.l.b16 %v6120
      %v8515 = vunpack.c.l.b16 %v6130
      %v8516 = vunpack.c.l.b16 %v6144
      %v8517 = vunpack.c.l.b16 %v6154
      %v8518 = vunpack.c.l.b16 %v6164
      %v8519 = vunpack.c.l.b16 %v6174
      %v8520 = vunpack.c.l.b16 %v6188
      %v8521 = vunpack.c.l.b16 %v6198
      %v8522 = vunpack.c.l.b16 %v6208
      %v8523 = vunpack.c.l.b16 %v6218
      %v8524 = vunpack.c.l.b16 %v6232
      %v8525 = vunpack.c.l.b16 %v6242
      %v8526 = vunpack.c.l.b16 %v6252
      %v8527 = vunpack.c.l.b16 %v6262
      %v8528 = vunpack.c.l.b16 %v6276
      %v8529 = vunpack.c.l.b16 %v6286
      %v8530 = vunpack.c.l.b16 %v6296
      %v8531 = vunpack.c.l.b16 %v6306
      %v8532 = vunpack.c.l.b16 %v6320
      %v8533 = vunpack.c.l.b16 %v6330
      %v8534 = vunpack.c.l.b16 %v6340
      %v8535 = vunpack.c.l.b16 %v6350
      %v8536 = vunpack.c.l.b16 %v6364
      %v8537 = vunpack.c.l.b16 %v6374
      %v8538 = vunpack.c.l.b16 %v6384
      %v8539 = vunpack.c.l.b16 %v6394
      %v8540 = vunpack.c.l.b16 %v6408
      %v8541 = vunpack.c.l.b16 %v6418
      %v8542 = vunpack.c.l.b16 %v6428
      %v8543 = vunpack.c.l.b16 %v6438
      %v8544 = vunpack.c.l.b16 %v6452
      %v8545 = vunpack.c.l.b16 %v6462
      %v8546 = vunpack.c.l.b16 %v6472
      %v8547 = vunpack.c.l.b16 %v6482
      %v8548 = vpack.c.b16 %v8485, %v8484
      %v8549 = vpack.c.b16 %v8487, %v8486
      %v8550 = vpack.c.b16 %v8489, %v8488
      %v8551 = vpack.c.b16 %v8491, %v8490
      %v8552 = vpack.c.b16 %v8493, %v8492
      %v8553 = vpack.c.b16 %v8495, %v8494
      %v8554 = vpack.c.b16 %v8497, %v8496
      %v8555 = vpack.c.b16 %v8499, %v8498
      %v8556 = vpack.c.b16 %v8501, %v8500
      %v8557 = vpack.c.b16 %v8503, %v8502
      %v8558 = vpack.c.b16 %v8505, %v8504
      %v8559 = vpack.c.b16 %v8507, %v8506
      %v8560 = vpack.c.b16 %v8509, %v8508
      %v8561 = vpack.c.b16 %v8511, %v8510
      %v8562 = vpack.c.b16 %v8513, %v8512
      %v8563 = vpack.c.b16 %v8515, %v8514
      %v8564 = vpack.c.b16 %v8517, %v8516
      %v8565 = vpack.c.b16 %v8519, %v8518
      %v8566 = vpack.c.b16 %v8521, %v8520
      %v8567 = vpack.c.b16 %v8523, %v8522
      %v8568 = vpack.c.b16 %v8525, %v8524
      %v8569 = vpack.c.b16 %v8527, %v8526
      %v8570 = vpack.c.b16 %v8529, %v8528
      %v8571 = vpack.c.b16 %v8531, %v8530
      %v8572 = vpack.c.b16 %v8533, %v8532
      %v8573 = vpack.c.b16 %v8535, %v8534
      %v8574 = vpack.c.b16 %v8537, %v8536
      %v8575 = vpack.c.b16 %v8539, %v8538
      %v8576 = vpack.c.b16 %v8541, %v8540
      %v8577 = vpack.c.b16 %v8543, %v8542
      %v8578 = vpack.c.b16 %v8545, %v8544
      %v8579 = vpack.c.b16 %v8547, %v8546
      %8580 = vrot.lane.b32.xlu0 %v8548, 16
      %v8581 = vpop.permute.xlu0 %8580
      %8582 = vrot.lane.b32.xlu0 %v8549, 16
      %v8583 = vpop.permute.xlu0 %8582
      %8584 = vrot.lane.b32.xlu0 %v8550, 16
      %v8585 = vpop.permute.xlu0 %8584
      %8586 = vrot.lane.b32.xlu0 %v8551, 16
      %v8587 = vpop.permute.xlu0 %8586
      %8588 = vrot.lane.b32.xlu0 %v8552, 16
      %v8589 = vpop.permute.xlu0 %8588
      %8590 = vrot.lane.b32.xlu0 %v8553, 16
      %v8591 = vpop.permute.xlu0 %8590
      %8592 = vrot.lane.b32.xlu0 %v8554, 16
      %v8593 = vpop.permute.xlu0 %8592
      %8594 = vrot.lane.b32.xlu0 %v8555, 16
      %v8595 = vpop.permute.xlu0 %8594
      %8596 = vrot.lane.b32.xlu0 %v8556, 16
      %v8597 = vpop.permute.xlu0 %8596
      %8598 = vrot.lane.b32.xlu0 %v8557, 16
      %v8599 = vpop.permute.xlu0 %8598
      %8600 = vrot.lane.b32.xlu0 %v8558, 16
      %v8601 = vpop.permute.xlu0 %8600
      %8602 = vrot.lane.b32.xlu0 %v8559, 16
      %v8603 = vpop.permute.xlu0 %8602
      %8604 = vrot.lane.b32.xlu0 %v8560, 16
      %v8605 = vpop.permute.xlu0 %8604
      %8606 = vrot.lane.b32.xlu0 %v8561, 16
      %v8607 = vpop.permute.xlu0 %8606
      %8608 = vrot.lane.b32.xlu0 %v8562, 16
      %v8609 = vpop.permute.xlu0 %8608
      %8610 = vrot.lane.b32.xlu0 %v8563, 16
      %v8611 = vpop.permute.xlu0 %8610
      %8612 = vrot.lane.b32.xlu0 %v8564, 16
      %v8613 = vpop.permute.xlu0 %8612
      %8614 = vrot.lane.b32.xlu0 %v8565, 16
      %v8615 = vpop.permute.xlu0 %8614
      %8616 = vrot.lane.b32.xlu0 %v8566, 16
      %v8617 = vpop.permute.xlu0 %8616
      %8618 = vrot.lane.b32.xlu0 %v8567, 16
      %v8619 = vpop.permute.xlu0 %8618
      %8620 = vrot.lane.b32.xlu0 %v8568, 16
      %v8621 = vpop.permute.xlu0 %8620
      %8622 = vrot.lane.b32.xlu0 %v8569, 16
      %v8623 = vpop.permute.xlu0 %8622
      %8624 = vrot.lane.b32.xlu0 %v8570, 16
      %v8625 = vpop.permute.xlu0 %8624
      %8626 = vrot.lane.b32.xlu0 %v8571, 16
      %v8627 = vpop.permute.xlu0 %8626
      %8628 = vrot.lane.b32.xlu0 %v8572, 16
      %v8629 = vpop.permute.xlu0 %8628
      %8630 = vrot.lane.b32.xlu0 %v8573, 16
      %v8631 = vpop.permute.xlu0 %8630
      %8632 = vrot.lane.b32.xlu0 %v8574, 16
      %v8633 = vpop.permute.xlu0 %8632
      %8634 = vrot.lane.b32.xlu0 %v8575, 16
      %v8635 = vpop.permute.xlu0 %8634
      %8636 = vrot.lane.b32.xlu0 %v8576, 16
      %v8637 = vpop.permute.xlu0 %8636
      %8638 = vrot.lane.b32.xlu0 %v8577, 16
      %v8639 = vpop.permute.xlu0 %8638
      %8640 = vrot.lane.b32.xlu0 %v8578, 16
      %v8641 = vpop.permute.xlu0 %8640
      %8642 = vrot.lane.b32.xlu0 %v8579, 16
      %v8643 = vpop.permute.xlu0 %8642
      %v8644 = vunpack.c.l.b16 %v6582
      %v8645 = vunpack.c.l.b16 %v6585
      %v8646 = vunpack.c.l.b16 %v6588
      %v8647 = vunpack.c.l.b16 %v6591
      %v8648 = vunpack.c.l.b16 %v6595
      %v8649 = vunpack.c.l.b16 %v6598
      %v8650 = vunpack.c.l.b16 %v6601
      %v8651 = vunpack.c.l.b16 %v6604
      %v8652 = vunpack.c.l.b16 %v6608
      %v8653 = vunpack.c.l.b16 %v6611
      %v8654 = vunpack.c.l.b16 %v6614
      %v8655 = vunpack.c.l.b16 %v6617
      %v8656 = vunpack.c.l.b16 %v6621
      %v8657 = vunpack.c.l.b16 %v6624
      %v8658 = vunpack.c.l.b16 %v6627
      %v8659 = vunpack.c.l.b16 %v6630
      %v8660 = vunpack.c.l.b16 %v6634
      %v8661 = vunpack.c.l.b16 %v6637
      %v8662 = vunpack.c.l.b16 %v6640
      %v8663 = vunpack.c.l.b16 %v6643
      %v8664 = vunpack.c.l.b16 %v6647
      %v8665 = vunpack.c.l.b16 %v6650
      %v8666 = vunpack.c.l.b16 %v6653
      %v8667 = vunpack.c.l.b16 %v6656
      %v8668 = vunpack.c.l.b16 %v6660
      %v8669 = vunpack.c.l.b16 %v6663
      %v8670 = vunpack.c.l.b16 %v6666
      %v8671 = vunpack.c.l.b16 %v6669
      %v8672 = vunpack.c.l.b16 %v6673
      %v8673 = vunpack.c.l.b16 %v6676
      %v8674 = vunpack.c.l.b16 %v6679
      %v8675 = vunpack.c.l.b16 %v6682
      %v8676 = vunpack.c.l.b16 %v6686
      %v8677 = vunpack.c.l.b16 %v6689
      %v8678 = vunpack.c.l.b16 %v6692
      %v8679 = vunpack.c.l.b16 %v6695
      %v8680 = vunpack.c.l.b16 %v6699
      %v8681 = vunpack.c.l.b16 %v6702
      %v8682 = vunpack.c.l.b16 %v6705
      %v8683 = vunpack.c.l.b16 %v6708
      %v8684 = vunpack.c.l.b16 %v6712
      %v8685 = vunpack.c.l.b16 %v6715
      %v8686 = vunpack.c.l.b16 %v6718
      %v8687 = vunpack.c.l.b16 %v6721
      %v8688 = vunpack.c.l.b16 %v6725
      %v8689 = vunpack.c.l.b16 %v6728
      %v8690 = vunpack.c.l.b16 %v6731
      %v8691 = vunpack.c.l.b16 %v6734
      %v8692 = vunpack.c.l.b16 %v6738
      %v8693 = vunpack.c.l.b16 %v6741
      %v8694 = vunpack.c.l.b16 %v6744
      %v8695 = vunpack.c.l.b16 %v6747
      %v8696 = vunpack.c.l.b16 %v6751
      %v8697 = vunpack.c.l.b16 %v6754
      %v8698 = vunpack.c.l.b16 %v6757
      %v8699 = vunpack.c.l.b16 %v6760
      %v8700 = vunpack.c.l.b16 %v6764
      %v8701 = vunpack.c.l.b16 %v6767
      %v8702 = vunpack.c.l.b16 %v6770
      %v8703 = vunpack.c.l.b16 %v6773
      %v8704 = vunpack.c.l.b16 %v6777
      %v8705 = vunpack.c.l.b16 %v6780
      %v8706 = vunpack.c.l.b16 %v6783
      %v8707 = vunpack.c.l.b16 %v6786
      %v8708 = vpack.c.b16 %v8645, %v8644
      %v8709 = vpack.c.b16 %v8647, %v8646
      %v8710 = vpack.c.b16 %v8649, %v8648
      %v8711 = vpack.c.b16 %v8651, %v8650
      %v8712 = vpack.c.b16 %v8653, %v8652
      %v8713 = vpack.c.b16 %v8655, %v8654
      %v8714 = vpack.c.b16 %v8657, %v8656
      %v8715 = vpack.c.b16 %v8659, %v8658
      %v8716 = vpack.c.b16 %v8661, %v8660
      %v8717 = vpack.c.b16 %v8663, %v8662
      %v8718 = vpack.c.b16 %v8665, %v8664
      %v8719 = vpack.c.b16 %v8667, %v8666
      %v8720 = vpack.c.b16 %v8669, %v8668
      %v8721 = vpack.c.b16 %v8671, %v8670
      %v8722 = vpack.c.b16 %v8673, %v8672
      %v8723 = vpack.c.b16 %v8675, %v8674
      %v8724 = vpack.c.b16 %v8677, %v8676
      %v8725 = vpack.c.b16 %v8679, %v8678
      %v8726 = vpack.c.b16 %v8681, %v8680
      %v8727 = vpack.c.b16 %v8683, %v8682
      %v8728 = vpack.c.b16 %v8685, %v8684
      %v8729 = vpack.c.b16 %v8687, %v8686
      %v8730 = vpack.c.b16 %v8689, %v8688
      %v8731 = vpack.c.b16 %v8691, %v8690
      %v8732 = vpack.c.b16 %v8693, %v8692
      %v8733 = vpack.c.b16 %v8695, %v8694
      %v8734 = vpack.c.b16 %v8697, %v8696
      %v8735 = vpack.c.b16 %v8699, %v8698
      %v8736 = vpack.c.b16 %v8701, %v8700
      %v8737 = vpack.c.b16 %v8703, %v8702
      %v8738 = vpack.c.b16 %v8705, %v8704
      %v8739 = vpack.c.b16 %v8707, %v8706
      %8740 = vrot.lane.b32.xlu0 %v8708, 20
      %v8741 = vpop.permute.xlu0 %8740
      %8742 = vrot.lane.b32.xlu0 %v8709, 20
      %v8743 = vpop.permute.xlu0 %8742
      %8744 = vrot.lane.b32.xlu0 %v8710, 20
      %v8745 = vpop.permute.xlu0 %8744
      %8746 = vrot.lane.b32.xlu0 %v8711, 20
      %v8747 = vpop.permute.xlu0 %8746
      %8748 = vrot.lane.b32.xlu0 %v8712, 20
      %v8749 = vpop.permute.xlu0 %8748
      %8750 = vrot.lane.b32.xlu0 %v8713, 20
      %v8751 = vpop.permute.xlu0 %8750
      %8752 = vrot.lane.b32.xlu0 %v8714, 20
      %v8753 = vpop.permute.xlu0 %8752
      %8754 = vrot.lane.b32.xlu0 %v8715, 20
      %v8755 = vpop.permute.xlu0 %8754
      %8756 = vrot.lane.b32.xlu0 %v8716, 20
      %v8757 = vpop.permute.xlu0 %8756
      %8758 = vrot.lane.b32.xlu0 %v8717, 20
      %v8759 = vpop.permute.xlu0 %8758
      %8760 = vrot.lane.b32.xlu0 %v8718, 20
      %v8761 = vpop.permute.xlu0 %8760
      %8762 = vrot.lane.b32.xlu0 %v8719, 20
      %v8763 = vpop.permute.xlu0 %8762
      %8764 = vrot.lane.b32.xlu0 %v8720, 20
      %v8765 = vpop.permute.xlu0 %8764
      %8766 = vrot.lane.b32.xlu0 %v8721, 20
      %v8767 = vpop.permute.xlu0 %8766
      %8768 = vrot.lane.b32.xlu0 %v8722, 20
      %v8769 = vpop.permute.xlu0 %8768
      %8770 = vrot.lane.b32.xlu0 %v8723, 20
      %v8771 = vpop.permute.xlu0 %8770
      %8772 = vrot.lane.b32.xlu0 %v8724, 20
      %v8773 = vpop.permute.xlu0 %8772
      %8774 = vrot.lane.b32.xlu0 %v8725, 20
      %v8775 = vpop.permute.xlu0 %8774
      %8776 = vrot.lane.b32.xlu0 %v8726, 20
      %v8777 = vpop.permute.xlu0 %8776
      %8778 = vrot.lane.b32.xlu0 %v8727, 20
      %v8779 = vpop.permute.xlu0 %8778
      %8780 = vrot.lane.b32.xlu0 %v8728, 20
      %v8781 = vpop.permute.xlu0 %8780
      %8782 = vrot.lane.b32.xlu0 %v8729, 20
      %v8783 = vpop.permute.xlu0 %8782
      %8784 = vrot.lane.b32.xlu0 %v8730, 20
      %v8785 = vpop.permute.xlu0 %8784
      %8786 = vrot.lane.b32.xlu0 %v8731, 20
      %v8787 = vpop.permute.xlu0 %8786
      %8788 = vrot.lane.b32.xlu0 %v8732, 20
      %v8789 = vpop.permute.xlu0 %8788
      %8790 = vrot.lane.b32.xlu0 %v8733, 20
      %v8791 = vpop.permute.xlu0 %8790
      %8792 = vrot.lane.b32.xlu0 %v8734, 20
      %v8793 = vpop.permute.xlu0 %8792
      %8794 = vrot.lane.b32.xlu0 %v8735, 20
      %v8795 = vpop.permute.xlu0 %8794
      %8796 = vrot.lane.b32.xlu0 %v8736, 20
      %v8797 = vpop.permute.xlu0 %8796
      %8798 = vrot.lane.b32.xlu0 %v8737, 20
      %v8799 = vpop.permute.xlu0 %8798
      %8800 = vrot.lane.b32.xlu0 %v8738, 20
      %v8801 = vpop.permute.xlu0 %8800
      %8802 = vrot.lane.b32.xlu0 %v8739, 20
      %v8803 = vpop.permute.xlu0 %8802
      %v8820 = vunpack.c.l.b16 %v6788
      %v8821 = vunpack.c.l.b16 %v6789
      %v8822 = vunpack.c.l.b16 %v6790
      %v8823 = vunpack.c.l.b16 %v6791
      %v8824 = vunpack.c.l.b16 %v6792
      %v8825 = vunpack.c.l.b16 %v6793
      %v8826 = vunpack.c.l.b16 %v6794
      %v8827 = vunpack.c.l.b16 %v6795
      %v8828 = vunpack.c.l.b16 %v6796
      %v8829 = vunpack.c.l.b16 %v6797
      %v8830 = vunpack.c.l.b16 %v6798
      %v8831 = vunpack.c.l.b16 %v6799
      %v8832 = vunpack.c.l.b16 %v6800
      %v8833 = vunpack.c.l.b16 %v6801
      %v8834 = vunpack.c.l.b16 %v6802
      %v8835 = vunpack.c.l.b16 %v6803
      %v8836 = vunpack.c.l.b16 %v6804
      %v8837 = vunpack.c.l.b16 %v6805
      %v8838 = vunpack.c.l.b16 %v6806
      %v8839 = vunpack.c.l.b16 %v6807
      %v8840 = vunpack.c.l.b16 %v6808
      %v8841 = vunpack.c.l.b16 %v6809
      %v8842 = vunpack.c.l.b16 %v6810
      %v8843 = vunpack.c.l.b16 %v6811
      %v8844 = vunpack.c.l.b16 %v6812
      %v8845 = vunpack.c.l.b16 %v6813
      %v8846 = vunpack.c.l.b16 %v6814
      %v8847 = vunpack.c.l.b16 %v6815
      %v8848 = vunpack.c.l.b16 %v6816
      %v8849 = vunpack.c.l.b16 %v6817
      %v8850 = vunpack.c.l.b16 %v6818
      %v8851 = vunpack.c.l.b16 %v6819
      %v8852 = vunpack.c.l.b16 %v6820
      %v8853 = vunpack.c.l.b16 %v6821
      %v8854 = vunpack.c.l.b16 %v6822
      %v8855 = vunpack.c.l.b16 %v6823
      %v8856 = vunpack.c.l.b16 %v6824
      %v8857 = vunpack.c.l.b16 %v6825
      %v8858 = vunpack.c.l.b16 %v6826
      %v8859 = vunpack.c.l.b16 %v6827
      %v8860 = vunpack.c.l.b16 %v6828
      %v8861 = vunpack.c.l.b16 %v6829
      %v8862 = vunpack.c.l.b16 %v6830
      %v8863 = vunpack.c.l.b16 %v6831
      %v8864 = vunpack.c.l.b16 %v6832
      %v8865 = vunpack.c.l.b16 %v6833
      %v8866 = vunpack.c.l.b16 %v6834
      %v8867 = vunpack.c.l.b16 %v6835
      %v8868 = vunpack.c.l.b16 %v6836
      %v8869 = vunpack.c.l.b16 %v6837
      %v8870 = vunpack.c.l.b16 %v6838
      %v8871 = vunpack.c.l.b16 %v6839
      %v8872 = vunpack.c.l.b16 %v6840
      %v8873 = vunpack.c.l.b16 %v6841
      %v8874 = vunpack.c.l.b16 %v6842
      %v8875 = vunpack.c.l.b16 %v6843
      %v8876 = vunpack.c.l.b16 %v6844
      %v8877 = vunpack.c.l.b16 %v6845
      %v8878 = vunpack.c.l.b16 %v6846
      %v8879 = vunpack.c.l.b16 %v6847
      %v8880 = vunpack.c.l.b16 %v6848
      %v8881 = vunpack.c.l.b16 %v6849
      %v8882 = vunpack.c.l.b16 %v6850
      %v8883 = vunpack.c.l.b16 %v6851
      %v8884 = vpack.c.b16 %v8821, %v8820
      %v8885 = vpack.c.b16 %v8823, %v8822
      %v8886 = vpack.c.b16 %v8825, %v8824
      %v8887 = vpack.c.b16 %v8827, %v8826
      %v8888 = vpack.c.b16 %v8829, %v8828
      %v8889 = vpack.c.b16 %v8831, %v8830
      %v8890 = vpack.c.b16 %v8833, %v8832
      %v8891 = vpack.c.b16 %v8835, %v8834
      %v8892 = vpack.c.b16 %v8837, %v8836
      %v8893 = vpack.c.b16 %v8839, %v8838
      %v8894 = vpack.c.b16 %v8841, %v8840
      %v8895 = vpack.c.b16 %v8843, %v8842
      %v8896 = vpack.c.b16 %v8845, %v8844
      %v8897 = vpack.c.b16 %v8847, %v8846
      %v8898 = vpack.c.b16 %v8849, %v8848
      %v8899 = vpack.c.b16 %v8851, %v8850
      %v8900 = vpack.c.b16 %v8853, %v8852
      %v8901 = vpack.c.b16 %v8855, %v8854
      %v8902 = vpack.c.b16 %v8857, %v8856
      %v8903 = vpack.c.b16 %v8859, %v8858
      %v8904 = vpack.c.b16 %v8861, %v8860
      %v8905 = vpack.c.b16 %v8863, %v8862
      %v8906 = vpack.c.b16 %v8865, %v8864
      %v8907 = vpack.c.b16 %v8867, %v8866
      %v8908 = vpack.c.b16 %v8869, %v8868
      %v8909 = vpack.c.b16 %v8871, %v8870
      %v8910 = vpack.c.b16 %v8873, %v8872
      %v8911 = vpack.c.b16 %v8875, %v8874
      %v8912 = vpack.c.b16 %v8877, %v8876
      %v8913 = vpack.c.b16 %v8879, %v8878
      %v8914 = vpack.c.b16 %v8881, %v8880
      %v8915 = vpack.c.b16 %v8883, %v8882
      %8916 = vrot.lane.b32.xlu0 %v8884, 24
      %v8917 = vpop.permute.xlu0 %8916
      %8918 = vrot.lane.b32.xlu0 %v8885, 24
      %v8919 = vpop.permute.xlu0 %8918
      %8920 = vrot.lane.b32.xlu0 %v8886, 24
      %v8921 = vpop.permute.xlu0 %8920
      %8922 = vrot.lane.b32.xlu0 %v8887, 24
      %v8923 = vpop.permute.xlu0 %8922
      %8924 = vrot.lane.b32.xlu0 %v8888, 24
      %v8925 = vpop.permute.xlu0 %8924
      %8926 = vrot.lane.b32.xlu0 %v8889, 24
      %v8927 = vpop.permute.xlu0 %8926
      %8928 = vrot.lane.b32.xlu0 %v8890, 24
      %v8929 = vpop.permute.xlu0 %8928
      %8930 = vrot.lane.b32.xlu0 %v8891, 24
      %v8931 = vpop.permute.xlu0 %8930
      %8932 = vrot.lane.b32.xlu0 %v8892, 24
      %v8933 = vpop.permute.xlu0 %8932
      %8934 = vrot.lane.b32.xlu0 %v8893, 24
      %v8935 = vpop.permute.xlu0 %8934
      %8936 = vrot.lane.b32.xlu0 %v8894, 24
      %v8937 = vpop.permute.xlu0 %8936
      %8938 = vrot.lane.b32.xlu0 %v8895, 24
      %v8939 = vpop.permute.xlu0 %8938
      %8940 = vrot.lane.b32.xlu0 %v8896, 24
      %v8941 = vpop.permute.xlu0 %8940
      %8942 = vrot.lane.b32.xlu0 %v8897, 24
      %v8943 = vpop.permute.xlu0 %8942
      %8944 = vrot.lane.b32.xlu0 %v8898, 24
      %v8945 = vpop.permute.xlu0 %8944
      %8946 = vrot.lane.b32.xlu0 %v8899, 24
      %v8947 = vpop.permute.xlu0 %8946
      %8948 = vrot.lane.b32.xlu0 %v8900, 24
      %v8949 = vpop.permute.xlu0 %8948
      %8950 = vrot.lane.b32.xlu0 %v8901, 24
      %v8951 = vpop.permute.xlu0 %8950
      %8952 = vrot.lane.b32.xlu0 %v8902, 24
      %v8953 = vpop.permute.xlu0 %8952
      %8954 = vrot.lane.b32.xlu0 %v8903, 24
      %v8955 = vpop.permute.xlu0 %8954
      %8956 = vrot.lane.b32.xlu0 %v8904, 24
      %v8957 = vpop.permute.xlu0 %8956
      %8958 = vrot.lane.b32.xlu0 %v8905, 24
      %v8959 = vpop.permute.xlu0 %8958
      %8960 = vrot.lane.b32.xlu0 %v8906, 24
      %v8961 = vpop.permute.xlu0 %8960
      %8962 = vrot.lane.b32.xlu0 %v8907, 24
      %v8963 = vpop.permute.xlu0 %8962
      %8964 = vrot.lane.b32.xlu0 %v8908, 24
      %v8965 = vpop.permute.xlu0 %8964
      %8966 = vrot.lane.b32.xlu0 %v8909, 24
      %v8967 = vpop.permute.xlu0 %8966
      %8968 = vrot.lane.b32.xlu0 %v8910, 24
      %v8969 = vpop.permute.xlu0 %8968
      %8970 = vrot.lane.b32.xlu0 %v8911, 24
      %v8971 = vpop.permute.xlu0 %8970
      %8972 = vrot.lane.b32.xlu0 %v8912, 24
      %v8973 = vpop.permute.xlu0 %8972
      %8974 = vrot.lane.b32.xlu0 %v8913, 24
      %v8975 = vpop.permute.xlu0 %8974
      %8976 = vrot.lane.b32.xlu0 %v8914, 24
      %v8977 = vpop.permute.xlu0 %8976
      %8978 = vrot.lane.b32.xlu0 %v8915, 24
      %v8979 = vpop.permute.xlu0 %8978
      %v8980 = vunpack.c.l.b16 %v6881
      %v8981 = vunpack.c.l.b16 %v6891
      %v8982 = vunpack.c.l.b16 %v6901
      %v8983 = vunpack.c.l.b16 %v6911
      %v8984 = vunpack.c.l.b16 %v6925
      %v8985 = vunpack.c.l.b16 %v6935
      %v8986 = vunpack.c.l.b16 %v6945
      %v8987 = vunpack.c.l.b16 %v6955
      %v8988 = vunpack.c.l.b16 %v6969
      %v8989 = vunpack.c.l.b16 %v6979
      %v8990 = vunpack.c.l.b16 %v6989
      %v8991 = vunpack.c.l.b16 %v6999
      %v8992 = vunpack.c.l.b16 %v7013
      %v8993 = vunpack.c.l.b16 %v7023
      %v8994 = vunpack.c.l.b16 %v7033
      %v8995 = vunpack.c.l.b16 %v7043
      %v8996 = vunpack.c.l.b16 %v7057
      %v8997 = vunpack.c.l.b16 %v7067
      %v8998 = vunpack.c.l.b16 %v7077
      %v8999 = vunpack.c.l.b16 %v7087
      %v9000 = vunpack.c.l.b16 %v7101
      %v9001 = vunpack.c.l.b16 %v7111
      %v9002 = vunpack.c.l.b16 %v7121
      %v9003 = vunpack.c.l.b16 %v7131
      %v9004 = vunpack.c.l.b16 %v7145
      %v9005 = vunpack.c.l.b16 %v7155
      %v9006 = vunpack.c.l.b16 %v7165
      %v9007 = vunpack.c.l.b16 %v7175
      %v9008 = vunpack.c.l.b16 %v7189
      %v9009 = vunpack.c.l.b16 %v7199
      %v9010 = vunpack.c.l.b16 %v7209
      %v9011 = vunpack.c.l.b16 %v7219
      %v9012 = vunpack.c.l.b16 %v7233
      %v9013 = vunpack.c.l.b16 %v7243
      %v9014 = vunpack.c.l.b16 %v7253
      %v9015 = vunpack.c.l.b16 %v7263
      %v9016 = vunpack.c.l.b16 %v7277
      %v9017 = vunpack.c.l.b16 %v7287
      %v9018 = vunpack.c.l.b16 %v7297
      %v9019 = vunpack.c.l.b16 %v7307
      %v9020 = vunpack.c.l.b16 %v7321
      %v9021 = vunpack.c.l.b16 %v7331
      %v9022 = vunpack.c.l.b16 %v7341
      %v9023 = vunpack.c.l.b16 %v7351
      %v9024 = vunpack.c.l.b16 %v7365
      %v9025 = vunpack.c.l.b16 %v7375
      %v9026 = vunpack.c.l.b16 %v7385
      %v9027 = vunpack.c.l.b16 %v7395
      %v9028 = vunpack.c.l.b16 %v7409
      %v9029 = vunpack.c.l.b16 %v7419
      %v9030 = vunpack.c.l.b16 %v7429
      %v9031 = vunpack.c.l.b16 %v7439
      %v9032 = vunpack.c.l.b16 %v7453
      %v9033 = vunpack.c.l.b16 %v7463
      %v9034 = vunpack.c.l.b16 %v7473
      %v9035 = vunpack.c.l.b16 %v7483
      %v9036 = vunpack.c.l.b16 %v7497
      %v9037 = vunpack.c.l.b16 %v7507
      %v9038 = vunpack.c.l.b16 %v7517
      %v9039 = vunpack.c.l.b16 %v7527
      %v9040 = vunpack.c.l.b16 %v7541
      %v9041 = vunpack.c.l.b16 %v7551
      %v9042 = vunpack.c.l.b16 %v7561
      %v9043 = vunpack.c.l.b16 %v7571
      %v9044 = vpack.c.b16 %v8981, %v8980
      %v9045 = vpack.c.b16 %v8983, %v8982
      %v9046 = vpack.c.b16 %v8985, %v8984
      %v9047 = vpack.c.b16 %v8987, %v8986
      %v9048 = vpack.c.b16 %v8989, %v8988
      %v9049 = vpack.c.b16 %v8991, %v8990
      %v9050 = vpack.c.b16 %v8993, %v8992
      %v9051 = vpack.c.b16 %v8995, %v8994
      %v9052 = vpack.c.b16 %v8997, %v8996
      %v9053 = vpack.c.b16 %v8999, %v8998
      %v9054 = vpack.c.b16 %v9001, %v9000
      %v9055 = vpack.c.b16 %v9003, %v9002
      %v9056 = vpack.c.b16 %v9005, %v9004
      %v9057 = vpack.c.b16 %v9007, %v9006
      %v9058 = vpack.c.b16 %v9009, %v9008
      %v9059 = vpack.c.b16 %v9011, %v9010
      %v9060 = vpack.c.b16 %v9013, %v9012
      %v9061 = vpack.c.b16 %v9015, %v9014
      %v9062 = vpack.c.b16 %v9017, %v9016
      %v9063 = vpack.c.b16 %v9019, %v9018
      %v9064 = vpack.c.b16 %v9021, %v9020
      %v9065 = vpack.c.b16 %v9023, %v9022
      %v9066 = vpack.c.b16 %v9025, %v9024
      %v9067 = vpack.c.b16 %v9027, %v9026
      %v9068 = vpack.c.b16 %v9029, %v9028
      %v9069 = vpack.c.b16 %v9031, %v9030
      %v9070 = vpack.c.b16 %v9033, %v9032
      %v9071 = vpack.c.b16 %v9035, %v9034
      %v9072 = vpack.c.b16 %v9037, %v9036
      %v9073 = vpack.c.b16 %v9039, %v9038
      %v9074 = vpack.c.b16 %v9041, %v9040
      %v9075 = vpack.c.b16 %v9043, %v9042
      %9076 = vrot.lane.b32.xlu0 %v9044, 28
      %v9077 = vpop.permute.xlu0 %9076
      %9078 = vrot.lane.b32.xlu0 %v9045, 28
      %v9079 = vpop.permute.xlu0 %9078
      %9080 = vrot.lane.b32.xlu0 %v9046, 28
      %v9081 = vpop.permute.xlu0 %9080
      %9082 = vrot.lane.b32.xlu0 %v9047, 28
      %v9083 = vpop.permute.xlu0 %9082
      %9084 = vrot.lane.b32.xlu0 %v9048, 28
      %v9085 = vpop.permute.xlu0 %9084
      %9086 = vrot.lane.b32.xlu0 %v9049, 28
      %v9087 = vpop.permute.xlu0 %9086
      %9088 = vrot.lane.b32.xlu0 %v9050, 28
      %v9089 = vpop.permute.xlu0 %9088
      %9090 = vrot.lane.b32.xlu0 %v9051, 28
      %v9091 = vpop.permute.xlu0 %9090
      %9092 = vrot.lane.b32.xlu0 %v9052, 28
      %v9093 = vpop.permute.xlu0 %9092
      %9094 = vrot.lane.b32.xlu0 %v9053, 28
      %v9095 = vpop.permute.xlu0 %9094
      %9096 = vrot.lane.b32.xlu0 %v9054, 28
      %v9097 = vpop.permute.xlu0 %9096
      %9098 = vrot.lane.b32.xlu0 %v9055, 28
      %v9099 = vpop.permute.xlu0 %9098
      %9100 = vrot.lane.b32.xlu0 %v9056, 28
      %v9101 = vpop.permute.xlu0 %9100
      %9102 = vrot.lane.b32.xlu0 %v9057, 28
      %v9103 = vpop.permute.xlu0 %9102
      %9104 = vrot.lane.b32.xlu0 %v9058, 28
      %v9105 = vpop.permute.xlu0 %9104
      %9106 = vrot.lane.b32.xlu0 %v9059, 28
      %v9107 = vpop.permute.xlu0 %9106
      %9108 = vrot.lane.b32.xlu0 %v9060, 28
      %v9109 = vpop.permute.xlu0 %9108
      %9110 = vrot.lane.b32.xlu0 %v9061, 28
      %v9111 = vpop.permute.xlu0 %9110
      %9112 = vrot.lane.b32.xlu0 %v9062, 28
      %v9113 = vpop.permute.xlu0 %9112
      %9114 = vrot.lane.b32.xlu0 %v9063, 28
      %v9115 = vpop.permute.xlu0 %9114
      %9116 = vrot.lane.b32.xlu0 %v9064, 28
      %v9117 = vpop.permute.xlu0 %9116
      %9118 = vrot.lane.b32.xlu0 %v9065, 28
      %v9119 = vpop.permute.xlu0 %9118
      %9120 = vrot.lane.b32.xlu0 %v9066, 28
      %v9121 = vpop.permute.xlu0 %9120
      %9122 = vrot.lane.b32.xlu0 %v9067, 28
      %v9123 = vpop.permute.xlu0 %9122
      %9124 = vrot.lane.b32.xlu0 %v9068, 28
      %v9125 = vpop.permute.xlu0 %9124
      %9126 = vrot.lane.b32.xlu0 %v9069, 28
      %v9127 = vpop.permute.xlu0 %9126
      %9128 = vrot.lane.b32.xlu0 %v9070, 28
      %v9129 = vpop.permute.xlu0 %9128
      %9130 = vrot.lane.b32.xlu0 %v9071, 28
      %v9131 = vpop.permute.xlu0 %9130
      %9132 = vrot.lane.b32.xlu0 %v9072, 28
      %v9133 = vpop.permute.xlu0 %9132
      %9134 = vrot.lane.b32.xlu0 %v9073, 28
      %v9135 = vpop.permute.xlu0 %9134
      %9136 = vrot.lane.b32.xlu0 %v9074, 28
      %v9137 = vpop.permute.xlu0 %9136
      %9138 = vrot.lane.b32.xlu0 %v9075, 28
      %v9139 = vpop.permute.xlu0 %9138
      %v9140 = vunpack.c.l.b16 %v7671
      %v9141 = vunpack.c.l.b16 %v7674
      %v9142 = vunpack.c.l.b16 %v7677
      %v9143 = vunpack.c.l.b16 %v7680
      %v9144 = vunpack.c.l.b16 %v7684
      %v9145 = vunpack.c.l.b16 %v7687
      %v9146 = vunpack.c.l.b16 %v7690
      %v9147 = vunpack.c.l.b16 %v7693
      %v9148 = vunpack.c.l.b16 %v7697
      %v9149 = vunpack.c.l.b16 %v7700
      %v9150 = vunpack.c.l.b16 %v7703
      %v9151 = vunpack.c.l.b16 %v7706
      %v9152 = vunpack.c.l.b16 %v7710
      %v9153 = vunpack.c.l.b16 %v7713
      %v9154 = vunpack.c.l.b16 %v7716
      %v9155 = vunpack.c.l.b16 %v7719
      %v9156 = vunpack.c.l.b16 %v7723
      %v9157 = vunpack.c.l.b16 %v7726
      %v9158 = vunpack.c.l.b16 %v7729
      %v9159 = vunpack.c.l.b16 %v7732
      %v9160 = vunpack.c.l.b16 %v7736
      %v9161 = vunpack.c.l.b16 %v7739
      %v9162 = vunpack.c.l.b16 %v7742
      %v9163 = vunpack.c.l.b16 %v7745
      %v9164 = vunpack.c.l.b16 %v7749
      %v9165 = vunpack.c.l.b16 %v7752
      %v9166 = vunpack.c.l.b16 %v7755
      %v9167 = vunpack.c.l.b16 %v7758
      %v9168 = vunpack.c.l.b16 %v7762
      %v9169 = vunpack.c.l.b16 %v7765
      %v9170 = vunpack.c.l.b16 %v7768
      %v9171 = vunpack.c.l.b16 %v7771
      %v9172 = vunpack.c.l.b16 %v7775
      %v9173 = vunpack.c.l.b16 %v7778
      %v9174 = vunpack.c.l.b16 %v7781
      %v9175 = vunpack.c.l.b16 %v7784
      %v9176 = vunpack.c.l.b16 %v7788
      %v9177 = vunpack.c.l.b16 %v7791
      %v9178 = vunpack.c.l.b16 %v7794
      %v9179 = vunpack.c.l.b16 %v7797
      %v9180 = vunpack.c.l.b16 %v7801
      %v9181 = vunpack.c.l.b16 %v7804
      %v9182 = vunpack.c.l.b16 %v7807
      %v9183 = vunpack.c.l.b16 %v7810
      %v9184 = vunpack.c.l.b16 %v7814
      %v9185 = vunpack.c.l.b16 %v7817
      %v9186 = vunpack.c.l.b16 %v7820
      %v9187 = vunpack.c.l.b16 %v7823
      %v9188 = vunpack.c.l.b16 %v7827
      %v9189 = vunpack.c.l.b16 %v7830
      %v9190 = vunpack.c.l.b16 %v7833
      %v9191 = vunpack.c.l.b16 %v7836
      %v9192 = vunpack.c.l.b16 %v7840
      %v9193 = vunpack.c.l.b16 %v7843
      %v9194 = vunpack.c.l.b16 %v7846
      %v9195 = vunpack.c.l.b16 %v7849
      %v9196 = vunpack.c.l.b16 %v7853
      %v9197 = vunpack.c.l.b16 %v7856
      %v9198 = vunpack.c.l.b16 %v7859
      %v9199 = vunpack.c.l.b16 %v7862
      %v9200 = vunpack.c.l.b16 %v7866
      %v9201 = vunpack.c.l.b16 %v7869
      %v9202 = vunpack.c.l.b16 %v7872
      %v9203 = vunpack.c.l.b16 %v7875
      %v9204 = vpack.c.b16 %v9141, %v9140
      %v9205 = vpack.c.b16 %v9143, %v9142
      %v9206 = vpack.c.b16 %v9145, %v9144
      %v9207 = vpack.c.b16 %v9147, %v9146
      %v9208 = vpack.c.b16 %v9149, %v9148
      %v9209 = vpack.c.b16 %v9151, %v9150
      %v9210 = vpack.c.b16 %v9153, %v9152
      %v9211 = vpack.c.b16 %v9155, %v9154
      %v9212 = vpack.c.b16 %v9157, %v9156
      %v9213 = vpack.c.b16 %v9159, %v9158
      %v9214 = vpack.c.b16 %v9161, %v9160
      %v9215 = vpack.c.b16 %v9163, %v9162
      %v9216 = vpack.c.b16 %v9165, %v9164
      %v9217 = vpack.c.b16 %v9167, %v9166
      %v9218 = vpack.c.b16 %v9169, %v9168
      %v9219 = vpack.c.b16 %v9171, %v9170
      %v9220 = vpack.c.b16 %v9173, %v9172
      %v9221 = vpack.c.b16 %v9175, %v9174
      %v9222 = vpack.c.b16 %v9177, %v9176
      %v9223 = vpack.c.b16 %v9179, %v9178
      %v9224 = vpack.c.b16 %v9181, %v9180
      %v9225 = vpack.c.b16 %v9183, %v9182
      %v9226 = vpack.c.b16 %v9185, %v9184
      %v9227 = vpack.c.b16 %v9187, %v9186
      %v9228 = vpack.c.b16 %v9189, %v9188
      %v9229 = vpack.c.b16 %v9191, %v9190
      %v9230 = vpack.c.b16 %v9193, %v9192
      %v9231 = vpack.c.b16 %v9195, %v9194
      %v9232 = vpack.c.b16 %v9197, %v9196
      %v9233 = vpack.c.b16 %v9199, %v9198
      %v9234 = vpack.c.b16 %v9201, %v9200
      %v9235 = vpack.c.b16 %v9203, %v9202
      %9236 = vrot.lane.b32.xlu0 %v9204, 32
      %v9237 = vpop.permute.xlu0 %9236
      %9238 = vrot.lane.b32.xlu0 %v9205, 32
      %v9239 = vpop.permute.xlu0 %9238
      %9240 = vrot.lane.b32.xlu0 %v9206, 32
      %v9241 = vpop.permute.xlu0 %9240
      %9242 = vrot.lane.b32.xlu0 %v9207, 32
      %v9243 = vpop.permute.xlu0 %9242
      %9244 = vrot.lane.b32.xlu0 %v9208, 32
      %v9245 = vpop.permute.xlu0 %9244
      %9246 = vrot.lane.b32.xlu0 %v9209, 32
      %v9247 = vpop.permute.xlu0 %9246
      %9248 = vrot.lane.b32.xlu0 %v9210, 32
      %v9249 = vpop.permute.xlu0 %9248
      %9250 = vrot.lane.b32.xlu0 %v9211, 32
      %v9251 = vpop.permute.xlu0 %9250
      %9252 = vrot.lane.b32.xlu0 %v9212, 32
      %v9253 = vpop.permute.xlu0 %9252
      %9254 = vrot.lane.b32.xlu0 %v9213, 32
      %v9255 = vpop.permute.xlu0 %9254
      %9256 = vrot.lane.b32.xlu0 %v9214, 32
      %v9257 = vpop.permute.xlu0 %9256
      %9258 = vrot.lane.b32.xlu0 %v9215, 32
      %v9259 = vpop.permute.xlu0 %9258
      %9260 = vrot.lane.b32.xlu0 %v9216, 32
      %v9261 = vpop.permute.xlu0 %9260
      %9262 = vrot.lane.b32.xlu0 %v9217, 32
      %v9263 = vpop.permute.xlu0 %9262
      %9264 = vrot.lane.b32.xlu0 %v9218, 32
      %v9265 = vpop.permute.xlu0 %9264
      %9266 = vrot.lane.b32.xlu0 %v9219, 32
      %v9267 = vpop.permute.xlu0 %9266
      %9268 = vrot.lane.b32.xlu0 %v9220, 32
      %v9269 = vpop.permute.xlu0 %9268
      %9270 = vrot.lane.b32.xlu0 %v9221, 32
      %v9271 = vpop.permute.xlu0 %9270
      %9272 = vrot.lane.b32.xlu0 %v9222, 32
      %v9273 = vpop.permute.xlu0 %9272
      %9274 = vrot.lane.b32.xlu0 %v9223, 32
      %v9275 = vpop.permute.xlu0 %9274
      %9276 = vrot.lane.b32.xlu0 %v9224, 32
      %v9277 = vpop.permute.xlu0 %9276
      %9278 = vrot.lane.b32.xlu0 %v9225, 32
      %v9279 = vpop.permute.xlu0 %9278
      %9280 = vrot.lane.b32.xlu0 %v9226, 32
      %v9281 = vpop.permute.xlu0 %9280
      %9282 = vrot.lane.b32.xlu0 %v9227, 32
      %v9283 = vpop.permute.xlu0 %9282
      %9284 = vrot.lane.b32.xlu0 %v9228, 32
      %v9285 = vpop.permute.xlu0 %9284
      %9286 = vrot.lane.b32.xlu0 %v9229, 32
      %v9287 = vpop.permute.xlu0 %9286
      %9288 = vrot.lane.b32.xlu0 %v9230, 32
      %v9289 = vpop.permute.xlu0 %9288
      %9290 = vrot.lane.b32.xlu0 %v9231, 32
      %v9291 = vpop.permute.xlu0 %9290
      %9292 = vrot.lane.b32.xlu0 %v9232, 32
      %v9293 = vpop.permute.xlu0 %9292
      %9294 = vrot.lane.b32.xlu0 %v9233, 32
      %v9295 = vpop.permute.xlu0 %9294
      %9296 = vrot.lane.b32.xlu0 %v9234, 32
      %v9297 = vpop.permute.xlu0 %9296
      %9298 = vrot.lane.b32.xlu0 %v9235, 32
      %v9299 = vpop.permute.xlu0 %9298
      %vm9300 = vcmask 31744
      %v9303 = vsel %vm9300, %v7956, %v8085
      %v9306 = vsel %vm9300, %v7957, %v8087
      %v9309 = vsel %vm9300, %v7958, %v8089
      %v9312 = vsel %vm9300, %v7959, %v8091
      %v9315 = vsel %vm9300, %v7960, %v8093
      %v9318 = vsel %vm9300, %v7961, %v8095
      %v9321 = vsel %vm9300, %v7962, %v8097
      %v9324 = vsel %vm9300, %v7963, %v8099
      %v9327 = vsel %vm9300, %v7964, %v8101
      %v9330 = vsel %vm9300, %v7965, %v8103
      %v9333 = vsel %vm9300, %v7966, %v8105
      %v9336 = vsel %vm9300, %v7967, %v8107
      %v9339 = vsel %vm9300, %v7968, %v8109
      %v9342 = vsel %vm9300, %v7969, %v8111
      %v9345 = vsel %vm9300, %v7970, %v8113
      %v9348 = vsel %vm9300, %v7971, %v8115
      %v9351 = vsel %vm9300, %v7972, %v8117
      %v9354 = vsel %vm9300, %v7973, %v8119
      %v9357 = vsel %vm9300, %v7974, %v8121
      %v9360 = vsel %vm9300, %v7975, %v8123
      %v9363 = vsel %vm9300, %v7976, %v8125
      %v9366 = vsel %vm9300, %v7977, %v8127
      %v9369 = vsel %vm9300, %v7978, %v8129
      %v9372 = vsel %vm9300, %v7979, %v8131
      %v9375 = vsel %vm9300, %v7980, %v8133
      %v9378 = vsel %vm9300, %v7981, %v8135
      %v9381 = vsel %vm9300, %v7982, %v8137
      %v9384 = vsel %vm9300, %v7983, %v8139
      %v9387 = vsel %vm9300, %v7984, %v8141
      %v9390 = vsel %vm9300, %v7985, %v8143
      %v9393 = vsel %vm9300, %v7986, %v8145
      %v9396 = vsel %vm9300, %v7987, %v8147
      %vm9397 = vcmask 64512
      %v9399 = vsel %vm9397, %v9303, %v8245
      %v9401 = vsel %vm9397, %v9306, %v8247
      %v9403 = vsel %vm9397, %v9309, %v8249
      %v9405 = vsel %vm9397, %v9312, %v8251
      %v9407 = vsel %vm9397, %v9315, %v8253
      %v9409 = vsel %vm9397, %v9318, %v8255
      %v9411 = vsel %vm9397, %v9321, %v8257
      %v9413 = vsel %vm9397, %v9324, %v8259
      %v9415 = vsel %vm9397, %v9327, %v8261
      %v9417 = vsel %vm9397, %v9330, %v8263
      %v9419 = vsel %vm9397, %v9333, %v8265
      %v9421 = vsel %vm9397, %v9336, %v8267
      %v9423 = vsel %vm9397, %v9339, %v8269
      %v9425 = vsel %vm9397, %v9342, %v8271
      %v9427 = vsel %vm9397, %v9345, %v8273
      %v9429 = vsel %vm9397, %v9348, %v8275
      %v9431 = vsel %vm9397, %v9351, %v8277
      %v9433 = vsel %vm9397, %v9354, %v8279
      %v9435 = vsel %vm9397, %v9357, %v8281
      %v9437 = vsel %vm9397, %v9360, %v8283
      %v9439 = vsel %vm9397, %v9363, %v8285
      %v9441 = vsel %vm9397, %v9366, %v8287
      %v9443 = vsel %vm9397, %v9369, %v8289
      %v9445 = vsel %vm9397, %v9372, %v8291
      %v9447 = vsel %vm9397, %v9375, %v8293
      %v9449 = vsel %vm9397, %v9378, %v8295
      %v9451 = vsel %vm9397, %v9381, %v8297
      %v9453 = vsel %vm9397, %v9384, %v8299
      %v9455 = vsel %vm9397, %v9387, %v8301
      %v9457 = vsel %vm9397, %v9390, %v8303
      %v9459 = vsel %vm9397, %v9393, %v8305
      %v9461 = vsel %vm9397, %v9396, %v8307
      %vm9462 = vcmask 97280
      %v9464 = vsel %vm9462, %v9399, %v8421
      %v9466 = vsel %vm9462, %v9401, %v8423
      %v9468 = vsel %vm9462, %v9403, %v8425
      %v9470 = vsel %vm9462, %v9405, %v8427
      %v9472 = vsel %vm9462, %v9407, %v8429
      %v9474 = vsel %vm9462, %v9409, %v8431
      %v9476 = vsel %vm9462, %v9411, %v8433
      %v9478 = vsel %vm9462, %v9413, %v8435
      %v9480 = vsel %vm9462, %v9415, %v8437
      %v9482 = vsel %vm9462, %v9417, %v8439
      %v9484 = vsel %vm9462, %v9419, %v8441
      %v9486 = vsel %vm9462, %v9421, %v8443
      %v9488 = vsel %vm9462, %v9423, %v8445
      %v9490 = vsel %vm9462, %v9425, %v8447
      %v9492 = vsel %vm9462, %v9427, %v8449
      %v9494 = vsel %vm9462, %v9429, %v8451
      %v9496 = vsel %vm9462, %v9431, %v8453
      %v9498 = vsel %vm9462, %v9433, %v8455
      %v9500 = vsel %vm9462, %v9435, %v8457
      %v9502 = vsel %vm9462, %v9437, %v8459
      %v9504 = vsel %vm9462, %v9439, %v8461
      %v9506 = vsel %vm9462, %v9441, %v8463
      %v9508 = vsel %vm9462, %v9443, %v8465
      %v9510 = vsel %vm9462, %v9445, %v8467
      %v9512 = vsel %vm9462, %v9447, %v8469
      %v9514 = vsel %vm9462, %v9449, %v8471
      %v9516 = vsel %vm9462, %v9451, %v8473
      %v9518 = vsel %vm9462, %v9453, %v8475
      %v9520 = vsel %vm9462, %v9455, %v8477
      %v9522 = vsel %vm9462, %v9457, %v8479
      %v9524 = vsel %vm9462, %v9459, %v8481
      %v9526 = vsel %vm9462, %v9461, %v8483
      %vm9527 = vcmask 130048
      %v9529 = vsel %vm9527, %v9464, %v8581
      %v9531 = vsel %vm9527, %v9466, %v8583
      %v9533 = vsel %vm9527, %v9468, %v8585
      %v9535 = vsel %vm9527, %v9470, %v8587
      %v9537 = vsel %vm9527, %v9472, %v8589
      %v9539 = vsel %vm9527, %v9474, %v8591
      %v9541 = vsel %vm9527, %v9476, %v8593
      %v9543 = vsel %vm9527, %v9478, %v8595
      %v9545 = vsel %vm9527, %v9480, %v8597
      %v9547 = vsel %vm9527, %v9482, %v8599
      %v9549 = vsel %vm9527, %v9484, %v8601
      %v9551 = vsel %vm9527, %v9486, %v8603
      %v9553 = vsel %vm9527, %v9488, %v8605
      %v9555 = vsel %vm9527, %v9490, %v8607
      %v9557 = vsel %vm9527, %v9492, %v8609
      %v9559 = vsel %vm9527, %v9494, %v8611
      %v9561 = vsel %vm9527, %v9496, %v8613
      %v9563 = vsel %vm9527, %v9498, %v8615
      %v9565 = vsel %vm9527, %v9500, %v8617
      %v9567 = vsel %vm9527, %v9502, %v8619
      %v9569 = vsel %vm9527, %v9504, %v8621
      %v9571 = vsel %vm9527, %v9506, %v8623
      %v9573 = vsel %vm9527, %v9508, %v8625
      %v9575 = vsel %vm9527, %v9510, %v8627
      %v9577 = vsel %vm9527, %v9512, %v8629
      %v9579 = vsel %vm9527, %v9514, %v8631
      %v9581 = vsel %vm9527, %v9516, %v8633
      %v9583 = vsel %vm9527, %v9518, %v8635
      %v9585 = vsel %vm9527, %v9520, %v8637
      %v9587 = vsel %vm9527, %v9522, %v8639
      %v9589 = vsel %vm9527, %v9524, %v8641
      %v9591 = vsel %vm9527, %v9526, %v8643
      %vm9592 = vcmask 162816
      %v9594 = vsel %vm9592, %v9529, %v8741
      %v9596 = vsel %vm9592, %v9531, %v8743
      %v9598 = vsel %vm9592, %v9533, %v8745
      %v9600 = vsel %vm9592, %v9535, %v8747
      %v9602 = vsel %vm9592, %v9537, %v8749
      %v9604 = vsel %vm9592, %v9539, %v8751
      %v9606 = vsel %vm9592, %v9541, %v8753
      %v9608 = vsel %vm9592, %v9543, %v8755
      %v9610 = vsel %vm9592, %v9545, %v8757
      %v9612 = vsel %vm9592, %v9547, %v8759
      %v9614 = vsel %vm9592, %v9549, %v8761
      %v9616 = vsel %vm9592, %v9551, %v8763
      %v9618 = vsel %vm9592, %v9553, %v8765
      %v9620 = vsel %vm9592, %v9555, %v8767
      %v9622 = vsel %vm9592, %v9557, %v8769
      %v9624 = vsel %vm9592, %v9559, %v8771
      %v9626 = vsel %vm9592, %v9561, %v8773
      %v9628 = vsel %vm9592, %v9563, %v8775
      %v9630 = vsel %vm9592, %v9565, %v8777
      %v9632 = vsel %vm9592, %v9567, %v8779
      %v9634 = vsel %vm9592, %v9569, %v8781
      %v9636 = vsel %vm9592, %v9571, %v8783
      %v9638 = vsel %vm9592, %v9573, %v8785
      %v9640 = vsel %vm9592, %v9575, %v8787
      %v9642 = vsel %vm9592, %v9577, %v8789
      %v9644 = vsel %vm9592, %v9579, %v8791
      %v9646 = vsel %vm9592, %v9581, %v8793
      %v9648 = vsel %vm9592, %v9583, %v8795
      %v9650 = vsel %vm9592, %v9585, %v8797
      %v9652 = vsel %vm9592, %v9587, %v8799
      %v9654 = vsel %vm9592, %v9589, %v8801
      %v9656 = vsel %vm9592, %v9591, %v8803
      %vm9657 = vcmask 195584
      %v9659 = vsel %vm9657, %v9594, %v8917
      %v9661 = vsel %vm9657, %v9596, %v8919
      %v9663 = vsel %vm9657, %v9598, %v8921
      %v9665 = vsel %vm9657, %v9600, %v8923
      %v9667 = vsel %vm9657, %v9602, %v8925
      %v9669 = vsel %vm9657, %v9604, %v8927
      %v9671 = vsel %vm9657, %v9606, %v8929
      %v9673 = vsel %vm9657, %v9608, %v8931
      %v9675 = vsel %vm9657, %v9610, %v8933
      %v9677 = vsel %vm9657, %v9612, %v8935
      %v9679 = vsel %vm9657, %v9614, %v8937
      %v9681 = vsel %vm9657, %v9616, %v8939
      %v9683 = vsel %vm9657, %v9618, %v8941
      %v9685 = vsel %vm9657, %v9620, %v8943
      %v9687 = vsel %vm9657, %v9622, %v8945
      %v9689 = vsel %vm9657, %v9624, %v8947
      %v9691 = vsel %vm9657, %v9626, %v8949
      %v9693 = vsel %vm9657, %v9628, %v8951
      %v9695 = vsel %vm9657, %v9630, %v8953
      %v9697 = vsel %vm9657, %v9632, %v8955
      %v9699 = vsel %vm9657, %v9634, %v8957
      %v9701 = vsel %vm9657, %v9636, %v8959
      %v9703 = vsel %vm9657, %v9638, %v8961
      %v9705 = vsel %vm9657, %v9640, %v8963
      %v9707 = vsel %vm9657, %v9642, %v8965
      %v9709 = vsel %vm9657, %v9644, %v8967
      %v9711 = vsel %vm9657, %v9646, %v8969
      %v9713 = vsel %vm9657, %v9648, %v8971
      %v9715 = vsel %vm9657, %v9650, %v8973
      %v9717 = vsel %vm9657, %v9652, %v8975
      %v9719 = vsel %vm9657, %v9654, %v8977
      %v9721 = vsel %vm9657, %v9656, %v8979
      %vm9722 = vcmask 228352
      %v9724 = vsel %vm9722, %v9659, %v9077
      %v9726 = vsel %vm9722, %v9661, %v9079
      %v9728 = vsel %vm9722, %v9663, %v9081
      %v9730 = vsel %vm9722, %v9665, %v9083
      %v9732 = vsel %vm9722, %v9667, %v9085
      %v9734 = vsel %vm9722, %v9669, %v9087
      %v9736 = vsel %vm9722, %v9671, %v9089
      %v9738 = vsel %vm9722, %v9673, %v9091
      %v9740 = vsel %vm9722, %v9675, %v9093
      %v9742 = vsel %vm9722, %v9677, %v9095
      %v9744 = vsel %vm9722, %v9679, %v9097
      %v9746 = vsel %vm9722, %v9681, %v9099
      %v9748 = vsel %vm9722, %v9683, %v9101
      %v9750 = vsel %vm9722, %v9685, %v9103
      %v9752 = vsel %vm9722, %v9687, %v9105
      %v9754 = vsel %vm9722, %v9689, %v9107
      %v9756 = vsel %vm9722, %v9691, %v9109
      %v9758 = vsel %vm9722, %v9693, %v9111
      %v9760 = vsel %vm9722, %v9695, %v9113
      %v9762 = vsel %vm9722, %v9697, %v9115
      %v9764 = vsel %vm9722, %v9699, %v9117
      %v9766 = vsel %vm9722, %v9701, %v9119
      %v9768 = vsel %vm9722, %v9703, %v9121
      %v9770 = vsel %vm9722, %v9705, %v9123
      %v9772 = vsel %vm9722, %v9707, %v9125
      %v9774 = vsel %vm9722, %v9709, %v9127
      %v9776 = vsel %vm9722, %v9711, %v9129
      %v9778 = vsel %vm9722, %v9713, %v9131
      %v9780 = vsel %vm9722, %v9715, %v9133
      %v9782 = vsel %vm9722, %v9717, %v9135
      %v9784 = vsel %vm9722, %v9719, %v9137
      %v9786 = vsel %vm9722, %v9721, %v9139
      %vm9787 = vcmask 261120
      %v9789 = vsel %vm9787, %v9724, %v9237
      %v9791 = vsel %vm9787, %v9726, %v9239
      %v9793 = vsel %vm9787, %v9728, %v9241
      %v9795 = vsel %vm9787, %v9730, %v9243
      %v9797 = vsel %vm9787, %v9732, %v9245
      %v9799 = vsel %vm9787, %v9734, %v9247
      %v9801 = vsel %vm9787, %v9736, %v9249
      %v9803 = vsel %vm9787, %v9738, %v9251
      %v9805 = vsel %vm9787, %v9740, %v9253
      %v9807 = vsel %vm9787, %v9742, %v9255
      %v9809 = vsel %vm9787, %v9744, %v9257
      %v9811 = vsel %vm9787, %v9746, %v9259
      %v9813 = vsel %vm9787, %v9748, %v9261
      %v9815 = vsel %vm9787, %v9750, %v9263
      %v9817 = vsel %vm9787, %v9752, %v9265
      %v9819 = vsel %vm9787, %v9754, %v9267
      %v9821 = vsel %vm9787, %v9756, %v9269
      %v9823 = vsel %vm9787, %v9758, %v9271
      %v9825 = vsel %vm9787, %v9760, %v9273
      %v9827 = vsel %vm9787, %v9762, %v9275
      %v9829 = vsel %vm9787, %v9764, %v9277
      %v9831 = vsel %vm9787, %v9766, %v9279
      %v9833 = vsel %vm9787, %v9768, %v9281
      %v9835 = vsel %vm9787, %v9770, %v9283
      %v9837 = vsel %vm9787, %v9772, %v9285
      %v9839 = vsel %vm9787, %v9774, %v9287
      %v9841 = vsel %vm9787, %v9776, %v9289
      %v9843 = vsel %vm9787, %v9778, %v9291
      %v9845 = vsel %vm9787, %v9780, %v9293
      %v9847 = vsel %vm9787, %v9782, %v9295
      %v9849 = vsel %vm9787, %v9784, %v9297
      %v9851 = vsel %vm9787, %v9786, %v9299
      %v9852 = vld [vmem:[%s1] sm:$0xf]
      %v9853 = vld [vmem:[%s1 + $0x4] sm:$0xf]
      %v9854 = vld [vmem:[%s1 + $0x8] sm:$0xf]
      %v9855 = vld [vmem:[%s1 + $0xc] sm:$0xf]
      %v9856 = vld [vmem:[%s1 + $0x10] sm:$0x3]
      %v9857 = vld [vmem:[%s2] sm:$0x1]
      %v9859 = vlaneseq
      %v9860 = vshrl.u32 %v9859, 7
      %v9861 = vsub.s32 0, %v9860
      %v9862 = vrot.slane %v9857, %v9861
      %v9869 = vunpack.c.l.b16 %v9852
      %v9870 = vunpack.c.l.b16 %v9853
      %v9871 = vunpack.c.l.b16 %v9854
      %v9872 = vunpack.c.l.b16 %v9855
      %v9873 = vunpack.c.l.b16 %v9856
      %v9874 = vpack.c.b16 %v9870, %v9869
      %v9875 = vpack.c.b16 %v9872, %v9871
      %v9876 = vpack.c.b16 %v9873, %v9873
      %vm9879 = vcmask 293888
      %v9880 = vsel %vm9879, %v9789, 0
      %v9882 = vsel %vm9879, %v9791, 0
      %v9884 = vsel %vm9879, %v9793, 0
      %v9886 = vsel %vm9879, %v9795, 0
      %v9888 = vsel %vm9879, %v9797, 0
      %v9890 = vsel %vm9879, %v9799, 0
      %v9892 = vsel %vm9879, %v9801, 0
      %v9894 = vsel %vm9879, %v9803, 0
      %v9896 = vsel %vm9879, %v9805, 0
      %v9898 = vsel %vm9879, %v9807, 0
      %v9900 = vsel %vm9879, %v9809, 0
      %v9902 = vsel %vm9879, %v9811, 0
      %v9904 = vsel %vm9879, %v9813, 0
      %v9906 = vsel %vm9879, %v9815, 0
      %v9908 = vsel %vm9879, %v9817, 0
      %v9910 = vsel %vm9879, %v9819, 0
      %v9912 = vsel %vm9879, %v9821, 0
      %v9914 = vsel %vm9879, %v9823, 0
      %v9916 = vsel %vm9879, %v9825, 0
      %v9918 = vsel %vm9879, %v9827, 0
      %v9920 = vsel %vm9879, %v9829, 0
      %v9922 = vsel %vm9879, %v9831, 0
      %v9924 = vsel %vm9879, %v9833, 0
      %v9926 = vsel %vm9879, %v9835, 0
      %v9928 = vsel %vm9879, %v9837, 0
      %v9930 = vsel %vm9879, %v9839, 0
      %v9932 = vsel %vm9879, %v9841, 0
      %v9934 = vsel %vm9879, %v9843, 0
      %v9936 = vsel %vm9879, %v9845, 0
      %v9938 = vsel %vm9879, %v9847, 0
      %v9940 = vsel %vm9879, %v9849, 0
      %v9942 = vsel %vm9879, %v9851, 0
      %vm9944 = vcmask 1041408
      %v9946 = vsel %vm9944, %v9876, 0
      %9948 = vmatprep.subr.bf16.mxu0 0
      %9949 = vmatpush1.bf16.msra.mxu0 0
      %9950 = vmatprep.subr.bf16.mxu0 0
      %9951 = vmatpush1.bf16.msra.mxu0 0
      %9952 = vmatprep.subr.bf16.mxu0 0
      %9953 = vmatpush1.bf16.msra.mxu0 0
      %9954 = vmatprep.subr.bf16.mxu0 0
      %9955 = vmatpush1.bf16.msra.mxu0 0
      %9956 = vmatprep.subr.bf16.mxu0 0
      %9957 = vmatpush1.bf16.msra.mxu0 0
      %9958 = vmatprep.subr.bf16.mxu0 0
      %9959 = vmatpush1.bf16.msra.mxu0 %v9946
      %9960 = vmatprep.subr.bf16.mxu0 0
      %9961 = vmatpush1.bf16.msra.mxu0 %v9875
      %9962 = vmatprep.subr.bf16.mxu0 0
      %9963 = vmatpush1.bf16.msra.mxu0 %v9874
      %9964 = vmatprep.subr.bf16.mxu0 0
      %9965 = vmatpush2.bf16.msra.mxu0 0
      %9966 = vmatprep.subr.bf16.mxu0 0
      %9967 = vmatpush2.bf16.msra.mxu0 0
      %9968 = vmatprep.subr.bf16.mxu0 0
      %9969 = vmatpush2.bf16.msra.mxu0 0
      %9970 = vmatprep.subr.bf16.mxu0 0
      %9971 = vmatpush2.bf16.msra.mxu0 0
      %9972 = vmatprep.subr.bf16.mxu0 0
      %9973 = vmatpush2.bf16.msra.mxu0 0
      %9974 = vmatprep.subr.bf16.mxu0 0
      %9975 = vmatpush2.bf16.msra.mxu0 0
      %9976 = vmatprep.subr.bf16.mxu0 0
      %9977 = vmatpush2.bf16.msra.mxu0 0
      %9978 = vmatprep.subr.bf16.mxu0 0
      %9979 = vmatpush2.bf16.msra.mxu0 0
      %9980 = vmatprep.mubr.bf16.mxu0 0
      %9981 = vmatmul.mubr.bf16.gmra.mxu0 %v9880
      %v9982 = vpop.f32.mrf.mxu0
      %v9983 = vadd.f32 %v9862, %v9982
      %v9984 = vpop.f32.mrf.mxu0
      %v9985 = vpop.f32.mrf.mxu0
      %v9986 = vadd.f32 %v9862, %v9985
      %v9987 = vpop.f32.mrf.mxu0
      %9988 = vmatprep.mubr.bf16.mxu0 0
      %9989 = vmatmul.mubr.bf16.gmra.mxu0 %v9882
      %v9990 = vpop.f32.mrf.mxu0
      %v9991 = vadd.f32 %v9862, %v9990
      %v9992 = vpop.f32.mrf.mxu0
      %v9993 = vpop.f32.mrf.mxu0
      %v9994 = vadd.f32 %v9862, %v9993
      %v9995 = vpop.f32.mrf.mxu0
      %9996 = vmatprep.mubr.bf16.mxu0 0
      %9997 = vmatmul.mubr.bf16.gmra.mxu0 %v9884
      %v9998 = vpop.f32.mrf.mxu0
      %v9999 = vadd.f32 %v9862, %v9998
      %v10000 = vpop.f32.mrf.mxu0
      %v10001 = vpop.f32.mrf.mxu0
      %v10002 = vadd.f32 %v9862, %v10001
      %v10003 = vpop.f32.mrf.mxu0
      %10004 = vmatprep.mubr.bf16.mxu0 0
      %10005 = vmatmul.mubr.bf16.gmra.mxu0 %v9886
      %v10006 = vpop.f32.mrf.mxu0
      %v10007 = vadd.f32 %v9862, %v10006
      %v10008 = vpop.f32.mrf.mxu0
      %v10009 = vpop.f32.mrf.mxu0
      %v10010 = vadd.f32 %v9862, %v10009
      %v10011 = vpop.f32.mrf.mxu0
      %10012 = vmatprep.mubr.bf16.mxu0 0
      %10013 = vmatmul.mubr.bf16.gmra.mxu0 %v9888
      %v10014 = vpop.f32.mrf.mxu0
      %v10015 = vadd.f32 %v9862, %v10014
      %v10016 = vpop.f32.mrf.mxu0
      %v10017 = vpop.f32.mrf.mxu0
      %v10018 = vadd.f32 %v9862, %v10017
      %v10019 = vpop.f32.mrf.mxu0
      %10020 = vmatprep.mubr.bf16.mxu0 0
      %10021 = vmatmul.mubr.bf16.gmra.mxu0 %v9890
      %v10022 = vpop.f32.mrf.mxu0
      %v10023 = vadd.f32 %v9862, %v10022
      %v10024 = vpop.f32.mrf.mxu0
      %v10025 = vpop.f32.mrf.mxu0
      %v10026 = vadd.f32 %v9862, %v10025
      %v10027 = vpop.f32.mrf.mxu0
      %10028 = vmatprep.mubr.bf16.mxu0 0
      %10029 = vmatmul.mubr.bf16.gmra.mxu0 %v9892
      %v10030 = vpop.f32.mrf.mxu0
      %v10031 = vadd.f32 %v9862, %v10030
      %v10032 = vpop.f32.mrf.mxu0
      %v10033 = vpop.f32.mrf.mxu0
      %v10034 = vadd.f32 %v9862, %v10033
      %v10035 = vpop.f32.mrf.mxu0
      %10036 = vmatprep.mubr.bf16.mxu0 0
      %10037 = vmatmul.mubr.bf16.gmra.mxu0 %v9894
      %v10038 = vpop.f32.mrf.mxu0
      %v10039 = vadd.f32 %v9862, %v10038
      %v10040 = vpop.f32.mrf.mxu0
      %v10041 = vpop.f32.mrf.mxu0
      %v10042 = vadd.f32 %v9862, %v10041
      %v10043 = vpop.f32.mrf.mxu0
      %10044 = vmatprep.mubr.bf16.mxu0 0
      %10045 = vmatmul.mubr.bf16.gmra.mxu0 %v9896
      %v10046 = vpop.f32.mrf.mxu0
      %v10047 = vadd.f32 %v9862, %v10046
      %v10048 = vpop.f32.mrf.mxu0
      %v10049 = vpop.f32.mrf.mxu0
      %v10050 = vadd.f32 %v9862, %v10049
      %v10051 = vpop.f32.mrf.mxu0
      %10052 = vmatprep.mubr.bf16.mxu0 0
      %10053 = vmatmul.mubr.bf16.gmra.mxu0 %v9898
      %v10054 = vpop.f32.mrf.mxu0
      %v10055 = vadd.f32 %v9862, %v10054
      %v10056 = vpop.f32.mrf.mxu0
      %v10057 = vpop.f32.mrf.mxu0
      %v10058 = vadd.f32 %v9862, %v10057
      %v10059 = vpop.f32.mrf.mxu0
      %10060 = vmatprep.mubr.bf16.mxu0 0
      %10061 = vmatmul.mubr.bf16.gmra.mxu0 %v9900
      %v10062 = vpop.f32.mrf.mxu0
      %v10063 = vadd.f32 %v9862, %v10062
      %v10064 = vpop.f32.mrf.mxu0
      %v10065 = vpop.f32.mrf.mxu0
      %v10066 = vadd.f32 %v9862, %v10065
      %v10067 = vpop.f32.mrf.mxu0
      %10068 = vmatprep.mubr.bf16.mxu0 0
      %10069 = vmatmul.mubr.bf16.gmra.mxu0 %v9902
      %v10070 = vpop.f32.mrf.mxu0
      %v10071 = vadd.f32 %v9862, %v10070
      %v10072 = vpop.f32.mrf.mxu0
      %v10073 = vpop.f32.mrf.mxu0
      %v10074 = vadd.f32 %v9862, %v10073
      %v10075 = vpop.f32.mrf.mxu0
      %10076 = vmatprep.mubr.bf16.mxu0 0
      %10077 = vmatmul.mubr.bf16.gmra.mxu0 %v9904
      %v10078 = vpop.f32.mrf.mxu0
      %v10079 = vadd.f32 %v9862, %v10078
      %v10080 = vpop.f32.mrf.mxu0
      %v10081 = vpop.f32.mrf.mxu0
      %v10082 = vadd.f32 %v9862, %v10081
      %v10083 = vpop.f32.mrf.mxu0
      %10084 = vmatprep.mubr.bf16.mxu0 0
      %10085 = vmatmul.mubr.bf16.gmra.mxu0 %v9906
      %v10086 = vpop.f32.mrf.mxu0
      %v10087 = vadd.f32 %v9862, %v10086
      %v10088 = vpop.f32.mrf.mxu0
      %v10089 = vpop.f32.mrf.mxu0
      %v10090 = vadd.f32 %v9862, %v10089
      %v10091 = vpop.f32.mrf.mxu0
      %10092 = vmatprep.mubr.bf16.mxu0 0
      %10093 = vmatmul.mubr.bf16.gmra.mxu0 %v9908
      %v10094 = vpop.f32.mrf.mxu0
      %v10095 = vadd.f32 %v9862, %v10094
      %v10096 = vpop.f32.mrf.mxu0
      %v10097 = vpop.f32.mrf.mxu0
      %v10098 = vadd.f32 %v9862, %v10097
      %v10099 = vpop.f32.mrf.mxu0
      %10100 = vmatprep.mubr.bf16.mxu0 0
      %10101 = vmatmul.mubr.bf16.gmra.mxu0 %v9910
      %v10102 = vpop.f32.mrf.mxu0
      %v10103 = vadd.f32 %v9862, %v10102
      %v10104 = vpop.f32.mrf.mxu0
      %v10105 = vpop.f32.mrf.mxu0
      %v10106 = vadd.f32 %v9862, %v10105
      %v10107 = vpop.f32.mrf.mxu0
      %10108 = vmatprep.mubr.bf16.mxu0 0
      %10109 = vmatmul.mubr.bf16.gmra.mxu0 %v9912
      %v10110 = vpop.f32.mrf.mxu0
      %v10111 = vadd.f32 %v9862, %v10110
      %v10112 = vpop.f32.mrf.mxu0
      %v10113 = vpop.f32.mrf.mxu0
      %v10114 = vadd.f32 %v9862, %v10113
      %v10115 = vpop.f32.mrf.mxu0
      %10116 = vmatprep.mubr.bf16.mxu0 0
      %10117 = vmatmul.mubr.bf16.gmra.mxu0 %v9914
      %v10118 = vpop.f32.mrf.mxu0
      %v10119 = vadd.f32 %v9862, %v10118
      %v10120 = vpop.f32.mrf.mxu0
      %v10121 = vpop.f32.mrf.mxu0
      %v10122 = vadd.f32 %v9862, %v10121
      %v10123 = vpop.f32.mrf.mxu0
      %10124 = vmatprep.mubr.bf16.mxu0 0
      %10125 = vmatmul.mubr.bf16.gmra.mxu0 %v9916
      %v10126 = vpop.f32.mrf.mxu0
      %v10127 = vadd.f32 %v9862, %v10126
      %v10128 = vpop.f32.mrf.mxu0
      %v10129 = vpop.f32.mrf.mxu0
      %v10130 = vadd.f32 %v9862, %v10129
      %v10131 = vpop.f32.mrf.mxu0
      %10132 = vmatprep.mubr.bf16.mxu0 0
      %10133 = vmatmul.mubr.bf16.gmra.mxu0 %v9918
      %v10134 = vpop.f32.mrf.mxu0
      %v10135 = vadd.f32 %v9862, %v10134
      %v10136 = vpop.f32.mrf.mxu0
      %v10137 = vpop.f32.mrf.mxu0
      %v10138 = vadd.f32 %v9862, %v10137
      %v10139 = vpop.f32.mrf.mxu0
      %10140 = vmatprep.mubr.bf16.mxu0 0
      %10141 = vmatmul.mubr.bf16.gmra.mxu0 %v9920
      %v10142 = vpop.f32.mrf.mxu0
      %v10143 = vadd.f32 %v9862, %v10142
      %v10144 = vpop.f32.mrf.mxu0
      %v10145 = vpop.f32.mrf.mxu0
      %v10146 = vadd.f32 %v9862, %v10145
      %v10147 = vpop.f32.mrf.mxu0
      %10148 = vmatprep.mubr.bf16.mxu0 0
      %10149 = vmatmul.mubr.bf16.gmra.mxu0 %v9922
      %v10150 = vpop.f32.mrf.mxu0
      %v10151 = vadd.f32 %v9862, %v10150
      %v10152 = vpop.f32.mrf.mxu0
      %v10153 = vpop.f32.mrf.mxu0
      %v10154 = vadd.f32 %v9862, %v10153
      %v10155 = vpop.f32.mrf.mxu0
      %10156 = vmatprep.mubr.bf16.mxu0 0
      %10157 = vmatmul.mubr.bf16.gmra.mxu0 %v9924
      %v10158 = vpop.f32.mrf.mxu0
      %v10159 = vadd.f32 %v9862, %v10158
      %v10160 = vpop.f32.mrf.mxu0
      %v10161 = vpop.f32.mrf.mxu0
      %v10162 = vadd.f32 %v9862, %v10161
      %v10163 = vpop.f32.mrf.mxu0
      %10164 = vmatprep.mubr.bf16.mxu0 0
      %10165 = vmatmul.mubr.bf16.gmra.mxu0 %v9926
      %v10166 = vpop.f32.mrf.mxu0
      %v10167 = vadd.f32 %v9862, %v10166
      %v10168 = vpop.f32.mrf.mxu0
      %v10169 = vpop.f32.mrf.mxu0
      %v10170 = vadd.f32 %v9862, %v10169
      %v10171 = vpop.f32.mrf.mxu0
      %10172 = vmatprep.mubr.bf16.mxu0 0
      %10173 = vmatmul.mubr.bf16.gmra.mxu0 %v9928
      %v10174 = vpop.f32.mrf.mxu0
      %v10175 = vadd.f32 %v9862, %v10174
      %v10176 = vpop.f32.mrf.mxu0
      %v10177 = vpop.f32.mrf.mxu0
      %v10178 = vadd.f32 %v9862, %v10177
      %v10179 = vpop.f32.mrf.mxu0
      %10180 = vmatprep.mubr.bf16.mxu0 0
      %10181 = vmatmul.mubr.bf16.gmra.mxu0 %v9930
      %v10182 = vpop.f32.mrf.mxu0
      %v10183 = vadd.f32 %v9862, %v10182
      %v10184 = vpop.f32.mrf.mxu0
      %v10185 = vpop.f32.mrf.mxu0
      %v10186 = vadd.f32 %v9862, %v10185
      %v10187 = vpop.f32.mrf.mxu0
      %10188 = vmatprep.mubr.bf16.mxu0 0
      %10189 = vmatmul.mubr.bf16.gmra.mxu0 %v9932
      %v10190 = vpop.f32.mrf.mxu0
      %v10191 = vadd.f32 %v9862, %v10190
      %v10192 = vpop.f32.mrf.mxu0
      %v10193 = vpop.f32.mrf.mxu0
      %v10194 = vadd.f32 %v9862, %v10193
      %v10195 = vpop.f32.mrf.mxu0
      %10196 = vmatprep.mubr.bf16.mxu0 0
      %10197 = vmatmul.mubr.bf16.gmra.mxu0 %v9934
      %v10198 = vpop.f32.mrf.mxu0
      %v10199 = vadd.f32 %v9862, %v10198
      %v10200 = vpop.f32.mrf.mxu0
      %v10201 = vpop.f32.mrf.mxu0
      %v10202 = vadd.f32 %v9862, %v10201
      %v10203 = vpop.f32.mrf.mxu0
      %10204 = vmatprep.mubr.bf16.mxu0 0
      %10205 = vmatmul.mubr.bf16.gmra.mxu0 %v9936
      %v10206 = vpop.f32.mrf.mxu0
      %v10207 = vadd.f32 %v9862, %v10206
      %v10208 = vpop.f32.mrf.mxu0
      %v10209 = vpop.f32.mrf.mxu0
      %v10210 = vadd.f32 %v9862, %v10209
      %v10211 = vpop.f32.mrf.mxu0
      %10212 = vmatprep.mubr.bf16.mxu0 0
      %10213 = vmatmul.mubr.bf16.gmra.mxu0 %v9938
      %v10214 = vpop.f32.mrf.mxu0
      %v10215 = vadd.f32 %v9862, %v10214
      %v10216 = vpop.f32.mrf.mxu0
      %v10217 = vpop.f32.mrf.mxu0
      %v10218 = vadd.f32 %v9862, %v10217
      %v10219 = vpop.f32.mrf.mxu0
      %10220 = vmatprep.mubr.bf16.mxu0 0
      %10221 = vmatmul.mubr.bf16.gmra.mxu0 %v9940
      %v10222 = vpop.f32.mrf.mxu0
      %v10223 = vadd.f32 %v9862, %v10222
      %v10224 = vpop.f32.mrf.mxu0
      %v10225 = vpop.f32.mrf.mxu0
      %v10226 = vadd.f32 %v9862, %v10225
      %v10227 = vpop.f32.mrf.mxu0
      %10228 = vmatprep.mubr.bf16.mxu0 0
      %10229 = vmatmul.mubr.bf16.gmra.mxu0 %v9942
      %v10230 = vpop.f32.mrf.mxu0
      %v10231 = vadd.f32 %v9862, %v10230
      %v10232 = vpop.f32.mrf.mxu0
      %v10233 = vpop.f32.mrf.mxu0
      %v10234 = vadd.f32 %v9862, %v10233
      %v10235 = vpop.f32.mrf.mxu0
      %10236 = vdwg.mxu0
      %v10237 = vadd.f32 %v9983, %v9986
      %v10238 = vadd.f32 %v10237, %v9991
      %v10239 = vadd.f32 %v10238, %v9994
      %v10240 = vadd.f32 %v10239, %v9999
      %v10241 = vadd.f32 %v10240, %v10002
      %v10242 = vadd.f32 %v10241, %v10007
      %v10243 = vadd.f32 %v10242, %v10010
      %v10244 = vadd.f32 %v10243, %v10015
      %v10245 = vadd.f32 %v10244, %v10018
      %v10246 = vadd.f32 %v10245, %v10023
      %v10247 = vadd.f32 %v10246, %v10026
      %v10248 = vadd.f32 %v10247, %v10031
      %v10249 = vadd.f32 %v10248, %v10034
      %v10250 = vadd.f32 %v10249, %v10039
      %v10251 = vadd.f32 %v10250, %v10042
      %v10252 = vadd.f32 %v10251, %v10047
      %v10253 = vadd.f32 %v10252, %v10050
      %v10254 = vadd.f32 %v10253, %v10055
      %v10255 = vadd.f32 %v10254, %v10058
      %v10256 = vadd.f32 %v10255, %v10063
      %v10257 = vadd.f32 %v10256, %v10066
      %v10258 = vadd.f32 %v10257, %v10071
      %v10259 = vadd.f32 %v10258, %v10074
      %v10260 = vadd.f32 %v10259, %v10079
      %v10261 = vadd.f32 %v10260, %v10082
      %v10262 = vadd.f32 %v10261, %v10087
      %v10263 = vadd.f32 %v10262, %v10090
      %v10264 = vadd.f32 %v10263, %v10095
      %v10265 = vadd.f32 %v10264, %v10098
      %v10266 = vadd.f32 %v10265, %v10103
      %v10267 = vadd.f32 %v10266, %v10106
      %v10268 = vadd.f32 %v10267, %v10111
      %v10269 = vadd.f32 %v10268, %v10114
      %v10270 = vadd.f32 %v10269, %v10119
      %v10271 = vadd.f32 %v10270, %v10122
      %v10272 = vadd.f32 %v10271, %v10127
      %v10273 = vadd.f32 %v10272, %v10130
      %v10274 = vadd.f32 %v10273, %v10135
      %v10275 = vadd.f32 %v10274, %v10138
      %v10276 = vadd.f32 %v10275, %v10143
      %v10277 = vadd.f32 %v10276, %v10146
      %v10278 = vadd.f32 %v10277, %v10151
      %v10279 = vadd.f32 %v10278, %v10154
      %v10280 = vadd.f32 %v10279, %v10159
      %v10281 = vadd.f32 %v10280, %v10162
      %v10282 = vadd.f32 %v10281, %v10167
      %v10283 = vadd.f32 %v10282, %v10170
      %v10284 = vadd.f32 %v10283, %v10175
      %v10285 = vadd.f32 %v10284, %v10178
      %v10286 = vadd.f32 %v10285, %v10183
      %v10287 = vadd.f32 %v10286, %v10186
      %v10288 = vadd.f32 %v10287, %v10191
      %v10289 = vadd.f32 %v10288, %v10194
      %v10290 = vadd.f32 %v10289, %v10199
      %v10291 = vadd.f32 %v10290, %v10202
      %v10292 = vadd.f32 %v10291, %v10207
      %v10293 = vadd.f32 %v10292, %v10210
      %v10294 = vadd.f32 %v10293, %v10215
      %v10295 = vadd.f32 %v10294, %v10218
      %v10296 = vadd.f32 %v10295, %v10223
      %v10297 = vadd.f32 %v10296, %v10226
      %v10298 = vadd.f32 %v10297, %v10231
      %v10299 = vadd.f32 %v10298, %v10234
      %v10300 = vrot.slane %v10299, 4
      %v10301 = vadd.f32 %v10299, %v10300
      %v10302 = vrot.slane %v10301, 2
      %v10303 = vadd.f32 %v10301, %v10302
      %v10304 = vrot.slane %v10303, 1
      %v10305 = vadd.f32 %v10303, %v10304
      %v10306 = vmul.f32 %v9983, %v9983
      %v10307 = vmul.f32 %v9986, %v9986
      %v10308 = vmul.f32 %v9991, %v9991
      %v10309 = vmul.f32 %v9994, %v9994
      %v10310 = vmul.f32 %v9999, %v9999
      %v10311 = vmul.f32 %v10002, %v10002
      %v10312 = vmul.f32 %v10007, %v10007
      %v10313 = vmul.f32 %v10010, %v10010
      %v10314 = vmul.f32 %v10015, %v10015
      %v10315 = vmul.f32 %v10018, %v10018
      %v10316 = vmul.f32 %v10023, %v10023
      %v10317 = vmul.f32 %v10026, %v10026
      %v10318 = vmul.f32 %v10031, %v10031
      %v10319 = vmul.f32 %v10034, %v10034
      %v10320 = vmul.f32 %v10039, %v10039
      %v10321 = vmul.f32 %v10042, %v10042
      %v10322 = vmul.f32 %v10047, %v10047
      %v10323 = vmul.f32 %v10050, %v10050
      %v10324 = vmul.f32 %v10055, %v10055
      %v10325 = vmul.f32 %v10058, %v10058
      %v10326 = vmul.f32 %v10063, %v10063
      %v10327 = vmul.f32 %v10066, %v10066
      %v10328 = vmul.f32 %v10071, %v10071
      %v10329 = vmul.f32 %v10074, %v10074
      %v10330 = vmul.f32 %v10079, %v10079
      %v10331 = vmul.f32 %v10082, %v10082
      %v10332 = vmul.f32 %v10087, %v10087
      %v10333 = vmul.f32 %v10090, %v10090
      %v10334 = vmul.f32 %v10095, %v10095
      %v10335 = vmul.f32 %v10098, %v10098
      %v10336 = vmul.f32 %v10103, %v10103
      %v10337 = vmul.f32 %v10106, %v10106
      %v10338 = vmul.f32 %v10111, %v10111
      %v10339 = vmul.f32 %v10114, %v10114
      %v10340 = vmul.f32 %v10119, %v10119
      %v10341 = vmul.f32 %v10122, %v10122
      %v10342 = vmul.f32 %v10127, %v10127
      %v10343 = vmul.f32 %v10130, %v10130
      %v10344 = vmul.f32 %v10135, %v10135
      %v10345 = vmul.f32 %v10138, %v10138
      %v10346 = vmul.f32 %v10143, %v10143
      %v10347 = vmul.f32 %v10146, %v10146
      %v10348 = vmul.f32 %v10151, %v10151
      %v10349 = vmul.f32 %v10154, %v10154
      %v10350 = vmul.f32 %v10159, %v10159
      %v10351 = vmul.f32 %v10162, %v10162
      %v10352 = vmul.f32 %v10167, %v10167
      %v10353 = vmul.f32 %v10170, %v10170
      %v10354 = vmul.f32 %v10175, %v10175
      %v10355 = vmul.f32 %v10178, %v10178
      %v10356 = vmul.f32 %v10183, %v10183
      %v10357 = vmul.f32 %v10186, %v10186
      %v10358 = vmul.f32 %v10191, %v10191
      %v10359 = vmul.f32 %v10194, %v10194
      %v10360 = vmul.f32 %v10199, %v10199
      %v10361 = vmul.f32 %v10202, %v10202
      %v10362 = vmul.f32 %v10207, %v10207
      %v10363 = vmul.f32 %v10210, %v10210
      %v10364 = vmul.f32 %v10215, %v10215
      %v10365 = vmul.f32 %v10218, %v10218
      %v10366 = vmul.f32 %v10223, %v10223
      %v10367 = vmul.f32 %v10226, %v10226
      %v10368 = vmul.f32 %v10231, %v10231
      %v10369 = vmul.f32 %v10234, %v10234
      %v10370 = vadd.f32 %v10306, %v10307
      %v10371 = vadd.f32 %v10370, %v10308
      %v10372 = vadd.f32 %v10371, %v10309
      %v10373 = vadd.f32 %v10372, %v10310
      %v10374 = vadd.f32 %v10373, %v10311
      %v10375 = vadd.f32 %v10374, %v10312
      %v10376 = vadd.f32 %v10375, %v10313
      %v10377 = vadd.f32 %v10376, %v10314
      %v10378 = vadd.f32 %v10377, %v10315
      %v10379 = vadd.f32 %v10378, %v10316
      %v10380 = vadd.f32 %v10379, %v10317
      %v10381 = vadd.f32 %v10380, %v10318
      %v10382 = vadd.f32 %v10381, %v10319
      %v10383 = vadd.f32 %v10382, %v10320
      %v10384 = vadd.f32 %v10383, %v10321
      %v10385 = vadd.f32 %v10384, %v10322
      %v10386 = vadd.f32 %v10385, %v10323
      %v10387 = vadd.f32 %v10386, %v10324
      %v10388 = vadd.f32 %v10387, %v10325
      %v10389 = vadd.f32 %v10388, %v10326
      %v10390 = vadd.f32 %v10389, %v10327
      %v10391 = vadd.f32 %v10390, %v10328
      %v10392 = vadd.f32 %v10391, %v10329
      %v10393 = vadd.f32 %v10392, %v10330
      %v10394 = vadd.f32 %v10393, %v10331
      %v10395 = vadd.f32 %v10394, %v10332
      %v10396 = vadd.f32 %v10395, %v10333
      %v10397 = vadd.f32 %v10396, %v10334
      %v10398 = vadd.f32 %v10397, %v10335
      %v10399 = vadd.f32 %v10398, %v10336
      %v10400 = vadd.f32 %v10399, %v10337
      %v10401 = vadd.f32 %v10400, %v10338
      %v10402 = vadd.f32 %v10401, %v10339
      %v10403 = vadd.f32 %v10402, %v10340
      %v10404 = vadd.f32 %v10403, %v10341
      %v10405 = vadd.f32 %v10404, %v10342
      %v10406 = vadd.f32 %v10405, %v10343
      %v10407 = vadd.f32 %v10406, %v10344
      %v10408 = vadd.f32 %v10407, %v10345
      %v10409 = vadd.f32 %v10408, %v10346
      %v10410 = vadd.f32 %v10409, %v10347
      %v10411 = vadd.f32 %v10410, %v10348
      %v10412 = vadd.f32 %v10411, %v10349
      %v10413 = vadd.f32 %v10412, %v10350
      %v10414 = vadd.f32 %v10413, %v10351
      %v10415 = vadd.f32 %v10414, %v10352
      %v10416 = vadd.f32 %v10415, %v10353
      %v10417 = vadd.f32 %v10416, %v10354
      %v10418 = vadd.f32 %v10417, %v10355
      %v10419 = vadd.f32 %v10418, %v10356
      %v10420 = vadd.f32 %v10419, %v10357
      %v10421 = vadd.f32 %v10420, %v10358
      %v10422 = vadd.f32 %v10421, %v10359
      %v10423 = vadd.f32 %v10422, %v10360
      %v10424 = vadd.f32 %v10423, %v10361
      %v10425 = vadd.f32 %v10424, %v10362
      %v10426 = vadd.f32 %v10425, %v10363
      %v10427 = vadd.f32 %v10426, %v10364
      %v10428 = vadd.f32 %v10427, %v10365
      %v10429 = vadd.f32 %v10428, %v10366
      %v10430 = vadd.f32 %v10429, %v10367
      %v10431 = vadd.f32 %v10430, %v10368
      %v10432 = vadd.f32 %v10431, %v10369
      %v10433 = vrot.slane %v10432, 4
      %v10434 = vadd.f32 %v10432, %v10433
      %v10435 = vrot.slane %v10434, 2
      %v10436 = vadd.f32 %v10434, %v10435
      %v10437 = vrot.slane %v10436, 1
      %v10438 = vadd.f32 %v10436, %v10437
      %vm10439 = vcmask 1040384
      %v10440 = vsel %vm10439, %v10305, %v10438
      %v10441 = vsel %vm9944, %v10440, 0.0
      %10442 = vst [vmem:[%s243] sm:$0xff] %v10441
      %10443 = vst [vmem:[%s234] sm:$0xff] %v9983
      %10444 = vst [vmem:[%s234 + $0x8] sm:$0xff] %v9986
      %10445 = vst [vmem:[%s234 + $0x10] sm:$0xff] %v9991
      %10446 = vst [vmem:[%s234 + $0x18] sm:$0xff] %v9994
      %10447 = vst [vmem:[%s234 + $0x20] sm:$0xff] %v9999
      %10448 = vst [vmem:[%s234 + $0x28] sm:$0xff] %v10002
      %10449 = vst [vmem:[%s234 + $0x30] sm:$0xff] %v10007
      %10450 = vst [vmem:[%s234 + $0x38] sm:$0xff] %v10010
      %10451 = vst [vmem:[%s234 + $0x40] sm:$0xff] %v10015
      %10452 = vst [vmem:[%s234 + $0x48] sm:$0xff] %v10018
      %10453 = vst [vmem:[%s234 + $0x50] sm:$0xff] %v10023
      %10454 = vst [vmem:[%s234 + $0x58] sm:$0xff] %v10026
      %10455 = vst [vmem:[%s234 + $0x60] sm:$0xff] %v10031
      %10456 = vst [vmem:[%s234 + $0x68] sm:$0xff] %v10034
      %10457 = vst [vmem:[%s234 + $0x70] sm:$0xff] %v10039
      %10458 = vst [vmem:[%s234 + $0x78] sm:$0xff] %v10042
      %10459 = vst [vmem:[%s234 + $0x80] sm:$0xff] %v10047
      %10460 = vst [vmem:[%s234 + $0x88] sm:$0xff] %v10050
      %10461 = vst [vmem:[%s234 + $0x90] sm:$0xff] %v10055
      %10462 = vst [vmem:[%s234 + $0x98] sm:$0xff] %v10058
      %10463 = vst [vmem:[%s234 + $0xa0] sm:$0xff] %v10063
      %10464 = vst [vmem:[%s234 + $0xa8] sm:$0xff] %v10066
      %10465 = vst [vmem:[%s234 + $0xb0] sm:$0xff] %v10071
      %10466 = vst [vmem:[%s234 + $0xb8] sm:$0xff] %v10074
      %10467 = vst [vmem:[%s234 + $0xc0] sm:$0xff] %v10079
      %10468 = vst [vmem:[%s234 + $0xc8] sm:$0xff] %v10082
      %10469 = vst [vmem:[%s234 + $0xd0] sm:$0xff] %v10087
      %10470 = vst [vmem:[%s234 + $0xd8] sm:$0xff] %v10090
      %10471 = vst [vmem:[%s234 + $0xe0] sm:$0xff] %v10095
      %10472 = vst [vmem:[%s234 + $0xe8] sm:$0xff] %v10098
      %10473 = vst [vmem:[%s234 + $0xf0] sm:$0xff] %v10103
      %10474 = vst [vmem:[%s234 + $0xf8] sm:$0xff] %v10106
      %10475 = vst [vmem:[%s234 + $0x100] sm:$0xff] %v10111
      %10476 = vst [vmem:[%s234 + $0x108] sm:$0xff] %v10114
      %10477 = vst [vmem:[%s234 + $0x110] sm:$0xff] %v10119
      %10478 = vst [vmem:[%s234 + $0x118] sm:$0xff] %v10122
      %10479 = vst [vmem:[%s234 + $0x120] sm:$0xff] %v10127
      %10480 = vst [vmem:[%s234 + $0x128] sm:$0xff] %v10130
      %10481 = vst [vmem:[%s234 + $0x130] sm:$0xff] %v10135
      %10482 = vst [vmem:[%s234 + $0x138] sm:$0xff] %v10138
      %10483 = vst [vmem:[%s234 + $0x140] sm:$0xff] %v10143
      %10484 = vst [vmem:[%s234 + $0x148] sm:$0xff] %v10146
      %10485 = vst [vmem:[%s234 + $0x150] sm:$0xff] %v10151
      %10486 = vst [vmem:[%s234 + $0x158] sm:$0xff] %v10154
      %10487 = vst [vmem:[%s234 + $0x160] sm:$0xff] %v10159
      %10488 = vst [vmem:[%s234 + $0x168] sm:$0xff] %v10162
      %10489 = vst [vmem:[%s234 + $0x170] sm:$0xff] %v10167
      %10490 = vst [vmem:[%s234 + $0x178] sm:$0xff] %v10170
      %10491 = vst [vmem:[%s234 + $0x180] sm:$0xff] %v10175
      %10492 = vst [vmem:[%s234 + $0x188] sm:$0xff] %v10178
      %10493 = vst [vmem:[%s234 + $0x190] sm:$0xff] %v10183
      %10494 = vst [vmem:[%s234 + $0x198] sm:$0xff] %v10186
      %10495 = vst [vmem:[%s234 + $0x1a0] sm:$0xff] %v10191
      %10496 = vst [vmem:[%s234 + $0x1a8] sm:$0xff] %v10194
      %10497 = vst [vmem:[%s234 + $0x1b0] sm:$0xff] %v10199
      %10498 = vst [vmem:[%s234 + $0x1b8] sm:$0xff] %v10202
      %10499 = vst [vmem:[%s234 + $0x1c0] sm:$0xff] %v10207
      %10500 = vst [vmem:[%s234 + $0x1c8] sm:$0xff] %v10210
      %10501 = vst [vmem:[%s234 + $0x1d0] sm:$0xff] %v10215
      %10502 = vst [vmem:[%s234 + $0x1d8] sm:$0xff] %v10218
      %10503 = vst [vmem:[%s234 + $0x1e0] sm:$0xff] %v10223
      %10504 = vst [vmem:[%s234 + $0x1e8] sm:$0xff] %v10226
      %10505 = vst [vmem:[%s234 + $0x1f0] sm:$0xff] %v10231
      %10506 = vst [vmem:[%s234 + $0x1f8] sm:$0xff] %v10234
      %s10507 = smul.u32 16, %s21
      %p10508 = scmp.lt.s32.totalorder %s20, 1
      %s10509 = scalar_select %p10508, %s20, 1
      %p10510 = scmp.lt.s32.totalorder %s10507, 31
      %s10511 = scalar_select %p10510, %s10507, 31
      %s10512 = smul.addr %s10511, 4
      %s10513 = smul.addr %s10509, 128
      %s10514 = sadd.s32 %s10512, %s10513
      %s10515 = smul.addr %s10514, 8
      %s10516 = scalar_lea.vmem %s3, %s10515
      %p10517 = scmp.lt.s32.totalorder %s20, 1
      %s10518 = scalar_select %p10517, %s20, 1
      %p10519 = scmp.lt.s32.totalorder %s21, 1
      %s10520 = scalar_select %p10519, %s21, 1
      %s10521 = smul.addr %s10518, 2
      %s10522 = sadd.s32 %s10520, %s10521
      %s10523 = smul.addr %s10522, 8
      %s10524 = scalar_lea.vmem %s4, %s10523
      // Predicated region
      $region33: #{upconv.2} parent=31 // pred_check
        %p10525 = pneg %p116
      $region34: #{upconv.2} parent=31 // pred_check_branch
        %10527 = sbr.rel (%p10525) target = $region36
      $region35: #{upconv.2} parent=31 // pred_region
        %s10528 = smul.u32 16, %s21
      $region36: #{upconv.2} parent=31 // pred_fallthru
        _
      // Predicated region
      $region37: #{upconv.2} parent=31 // pred_check
        %p10529 = pneg %p144
      $region38: #{upconv.2} parent=31 // pred_check_branch
        %10531 = sbr.rel (%p10529) target = $region40
      $region39: #{upconv.2} parent=31 // pred_region
        _
      $region40: #{upconv.2} parent=31 // pred_fallthru
        _
    $region32: #{upconv.2} parent=5 // pred_fallthru
      _
    %p10532 = scmp.le.s32.totalorder 2, %s11
    // Predicated region
    $region41: #{upconv.2} parent=5 // pred_check
      %p10533 = pneg %p10532
    $region42: #{upconv.2} parent=5 // pred_check_branch
      %10535 = sbr.rel (%p10533) target = $region44
    $region43: #{upconv.2} parent=5 // pred_region
      %s10536 = ssub.s32 %s11, 2
      // Predicated region
      $region45: #{upconv.2} parent=43 // pred_check
        %p10537 = pneg %p122
      $region46: #{upconv.2} parent=43 // pred_check_branch
        %10539 = sbr.rel (%p10537) target = $region48
      $region47: #{upconv.2} parent=43 // pred_region
        %s10540 = smul.u32 16, %s23
        %p10541 = scmp.lt.s32.totalorder %s22, 1
        %s10542 = scalar_select %p10541, %s22, 1
        %p10543 = scmp.lt.s32.totalorder %s10540, 31
        %s10544 = scalar_select %p10543, %s10540, 31
        %s10545 = smul.addr %s10544, 4
        %s10546 = smul.addr %s10542, 128
        %s10547 = sadd.s32 %s10545, %s10546
        %s10548 = smul.addr %s10547, 8
        %s10549 = scalar_lea.vmem %s3, %s10548
      $region48: #{upconv.2} parent=43 // pred_fallthru
        _
      // Predicated region
      $region49: #{upconv.2} parent=43 // pred_check
        %p10550 = pneg %p150
      $region50: #{upconv.2} parent=43 // pred_check_branch
        %10552 = sbr.rel (%p10550) target = $region52
      $region51: #{upconv.2} parent=43 // pred_region
        %p10553 = scmp.lt.s32.totalorder %s22, 1
        %s10554 = scalar_select %p10553, %s22, 1
        %p10555 = scmp.lt.s32.totalorder %s23, 1
        %s10556 = scalar_select %p10555, %s23, 1
        %s10557 = smul.addr %s10554, 2
        %s10558 = sadd.s32 %s10556, %s10557
        %s10559 = smul.addr %s10558, 8
        %s10560 = scalar_lea.vmem %s4, %s10559
      $region52: #{upconv.2} parent=43 // pred_fallthru
        _
    $region44: #{upconv.2} parent=5 // pred_fallthru
      _
  $region6: #{upconv.2} parent=0 // loop_footer
    %s15 = sadd.s32 1, %s11
  $region7: #{upconv.2} parent=0 // loop_footer_branch
    %10 = sbr.rel target = $region3
  $region8: #{upconv.2} parent=0 // loop_exit
    _

</llo_original>
